<compile_context>
chip_gen: v5e
topology: v5e:2x2
jax: 0.10.0
libtpu: 0.0.40
codegen_flags: <defaults>
</compile_context>

<pallas_src>
import math
import jax
import jax.numpy as jnp
from jax.experimental import pallas as pl
from jax.experimental.pallas import tpu as pltpu

LATENT_DIM = 10
IN_DIM = 28 * 28          # 784
H1, H2 = 512, 256


def _round_up(x, m):
    return ((x + m - 1) // m) * m


def _ceil_div(a, b):
    return -(-a // b)


def _vae_kernel(
    x_ref, eps_ref,
    e_w1, e_b1, e_w2, e_b2,
    ml_w, ml_b,
    d_w1, d_b1, d_w2, d_b2, d_w3, d_b3,
    recon_ref, mulv_ref,
):
    f32 = jnp.float32
    bf16 = jnp.bfloat16
    L = LATENT_DIM

    # In-kernel bf16 cast of the input (VPU cast hides under MXU work).
    x = x_ref[...].astype(bf16)

    # ----- encoder: bf16 matmul operands, f32 MXU accumulation, f32 elementwise -----
    h = jnp.dot(x, e_w1[...], preferred_element_type=f32) + e_b1[...]
    h = jnp.maximum(h, 0.0)
    h = jnp.dot(h.astype(bf16), e_w2[...], preferred_element_type=f32) + e_b2[...]
    h = jnp.maximum(h, 0.0)                                   # (TB, 256) f32

    # ----- fused latent heads: one (256, 2L) matmul instead of two N=10 ones -----
    ml = jnp.dot(h.astype(bf16), ml_w[...], preferred_element_type=f32) + ml_b[...]
    mu = ml[:, :L]
    logvar = ml[:, L:]

    # ----- reparameterize: z = mu + eps * exp(0.5 * logvar) -----
    z = mu + eps_ref[...] * jnp.exp(0.5 * logvar)             # (TB, L) f32

    # ----- decoder -----
    d = jnp.dot(z.astype(bf16), d_w1[...], preferred_element_type=f32) + d_b1[...]
    d = jnp.maximum(d, 0.0)
    d = jnp.dot(d.astype(bf16), d_w2[...], preferred_element_type=f32) + d_b2[...]
    d = jnp.maximum(d, 0.0)
    d = jnp.dot(d.astype(bf16), d_w3[...], preferred_element_type=f32) + d_b3[...]
    # sigmoid(d) == 0.5 * (tanh(0.5 * d) + 1): single EUP tanh, no f32 divide.
    recon = 0.5 * (jnp.tanh(0.5 * d) + 1.0)

    recon_ref[...] = recon.astype(recon_ref.dtype)
    mulv_ref[...] = ml.astype(mulv_ref.dtype)


def _build_call(B, TB, nb, param_inputs, recon_dtype, single_buffer_weights):
    def batch_spec(feat):
        return pl.BlockSpec((TB, feat), lambda i: (i, 0))

    def const_spec(arr):
        # Constant block index -> weights stay VMEM-resident across grid steps.
        if single_buffer_weights:
            return pl.BlockSpec(arr.shape, lambda i: (0, 0),
                                pipeline_mode=pl.Buffered(1))
        return pl.BlockSpec(arr.shape, lambda i: (0, 0))

    in_specs = [batch_spec(IN_DIM), batch_spec(LATENT_DIM)]
    in_specs += [const_spec(p) for p in param_inputs]
    out_specs = (batch_spec(IN_DIM), batch_spec(2 * LATENT_DIM))

    flops = 2 * B * (IN_DIM * H1 + H1 * H2 + H2 * 2 * LATENT_DIM
                     + LATENT_DIM * H2 + H2 * H1 + H1 * IN_DIM)
    transcendentals = B * (LATENT_DIM + IN_DIM)        # exp (reparam) + tanh (sigmoid)
    bytes_accessed = (
        sum(int(p.size) * p.dtype.itemsize for p in param_inputs)
        + B * IN_DIM * 4 + B * LATENT_DIM * 4                        # x f32, eps f32
        + B * IN_DIM * jnp.dtype(recon_dtype).itemsize               # recon out
        + B * 2 * LATENT_DIM * 4                                     # mu||logvar out
    )

    return pl.pallas_call(
        _vae_kernel,
        out_shape=(
            jax.ShapeDtypeStruct((B, IN_DIM), recon_dtype),
            jax.ShapeDtypeStruct((B, 2 * LATENT_DIM), jnp.float32),
        ),
        grid=(nb,),
        in_specs=in_specs,
        out_specs=out_specs,
        compiler_params=pltpu.CompilerParams(
            dimension_semantics=("parallel",),      # batch tiles independent (megacore)
            vmem_limit_bytes=32 * 1024 * 1024,      # ~2.2 MB bf16 params + tiles: ample
        ),
        cost_estimate=pl.CostEstimate(
            flops=flops,
            transcendentals=transcendentals,
            bytes_accessed=bytes_accessed,
        ),
    )


def simple_vae_forward(x, eps, params, *, batch_tile=512, recon_dtype=jnp.bfloat16):
    """x: (B, 1, 28, 28) f32 (NCHW).  eps: (B, latent_dim) N(0,1) noise.
       Returns (recon (B,1,28,28) recon_dtype, mu (B,L) f32, logvar (B,L) f32)."""
    (e_w1, e_b1, e_w2, e_b2, mu_w, mu_b, lv_w, lv_b,
     d_w1, d_b1, d_w2, d_b2, d_w3, d_b3) = params

    # Fuse mu/logvar heads; bf16 weights, f32 biases.
    ml_w = jnp.concatenate([mu_w, lv_w], axis=1)        # (256, 2L)
    ml_b = jnp.concatenate([mu_b, lv_b], axis=1)        # (1, 2L)
    bf16 = jnp.bfloat16
    param_inputs = (
        e_w1.astype(bf16), e_b1.astype(jnp.float32),
        e_w2.astype(bf16), e_b2.astype(jnp.float32),
        ml_w.astype(bf16), ml_b.astype(jnp.float32),
        d_w1.astype(bf16), d_b1.astype(jnp.float32),
        d_w2.astype(bf16), d_b2.astype(jnp.float32),
        d_w3.astype(bf16), d_b3.astype(jnp.float32),
    )

    # ---- adaptive batch tiling: no jnp.pad, ragged last block ----
    B = x.shape[0]
    batch_tile = max(16, _round_up(int(batch_tile), 16))
    B16 = _round_up(B, 16)                 # tile-granularity ceiling (never materialized)
    # >= 2 grid steps whenever there is enough work so the "parallel" batch axis
    # can shard across both v7x TensorCores; single step only for tiny batches.
    nsteps = max(2, _ceil_div(B16, batch_tile)) if B16 >= 32 else 1
    TB = _round_up(_ceil_div(B16, nsteps), 16)
    nb = _ceil_div(B, TB)                  # grid over the *unpadded* batch

    x_flat = x.reshape(B, IN_DIM)          # metadata-only reshape, stays f32
    eps_f = eps.astype(jnp.float32)

    call_args = (x_flat, eps_f) + param_inputs
    try:
        recon_flat, mulv = _build_call(
            B, TB, nb, param_inputs, recon_dtype,
            single_buffer_weights=True)(*call_args)
    except Exception:
        # Fallback if this Pallas build rejects Buffered(1) input specs;
        # double-buffered weights (~4.4 MB) still fit VMEM comfortably.
        recon_flat, mulv = _build_call(
            B, TB, nb, param_inputs, recon_dtype,
            single_buffer_weights=False)(*call_args)

    recon = recon_flat.reshape(B, 1, 28, 28)
    mu = mulv[:, :LATENT_DIM]
    logvar = mulv[:, LATENT_DIM:]
    return recon, mu, logvar


def init_params(key, latent_dim=LATENT_DIM):
    """PyTorch-style init: U(-1/sqrt(fan_in), 1/sqrt(fan_in)).
       Weights stored as (in, out) = W^T; biases as (1, out). f32 master copies."""
    shapes = [
        (IN_DIM, H1),        # encoder.0
        (H1, H2),            # encoder.2
        (H2, latent_dim),    # fc_mu
        (H2, latent_dim),    # fc_var
        (latent_dim, H2),    # decoder.0
        (H2, H1),            # decoder.2
        (H1, IN_DIM),        # decoder.4
    ]
    params = []
    for (fan_in, fan_out) in shapes:
        key, kw, kb = jax.random.split(key, 3)
        bound = 1.0 / math.sqrt(fan_in)
        w = jax.random.uniform(kw, (fan_in, fan_out), jnp.float32, -bound, bound)
        b = jax.random.uniform(kb, (1, fan_out), jnp.float32, -bound, bound)
        params.append(w)
        params.append(b)
    return params


def reference_forward_f32(x, eps, params):
    """Full-f32 reference matching the PyTorch semantics."""
    (e_w1, e_b1, e_w2, e_b2, mu_w, mu_b, lv_w, lv_b,
     d_w1, d_b1, d_w2, d_b2, d_w3, d_b3) = params
    B = x.shape[0]
    h = x.reshape(B, -1)
    h = jnp.maximum(h @ e_w1 + e_b1, 0.0)
    h = jnp.maximum(h @ e_w2 + e_b2, 0.0)
    mu = h @ mu_w + mu_b
    logvar = h @ lv_w + lv_b
    z = mu + eps * jnp.exp(0.5 * logvar)
    d = jnp.maximum(z @ d_w1 + d_b1, 0.0)
    d = jnp.maximum(d @ d_w2 + d_b2, 0.0)
    recon = jax.nn.sigmoid(d @ d_w3 + d_b3)
    return recon.reshape(B, 1, 28, 28), mu, logvar


def reference_forward_bf16(x, eps, params):
    """Mirrors the kernel's mixed precision: bf16 matmul operands, f32 accumulation."""
    bf16, f32 = jnp.bfloat16, jnp.float32

    def mm(a, w, b):
        return jnp.dot(a.astype(bf16), w.astype(bf16), preferred_element_type=f32) + b

    (e_w1, e_b1, e_w2, e_b2, mu_w, mu_b, lv_w, lv_b,
     d_w1, d_b1, d_w2, d_b2, d_w3, d_b3) = params
    B = x.shape[0]
    h = jnp.maximum(mm(x.reshape(B, -1), e_w1, e_b1), 0.0)
    h = jnp.maximum(mm(h, e_w2, e_b2), 0.0)
    mu = mm(h, mu_w, mu_b)
    logvar = mm(h, lv_w, lv_b)
    z = mu + eps * jnp.exp(0.5 * logvar)
    d = jnp.maximum(mm(z, d_w1, d_b1), 0.0)
    d = jnp.maximum(mm(d, d_w2, d_b2), 0.0)
    recon = jax.nn.sigmoid(mm(d, d_w3, d_b3))
    return recon.reshape(B, 1, 28, 28), mu, logvar


if __name__ == "__main__":
    key = jax.random.PRNGKey(0)
    k_params, k_x, k_eps, k_x2, k_eps2 = jax.random.split(key, 5)

    params = init_params(k_params)

    # --- small demo shapes (B=2, single ragged block) ---
    B = 2
    x = jax.random.uniform(k_x, (B, 1, 28, 28), jnp.float32)       # NCHW input
    eps = jax.random.normal(k_eps, (B, LATENT_DIM), jnp.float32)   # reparam noise

    recon, mu, logvar = simple_vae_forward(x, eps, params)
    jax.block_until_ready((recon, mu, logvar))

    assert recon.shape == (B, 1, 28, 28)
    assert mu.shape == (B, LATENT_DIM) and logvar.shape == (B, LATENT_DIM)

    # Tight check vs precision-matched (bf16 operand / f32 accumulate) reference.
    # recon is emitted in bf16 -> allow ~1 bf16 ulp of [0,1] values on top.
    b_recon, b_mu, b_logvar = reference_forward_bf16(x, eps, params)
    assert jnp.allclose(recon.astype(jnp.float32), b_recon, atol=8e-3, rtol=1e-2)
    assert jnp.allclose(mu, b_mu, atol=2e-3, rtol=2e-3)
    assert jnp.allclose(logvar, b_logvar, atol=2e-3, rtol=2e-3)

    # Loose sanity check vs full-f32 reference (bf16 weights -> expected drift).
    f_recon, f_mu, f_logvar = reference_forward_f32(x, eps, params)
    assert jnp.allclose(recon.astype(jnp.float32), f_recon, atol=5e-2, rtol=5e-2)
    assert jnp.allclose(mu, f_mu, atol=5e-2, rtol=5e-2)
    assert jnp.allclose(logvar, f_logvar, atol=5e-2, rtol=5e-2)

    # --- multi-tile path: >=2 grid steps (megacore) + ragged last block, no padding ---
    B2 = 300
    x2 = jax.random.uniform(k_x2, (B2, 1, 28, 28), jnp.float32)
    eps2 = jax.random.normal(k_eps2, (B2, LATENT_DIM), jnp.float32)
    recon2, mu2, logvar2 = simple_vae_forward(x2, eps2, params)
    jax.block_until_ready((recon2, mu2, logvar2))
    b_recon2, b_mu2, b_logvar2 = reference_forward_bf16(x2, eps2, params)
    assert recon2.shape == (B2, 1, 28, 28)
    assert jnp.allclose(recon2.astype(jnp.float32), b_recon2, atol=8e-3, rtol=1e-2)
    assert jnp.allclose(mu2, b_mu2, atol=2e-3, rtol=2e-3)
    assert jnp.allclose(logvar2, b_logvar2, atol=2e-3, rtol=2e-3)

    print("KERNEL_OK")
</pallas_src>

<mosaic_0001>
module attributes {stable_mosaic.version = 11 : i64} {
  func.func @_vae_kernel(%arg0: i32, %arg1: memref<16x784xf32, #tpu.memory_space<vmem>>, %arg2: memref<16x10xf32, #tpu.memory_space<vmem>>, %arg3: memref<784x512xbf16, #tpu.memory_space<vmem>>, %arg4: memref<1x512xf32, #tpu.memory_space<vmem>>, %arg5: memref<512x256xbf16, #tpu.memory_space<vmem>>, %arg6: memref<1x256xf32, #tpu.memory_space<vmem>>, %arg7: memref<256x20xbf16, #tpu.memory_space<vmem>>, %arg8: memref<1x20xf32, #tpu.memory_space<vmem>>, %arg9: memref<10x256xbf16, #tpu.memory_space<vmem>>, %arg10: memref<1x256xf32, #tpu.memory_space<vmem>>, %arg11: memref<256x512xbf16, #tpu.memory_space<vmem>>, %arg12: memref<1x512xf32, #tpu.memory_space<vmem>>, %arg13: memref<512x784xbf16, #tpu.memory_space<vmem>>, %arg14: memref<1x784xf32, #tpu.memory_space<vmem>>, %arg15: memref<16x784xbf16, #tpu.memory_space<vmem>>, %arg16: memref<16x20xf32, #tpu.memory_space<vmem>>) attributes {dimension_semantics = [#tpu.dimension_semantics<parallel>], iteration_bounds = array<i64: 1>, scalar_prefetch = 0 : i64, scratch_operands = 0 : i64, tpu.core_type = #tpu.core_type<tc>, window_params = [{transform_indices = @transform_0, window_bounds = array<i64: 16, 784>}, {transform_indices = @transform_1, window_bounds = array<i64: 16, 10>}, {pipeline_mode = #tpu.pipeline_mode<synchronous>, transform_indices = @transform_2, window_bounds = array<i64: 784, 512>}, {pipeline_mode = #tpu.pipeline_mode<synchronous>, transform_indices = @transform_3, window_bounds = array<i64: 1, 512>}, {pipeline_mode = #tpu.pipeline_mode<synchronous>, transform_indices = @transform_4, window_bounds = array<i64: 512, 256>}, {pipeline_mode = #tpu.pipeline_mode<synchronous>, transform_indices = @transform_5, window_bounds = array<i64: 1, 256>}, {pipeline_mode = #tpu.pipeline_mode<synchronous>, transform_indices = @transform_6, window_bounds = array<i64: 256, 20>}, {pipeline_mode = #tpu.pipeline_mode<synchronous>, transform_indices = @transform_7, window_bounds = array<i64: 1, 20>}, {pipeline_mode = #tpu.pipeline_mode<synchronous>, transform_indices = @transform_8, window_bounds = array<i64: 10, 256>}, {pipeline_mode = #tpu.pipeline_mode<synchronous>, transform_indices = @transform_9, window_bounds = array<i64: 1, 256>}, {pipeline_mode = #tpu.pipeline_mode<synchronous>, transform_indices = @transform_10, window_bounds = array<i64: 256, 512>}, {pipeline_mode = #tpu.pipeline_mode<synchronous>, transform_indices = @transform_11, window_bounds = array<i64: 1, 512>}, {pipeline_mode = #tpu.pipeline_mode<synchronous>, transform_indices = @transform_12, window_bounds = array<i64: 512, 784>}, {pipeline_mode = #tpu.pipeline_mode<synchronous>, transform_indices = @transform_13, window_bounds = array<i64: 1, 784>}, {transform_indices = @transform_14, window_bounds = array<i64: 16, 784>}, {transform_indices = @transform_15, window_bounds = array<i64: 16, 20>}]} {
    %c0 = arith.constant 0 : index
    %c0_0 = arith.constant 0 : index
    %0 = vector.load %arg1[%c0, %c0_0] : memref<16x784xf32, #tpu.memory_space<vmem>>, vector<16x784xf32>
    %1 = arith.truncf %0 : vector<16x784xf32> to vector<16x784xbf16>
    %c0_1 = arith.constant 0 : index
    %c0_2 = arith.constant 0 : index
    %2 = vector.load %arg3[%c0_1, %c0_2] : memref<784x512xbf16, #tpu.memory_space<vmem>>, vector<784x512xbf16>
    %cst = arith.constant dense<0.000000e+00> : vector<16x512xf32>
    %3 = tpu.matmul %1, %2, %cst {dimension_numbers = #tpu.dot_dimension_numbers<[1], [0], [0], [1], [0, 0, 1, 1], [], []>} : vector<16x784xbf16>, vector<784x512xbf16>, vector<16x512xf32> -> vector<16x512xf32>
    %c0_3 = arith.constant 0 : index
    %c0_4 = arith.constant 0 : index
    %4 = vector.load %arg4[%c0_3, %c0_4] : memref<1x512xf32, #tpu.memory_space<vmem>>, vector<1x512xf32>
    %5 = vector.broadcast %4 : vector<1x512xf32> to vector<16x512xf32>
    %6 = arith.addf %3, %5 : vector<16x512xf32>
    %cst_5 = arith.constant 0.000000e+00 : f32
    %7 = vector.broadcast %cst_5 : f32 to vector<16x512xf32>
    %8 = arith.maximumf %6, %7 : vector<16x512xf32>
    %9 = arith.truncf %8 : vector<16x512xf32> to vector<16x512xbf16>
    %c0_6 = arith.constant 0 : index
    %c0_7 = arith.constant 0 : index
    %10 = vector.load %arg5[%c0_6, %c0_7] : memref<512x256xbf16, #tpu.memory_space<vmem>>, vector<512x256xbf16>
    %cst_8 = arith.constant dense<0.000000e+00> : vector<16x256xf32>
    %11 = tpu.matmul %9, %10, %cst_8 {dimension_numbers = #tpu.dot_dimension_numbers<[1], [0], [0], [1], [0, 0, 1, 1], [], []>} : vector<16x512xbf16>, vector<512x256xbf16>, vector<16x256xf32> -> vector<16x256xf32>
    %c0_9 = arith.constant 0 : index
    %c0_10 = arith.constant 0 : index
    %12 = vector.load %arg6[%c0_9, %c0_10] : memref<1x256xf32, #tpu.memory_space<vmem>>, vector<1x256xf32>
    %13 = vector.broadcast %12 : vector<1x256xf32> to vector<16x256xf32>
    %14 = arith.addf %11, %13 : vector<16x256xf32>
    %cst_11 = arith.constant 0.000000e+00 : f32
    %15 = vector.broadcast %cst_11 : f32 to vector<16x256xf32>
    %16 = arith.maximumf %14, %15 : vector<16x256xf32>
    %17 = arith.truncf %16 : vector<16x256xf32> to vector<16x256xbf16>
    %c0_12 = arith.constant 0 : index
    %c0_13 = arith.constant 0 : index
    %18 = vector.load %arg7[%c0_12, %c0_13] : memref<256x20xbf16, #tpu.memory_space<vmem>>, vector<256x20xbf16>
    %cst_14 = arith.constant dense<0.000000e+00> : vector<16x20xf32>
    %19 = tpu.matmul %17, %18, %cst_14 {dimension_numbers = #tpu.dot_dimension_numbers<[1], [0], [0], [1], [0, 0, 1, 1], [], []>} : vector<16x256xbf16>, vector<256x20xbf16>, vector<16x20xf32> -> vector<16x20xf32>
    %c0_15 = arith.constant 0 : index
    %c0_16 = arith.constant 0 : index
    %20 = vector.load %arg8[%c0_15, %c0_16] : memref<1x20xf32, #tpu.memory_space<vmem>>, vector<1x20xf32>
    %21 = vector.broadcast %20 : vector<1x20xf32> to vector<16x20xf32>
    %22 = arith.addf %19, %21 : vector<16x20xf32>
    %23 = vector.extract_strided_slice %22 {offsets = [0, 0], sizes = [16, 10], strides = [1, 1]} : vector<16x20xf32> to vector<16x10xf32>
    %24 = vector.extract_strided_slice %22 {offsets = [0, 10], sizes = [16, 10], strides = [1, 1]} : vector<16x20xf32> to vector<16x10xf32>
    %c0_17 = arith.constant 0 : index
    %c0_18 = arith.constant 0 : index
    %25 = vector.load %arg2[%c0_17, %c0_18] : memref<16x10xf32, #tpu.memory_space<vmem>>, vector<16x10xf32>
    %cst_19 = arith.constant 5.000000e-01 : f32
    %26 = vector.broadcast %cst_19 : f32 to vector<16x10xf32>
    %27 = arith.mulf %26, %24 : vector<16x10xf32>
    %28 = math.exp %27 : vector<16x10xf32>
    %29 = arith.mulf %25, %28 : vector<16x10xf32>
    %30 = arith.addf %23, %29 : vector<16x10xf32>
    %31 = arith.truncf %30 : vector<16x10xf32> to vector<16x10xbf16>
    %c0_20 = arith.constant 0 : index
    %c0_21 = arith.constant 0 : index
    %32 = vector.load %arg9[%c0_20, %c0_21] : memref<10x256xbf16, #tpu.memory_space<vmem>>, vector<10x256xbf16>
    %cst_22 = arith.constant dense<0.000000e+00> : vector<16x256xf32>
    %33 = tpu.matmul %31, %32, %cst_22 {dimension_numbers = #tpu.dot_dimension_numbers<[1], [0], [0], [1], [0, 0, 1, 1], [], []>} : vector<16x10xbf16>, vector<10x256xbf16>, vector<16x256xf32> -> vector<16x256xf32>
    %c0_23 = arith.constant 0 : index
    %c0_24 = arith.constant 0 : index
    %34 = vector.load %arg10[%c0_23, %c0_24] : memref<1x256xf32, #tpu.memory_space<vmem>>, vector<1x256xf32>
    %35 = vector.broadcast %34 : vector<1x256xf32> to vector<16x256xf32>
    %36 = arith.addf %33, %35 : vector<16x256xf32>
    %cst_25 = arith.constant 0.000000e+00 : f32
    %37 = vector.broadcast %cst_25 : f32 to vector<16x256xf32>
    %38 = arith.maximumf %36, %37 : vector<16x256xf32>
    %39 = arith.truncf %38 : vector<16x256xf32> to vector<16x256xbf16>
    %c0_26 = arith.constant 0 : index
    %c0_27 = arith.constant 0 : index
    %40 = vector.load %arg11[%c0_26, %c0_27] : memref<256x512xbf16, #tpu.memory_space<vmem>>, vector<256x512xbf16>
    %cst_28 = arith.constant dense<0.000000e+00> : vector<16x512xf32>
    %41 = tpu.matmul %39, %40, %cst_28 {dimension_numbers = #tpu.dot_dimension_numbers<[1], [0], [0], [1], [0, 0, 1, 1], [], []>} : vector<16x256xbf16>, vector<256x512xbf16>, vector<16x512xf32> -> vector<16x512xf32>
    %c0_29 = arith.constant 0 : index
    %c0_30 = arith.constant 0 : index
    %42 = vector.load %arg12[%c0_29, %c0_30] : memref<1x512xf32, #tpu.memory_space<vmem>>, vector<1x512xf32>
    %43 = vector.broadcast %42 : vector<1x512xf32> to vector<16x512xf32>
    %44 = arith.addf %41, %43 : vector<16x512xf32>
    %cst_31 = arith.constant 0.000000e+00 : f32
    %45 = vector.broadcast %cst_31 : f32 to vector<16x512xf32>
    %46 = arith.maximumf %44, %45 : vector<16x512xf32>
    %47 = arith.truncf %46 : vector<16x512xf32> to vector<16x512xbf16>
    %c0_32 = arith.constant 0 : index
    %c0_33 = arith.constant 0 : index
    %48 = vector.load %arg13[%c0_32, %c0_33] : memref<512x784xbf16, #tpu.memory_space<vmem>>, vector<512x784xbf16>
    %cst_34 = arith.constant dense<0.000000e+00> : vector<16x784xf32>
    %49 = tpu.matmul %47, %48, %cst_34 {dimension_numbers = #tpu.dot_dimension_numbers<[1], [0], [0], [1], [0, 0, 1, 1], [], []>} : vector<16x512xbf16>, vector<512x784xbf16>, vector<16x784xf32> -> vector<16x784xf32>
    %c0_35 = arith.constant 0 : index
    %c0_36 = arith.constant 0 : index
    %50 = vector.load %arg14[%c0_35, %c0_36] : memref<1x784xf32, #tpu.memory_space<vmem>>, vector<1x784xf32>
    %51 = vector.broadcast %50 : vector<1x784xf32> to vector<16x784xf32>
    %52 = arith.addf %49, %51 : vector<16x784xf32>
    %cst_37 = arith.constant 5.000000e-01 : f32
    %53 = vector.broadcast %cst_37 : f32 to vector<16x784xf32>
    %54 = arith.mulf %53, %52 : vector<16x784xf32>
    %55 = math.tanh %54 : vector<16x784xf32>
    %cst_38 = arith.constant 1.000000e+00 : f32
    %56 = vector.broadcast %cst_38 : f32 to vector<16x784xf32>
    %57 = arith.addf %55, %56 : vector<16x784xf32>
    %cst_39 = arith.constant 5.000000e-01 : f32
    %58 = vector.broadcast %cst_39 : f32 to vector<16x784xf32>
    %59 = arith.mulf %58, %57 : vector<16x784xf32>
    %60 = arith.truncf %59 : vector<16x784xf32> to vector<16x784xbf16>
    %c0_40 = arith.constant 0 : index
    %c0_41 = arith.constant 0 : index
    %61 = vector.load %arg15[%c0_40, %c0_41] : memref<16x784xbf16, #tpu.memory_space<vmem>>, vector<16x784xbf16>
    tpu.vector_store %arg15[%c0_40, %c0_41], %60 {strides = array<i32>} : memref<16x784xbf16, #tpu.memory_space<vmem>>, vector<16x784xbf16>,
    %c0_42 = arith.constant 0 : index
    %c0_43 = arith.constant 0 : index
    %62 = vector.load %arg16[%c0_42, %c0_43] : memref<16x20xf32, #tpu.memory_space<vmem>>, vector<16x20xf32>
    tpu.vector_store %arg16[%c0_42, %c0_43], %22 {strides = array<i32>} : memref<16x20xf32, #tpu.memory_space<vmem>>, vector<16x20xf32>,
    return
  }
  func.func @transform_0(%arg0: i32) -> (i32, i32) {
    %c0_i32 = arith.constant 0 : i32
    %c0_i32_0 = arith.constant 0 : i32
    return %arg0, %c0_i32 : i32, i32
  }
  func.func @transform_1(%arg0: i32) -> (i32, i32) {
    %c0_i32 = arith.constant 0 : i32
    %c0_i32_0 = arith.constant 0 : i32
    return %arg0, %c0_i32 : i32, i32
  }
  func.func @transform_2(%arg0: i32) -> (i32, i32) {
    %c0_i32 = arith.constant 0 : i32
    %c0_i32_0 = arith.constant 0 : i32
    %c0_i32_1 = arith.constant 0 : i32
    return %c0_i32, %c0_i32_0 : i32, i32
  }
  func.func @transform_3(%arg0: i32) -> (i32, i32) {
    %c0_i32 = arith.constant 0 : i32
    %c0_i32_0 = arith.constant 0 : i32
    %c0_i32_1 = arith.constant 0 : i32
    return %c0_i32, %c0_i32_0 : i32, i32
  }
  func.func @transform_4(%arg0: i32) -> (i32, i32) {
    %c0_i32 = arith.constant 0 : i32
    %c0_i32_0 = arith.constant 0 : i32
    %c0_i32_1 = arith.constant 0 : i32
    return %c0_i32, %c0_i32_0 : i32, i32
  }
  func.func @transform_5(%arg0: i32) -> (i32, i32) {
    %c0_i32 = arith.constant 0 : i32
    %c0_i32_0 = arith.constant 0 : i32
    %c0_i32_1 = arith.constant 0 : i32
    return %c0_i32, %c0_i32_0 : i32, i32
  }
  func.func @transform_6(%arg0: i32) -> (i32, i32) {
    %c0_i32 = arith.constant 0 : i32
    %c0_i32_0 = arith.constant 0 : i32
    %c0_i32_1 = arith.constant 0 : i32
    return %c0_i32, %c0_i32_0 : i32, i32
  }
  func.func @transform_7(%arg0: i32) -> (i32, i32) {
    %c0_i32 = arith.constant 0 : i32
    %c0_i32_0 = arith.constant 0 : i32
    %c0_i32_1 = arith.constant 0 : i32
    return %c0_i32, %c0_i32_0 : i32, i32
  }
  func.func @transform_8(%arg0: i32) -> (i32, i32) {
    %c0_i32 = arith.constant 0 : i32
    %c0_i32_0 = arith.constant 0 : i32
    %c0_i32_1 = arith.constant 0 : i32
    return %c0_i32, %c0_i32_0 : i32, i32
  }
  func.func @transform_9(%arg0: i32) -> (i32, i32) {
    %c0_i32 = arith.constant 0 : i32
    %c0_i32_0 = arith.constant 0 : i32
    %c0_i32_1 = arith.constant 0 : i32
    return %c0_i32, %c0_i32_0 : i32, i32
  }
  func.func @transform_10(%arg0: i32) -> (i32, i32) {
    %c0_i32 = arith.constant 0 : i32
    %c0_i32_0 = arith.constant 0 : i32
    %c0_i32_1 = arith.constant 0 : i32
    return %c0_i32, %c0_i32_0 : i32, i32
  }
  func.func @transform_11(%arg0: i32) -> (i32, i32) {
    %c0_i32 = arith.constant 0 : i32
    %c0_i32_0 = arith.constant 0 : i32
    %c0_i32_1 = arith.constant 0 : i32
    return %c0_i32, %c0_i32_0 : i32, i32
  }
  func.func @transform_12(%arg0: i32) -> (i32, i32) {
    %c0_i32 = arith.constant 0 : i32
    %c0_i32_0 = arith.constant 0 : i32
    %c0_i32_1 = arith.constant 0 : i32
    return %c0_i32, %c0_i32_0 : i32, i32
  }
  func.func @transform_13(%arg0: i32) -> (i32, i32) {
    %c0_i32 = arith.constant 0 : i32
    %c0_i32_0 = arith.constant 0 : i32
    %c0_i32_1 = arith.constant 0 : i32
    return %c0_i32, %c0_i32_0 : i32, i32
  }
  func.func @transform_14(%arg0: i32) -> (i32, i32) {
    %c0_i32 = arith.constant 0 : i32
    %c0_i32_0 = arith.constant 0 : i32
    return %arg0, %c0_i32 : i32, i32
  }
  func.func @transform_15(%arg0: i32) -> (i32, i32) {
    %c0_i32 = arith.constant 0 : i32
    %c0_i32_0 = arith.constant 0 : i32
    return %arg0, %c0_i32 : i32, i32
  }
}

module attributes {stable_mosaic.version = 11 : i64} {
  func.func @_vae_kernel(%arg0: i32, %arg1: memref<16x784xf32, #tpu.memory_space<vmem>>, %arg2: memref<16x10xf32, #tpu.memory_space<vmem>>, %arg3: memref<784x512xbf16, #tpu.memory_space<vmem>>, %arg4: memref<1x512xf32, #tpu.memory_space<vmem>>, %arg5: memref<512x256xbf16, #tpu.memory_space<vmem>>, %arg6: memref<1x256xf32, #tpu.memory_space<vmem>>, %arg7: memref<256x20xbf16, #tpu.memory_space<vmem>>, %arg8: memref<1x20xf32, #tpu.memory_space<vmem>>, %arg9: memref<10x256xbf16, #tpu.memory_space<vmem>>, %arg10: memref<1x256xf32, #tpu.memory_space<vmem>>, %arg11: memref<256x512xbf16, #tpu.memory_space<vmem>>, %arg12: memref<1x512xf32, #tpu.memory_space<vmem>>, %arg13: memref<512x784xbf16, #tpu.memory_space<vmem>>, %arg14: memref<1x784xf32, #tpu.memory_space<vmem>>, %arg15: memref<16x784xbf16, #tpu.memory_space<vmem>>, %arg16: memref<16x20xf32, #tpu.memory_space<vmem>>) attributes {dimension_semantics = [#tpu.dimension_semantics<parallel>], iteration_bounds = array<i64: 1>, scalar_prefetch = 0 : i64, scratch_operands = 0 : i64, tpu.core_type = #tpu.core_type<tc>, window_params = [{transform_indices = @transform_0, window_bounds = array<i64: 16, 784>}, {transform_indices = @transform_1, window_bounds = array<i64: 16, 10>}, {pipeline_mode = #tpu.pipeline_mode<synchronous>, transform_indices = @transform_2, window_bounds = array<i64: 784, 512>}, {pipeline_mode = #tpu.pipeline_mode<synchronous>, transform_indices = @transform_3, window_bounds = array<i64: 1, 512>}, {pipeline_mode = #tpu.pipeline_mode<synchronous>, transform_indices = @transform_4, window_bounds = array<i64: 512, 256>}, {pipeline_mode = #tpu.pipeline_mode<synchronous>, transform_indices = @transform_5, window_bounds = array<i64: 1, 256>}, {pipeline_mode = #tpu.pipeline_mode<synchronous>, transform_indices = @transform_6, window_bounds = array<i64: 256, 20>}, {pipeline_mode = #tpu.pipeline_mode<synchronous>, transform_indices = @transform_7, window_bounds = array<i64: 1, 20>}, {pipeline_mode = #tpu.pipeline_mode<synchronous>, transform_indices = @transform_8, window_bounds = array<i64: 10, 256>}, {pipeline_mode = #tpu.pipeline_mode<synchronous>, transform_indices = @transform_9, window_bounds = array<i64: 1, 256>}, {pipeline_mode = #tpu.pipeline_mode<synchronous>, transform_indices = @transform_10, window_bounds = array<i64: 256, 512>}, {pipeline_mode = #tpu.pipeline_mode<synchronous>, transform_indices = @transform_11, window_bounds = array<i64: 1, 512>}, {pipeline_mode = #tpu.pipeline_mode<synchronous>, transform_indices = @transform_12, window_bounds = array<i64: 512, 784>}, {pipeline_mode = #tpu.pipeline_mode<synchronous>, transform_indices = @transform_13, window_bounds = array<i64: 1, 784>}, {transform_indices = @transform_14, window_bounds = array<i64: 16, 784>}, {transform_indices = @transform_15, window_bounds = array<i64: 16, 20>}]} {
    %c0 = arith.constant 0 : index
    %c0_0 = arith.constant 0 : index
    %0 = vector.load %arg1[%c0, %c0_0] : memref<16x784xf32, #tpu.memory_space<vmem>>, vector<16x784xf32>
    %1 = arith.truncf %0 : vector<16x784xf32> to vector<16x784xbf16>
    %c0_1 = arith.constant 0 : index
    %c0_2 = arith.constant 0 : index
    %2 = vector.load %arg3[%c0_1, %c0_2] : memref<784x512xbf16, #tpu.memory_space<vmem>>, vector<784x512xbf16>
    %cst = arith.constant dense<0.000000e+00> : vector<16x512xf32>
    %3 = tpu.matmul %1, %2, %cst {dimension_numbers = #tpu.dot_dimension_numbers<[1], [0], [0], [1], [0, 0, 1, 1], [], []>} : vector<16x784xbf16>, vector<784x512xbf16>, vector<16x512xf32> -> vector<16x512xf32>
    %c0_3 = arith.constant 0 : index
    %c0_4 = arith.constant 0 : index
    %4 = vector.load %arg4[%c0_3, %c0_4] : memref<1x512xf32, #tpu.memory_space<vmem>>, vector<1x512xf32>
    %5 = vector.broadcast %4 : vector<1x512xf32> to vector<16x512xf32>
    %6 = arith.addf %3, %5 : vector<16x512xf32>
    %cst_5 = arith.constant 0.000000e+00 : f32
    %7 = vector.broadcast %cst_5 : f32 to vector<16x512xf32>
    %8 = arith.maximumf %6, %7 : vector<16x512xf32>
    %9 = arith.truncf %8 : vector<16x512xf32> to vector<16x512xbf16>
    %c0_6 = arith.constant 0 : index
    %c0_7 = arith.constant 0 : index
    %10 = vector.load %arg5[%c0_6, %c0_7] : memref<512x256xbf16, #tpu.memory_space<vmem>>, vector<512x256xbf16>
    %cst_8 = arith.constant dense<0.000000e+00> : vector<16x256xf32>
    %11 = tpu.matmul %9, %10, %cst_8 {dimension_numbers = #tpu.dot_dimension_numbers<[1], [0], [0], [1], [0, 0, 1, 1], [], []>} : vector<16x512xbf16>, vector<512x256xbf16>, vector<16x256xf32> -> vector<16x256xf32>
    %c0_9 = arith.constant 0 : index
    %c0_10 = arith.constant 0 : index
    %12 = vector.load %arg6[%c0_9, %c0_10] : memref<1x256xf32, #tpu.memory_space<vmem>>, vector<1x256xf32>
    %13 = vector.broadcast %12 : vector<1x256xf32> to vector<16x256xf32>
    %14 = arith.addf %11, %13 : vector<16x256xf32>
    %cst_11 = arith.constant 0.000000e+00 : f32
    %15 = vector.broadcast %cst_11 : f32 to vector<16x256xf32>
    %16 = arith.maximumf %14, %15 : vector<16x256xf32>
    %17 = arith.truncf %16 : vector<16x256xf32> to vector<16x256xbf16>
    %c0_12 = arith.constant 0 : index
    %c0_13 = arith.constant 0 : index
    %18 = vector.load %arg7[%c0_12, %c0_13] : memref<256x20xbf16, #tpu.memory_space<vmem>>, vector<256x20xbf16>
    %cst_14 = arith.constant dense<0.000000e+00> : vector<16x20xf32>
    %19 = tpu.matmul %17, %18, %cst_14 {dimension_numbers = #tpu.dot_dimension_numbers<[1], [0], [0], [1], [0, 0, 1, 1], [], []>} : vector<16x256xbf16>, vector<256x20xbf16>, vector<16x20xf32> -> vector<16x20xf32>
    %c0_15 = arith.constant 0 : index
    %c0_16 = arith.constant 0 : index
    %20 = vector.load %arg8[%c0_15, %c0_16] : memref<1x20xf32, #tpu.memory_space<vmem>>, vector<1x20xf32>
    %21 = vector.broadcast %20 : vector<1x20xf32> to vector<16x20xf32>
    %22 = arith.addf %19, %21 : vector<16x20xf32>
    %23 = vector.extract_strided_slice %22 {offsets = [0, 0], sizes = [16, 10], strides = [1, 1]} : vector<16x20xf32> to vector<16x10xf32>
    %24 = vector.extract_strided_slice %22 {offsets = [0, 10], sizes = [16, 10], strides = [1, 1]} : vector<16x20xf32> to vector<16x10xf32>
    %c0_17 = arith.constant 0 : index
    %c0_18 = arith.constant 0 : index
    %25 = vector.load %arg2[%c0_17, %c0_18] : memref<16x10xf32, #tpu.memory_space<vmem>>, vector<16x10xf32>
    %cst_19 = arith.constant 5.000000e-01 : f32
    %26 = vector.broadcast %cst_19 : f32 to vector<16x10xf32>
    %27 = arith.mulf %26, %24 : vector<16x10xf32>
    %28 = math.exp %27 : vector<16x10xf32>
    %29 = arith.mulf %25, %28 : vector<16x10xf32>
    %30 = arith.addf %23, %29 : vector<16x10xf32>
    %31 = arith.truncf %30 : vector<16x10xf32> to vector<16x10xbf16>
    %c0_20 = arith.constant 0 : index
    %c0_21 = arith.constant 0 : index
    %32 = vector.load %arg9[%c0_20, %c0_21] : memref<10x256xbf16, #tpu.memory_space<vmem>>, vector<10x256xbf16>
    %cst_22 = arith.constant dense<0.000000e+00> : vector<16x256xf32>
    %33 = tpu.matmul %31, %32, %cst_22 {dimension_numbers = #tpu.dot_dimension_numbers<[1], [0], [0], [1], [0, 0, 1, 1], [], []>} : vector<16x10xbf16>, vector<10x256xbf16>, vector<16x256xf32> -> vector<16x256xf32>
    %c0_23 = arith.constant 0 : index
    %c0_24 = arith.constant 0 : index
    %34 = vector.load %arg10[%c0_23, %c0_24] : memref<1x256xf32, #tpu.memory_space<vmem>>, vector<1x256xf32>
    %35 = vector.broadcast %34 : vector<1x256xf32> to vector<16x256xf32>
    %36 = arith.addf %33, %35 : vector<16x256xf32>
    %cst_25 = arith.constant 0.000000e+00 : f32
    %37 = vector.broadcast %cst_25 : f32 to vector<16x256xf32>
    %38 = arith.maximumf %36, %37 : vector<16x256xf32>
    %39 = arith.truncf %38 : vector<16x256xf32> to vector<16x256xbf16>
    %c0_26 = arith.constant 0 : index
    %c0_27 = arith.constant 0 : index
    %40 = vector.load %arg11[%c0_26, %c0_27] : memref<256x512xbf16, #tpu.memory_space<vmem>>, vector<256x512xbf16>
    %cst_28 = arith.constant dense<0.000000e+00> : vector<16x512xf32>
    %41 = tpu.matmul %39, %40, %cst_28 {dimension_numbers = #tpu.dot_dimension_numbers<[1], [0], [0], [1], [0, 0, 1, 1], [], []>} : vector<16x256xbf16>, vector<256x512xbf16>, vector<16x512xf32> -> vector<16x512xf32>
    %c0_29 = arith.constant 0 : index
    %c0_30 = arith.constant 0 : index
    %42 = vector.load %arg12[%c0_29, %c0_30] : memref<1x512xf32, #tpu.memory_space<vmem>>, vector<1x512xf32>
    %43 = vector.broadcast %42 : vector<1x512xf32> to vector<16x512xf32>
    %44 = arith.addf %41, %43 : vector<16x512xf32>
    %cst_31 = arith.constant 0.000000e+00 : f32
    %45 = vector.broadcast %cst_31 : f32 to vector<16x512xf32>
    %46 = arith.maximumf %44, %45 : vector<16x512xf32>
    %47 = arith.truncf %46 : vector<16x512xf32> to vector<16x512xbf16>
    %c0_32 = arith.constant 0 : index
    %c0_33 = arith.constant 0 : index
    %48 = vector.load %arg13[%c0_32, %c0_33] : memref<512x784xbf16, #tpu.memory_space<vmem>>, vector<512x784xbf16>
    %cst_34 = arith.constant dense<0.000000e+00> : vector<16x784xf32>
    %49 = tpu.matmul %47, %48, %cst_34 {dimension_numbers = #tpu.dot_dimension_numbers<[1], [0], [0], [1], [0, 0, 1, 1], [], []>} : vector<16x512xbf16>, vector<512x784xbf16>, vector<16x784xf32> -> vector<16x784xf32>
    %c0_35 = arith.constant 0 : index
    %c0_36 = arith.constant 0 : index
    %50 = vector.load %arg14[%c0_35, %c0_36] : memref<1x784xf32, #tpu.memory_space<vmem>>, vector<1x784xf32>
    %51 = vector.broadcast %50 : vector<1x784xf32> to vector<16x784xf32>
    %52 = arith.addf %49, %51 : vector<16x784xf32>
    %cst_37 = arith.constant 5.000000e-01 : f32
    %53 = vector.broadcast %cst_37 : f32 to vector<16x784xf32>
    %54 = arith.mulf %53, %52 : vector<16x784xf32>
    %55 = math.tanh %54 : vector<16x784xf32>
    %cst_38 = arith.constant 1.000000e+00 : f32
    %56 = vector.broadcast %cst_38 : f32 to vector<16x784xf32>
    %57 = arith.addf %55, %56 : vector<16x784xf32>
    %cst_39 = arith.constant 5.000000e-01 : f32
    %58 = vector.broadcast %cst_39 : f32 to vector<16x784xf32>
    %59 = arith.mulf %58, %57 : vector<16x784xf32>
    %60 = arith.truncf %59 : vector<16x784xf32> to vector<16x784xbf16>
    %c0_40 = arith.constant 0 : index
    %c0_41 = arith.constant 0 : index
    %61 = vector.load %arg15[%c0_40, %c0_41] : memref<16x784xbf16, #tpu.memory_space<vmem>>, vector<16x784xbf16>
    tpu.vector_store %arg15[%c0_40, %c0_41], %60 {strides = array<i32>} : memref<16x784xbf16, #tpu.memory_space<vmem>>, vector<16x784xbf16>,
    %c0_42 = arith.constant 0 : index
    %c0_43 = arith.constant 0 : index
    %62 = vector.load %arg16[%c0_42, %c0_43] : memref<16x20xf32, #tpu.memory_space<vmem>>, vector<16x20xf32>
    tpu.vector_store %arg16[%c0_42, %c0_43], %22 {strides = array<i32>} : memref<16x20xf32, #tpu.memory_space<vmem>>, vector<16x20xf32>,
    return
  }
  func.func @transform_0(%arg0: i32) -> (i32, i32) {
    %c0_i32 = arith.constant 0 : i32
    %c0_i32_0 = arith.constant 0 : i32
    return %arg0, %c0_i32 : i32, i32
  }
  func.func @transform_1(%arg0: i32) -> (i32, i32) {
    %c0_i32 = arith.constant 0 : i32
    %c0_i32_0 = arith.constant 0 : i32
    return %arg0, %c0_i32 : i32, i32
  }
  func.func @transform_2(%arg0: i32) -> (i32, i32) {
    %c0_i32 = arith.constant 0 : i32
    %c0_i32_0 = arith.constant 0 : i32
    %c0_i32_1 = arith.constant 0 : i32
    return %c0_i32, %c0_i32_0 : i32, i32
  }
  func.func @transform_3(%arg0: i32) -> (i32, i32) {
    %c0_i32 = arith.constant 0 : i32
    %c0_i32_0 = arith.constant 0 : i32
    %c0_i32_1 = arith.constant 0 : i32
    return %c0_i32, %c0_i32_0 : i32, i32
  }
  func.func @transform_4(%arg0: i32) -> (i32, i32) {
    %c0_i32 = arith.constant 0 : i32
    %c0_i32_0 = arith.constant 0 : i32
    %c0_i32_1 = arith.constant 0 : i32
    return %c0_i32, %c0_i32_0 : i32, i32
  }
  func.func @transform_5(%arg0: i32) -> (i32, i32) {
    %c0_i32 = arith.constant 0 : i32
    %c0_i32_0 = arith.constant 0 : i32
    %c0_i32_1 = arith.constant 0 : i32
    return %c0_i32, %c0_i32_0 : i32, i32
  }
  func.func @transform_6(%arg0: i32) -> (i32, i32) {
    %c0_i32 = arith.constant 0 : i32
    %c0_i32_0 = arith.constant 0 : i32
    %c0_i32_1 = arith.constant 0 : i32
    return %c0_i32, %c0_i32_0 : i32, i32
  }
  func.func @transform_7(%arg0: i32) -> (i32, i32) {
    %c0_i32 = arith.constant 0 : i32
    %c0_i32_0 = arith.constant 0 : i32
    %c0_i32_1 = arith.constant 0 : i32
    return %c0_i32, %c0_i32_0 : i32, i32
  }
  func.func @transform_8(%arg0: i32) -> (i32, i32) {
    %c0_i32 = arith.constant 0 : i32
    %c0_i32_0 = arith.constant 0 : i32
    %c0_i32_1 = arith.constant 0 : i32
    return %c0_i32, %c0_i32_0 : i32, i32
  }
  func.func @transform_9(%arg0: i32) -> (i32, i32) {
    %c0_i32 = arith.constant 0 : i32
    %c0_i32_0 = arith.constant 0 : i32
    %c0_i32_1 = arith.constant 0 : i32
    return %c0_i32, %c0_i32_0 : i32, i32
  }
  func.func @transform_10(%arg0: i32) -> (i32, i32) {
    %c0_i32 = arith.constant 0 : i32
    %c0_i32_0 = arith.constant 0 : i32
    %c0_i32_1 = arith.constant 0 : i32
    return %c0_i32, %c0_i32_0 : i32, i32
  }
  func.func @transform_11(%arg0: i32) -> (i32, i32) {
    %c0_i32 = arith.constant 0 : i32
    %c0_i32_0 = arith.constant 0 : i32
    %c0_i32_1 = arith.constant 0 : i32
    return %c0_i32, %c0_i32_0 : i32, i32
  }
  func.func @transform_12(%arg0: i32) -> (i32, i32) {
    %c0_i32 = arith.constant 0 : i32
    %c0_i32_0 = arith.constant 0 : i32
    %c0_i32_1 = arith.constant 0 : i32
    return %c0_i32, %c0_i32_0 : i32, i32
  }
  func.func @transform_13(%arg0: i32) -> (i32, i32) {
    %c0_i32 = arith.constant 0 : i32
    %c0_i32_0 = arith.constant 0 : i32
    %c0_i32_1 = arith.constant 0 : i32
    return %c0_i32, %c0_i32_0 : i32, i32
  }
  func.func @transform_14(%arg0: i32) -> (i32, i32) {
    %c0_i32 = arith.constant 0 : i32
    %c0_i32_0 = arith.constant 0 : i32
    return %arg0, %c0_i32 : i32, i32
  }
  func.func @transform_15(%arg0: i32) -> (i32, i32) {
    %c0_i32 = arith.constant 0 : i32
    %c0_i32_0 = arith.constant 0 : i32
    return %arg0, %c0_i32 : i32, i32
  }
}

</mosaic_0001>

<llo_original>
// kernel: tpu_custom_call.1
$region0: #{tpu_custom_call.1}
  #allocation0 [shape = 'u32[]', space=smem, size = 0x4, offset = 0x4, fixed_abs, tag = 'smem constant byte address 0x4 - core index']
  #allocation1 [shape = 'u32[72,128]{1,0:T(1,128)}', space=vmem, size = 0x9000, scoped, tag = 'internal scratch']
  %s0 = inlined_call_operand.vmem [shape: f32[2,784], index: 0, kind: input, shape index: {}]
  %s1 = inlined_call_operand.vmem [shape: f32[2,10], index: 1, kind: input, shape index: {}]
  %s2 = inlined_call_operand.vmem [shape: bf16[784,512], index: 2, kind: input, shape index: {}]
  %s3 = inlined_call_operand.vmem [shape: f32[1,512], index: 3, kind: input, shape index: {}]
  %s4 = inlined_call_operand.vmem [shape: bf16[512,256], index: 4, kind: input, shape index: {}]
  %s5 = inlined_call_operand.vmem [shape: f32[1,256], index: 5, kind: input, shape index: {}]
  %s6 = inlined_call_operand.vmem [shape: bf16[256,20], index: 6, kind: input, shape index: {}]
  %s7 = inlined_call_operand.vmem [shape: f32[1,20], index: 7, kind: input, shape index: {}]
  %s8 = inlined_call_operand.vmem [shape: bf16[10,256], index: 8, kind: input, shape index: {}]
  %s9 = inlined_call_operand.vmem [shape: f32[1,256], index: 9, kind: input, shape index: {}]
  %s10 = inlined_call_operand.vmem [shape: bf16[256,512], index: 10, kind: input, shape index: {}]
  %s11 = inlined_call_operand.vmem [shape: f32[1,512], index: 11, kind: input, shape index: {}]
  %s12 = inlined_call_operand.vmem [shape: bf16[512,784], index: 12, kind: input, shape index: {}]
  %s13 = inlined_call_operand.vmem [shape: f32[1,784], index: 13, kind: input, shape index: {}]
  %s14 = inlined_call_operand.hbm [shape: bf16[2,784], index: 14, kind: output, shape index: {0}]
  %s15 = inlined_call_operand.hbm [shape: f32[2,20], index: 15, kind: output, shape index: {1}]
  %16 = xla_tuple %s14, %s15
  %s17 = sld [smem:[#allocation0]]
  $region74: #{tpu_custom_call.1} parent=0
    _
  %s19 = ssub.s32 1, %s17
  %s20 = scalar_select 0, %s19, %s17
  $region1: #{tpu_custom_call.1} parent=0
    #allocation2 [shape = 'u8[28672]{0}', space=vmem, size = 0x7000, scoped, tag = 'output window, operand 0, single buffered']
    #allocation3 [shape = 's32[1]{0}', space=sflag, size = 0x4, scoped, tag = 'scoped memory for tpu_custom_call.1']
    #allocation4 [shape = 'u8[8192]{0}', space=vmem, size = 0x2000, scoped, tag = 'output window, operand 1, single buffered']
    #allocation5 [shape = 's32[1]{0}', space=sflag, size = 0x4, scoped, tag = 'scoped memory for tpu_custom_call.1']
    %21 = vsyncpa [#allocation3], 0
    %22 = vsyncpa [#allocation5], 0
    // Predicated region
    $region2: #{tpu_custom_call.1} parent=1 // pred_check
      _
    $region3: #{tpu_custom_call.1} parent=1 // pred_check_branch
      %24 = sbr.rel (0) target = $region5
    $region4: #{tpu_custom_call.1} parent=1 // pred_region
      _
    $region5: #{tpu_custom_call.1} parent=1 // pred_fallthru
      _
    // Predicated region
    $region6: #{tpu_custom_call.1} parent=1 // pred_check
      _
    $region7: #{tpu_custom_call.1} parent=1 // pred_check_branch
      %26 = sbr.rel (0) target = $region9
    $region8: #{tpu_custom_call.1} parent=1 // pred_region
      _
    $region9: #{tpu_custom_call.1} parent=1 // pred_fallthru
      _
    // Predicated region
    $region10: #{tpu_custom_call.1} parent=1 // pred_check
      _
    $region11: #{tpu_custom_call.1} parent=1 // pred_check_branch
      %28 = sbr.rel (0) target = $region13
    $region12: #{tpu_custom_call.1} parent=1 // pred_region
      _
    $region13: #{tpu_custom_call.1} parent=1 // pred_fallthru
      _
    // Predicated region
    $region14: #{tpu_custom_call.1} parent=1 // pred_check
      _
    $region15: #{tpu_custom_call.1} parent=1 // pred_check_branch
      %30 = sbr.rel (0) target = $region17
    $region16: #{tpu_custom_call.1} parent=1 // pred_region
      _
    $region17: #{tpu_custom_call.1} parent=1 // pred_fallthru
      _
    // Predicated region
    $region18: #{tpu_custom_call.1} parent=1 // pred_check
      _
    $region19: #{tpu_custom_call.1} parent=1 // pred_check_branch
      %32 = sbr.rel (0) target = $region21
    $region20: #{tpu_custom_call.1} parent=1 // pred_region
      _
    $region21: #{tpu_custom_call.1} parent=1 // pred_fallthru
      _
    // Predicated region
    $region22: #{tpu_custom_call.1} parent=1 // pred_check
      _
    $region23: #{tpu_custom_call.1} parent=1 // pred_check_branch
      %34 = sbr.rel (0) target = $region25
    $region24: #{tpu_custom_call.1} parent=1 // pred_region
      _
    $region25: #{tpu_custom_call.1} parent=1 // pred_fallthru
      _
    // Predicated region
    $region26: #{tpu_custom_call.1} parent=1 // pred_check
      _
    $region27: #{tpu_custom_call.1} parent=1 // pred_check_branch
      %36 = sbr.rel (0) target = $region29
    $region28: #{tpu_custom_call.1} parent=1 // pred_region
      _
    $region29: #{tpu_custom_call.1} parent=1 // pred_fallthru
      _
    // Predicated region
    $region30: #{tpu_custom_call.1} parent=1 // pred_check
      _
    $region31: #{tpu_custom_call.1} parent=1 // pred_check_branch
      %38 = sbr.rel (0) target = $region33
    $region32: #{tpu_custom_call.1} parent=1 // pred_region
      _
    $region33: #{tpu_custom_call.1} parent=1 // pred_fallthru
      _
    // Predicated region
    $region34: #{tpu_custom_call.1} parent=1 // pred_check
      _
    $region35: #{tpu_custom_call.1} parent=1 // pred_check_branch
      %40 = sbr.rel (0) target = $region37
    $region36: #{tpu_custom_call.1} parent=1 // pred_region
      _
    $region37: #{tpu_custom_call.1} parent=1 // pred_fallthru
      _
    // Predicated region
    $region38: #{tpu_custom_call.1} parent=1 // pred_check
      _
    $region39: #{tpu_custom_call.1} parent=1 // pred_check_branch
      %42 = sbr.rel (0) target = $region41
    $region40: #{tpu_custom_call.1} parent=1 // pred_region
      _
    $region41: #{tpu_custom_call.1} parent=1 // pred_fallthru
      _
    // Predicated region
    $region42: #{tpu_custom_call.1} parent=1 // pred_check
      _
    $region43: #{tpu_custom_call.1} parent=1 // pred_check_branch
      %44 = sbr.rel (0) target = $region45
    $region44: #{tpu_custom_call.1} parent=1 // pred_region
      _
    $region45: #{tpu_custom_call.1} parent=1 // pred_fallthru
      _
    // Predicated region
    $region46: #{tpu_custom_call.1} parent=1 // pred_check
      _
    $region47: #{tpu_custom_call.1} parent=1 // pred_check_branch
      %46 = sbr.rel (0) target = $region49
    $region48: #{tpu_custom_call.1} parent=1 // pred_region
      _
    $region49: #{tpu_custom_call.1} parent=1 // pred_fallthru
      _
    // Predicated region
    $region50: #{tpu_custom_call.1} parent=1 // pred_check
      _
    $region51: #{tpu_custom_call.1} parent=1 // pred_check_branch
      %48 = sbr.rel (0) target = $region53
    $region52: #{tpu_custom_call.1} parent=1 // pred_region
      _
    $region53: #{tpu_custom_call.1} parent=1 // pred_fallthru
      _
    // Predicated region
    $region54: #{tpu_custom_call.1} parent=1 // pred_check
      _
    $region55: #{tpu_custom_call.1} parent=1 // pred_check_branch
      %50 = sbr.rel (0) target = $region57
    $region56: #{tpu_custom_call.1} parent=1 // pred_region
      _
    $region57: #{tpu_custom_call.1} parent=1 // pred_fallthru
      _
    %v52 = vld [vmem:[%s0] sm:$0xff]
    %v53 = vld [vmem:[%s0 + $0x8] sm:$0x3f]
    %v54 = vld [vmem:[%s0 + $0xe] sm:$0xff]
    %v55 = vld [vmem:[%s0 + $0x16] sm:$0x3f]
    %v56 = vld [vmem:[%s0 + $0x1c] sm:$0xff]
    %v57 = vld [vmem:[%s0 + $0x24] sm:$0x3f]
    %v58 = vld [vmem:[%s0 + $0x2a] sm:$0xff]
    %v59 = vld [vmem:[%s0 + $0x32] sm:$0x3f]
    %v60 = vld [vmem:[%s0 + $0x38] sm:$0xff]
    %v61 = vld [vmem:[%s0 + $0x40] sm:$0x3f]
    %v62 = vld [vmem:[%s0 + $0x46] sm:$0xff]
    %v63 = vld [vmem:[%s0 + $0x4e] sm:$0x3f]
    %v64 = vld [vmem:[%s0 + $0x54] sm:$0xff]
    %v65 = vld [vmem:[%s0 + $0x5c] sm:$0x3f]
    %v66 = vld [vmem:[%s0 + $0x62] sm:$0xff]
    %v67 = vld [vmem:[%s0 + $0x6a] sm:$0x3f]
    %84 = vst [vmem:[#allocation1] ss:$4 sm:$0xff] %v52
    %s85 = scalar_lea.vmem [#allocation1], 1
    %86 = vst [vmem:[%s85] ss:$4 sm:$0xff] %v54
    %s87 = scalar_lea.vmem [#allocation1], 2
    %88 = vst [vmem:[%s87] ss:$4 sm:$0xff] %v56
    %s89 = scalar_lea.vmem [#allocation1], 3
    %90 = vst [vmem:[%s89] ss:$4 sm:$0xff] %v58
    %s91 = scalar_lea.vmem [#allocation1], 32
    %92 = vst [vmem:[%s91] ss:$4 sm:$0xff] %v53
    %s93 = scalar_lea.vmem [#allocation1], 33
    %94 = vst [vmem:[%s93] ss:$4 sm:$0xff] %v55
    %s95 = scalar_lea.vmem [#allocation1], 34
    %96 = vst [vmem:[%s95] ss:$4 sm:$0xff] %v57
    %s97 = scalar_lea.vmem [#allocation1], 35
    %98 = vst [vmem:[%s97] ss:$4 sm:$0xff] %v59
    %v99 = vld.sshfl [vmem:[#allocation1] sm:$0xff pattern:$0x73625140]
    %v100 = vld.sshfl [vmem:[#allocation1 + $0x8] sm:$0xff pattern:$0x73625140]
    %v101 = vld.sshfl [vmem:[#allocation1 + $0x10] sm:$0xff pattern:$0x73625140]
    %v102 = vld.sshfl [vmem:[#allocation1 + $0x18] sm:$0xff pattern:$0x73625140]
    %v103 = vld.sshfl [vmem:[#allocation1 + $0x20] sm:$0xff pattern:$0x73625140]
    %v104 = vld.sshfl [vmem:[#allocation1 + $0x28] sm:$0xff pattern:$0x73625140]
    %v105 = vld.sshfl [vmem:[#allocation1 + $0x30] sm:$0xff pattern:$0x73625140]
    %106 = vst [vmem:[#allocation1] ss:$4 sm:$0xff] %v60
    %107 = vst [vmem:[%s85] ss:$4 sm:$0xff] %v62
    %108 = vst [vmem:[%s87] ss:$4 sm:$0xff] %v64
    %109 = vst [vmem:[%s89] ss:$4 sm:$0xff] %v66
    %110 = vst [vmem:[%s91] ss:$4 sm:$0xff] %v61
    %111 = vst [vmem:[%s93] ss:$4 sm:$0xff] %v63
    %112 = vst [vmem:[%s95] ss:$4 sm:$0xff] %v65
    %113 = vst [vmem:[%s97] ss:$4 sm:$0xff] %v67
    %v114 = vld.sshfl [vmem:[#allocation1] sm:$0xff pattern:$0x73625140]
    %v115 = vld.sshfl [vmem:[#allocation1 + $0x8] sm:$0xff pattern:$0x73625140]
    %v116 = vld.sshfl [vmem:[#allocation1 + $0x10] sm:$0xff pattern:$0x73625140]
    %v117 = vld.sshfl [vmem:[#allocation1 + $0x18] sm:$0xff pattern:$0x73625140]
    %v118 = vld.sshfl [vmem:[#allocation1 + $0x20] sm:$0xff pattern:$0x73625140]
    %v119 = vld.sshfl [vmem:[#allocation1 + $0x28] sm:$0xff pattern:$0x73625140]
    %v120 = vld.sshfl [vmem:[#allocation1 + $0x30] sm:$0xff pattern:$0x73625140]
    %v135 = vpack.c.bf16 %v114, %v99
    %v136 = vpack.c.bf16 %v115, %v100
    %v137 = vpack.c.bf16 %v116, %v101
    %v138 = vpack.c.bf16 %v117, %v102
    %v139 = vpack.c.bf16 %v118, %v103
    %v140 = vpack.c.bf16 %v119, %v104
    %v141 = vpack.c.bf16 %v120, %v105
    %v142 = vld [vmem:[%s2] sm:$0xff]
    %v143 = vld [vmem:[%s2 + $0x8] sm:$0xff]
    %v144 = vld [vmem:[%s2 + $0x10] sm:$0xff]
    %v145 = vld [vmem:[%s2 + $0x18] sm:$0xff]
    %v146 = vld [vmem:[%s2 + $0x20] sm:$0xff]
    %v147 = vld [vmem:[%s2 + $0x28] sm:$0xff]
    %v148 = vld [vmem:[%s2 + $0x30] sm:$0xff]
    %v149 = vld [vmem:[%s2 + $0x38] sm:$0xff]
    %v150 = vld [vmem:[%s2 + $0x40] sm:$0xff]
    %v151 = vld [vmem:[%s2 + $0x48] sm:$0xff]
    %v152 = vld [vmem:[%s2 + $0x50] sm:$0xff]
    %v153 = vld [vmem:[%s2 + $0x58] sm:$0xff]
    %v154 = vld [vmem:[%s2 + $0x60] sm:$0xff]
    %v155 = vld [vmem:[%s2 + $0x68] sm:$0xff]
    %v156 = vld [vmem:[%s2 + $0x70] sm:$0xff]
    %v157 = vld [vmem:[%s2 + $0x78] sm:$0xff]
    %v158 = vld [vmem:[%s2 + $0x80] sm:$0xff]
    %v159 = vld [vmem:[%s2 + $0x88] sm:$0xff]
    %v160 = vld [vmem:[%s2 + $0x90] sm:$0xff]
    %v161 = vld [vmem:[%s2 + $0x98] sm:$0xff]
    %v162 = vld [vmem:[%s2 + $0xa0] sm:$0xff]
    %v163 = vld [vmem:[%s2 + $0xa8] sm:$0xff]
    %v164 = vld [vmem:[%s2 + $0xb0] sm:$0xff]
    %v165 = vld [vmem:[%s2 + $0xb8] sm:$0xff]
    %v166 = vld [vmem:[%s2 + $0xc0] sm:$0xff]
    %v167 = vld [vmem:[%s2 + $0xc8] sm:$0xff]
    %v168 = vld [vmem:[%s2 + $0xd0] sm:$0xff]
    %v169 = vld [vmem:[%s2 + $0xd8] sm:$0xff]
    %v170 = vld [vmem:[%s2 + $0xe0] sm:$0xff]
    %v171 = vld [vmem:[%s2 + $0xe8] sm:$0xff]
    %v172 = vld [vmem:[%s2 + $0xf0] sm:$0xff]
    %v173 = vld [vmem:[%s2 + $0xf8] sm:$0xff]
    %v174 = vld [vmem:[%s2 + $0x100] sm:$0xff]
    %v175 = vld [vmem:[%s2 + $0x108] sm:$0xff]
    %v176 = vld [vmem:[%s2 + $0x110] sm:$0xff]
    %v177 = vld [vmem:[%s2 + $0x118] sm:$0xff]
    %v178 = vld [vmem:[%s2 + $0x120] sm:$0xff]
    %v179 = vld [vmem:[%s2 + $0x128] sm:$0xff]
    %v180 = vld [vmem:[%s2 + $0x130] sm:$0xff]
    %v181 = vld [vmem:[%s2 + $0x138] sm:$0xff]
    %v182 = vld [vmem:[%s2 + $0x140] sm:$0xff]
    %v183 = vld [vmem:[%s2 + $0x148] sm:$0xff]
    %v184 = vld [vmem:[%s2 + $0x150] sm:$0xff]
    %v185 = vld [vmem:[%s2 + $0x158] sm:$0xff]
    %v186 = vld [vmem:[%s2 + $0x160] sm:$0xff]
    %v187 = vld [vmem:[%s2 + $0x168] sm:$0xff]
    %v188 = vld [vmem:[%s2 + $0x170] sm:$0xff]
    %v189 = vld [vmem:[%s2 + $0x178] sm:$0xff]
    %v190 = vld [vmem:[%s2 + $0x180] sm:$0xff]
    %v191 = vld [vmem:[%s2 + $0x188] sm:$0xff]
    %v192 = vld [vmem:[%s2 + $0x190] sm:$0xff]
    %v193 = vld [vmem:[%s2 + $0x198] sm:$0xff]
    %v194 = vld [vmem:[%s2 + $0x1a0] sm:$0xff]
    %v195 = vld [vmem:[%s2 + $0x1a8] sm:$0xff]
    %v196 = vld [vmem:[%s2 + $0x1b0] sm:$0xff]
    %v197 = vld [vmem:[%s2 + $0x1b8] sm:$0xff]
    %v198 = vld [vmem:[%s2 + $0x1c0] sm:$0xff]
    %v199 = vld [vmem:[%s2 + $0x1c8] sm:$0xff]
    %v200 = vld [vmem:[%s2 + $0x1d0] sm:$0xff]
    %v201 = vld [vmem:[%s2 + $0x1d8] sm:$0xff]
    %v202 = vld [vmem:[%s2 + $0x1e0] sm:$0xff]
    %v203 = vld [vmem:[%s2 + $0x1e8] sm:$0xff]
    %v204 = vld [vmem:[%s2 + $0x1f0] sm:$0xff]
    %v205 = vld [vmem:[%s2 + $0x1f8] sm:$0xff]
    %v206 = vld [vmem:[%s2 + $0x200] sm:$0xff]
    %v207 = vld [vmem:[%s2 + $0x208] sm:$0xff]
    %v208 = vld [vmem:[%s2 + $0x210] sm:$0xff]
    %v209 = vld [vmem:[%s2 + $0x218] sm:$0xff]
    %v210 = vld [vmem:[%s2 + $0x220] sm:$0xff]
    %v211 = vld [vmem:[%s2 + $0x228] sm:$0xff]
    %v212 = vld [vmem:[%s2 + $0x230] sm:$0xff]
    %v213 = vld [vmem:[%s2 + $0x238] sm:$0xff]
    %v214 = vld [vmem:[%s2 + $0x240] sm:$0xff]
    %v215 = vld [vmem:[%s2 + $0x248] sm:$0xff]
    %v216 = vld [vmem:[%s2 + $0x250] sm:$0xff]
    %v217 = vld [vmem:[%s2 + $0x258] sm:$0xff]
    %v218 = vld [vmem:[%s2 + $0x260] sm:$0xff]
    %v219 = vld [vmem:[%s2 + $0x268] sm:$0xff]
    %v220 = vld [vmem:[%s2 + $0x270] sm:$0xff]
    %v221 = vld [vmem:[%s2 + $0x278] sm:$0xff]
    %v222 = vld [vmem:[%s2 + $0x280] sm:$0xff]
    %v223 = vld [vmem:[%s2 + $0x288] sm:$0xff]
    %v224 = vld [vmem:[%s2 + $0x290] sm:$0xff]
    %v225 = vld [vmem:[%s2 + $0x298] sm:$0xff]
    %v226 = vld [vmem:[%s2 + $0x2a0] sm:$0xff]
    %v227 = vld [vmem:[%s2 + $0x2a8] sm:$0xff]
    %v228 = vld [vmem:[%s2 + $0x2b0] sm:$0xff]
    %v229 = vld [vmem:[%s2 + $0x2b8] sm:$0xff]
    %v230 = vld [vmem:[%s2 + $0x2c0] sm:$0xff]
    %v231 = vld [vmem:[%s2 + $0x2c8] sm:$0xff]
    %v232 = vld [vmem:[%s2 + $0x2d0] sm:$0xff]
    %v233 = vld [vmem:[%s2 + $0x2d8] sm:$0xff]
    %v234 = vld [vmem:[%s2 + $0x2e0] sm:$0xff]
    %v235 = vld [vmem:[%s2 + $0x2e8] sm:$0xff]
    %v236 = vld [vmem:[%s2 + $0x2f0] sm:$0xff]
    %v237 = vld [vmem:[%s2 + $0x2f8] sm:$0xff]
    %v238 = vld [vmem:[%s2 + $0x300] sm:$0xff]
    %v239 = vld [vmem:[%s2 + $0x308] sm:$0xff]
    %v240 = vld [vmem:[%s2 + $0x310] sm:$0xff]
    %v241 = vld [vmem:[%s2 + $0x318] sm:$0xff]
    %v242 = vld [vmem:[%s2 + $0x320] sm:$0xff]
    %v243 = vld [vmem:[%s2 + $0x328] sm:$0xff]
    %v244 = vld [vmem:[%s2 + $0x330] sm:$0xff]
    %v245 = vld [vmem:[%s2 + $0x338] sm:$0xff]
    %v246 = vld [vmem:[%s2 + $0x340] sm:$0xff]
    %v247 = vld [vmem:[%s2 + $0x348] sm:$0xff]
    %v248 = vld [vmem:[%s2 + $0x350] sm:$0xff]
    %v249 = vld [vmem:[%s2 + $0x358] sm:$0xff]
    %v250 = vld [vmem:[%s2 + $0x360] sm:$0xff]
    %v251 = vld [vmem:[%s2 + $0x368] sm:$0xff]
    %v252 = vld [vmem:[%s2 + $0x370] sm:$0xff]
    %v253 = vld [vmem:[%s2 + $0x378] sm:$0xff]
    %v254 = vld [vmem:[%s2 + $0x380] sm:$0xff]
    %v255 = vld [vmem:[%s2 + $0x388] sm:$0xff]
    %v256 = vld [vmem:[%s2 + $0x390] sm:$0xff]
    %v257 = vld [vmem:[%s2 + $0x398] sm:$0xff]
    %v258 = vld [vmem:[%s2 + $0x3a0] sm:$0xff]
    %v259 = vld [vmem:[%s2 + $0x3a8] sm:$0xff]
    %v260 = vld [vmem:[%s2 + $0x3b0] sm:$0xff]
    %v261 = vld [vmem:[%s2 + $0x3b8] sm:$0xff]
    %v262 = vld [vmem:[%s2 + $0x3c0] sm:$0xff]
    %v263 = vld [vmem:[%s2 + $0x3c8] sm:$0xff]
    %v264 = vld [vmem:[%s2 + $0x3d0] sm:$0xff]
    %v265 = vld [vmem:[%s2 + $0x3d8] sm:$0xff]
    %v266 = vld [vmem:[%s2 + $0x3e0] sm:$0xff]
    %v267 = vld [vmem:[%s2 + $0x3e8] sm:$0xff]
    %v268 = vld [vmem:[%s2 + $0x3f0] sm:$0xff]
    %v269 = vld [vmem:[%s2 + $0x3f8] sm:$0xff]
    %v270 = vld [vmem:[%s2 + $0x400] sm:$0xff]
    %v271 = vld [vmem:[%s2 + $0x408] sm:$0xff]
    %v272 = vld [vmem:[%s2 + $0x410] sm:$0xff]
    %v273 = vld [vmem:[%s2 + $0x418] sm:$0xff]
    %v274 = vld [vmem:[%s2 + $0x420] sm:$0xff]
    %v275 = vld [vmem:[%s2 + $0x428] sm:$0xff]
    %v276 = vld [vmem:[%s2 + $0x430] sm:$0xff]
    %v277 = vld [vmem:[%s2 + $0x438] sm:$0xff]
    %v278 = vld [vmem:[%s2 + $0x440] sm:$0xff]
    %v279 = vld [vmem:[%s2 + $0x448] sm:$0xff]
    %v280 = vld [vmem:[%s2 + $0x450] sm:$0xff]
    %v281 = vld [vmem:[%s2 + $0x458] sm:$0xff]
    %v282 = vld [vmem:[%s2 + $0x460] sm:$0xff]
    %v283 = vld [vmem:[%s2 + $0x468] sm:$0xff]
    %v284 = vld [vmem:[%s2 + $0x470] sm:$0xff]
    %v285 = vld [vmem:[%s2 + $0x478] sm:$0xff]
    %v286 = vld [vmem:[%s2 + $0x480] sm:$0xff]
    %v287 = vld [vmem:[%s2 + $0x488] sm:$0xff]
    %v288 = vld [vmem:[%s2 + $0x490] sm:$0xff]
    %v289 = vld [vmem:[%s2 + $0x498] sm:$0xff]
    %v290 = vld [vmem:[%s2 + $0x4a0] sm:$0xff]
    %v291 = vld [vmem:[%s2 + $0x4a8] sm:$0xff]
    %v292 = vld [vmem:[%s2 + $0x4b0] sm:$0xff]
    %v293 = vld [vmem:[%s2 + $0x4b8] sm:$0xff]
    %v294 = vld [vmem:[%s2 + $0x4c0] sm:$0xff]
    %v295 = vld [vmem:[%s2 + $0x4c8] sm:$0xff]
    %v296 = vld [vmem:[%s2 + $0x4d0] sm:$0xff]
    %v297 = vld [vmem:[%s2 + $0x4d8] sm:$0xff]
    %v298 = vld [vmem:[%s2 + $0x4e0] sm:$0xff]
    %v299 = vld [vmem:[%s2 + $0x4e8] sm:$0xff]
    %v300 = vld [vmem:[%s2 + $0x4f0] sm:$0xff]
    %v301 = vld [vmem:[%s2 + $0x4f8] sm:$0xff]
    %v302 = vld [vmem:[%s2 + $0x500] sm:$0xff]
    %v303 = vld [vmem:[%s2 + $0x508] sm:$0xff]
    %v304 = vld [vmem:[%s2 + $0x510] sm:$0xff]
    %v305 = vld [vmem:[%s2 + $0x518] sm:$0xff]
    %v306 = vld [vmem:[%s2 + $0x520] sm:$0xff]
    %v307 = vld [vmem:[%s2 + $0x528] sm:$0xff]
    %v308 = vld [vmem:[%s2 + $0x530] sm:$0xff]
    %v309 = vld [vmem:[%s2 + $0x538] sm:$0xff]
    %v310 = vld [vmem:[%s2 + $0x540] sm:$0xff]
    %v311 = vld [vmem:[%s2 + $0x548] sm:$0xff]
    %v312 = vld [vmem:[%s2 + $0x550] sm:$0xff]
    %v313 = vld [vmem:[%s2 + $0x558] sm:$0xff]
    %v314 = vld [vmem:[%s2 + $0x560] sm:$0xff]
    %v315 = vld [vmem:[%s2 + $0x568] sm:$0xff]
    %v316 = vld [vmem:[%s2 + $0x570] sm:$0xff]
    %v317 = vld [vmem:[%s2 + $0x578] sm:$0xff]
    %v318 = vld [vmem:[%s2 + $0x580] sm:$0xff]
    %v319 = vld [vmem:[%s2 + $0x588] sm:$0xff]
    %v320 = vld [vmem:[%s2 + $0x590] sm:$0xff]
    %v321 = vld [vmem:[%s2 + $0x598] sm:$0xff]
    %v322 = vld [vmem:[%s2 + $0x5a0] sm:$0xff]
    %v323 = vld [vmem:[%s2 + $0x5a8] sm:$0xff]
    %v324 = vld [vmem:[%s2 + $0x5b0] sm:$0xff]
    %v325 = vld [vmem:[%s2 + $0x5b8] sm:$0xff]
    %v326 = vld [vmem:[%s2 + $0x5c0] sm:$0xff]
    %v327 = vld [vmem:[%s2 + $0x5c8] sm:$0xff]
    %v328 = vld [vmem:[%s2 + $0x5d0] sm:$0xff]
    %v329 = vld [vmem:[%s2 + $0x5d8] sm:$0xff]
    %v330 = vld [vmem:[%s2 + $0x5e0] sm:$0xff]
    %v331 = vld [vmem:[%s2 + $0x5e8] sm:$0xff]
    %v332 = vld [vmem:[%s2 + $0x5f0] sm:$0xff]
    %v333 = vld [vmem:[%s2 + $0x5f8] sm:$0xff]
    %v334 = vld [vmem:[%s2 + $0x600] sm:$0xff]
    %v335 = vld [vmem:[%s2 + $0x608] sm:$0xff]
    %v336 = vld [vmem:[%s2 + $0x610] sm:$0xff]
    %v337 = vld [vmem:[%s2 + $0x618] sm:$0xff]
    %v338 = vld [vmem:[%s3] sm:$0xf]
    %v340 = vperm.slane %v338, 0
    %v341 = vperm.slane %v338, 1
    %v342 = vperm.slane %v338, 2
    %v343 = vperm.slane %v338, 3
    %v544 = vunpack.c.l.b16 %v142
    %v545 = vunpack.c.h.b16 %v142
    %v546 = vunpack.c.l.b16 %v143
    %v547 = vunpack.c.h.b16 %v143
    %v548 = vunpack.c.l.b16 %v144
    %v549 = vunpack.c.h.b16 %v144
    %v550 = vunpack.c.l.b16 %v145
    %v551 = vunpack.c.h.b16 %v145
    %v552 = vunpack.c.l.b16 %v146
    %v553 = vunpack.c.h.b16 %v146
    %v554 = vunpack.c.l.b16 %v147
    %v555 = vunpack.c.h.b16 %v147
    %v556 = vunpack.c.l.b16 %v148
    %v557 = vunpack.c.h.b16 %v148
    %v558 = vunpack.c.l.b16 %v149
    %v559 = vunpack.c.h.b16 %v149
    %v560 = vunpack.c.l.b16 %v150
    %v561 = vunpack.c.h.b16 %v150
    %v562 = vunpack.c.l.b16 %v151
    %v563 = vunpack.c.h.b16 %v151
    %v564 = vunpack.c.l.b16 %v152
    %v565 = vunpack.c.h.b16 %v152
    %v566 = vunpack.c.l.b16 %v153
    %v567 = vunpack.c.h.b16 %v153
    %v568 = vunpack.c.l.b16 %v154
    %v569 = vunpack.c.h.b16 %v154
    %v570 = vunpack.c.l.b16 %v155
    %v571 = vunpack.c.h.b16 %v155
    %v572 = vunpack.c.l.b16 %v156
    %v573 = vunpack.c.h.b16 %v156
    %v574 = vunpack.c.l.b16 %v157
    %v575 = vunpack.c.h.b16 %v157
    %v576 = vunpack.c.l.b16 %v158
    %v577 = vunpack.c.h.b16 %v158
    %v578 = vunpack.c.l.b16 %v159
    %v579 = vunpack.c.h.b16 %v159
    %v580 = vunpack.c.l.b16 %v160
    %v581 = vunpack.c.h.b16 %v160
    %v582 = vunpack.c.l.b16 %v161
    %v583 = vunpack.c.h.b16 %v161
    %v584 = vunpack.c.l.b16 %v162
    %v585 = vunpack.c.h.b16 %v162
    %v586 = vunpack.c.l.b16 %v163
    %v587 = vunpack.c.h.b16 %v163
    %v588 = vunpack.c.l.b16 %v164
    %v589 = vunpack.c.h.b16 %v164
    %v590 = vunpack.c.l.b16 %v165
    %v591 = vunpack.c.h.b16 %v165
    %v592 = vunpack.c.l.b16 %v166
    %v593 = vunpack.c.h.b16 %v166
    %v594 = vunpack.c.l.b16 %v167
    %v595 = vunpack.c.h.b16 %v167
    %v596 = vunpack.c.l.b16 %v168
    %v597 = vunpack.c.h.b16 %v168
    %v598 = vunpack.c.l.b16 %v169
    %v599 = vunpack.c.h.b16 %v169
    %v600 = vunpack.c.l.b16 %v170
    %v601 = vunpack.c.h.b16 %v170
    %v602 = vunpack.c.l.b16 %v171
    %v603 = vunpack.c.h.b16 %v171
    %v604 = vunpack.c.l.b16 %v172
    %v605 = vunpack.c.h.b16 %v172
    %v606 = vunpack.c.l.b16 %v173
    %v607 = vunpack.c.h.b16 %v173
    %v608 = vunpack.c.l.b16 %v174
    %v609 = vunpack.c.h.b16 %v174
    %v610 = vunpack.c.l.b16 %v175
    %v611 = vunpack.c.h.b16 %v175
    %v612 = vunpack.c.l.b16 %v176
    %v613 = vunpack.c.h.b16 %v176
    %v614 = vunpack.c.l.b16 %v177
    %v615 = vunpack.c.h.b16 %v177
    %v616 = vunpack.c.l.b16 %v178
    %v617 = vunpack.c.h.b16 %v178
    %v618 = vunpack.c.l.b16 %v179
    %v619 = vunpack.c.h.b16 %v179
    %v620 = vunpack.c.l.b16 %v180
    %v621 = vunpack.c.h.b16 %v180
    %v622 = vunpack.c.l.b16 %v181
    %v623 = vunpack.c.h.b16 %v181
    %v624 = vunpack.c.l.b16 %v182
    %v625 = vunpack.c.h.b16 %v182
    %v626 = vunpack.c.l.b16 %v183
    %v627 = vunpack.c.h.b16 %v183
    %v628 = vunpack.c.l.b16 %v184
    %v629 = vunpack.c.h.b16 %v184
    %v630 = vunpack.c.l.b16 %v185
    %v631 = vunpack.c.h.b16 %v185
    %v632 = vunpack.c.l.b16 %v186
    %v633 = vunpack.c.h.b16 %v186
    %v634 = vunpack.c.l.b16 %v187
    %v635 = vunpack.c.h.b16 %v187
    %v636 = vunpack.c.l.b16 %v188
    %v637 = vunpack.c.h.b16 %v188
    %v638 = vunpack.c.l.b16 %v189
    %v639 = vunpack.c.h.b16 %v189
    %v640 = vunpack.c.l.b16 %v190
    %v641 = vunpack.c.h.b16 %v190
    %v642 = vunpack.c.l.b16 %v191
    %v643 = vunpack.c.h.b16 %v191
    %v644 = vunpack.c.l.b16 %v192
    %v645 = vunpack.c.h.b16 %v192
    %v646 = vunpack.c.l.b16 %v193
    %v647 = vunpack.c.h.b16 %v193
    %v648 = vunpack.c.l.b16 %v194
    %v649 = vunpack.c.h.b16 %v194
    %v650 = vunpack.c.l.b16 %v195
    %v651 = vunpack.c.h.b16 %v195
    %v652 = vunpack.c.l.b16 %v196
    %v653 = vunpack.c.h.b16 %v196
    %v654 = vunpack.c.l.b16 %v197
    %v655 = vunpack.c.h.b16 %v197
    %v656 = vunpack.c.l.b16 %v198
    %v657 = vunpack.c.h.b16 %v198
    %v658 = vunpack.c.l.b16 %v199
    %v659 = vunpack.c.h.b16 %v199
    %v660 = vunpack.c.l.b16 %v200
    %v661 = vunpack.c.h.b16 %v200
    %v662 = vunpack.c.l.b16 %v201
    %v663 = vunpack.c.h.b16 %v201
    %v664 = vunpack.c.l.b16 %v202
    %v665 = vunpack.c.h.b16 %v202
    %v666 = vunpack.c.l.b16 %v203
    %v667 = vunpack.c.h.b16 %v203
    %v668 = vunpack.c.l.b16 %v204
    %v669 = vunpack.c.h.b16 %v204
    %v670 = vunpack.c.l.b16 %v205
    %v671 = vunpack.c.h.b16 %v205
    %v672 = vunpack.c.l.b16 %v206
    %v673 = vunpack.c.h.b16 %v206
    %v674 = vunpack.c.l.b16 %v207
    %v675 = vunpack.c.h.b16 %v207
    %v676 = vunpack.c.l.b16 %v208
    %v677 = vunpack.c.h.b16 %v208
    %v678 = vunpack.c.l.b16 %v209
    %v679 = vunpack.c.h.b16 %v209
    %v680 = vunpack.c.l.b16 %v210
    %v681 = vunpack.c.h.b16 %v210
    %v682 = vunpack.c.l.b16 %v211
    %v683 = vunpack.c.h.b16 %v211
    %v684 = vunpack.c.l.b16 %v212
    %v685 = vunpack.c.h.b16 %v212
    %v686 = vunpack.c.l.b16 %v213
    %v687 = vunpack.c.h.b16 %v213
    %v688 = vunpack.c.l.b16 %v214
    %v689 = vunpack.c.h.b16 %v214
    %v690 = vunpack.c.l.b16 %v215
    %v691 = vunpack.c.h.b16 %v215
    %v692 = vunpack.c.l.b16 %v216
    %v693 = vunpack.c.h.b16 %v216
    %v694 = vunpack.c.l.b16 %v217
    %v695 = vunpack.c.h.b16 %v217
    %v696 = vunpack.c.l.b16 %v218
    %v697 = vunpack.c.h.b16 %v218
    %v698 = vunpack.c.l.b16 %v219
    %v699 = vunpack.c.h.b16 %v219
    %v700 = vunpack.c.l.b16 %v220
    %v701 = vunpack.c.h.b16 %v220
    %v702 = vunpack.c.l.b16 %v221
    %v703 = vunpack.c.h.b16 %v221
    %v704 = vunpack.c.l.b16 %v222
    %v705 = vunpack.c.h.b16 %v222
    %v706 = vunpack.c.l.b16 %v223
    %v707 = vunpack.c.h.b16 %v223
    %v708 = vunpack.c.l.b16 %v224
    %v709 = vunpack.c.h.b16 %v224
    %v710 = vunpack.c.l.b16 %v225
    %v711 = vunpack.c.h.b16 %v225
    %v712 = vunpack.c.l.b16 %v226
    %v713 = vunpack.c.h.b16 %v226
    %v714 = vunpack.c.l.b16 %v227
    %v715 = vunpack.c.h.b16 %v227
    %v716 = vunpack.c.l.b16 %v228
    %v717 = vunpack.c.h.b16 %v228
    %v718 = vunpack.c.l.b16 %v229
    %v719 = vunpack.c.h.b16 %v229
    %v720 = vunpack.c.l.b16 %v230
    %v721 = vunpack.c.h.b16 %v230
    %v722 = vunpack.c.l.b16 %v231
    %v723 = vunpack.c.h.b16 %v231
    %v724 = vunpack.c.l.b16 %v232
    %v725 = vunpack.c.h.b16 %v232
    %v726 = vunpack.c.l.b16 %v233
    %v727 = vunpack.c.h.b16 %v233
    %v728 = vunpack.c.l.b16 %v234
    %v729 = vunpack.c.h.b16 %v234
    %v730 = vunpack.c.l.b16 %v235
    %v731 = vunpack.c.h.b16 %v235
    %v732 = vunpack.c.l.b16 %v236
    %v733 = vunpack.c.h.b16 %v236
    %v734 = vunpack.c.l.b16 %v237
    %v735 = vunpack.c.h.b16 %v237
    %v736 = vunpack.c.l.b16 %v238
    %v737 = vunpack.c.h.b16 %v238
    %v738 = vunpack.c.l.b16 %v239
    %v739 = vunpack.c.h.b16 %v239
    %v740 = vunpack.c.l.b16 %v240
    %v741 = vunpack.c.h.b16 %v240
    %v742 = vunpack.c.l.b16 %v241
    %v743 = vunpack.c.h.b16 %v241
    %v744 = vunpack.c.l.b16 %v242
    %v745 = vunpack.c.h.b16 %v242
    %v746 = vunpack.c.l.b16 %v243
    %v747 = vunpack.c.h.b16 %v243
    %v748 = vunpack.c.l.b16 %v244
    %v749 = vunpack.c.h.b16 %v244
    %v750 = vunpack.c.l.b16 %v245
    %v751 = vunpack.c.h.b16 %v245
    %v752 = vunpack.c.l.b16 %v246
    %v753 = vunpack.c.h.b16 %v246
    %v754 = vunpack.c.l.b16 %v247
    %v755 = vunpack.c.h.b16 %v247
    %v756 = vunpack.c.l.b16 %v248
    %v757 = vunpack.c.h.b16 %v248
    %v758 = vunpack.c.l.b16 %v249
    %v759 = vunpack.c.h.b16 %v249
    %v760 = vunpack.c.l.b16 %v250
    %v761 = vunpack.c.h.b16 %v250
    %v762 = vunpack.c.l.b16 %v251
    %v763 = vunpack.c.h.b16 %v251
    %v764 = vunpack.c.l.b16 %v252
    %v765 = vunpack.c.h.b16 %v252
    %v766 = vunpack.c.l.b16 %v253
    %v767 = vunpack.c.h.b16 %v253
    %v768 = vunpack.c.l.b16 %v254
    %v769 = vunpack.c.h.b16 %v254
    %v770 = vunpack.c.l.b16 %v255
    %v771 = vunpack.c.h.b16 %v255
    %v772 = vunpack.c.l.b16 %v256
    %v773 = vunpack.c.h.b16 %v256
    %v774 = vunpack.c.l.b16 %v257
    %v775 = vunpack.c.h.b16 %v257
    %v776 = vunpack.c.l.b16 %v258
    %v777 = vunpack.c.h.b16 %v258
    %v778 = vunpack.c.l.b16 %v259
    %v779 = vunpack.c.h.b16 %v259
    %v780 = vunpack.c.l.b16 %v260
    %v781 = vunpack.c.h.b16 %v260
    %v782 = vunpack.c.l.b16 %v261
    %v783 = vunpack.c.h.b16 %v261
    %v784 = vunpack.c.l.b16 %v262
    %v785 = vunpack.c.h.b16 %v262
    %v786 = vunpack.c.l.b16 %v263
    %v787 = vunpack.c.h.b16 %v263
    %v788 = vunpack.c.l.b16 %v264
    %v789 = vunpack.c.h.b16 %v264
    %v790 = vunpack.c.l.b16 %v265
    %v791 = vunpack.c.h.b16 %v265
    %v792 = vunpack.c.l.b16 %v266
    %v793 = vunpack.c.h.b16 %v266
    %v794 = vunpack.c.l.b16 %v267
    %v795 = vunpack.c.h.b16 %v267
    %v796 = vunpack.c.l.b16 %v268
    %v797 = vunpack.c.h.b16 %v268
    %v798 = vunpack.c.l.b16 %v269
    %v799 = vunpack.c.h.b16 %v269
    %v800 = vunpack.c.l.b16 %v270
    %v801 = vunpack.c.h.b16 %v270
    %v802 = vunpack.c.l.b16 %v271
    %v803 = vunpack.c.h.b16 %v271
    %v804 = vunpack.c.l.b16 %v272
    %v805 = vunpack.c.h.b16 %v272
    %v806 = vunpack.c.l.b16 %v273
    %v807 = vunpack.c.h.b16 %v273
    %v808 = vunpack.c.l.b16 %v274
    %v809 = vunpack.c.h.b16 %v274
    %v810 = vunpack.c.l.b16 %v275
    %v811 = vunpack.c.h.b16 %v275
    %v812 = vunpack.c.l.b16 %v276
    %v813 = vunpack.c.h.b16 %v276
    %v814 = vunpack.c.l.b16 %v277
    %v815 = vunpack.c.h.b16 %v277
    %v816 = vunpack.c.l.b16 %v278
    %v817 = vunpack.c.h.b16 %v278
    %v818 = vunpack.c.l.b16 %v279
    %v819 = vunpack.c.h.b16 %v279
    %v820 = vunpack.c.l.b16 %v280
    %v821 = vunpack.c.h.b16 %v280
    %v822 = vunpack.c.l.b16 %v281
    %v823 = vunpack.c.h.b16 %v281
    %v824 = vunpack.c.l.b16 %v282
    %v825 = vunpack.c.h.b16 %v282
    %v826 = vunpack.c.l.b16 %v283
    %v827 = vunpack.c.h.b16 %v283
    %v828 = vunpack.c.l.b16 %v284
    %v829 = vunpack.c.h.b16 %v284
    %v830 = vunpack.c.l.b16 %v285
    %v831 = vunpack.c.h.b16 %v285
    %v832 = vunpack.c.l.b16 %v286
    %v833 = vunpack.c.h.b16 %v286
    %v834 = vunpack.c.l.b16 %v287
    %v835 = vunpack.c.h.b16 %v287
    %v836 = vunpack.c.l.b16 %v288
    %v837 = vunpack.c.h.b16 %v288
    %v838 = vunpack.c.l.b16 %v289
    %v839 = vunpack.c.h.b16 %v289
    %v840 = vunpack.c.l.b16 %v290
    %v841 = vunpack.c.h.b16 %v290
    %v842 = vunpack.c.l.b16 %v291
    %v843 = vunpack.c.h.b16 %v291
    %v844 = vunpack.c.l.b16 %v292
    %v845 = vunpack.c.h.b16 %v292
    %v846 = vunpack.c.l.b16 %v293
    %v847 = vunpack.c.h.b16 %v293
    %v848 = vunpack.c.l.b16 %v294
    %v849 = vunpack.c.h.b16 %v294
    %v850 = vunpack.c.l.b16 %v295
    %v851 = vunpack.c.h.b16 %v295
    %v852 = vunpack.c.l.b16 %v296
    %v853 = vunpack.c.h.b16 %v296
    %v854 = vunpack.c.l.b16 %v297
    %v855 = vunpack.c.h.b16 %v297
    %v856 = vunpack.c.l.b16 %v298
    %v857 = vunpack.c.h.b16 %v298
    %v858 = vunpack.c.l.b16 %v299
    %v859 = vunpack.c.h.b16 %v299
    %v860 = vunpack.c.l.b16 %v300
    %v861 = vunpack.c.h.b16 %v300
    %v862 = vunpack.c.l.b16 %v301
    %v863 = vunpack.c.h.b16 %v301
    %v864 = vunpack.c.l.b16 %v302
    %v865 = vunpack.c.h.b16 %v302
    %v866 = vunpack.c.l.b16 %v303
    %v867 = vunpack.c.h.b16 %v303
    %v868 = vunpack.c.l.b16 %v304
    %v869 = vunpack.c.h.b16 %v304
    %v870 = vunpack.c.l.b16 %v305
    %v871 = vunpack.c.h.b16 %v305
    %v872 = vunpack.c.l.b16 %v306
    %v873 = vunpack.c.h.b16 %v306
    %v874 = vunpack.c.l.b16 %v307
    %v875 = vunpack.c.h.b16 %v307
    %v876 = vunpack.c.l.b16 %v308
    %v877 = vunpack.c.h.b16 %v308
    %v878 = vunpack.c.l.b16 %v309
    %v879 = vunpack.c.h.b16 %v309
    %v880 = vunpack.c.l.b16 %v310
    %v881 = vunpack.c.h.b16 %v310
    %v882 = vunpack.c.l.b16 %v311
    %v883 = vunpack.c.h.b16 %v311
    %v884 = vunpack.c.l.b16 %v312
    %v885 = vunpack.c.h.b16 %v312
    %v886 = vunpack.c.l.b16 %v313
    %v887 = vunpack.c.h.b16 %v313
    %v888 = vunpack.c.l.b16 %v314
    %v889 = vunpack.c.h.b16 %v314
    %v890 = vunpack.c.l.b16 %v315
    %v891 = vunpack.c.h.b16 %v315
    %v892 = vunpack.c.l.b16 %v316
    %v893 = vunpack.c.h.b16 %v316
    %v894 = vunpack.c.l.b16 %v317
    %v895 = vunpack.c.h.b16 %v317
    %v896 = vunpack.c.l.b16 %v318
    %v897 = vunpack.c.h.b16 %v318
    %v898 = vunpack.c.l.b16 %v319
    %v899 = vunpack.c.h.b16 %v319
    %v900 = vunpack.c.l.b16 %v320
    %v901 = vunpack.c.h.b16 %v320
    %v902 = vunpack.c.l.b16 %v321
    %v903 = vunpack.c.h.b16 %v321
    %v904 = vunpack.c.l.b16 %v322
    %v905 = vunpack.c.h.b16 %v322
    %v906 = vunpack.c.l.b16 %v323
    %v907 = vunpack.c.h.b16 %v323
    %v908 = vunpack.c.l.b16 %v324
    %v909 = vunpack.c.h.b16 %v324
    %v910 = vunpack.c.l.b16 %v325
    %v911 = vunpack.c.h.b16 %v325
    %v912 = vunpack.c.l.b16 %v326
    %v913 = vunpack.c.h.b16 %v326
    %v914 = vunpack.c.l.b16 %v327
    %v915 = vunpack.c.h.b16 %v327
    %v916 = vunpack.c.l.b16 %v328
    %v917 = vunpack.c.h.b16 %v328
    %v918 = vunpack.c.l.b16 %v329
    %v919 = vunpack.c.h.b16 %v329
    %v920 = vunpack.c.l.b16 %v330
    %v921 = vunpack.c.h.b16 %v330
    %v922 = vunpack.c.l.b16 %v331
    %v923 = vunpack.c.h.b16 %v331
    %v924 = vunpack.c.l.b16 %v332
    %v925 = vunpack.c.h.b16 %v332
    %v926 = vunpack.c.l.b16 %v333
    %v927 = vunpack.c.h.b16 %v333
    %v928 = vunpack.c.l.b16 %v334
    %v929 = vunpack.c.h.b16 %v334
    %v930 = vunpack.c.l.b16 %v335
    %v931 = vunpack.c.h.b16 %v335
    %v932 = vunpack.c.l.b16 %v336
    %v933 = vunpack.c.h.b16 %v336
    %v934 = vunpack.c.l.b16 %v337
    %v935 = vunpack.c.h.b16 %v337
    %v936 = vpack.c.b16 %v548, %v544
    %v937 = vpack.c.b16 %v549, %v545
    %v938 = vpack.c.b16 %v550, %v546
    %v939 = vpack.c.b16 %v551, %v547
    %v940 = vpack.c.b16 %v556, %v552
    %v941 = vpack.c.b16 %v557, %v553
    %v942 = vpack.c.b16 %v558, %v554
    %v943 = vpack.c.b16 %v559, %v555
    %v944 = vpack.c.b16 %v564, %v560
    %v945 = vpack.c.b16 %v565, %v561
    %v946 = vpack.c.b16 %v566, %v562
    %v947 = vpack.c.b16 %v567, %v563
    %v948 = vpack.c.b16 %v572, %v568
    %v949 = vpack.c.b16 %v573, %v569
    %v950 = vpack.c.b16 %v574, %v570
    %v951 = vpack.c.b16 %v575, %v571
    %v952 = vpack.c.b16 %v580, %v576
    %v953 = vpack.c.b16 %v581, %v577
    %v954 = vpack.c.b16 %v582, %v578
    %v955 = vpack.c.b16 %v583, %v579
    %v956 = vpack.c.b16 %v588, %v584
    %v957 = vpack.c.b16 %v589, %v585
    %v958 = vpack.c.b16 %v590, %v586
    %v959 = vpack.c.b16 %v591, %v587
    %v960 = vpack.c.b16 %v596, %v592
    %v961 = vpack.c.b16 %v597, %v593
    %v962 = vpack.c.b16 %v598, %v594
    %v963 = vpack.c.b16 %v599, %v595
    %v964 = vpack.c.b16 %v604, %v600
    %v965 = vpack.c.b16 %v605, %v601
    %v966 = vpack.c.b16 %v606, %v602
    %v967 = vpack.c.b16 %v607, %v603
    %v968 = vpack.c.b16 %v612, %v608
    %v969 = vpack.c.b16 %v613, %v609
    %v970 = vpack.c.b16 %v614, %v610
    %v971 = vpack.c.b16 %v615, %v611
    %v972 = vpack.c.b16 %v620, %v616
    %v973 = vpack.c.b16 %v621, %v617
    %v974 = vpack.c.b16 %v622, %v618
    %v975 = vpack.c.b16 %v623, %v619
    %v976 = vpack.c.b16 %v628, %v624
    %v977 = vpack.c.b16 %v629, %v625
    %v978 = vpack.c.b16 %v630, %v626
    %v979 = vpack.c.b16 %v631, %v627
    %v980 = vpack.c.b16 %v636, %v632
    %v981 = vpack.c.b16 %v637, %v633
    %v982 = vpack.c.b16 %v638, %v634
    %v983 = vpack.c.b16 %v639, %v635
    %v984 = vpack.c.b16 %v644, %v640
    %v985 = vpack.c.b16 %v645, %v641
    %v986 = vpack.c.b16 %v646, %v642
    %v987 = vpack.c.b16 %v647, %v643
    %v988 = vpack.c.b16 %v652, %v648
    %v989 = vpack.c.b16 %v653, %v649
    %v990 = vpack.c.b16 %v654, %v650
    %v991 = vpack.c.b16 %v655, %v651
    %v992 = vpack.c.b16 %v660, %v656
    %v993 = vpack.c.b16 %v661, %v657
    %v994 = vpack.c.b16 %v662, %v658
    %v995 = vpack.c.b16 %v663, %v659
    %v996 = vpack.c.b16 %v668, %v664
    %v997 = vpack.c.b16 %v669, %v665
    %v998 = vpack.c.b16 %v670, %v666
    %v999 = vpack.c.b16 %v671, %v667
    %v1000 = vpack.c.b16 %v676, %v672
    %v1001 = vpack.c.b16 %v677, %v673
    %v1002 = vpack.c.b16 %v678, %v674
    %v1003 = vpack.c.b16 %v679, %v675
    %v1004 = vpack.c.b16 %v684, %v680
    %v1005 = vpack.c.b16 %v685, %v681
    %v1006 = vpack.c.b16 %v686, %v682
    %v1007 = vpack.c.b16 %v687, %v683
    %v1008 = vpack.c.b16 %v692, %v688
    %v1009 = vpack.c.b16 %v693, %v689
    %v1010 = vpack.c.b16 %v694, %v690
    %v1011 = vpack.c.b16 %v695, %v691
    %v1012 = vpack.c.b16 %v700, %v696
    %v1013 = vpack.c.b16 %v701, %v697
    %v1014 = vpack.c.b16 %v702, %v698
    %v1015 = vpack.c.b16 %v703, %v699
    %v1016 = vpack.c.b16 %v708, %v704
    %v1017 = vpack.c.b16 %v709, %v705
    %v1018 = vpack.c.b16 %v710, %v706
    %v1019 = vpack.c.b16 %v711, %v707
    %v1020 = vpack.c.b16 %v716, %v712
    %v1021 = vpack.c.b16 %v717, %v713
    %v1022 = vpack.c.b16 %v718, %v714
    %v1023 = vpack.c.b16 %v719, %v715
    %v1024 = vpack.c.b16 %v724, %v720
    %v1025 = vpack.c.b16 %v725, %v721
    %v1026 = vpack.c.b16 %v726, %v722
    %v1027 = vpack.c.b16 %v727, %v723
    %v1028 = vpack.c.b16 %v732, %v728
    %v1029 = vpack.c.b16 %v733, %v729
    %v1030 = vpack.c.b16 %v734, %v730
    %v1031 = vpack.c.b16 %v735, %v731
    %v1032 = vpack.c.b16 %v740, %v736
    %v1033 = vpack.c.b16 %v741, %v737
    %v1034 = vpack.c.b16 %v742, %v738
    %v1035 = vpack.c.b16 %v743, %v739
    %v1036 = vpack.c.b16 %v748, %v744
    %v1037 = vpack.c.b16 %v749, %v745
    %v1038 = vpack.c.b16 %v750, %v746
    %v1039 = vpack.c.b16 %v751, %v747
    %v1040 = vpack.c.b16 %v756, %v752
    %v1041 = vpack.c.b16 %v757, %v753
    %v1042 = vpack.c.b16 %v758, %v754
    %v1043 = vpack.c.b16 %v759, %v755
    %v1044 = vpack.c.b16 %v764, %v760
    %v1045 = vpack.c.b16 %v765, %v761
    %v1046 = vpack.c.b16 %v766, %v762
    %v1047 = vpack.c.b16 %v767, %v763
    %v1048 = vpack.c.b16 %v772, %v768
    %v1049 = vpack.c.b16 %v773, %v769
    %v1050 = vpack.c.b16 %v774, %v770
    %v1051 = vpack.c.b16 %v775, %v771
    %v1052 = vpack.c.b16 %v780, %v776
    %v1053 = vpack.c.b16 %v781, %v777
    %v1054 = vpack.c.b16 %v782, %v778
    %v1055 = vpack.c.b16 %v783, %v779
    %v1056 = vpack.c.b16 %v788, %v784
    %v1057 = vpack.c.b16 %v789, %v785
    %v1058 = vpack.c.b16 %v790, %v786
    %v1059 = vpack.c.b16 %v791, %v787
    %v1060 = vpack.c.b16 %v796, %v792
    %v1061 = vpack.c.b16 %v797, %v793
    %v1062 = vpack.c.b16 %v798, %v794
    %v1063 = vpack.c.b16 %v799, %v795
    %v1064 = vpack.c.b16 %v804, %v800
    %v1065 = vpack.c.b16 %v805, %v801
    %v1066 = vpack.c.b16 %v806, %v802
    %v1067 = vpack.c.b16 %v807, %v803
    %v1068 = vpack.c.b16 %v812, %v808
    %v1069 = vpack.c.b16 %v813, %v809
    %v1070 = vpack.c.b16 %v814, %v810
    %v1071 = vpack.c.b16 %v815, %v811
    %v1072 = vpack.c.b16 %v820, %v816
    %v1073 = vpack.c.b16 %v821, %v817
    %v1074 = vpack.c.b16 %v822, %v818
    %v1075 = vpack.c.b16 %v823, %v819
    %v1076 = vpack.c.b16 %v828, %v824
    %v1077 = vpack.c.b16 %v829, %v825
    %v1078 = vpack.c.b16 %v830, %v826
    %v1079 = vpack.c.b16 %v831, %v827
    %v1080 = vpack.c.b16 %v836, %v832
    %v1081 = vpack.c.b16 %v837, %v833
    %v1082 = vpack.c.b16 %v838, %v834
    %v1083 = vpack.c.b16 %v839, %v835
    %v1084 = vpack.c.b16 %v844, %v840
    %v1085 = vpack.c.b16 %v845, %v841
    %v1086 = vpack.c.b16 %v846, %v842
    %v1087 = vpack.c.b16 %v847, %v843
    %v1088 = vpack.c.b16 %v852, %v848
    %v1089 = vpack.c.b16 %v853, %v849
    %v1090 = vpack.c.b16 %v854, %v850
    %v1091 = vpack.c.b16 %v855, %v851
    %v1092 = vpack.c.b16 %v860, %v856
    %v1093 = vpack.c.b16 %v861, %v857
    %v1094 = vpack.c.b16 %v862, %v858
    %v1095 = vpack.c.b16 %v863, %v859
    %v1096 = vpack.c.b16 %v868, %v864
    %v1097 = vpack.c.b16 %v869, %v865
    %v1098 = vpack.c.b16 %v870, %v866
    %v1099 = vpack.c.b16 %v871, %v867
    %v1100 = vpack.c.b16 %v876, %v872
    %v1101 = vpack.c.b16 %v877, %v873
    %v1102 = vpack.c.b16 %v878, %v874
    %v1103 = vpack.c.b16 %v879, %v875
    %v1104 = vpack.c.b16 %v884, %v880
    %v1105 = vpack.c.b16 %v885, %v881
    %v1106 = vpack.c.b16 %v886, %v882
    %v1107 = vpack.c.b16 %v887, %v883
    %v1108 = vpack.c.b16 %v892, %v888
    %v1109 = vpack.c.b16 %v893, %v889
    %v1110 = vpack.c.b16 %v894, %v890
    %v1111 = vpack.c.b16 %v895, %v891
    %v1112 = vpack.c.b16 %v900, %v896
    %v1113 = vpack.c.b16 %v901, %v897
    %v1114 = vpack.c.b16 %v902, %v898
    %v1115 = vpack.c.b16 %v903, %v899
    %v1116 = vpack.c.b16 %v908, %v904
    %v1117 = vpack.c.b16 %v909, %v905
    %v1118 = vpack.c.b16 %v910, %v906
    %v1119 = vpack.c.b16 %v911, %v907
    %v1120 = vpack.c.b16 %v916, %v912
    %v1121 = vpack.c.b16 %v917, %v913
    %v1122 = vpack.c.b16 %v918, %v914
    %v1123 = vpack.c.b16 %v919, %v915
    %v1124 = vpack.c.b16 %v924, %v920
    %v1125 = vpack.c.b16 %v925, %v921
    %v1126 = vpack.c.b16 %v926, %v922
    %v1127 = vpack.c.b16 %v927, %v923
    %v1128 = vpack.c.b16 %v932, %v928
    %v1129 = vpack.c.b16 %v933, %v929
    %v1130 = vpack.c.b16 %v934, %v930
    %v1131 = vpack.c.b16 %v935, %v931
    %vm1328 = vcmask 130048
    %v1330 = vsel %vm1328, %v141, 0
    %1332 = vmatpush.bf16.msra.mxu0 %v964
    %1333 = vmatpush.bf16.msra.mxu0 %v960
    %1334 = vmatpush.bf16.msra.mxu0 %v956
    %1335 = vmatpush.bf16.msra.mxu0 %v952
    %1336 = vmatpush.bf16.msra.mxu0 %v948
    %1337 = vmatpush.bf16.msra.mxu0 %v944
    %1338 = vmatpush.bf16.msra.mxu0 %v940
    %1339 = vmatpush.bf16.msra.mxu0 %v936
    %1340 = vmatmul.bf16.gmra.mxu0 %v135
    %v1341 = vpop.f32.mrf.mxu0
    %v1342 = vadd.f32 %v340, %v1341
    %v1343 = vpop.f32.mrf.mxu0
    %v1344 = vadd.f32 %v340, %v1343
    %1345 = vdwg.mxu0
    %1346 = vmatpush.bf16.msra.mxu0 %v996
    %1347 = vmatpush.bf16.msra.mxu0 %v992
    %1348 = vmatpush.bf16.msra.mxu0 %v988
    %1349 = vmatpush.bf16.msra.mxu0 %v984
    %1350 = vmatpush.bf16.msra.mxu0 %v980
    %1351 = vmatpush.bf16.msra.mxu0 %v976
    %1352 = vmatpush.bf16.msra.mxu0 %v972
    %1353 = vmatpush.bf16.msra.mxu0 %v968
    %1354 = vmatmul.bf16.gmra.mxu0 %v136
    %v1355 = vpop.f32.mrf.mxu0
    %v1356 = vadd.f32 %v1342, %v1355
    %v1357 = vpop.f32.mrf.mxu0
    %v1358 = vadd.f32 %v1344, %v1357
    %1359 = vdwg.mxu0
    %1360 = vmatpush.bf16.msra.mxu0 %v1028
    %1361 = vmatpush.bf16.msra.mxu0 %v1024
    %1362 = vmatpush.bf16.msra.mxu0 %v1020
    %1363 = vmatpush.bf16.msra.mxu0 %v1016
    %1364 = vmatpush.bf16.msra.mxu0 %v1012
    %1365 = vmatpush.bf16.msra.mxu0 %v1008
    %1366 = vmatpush.bf16.msra.mxu0 %v1004
    %1367 = vmatpush.bf16.msra.mxu0 %v1000
    %1368 = vmatmul.bf16.gmra.mxu0 %v137
    %v1369 = vpop.f32.mrf.mxu0
    %v1370 = vadd.f32 %v1356, %v1369
    %v1371 = vpop.f32.mrf.mxu0
    %v1372 = vadd.f32 %v1358, %v1371
    %1373 = vdwg.mxu0
    %1374 = vmatpush.bf16.msra.mxu0 %v1060
    %1375 = vmatpush.bf16.msra.mxu0 %v1056
    %1376 = vmatpush.bf16.msra.mxu0 %v1052
    %1377 = vmatpush.bf16.msra.mxu0 %v1048
    %1378 = vmatpush.bf16.msra.mxu0 %v1044
    %1379 = vmatpush.bf16.msra.mxu0 %v1040
    %1380 = vmatpush.bf16.msra.mxu0 %v1036
    %1381 = vmatpush.bf16.msra.mxu0 %v1032
    %1382 = vmatmul.bf16.gmra.mxu0 %v138
    %v1383 = vpop.f32.mrf.mxu0
    %v1384 = vadd.f32 %v1370, %v1383
    %v1385 = vpop.f32.mrf.mxu0
    %v1386 = vadd.f32 %v1372, %v1385
    %1387 = vdwg.mxu0
    %1388 = vmatpush.bf16.msra.mxu0 %v1092
    %1389 = vmatpush.bf16.msra.mxu0 %v1088
    %1390 = vmatpush.bf16.msra.mxu0 %v1084
    %1391 = vmatpush.bf16.msra.mxu0 %v1080
    %1392 = vmatpush.bf16.msra.mxu0 %v1076
    %1393 = vmatpush.bf16.msra.mxu0 %v1072
    %1394 = vmatpush.bf16.msra.mxu0 %v1068
    %1395 = vmatpush.bf16.msra.mxu0 %v1064
    %1396 = vmatmul.bf16.gmra.mxu0 %v139
    %v1397 = vpop.f32.mrf.mxu0
    %v1398 = vadd.f32 %v1384, %v1397
    %v1399 = vpop.f32.mrf.mxu0
    %v1400 = vadd.f32 %v1386, %v1399
    %1401 = vdwg.mxu0
    %1402 = vmatpush.bf16.msra.mxu0 %v1124
    %1403 = vmatpush.bf16.msra.mxu0 %v1120
    %1404 = vmatpush.bf16.msra.mxu0 %v1116
    %1405 = vmatpush.bf16.msra.mxu0 %v1112
    %1406 = vmatpush.bf16.msra.mxu0 %v1108
    %1407 = vmatpush.bf16.msra.mxu0 %v1104
    %1408 = vmatpush.bf16.msra.mxu0 %v1100
    %1409 = vmatpush.bf16.msra.mxu0 %v1096
    %1410 = vmatmul.bf16.gmra.mxu0 %v140
    %v1411 = vpop.f32.mrf.mxu0
    %v1412 = vadd.f32 %v1398, %v1411
    %v1413 = vpop.f32.mrf.mxu0
    %v1414 = vadd.f32 %v1400, %v1413
    %1415 = vdwg.mxu0
    %1416 = vmatpush.bf16.msra.mxu0 0
    %1417 = vmatpush.bf16.msra.mxu0 0
    %1418 = vmatpush.bf16.msra.mxu0 0
    %1419 = vmatpush.bf16.msra.mxu0 0
    %1420 = vmatpush.bf16.msra.mxu0 0
    %1421 = vmatpush.bf16.msra.mxu0 0
    %1422 = vmatpush.bf16.msra.mxu0 0
    %1423 = vmatpush.bf16.msra.mxu0 %v1128
    %1424 = vmatmul.bf16.gmra.mxu0 %v1330
    %v1425 = vpop.f32.mrf.mxu0
    %v1426 = vadd.f32 %v1412, %v1425
    %v1427 = vpop.f32.mrf.mxu0
    %v1428 = vadd.f32 %v1414, %v1427
    %1429 = vdwg.mxu0
    %1430 = vmatpush.bf16.msra.mxu0 %v965
    %1431 = vmatpush.bf16.msra.mxu0 %v961
    %1432 = vmatpush.bf16.msra.mxu0 %v957
    %1433 = vmatpush.bf16.msra.mxu0 %v953
    %1434 = vmatpush.bf16.msra.mxu0 %v949
    %1435 = vmatpush.bf16.msra.mxu0 %v945
    %1436 = vmatpush.bf16.msra.mxu0 %v941
    %1437 = vmatpush.bf16.msra.mxu0 %v937
    %1438 = vmatmul.bf16.gmra.mxu0 %v135
    %v1439 = vpop.f32.mrf.mxu0
    %v1440 = vadd.f32 %v341, %v1439
    %v1441 = vpop.f32.mrf.mxu0
    %v1442 = vadd.f32 %v341, %v1441
    %1443 = vdwg.mxu0
    %1444 = vmatpush.bf16.msra.mxu0 %v997
    %1445 = vmatpush.bf16.msra.mxu0 %v993
    %1446 = vmatpush.bf16.msra.mxu0 %v989
    %1447 = vmatpush.bf16.msra.mxu0 %v985
    %1448 = vmatpush.bf16.msra.mxu0 %v981
    %1449 = vmatpush.bf16.msra.mxu0 %v977
    %1450 = vmatpush.bf16.msra.mxu0 %v973
    %1451 = vmatpush.bf16.msra.mxu0 %v969
    %1452 = vmatmul.bf16.gmra.mxu0 %v136
    %v1453 = vpop.f32.mrf.mxu0
    %v1454 = vadd.f32 %v1440, %v1453
    %v1455 = vpop.f32.mrf.mxu0
    %v1456 = vadd.f32 %v1442, %v1455
    %1457 = vdwg.mxu0
    %1458 = vmatpush.bf16.msra.mxu0 %v1029
    %1459 = vmatpush.bf16.msra.mxu0 %v1025
    %1460 = vmatpush.bf16.msra.mxu0 %v1021
    %1461 = vmatpush.bf16.msra.mxu0 %v1017
    %1462 = vmatpush.bf16.msra.mxu0 %v1013
    %1463 = vmatpush.bf16.msra.mxu0 %v1009
    %1464 = vmatpush.bf16.msra.mxu0 %v1005
    %1465 = vmatpush.bf16.msra.mxu0 %v1001
    %1466 = vmatmul.bf16.gmra.mxu0 %v137
    %v1467 = vpop.f32.mrf.mxu0
    %v1468 = vadd.f32 %v1454, %v1467
    %v1469 = vpop.f32.mrf.mxu0
    %v1470 = vadd.f32 %v1456, %v1469
    %1471 = vdwg.mxu0
    %1472 = vmatpush.bf16.msra.mxu0 %v1061
    %1473 = vmatpush.bf16.msra.mxu0 %v1057
    %1474 = vmatpush.bf16.msra.mxu0 %v1053
    %1475 = vmatpush.bf16.msra.mxu0 %v1049
    %1476 = vmatpush.bf16.msra.mxu0 %v1045
    %1477 = vmatpush.bf16.msra.mxu0 %v1041
    %1478 = vmatpush.bf16.msra.mxu0 %v1037
    %1479 = vmatpush.bf16.msra.mxu0 %v1033
    %1480 = vmatmul.bf16.gmra.mxu0 %v138
    %v1481 = vpop.f32.mrf.mxu0
    %v1482 = vadd.f32 %v1468, %v1481
    %v1483 = vpop.f32.mrf.mxu0
    %v1484 = vadd.f32 %v1470, %v1483
    %1485 = vdwg.mxu0
    %1486 = vmatpush.bf16.msra.mxu0 %v1093
    %1487 = vmatpush.bf16.msra.mxu0 %v1089
    %1488 = vmatpush.bf16.msra.mxu0 %v1085
    %1489 = vmatpush.bf16.msra.mxu0 %v1081
    %1490 = vmatpush.bf16.msra.mxu0 %v1077
    %1491 = vmatpush.bf16.msra.mxu0 %v1073
    %1492 = vmatpush.bf16.msra.mxu0 %v1069
    %1493 = vmatpush.bf16.msra.mxu0 %v1065
    %1494 = vmatmul.bf16.gmra.mxu0 %v139
    %v1495 = vpop.f32.mrf.mxu0
    %v1496 = vadd.f32 %v1482, %v1495
    %v1497 = vpop.f32.mrf.mxu0
    %v1498 = vadd.f32 %v1484, %v1497
    %1499 = vdwg.mxu0
    %1500 = vmatpush.bf16.msra.mxu0 %v1125
    %1501 = vmatpush.bf16.msra.mxu0 %v1121
    %1502 = vmatpush.bf16.msra.mxu0 %v1117
    %1503 = vmatpush.bf16.msra.mxu0 %v1113
    %1504 = vmatpush.bf16.msra.mxu0 %v1109
    %1505 = vmatpush.bf16.msra.mxu0 %v1105
    %1506 = vmatpush.bf16.msra.mxu0 %v1101
    %1507 = vmatpush.bf16.msra.mxu0 %v1097
    %1508 = vmatmul.bf16.gmra.mxu0 %v140
    %v1509 = vpop.f32.mrf.mxu0
    %v1510 = vadd.f32 %v1496, %v1509
    %v1511 = vpop.f32.mrf.mxu0
    %v1512 = vadd.f32 %v1498, %v1511
    %1513 = vdwg.mxu0
    %1514 = vmatpush.bf16.msra.mxu0 0
    %1515 = vmatpush.bf16.msra.mxu0 0
    %1516 = vmatpush.bf16.msra.mxu0 0
    %1517 = vmatpush.bf16.msra.mxu0 0
    %1518 = vmatpush.bf16.msra.mxu0 0
    %1519 = vmatpush.bf16.msra.mxu0 0
    %1520 = vmatpush.bf16.msra.mxu0 0
    %1521 = vmatpush.bf16.msra.mxu0 %v1129
    %1522 = vmatmul.bf16.gmra.mxu0 %v1330
    %v1523 = vpop.f32.mrf.mxu0
    %v1524 = vadd.f32 %v1510, %v1523
    %v1525 = vpop.f32.mrf.mxu0
    %v1526 = vadd.f32 %v1512, %v1525
    %1527 = vdwg.mxu0
    %1528 = vmatpush.bf16.msra.mxu0 %v966
    %1529 = vmatpush.bf16.msra.mxu0 %v962
    %1530 = vmatpush.bf16.msra.mxu0 %v958
    %1531 = vmatpush.bf16.msra.mxu0 %v954
    %1532 = vmatpush.bf16.msra.mxu0 %v950
    %1533 = vmatpush.bf16.msra.mxu0 %v946
    %1534 = vmatpush.bf16.msra.mxu0 %v942
    %1535 = vmatpush.bf16.msra.mxu0 %v938
    %1536 = vmatmul.bf16.gmra.mxu0 %v135
    %v1537 = vpop.f32.mrf.mxu0
    %v1538 = vadd.f32 %v342, %v1537
    %v1539 = vpop.f32.mrf.mxu0
    %v1540 = vadd.f32 %v342, %v1539
    %1541 = vdwg.mxu0
    %1542 = vmatpush.bf16.msra.mxu0 %v998
    %1543 = vmatpush.bf16.msra.mxu0 %v994
    %1544 = vmatpush.bf16.msra.mxu0 %v990
    %1545 = vmatpush.bf16.msra.mxu0 %v986
    %1546 = vmatpush.bf16.msra.mxu0 %v982
    %1547 = vmatpush.bf16.msra.mxu0 %v978
    %1548 = vmatpush.bf16.msra.mxu0 %v974
    %1549 = vmatpush.bf16.msra.mxu0 %v970
    %1550 = vmatmul.bf16.gmra.mxu0 %v136
    %v1551 = vpop.f32.mrf.mxu0
    %v1552 = vadd.f32 %v1538, %v1551
    %v1553 = vpop.f32.mrf.mxu0
    %v1554 = vadd.f32 %v1540, %v1553
    %1555 = vdwg.mxu0
    %1556 = vmatpush.bf16.msra.mxu0 %v1030
    %1557 = vmatpush.bf16.msra.mxu0 %v1026
    %1558 = vmatpush.bf16.msra.mxu0 %v1022
    %1559 = vmatpush.bf16.msra.mxu0 %v1018
    %1560 = vmatpush.bf16.msra.mxu0 %v1014
    %1561 = vmatpush.bf16.msra.mxu0 %v1010
    %1562 = vmatpush.bf16.msra.mxu0 %v1006
    %1563 = vmatpush.bf16.msra.mxu0 %v1002
    %1564 = vmatmul.bf16.gmra.mxu0 %v137
    %v1565 = vpop.f32.mrf.mxu0
    %v1566 = vadd.f32 %v1552, %v1565
    %v1567 = vpop.f32.mrf.mxu0
    %v1568 = vadd.f32 %v1554, %v1567
    %1569 = vdwg.mxu0
    %1570 = vmatpush.bf16.msra.mxu0 %v1062
    %1571 = vmatpush.bf16.msra.mxu0 %v1058
    %1572 = vmatpush.bf16.msra.mxu0 %v1054
    %1573 = vmatpush.bf16.msra.mxu0 %v1050
    %1574 = vmatpush.bf16.msra.mxu0 %v1046
    %1575 = vmatpush.bf16.msra.mxu0 %v1042
    %1576 = vmatpush.bf16.msra.mxu0 %v1038
    %1577 = vmatpush.bf16.msra.mxu0 %v1034
    %1578 = vmatmul.bf16.gmra.mxu0 %v138
    %v1579 = vpop.f32.mrf.mxu0
    %v1580 = vadd.f32 %v1566, %v1579
    %v1581 = vpop.f32.mrf.mxu0
    %v1582 = vadd.f32 %v1568, %v1581
    %1583 = vdwg.mxu0
    %1584 = vmatpush.bf16.msra.mxu0 %v1094
    %1585 = vmatpush.bf16.msra.mxu0 %v1090
    %1586 = vmatpush.bf16.msra.mxu0 %v1086
    %1587 = vmatpush.bf16.msra.mxu0 %v1082
    %1588 = vmatpush.bf16.msra.mxu0 %v1078
    %1589 = vmatpush.bf16.msra.mxu0 %v1074
    %1590 = vmatpush.bf16.msra.mxu0 %v1070
    %1591 = vmatpush.bf16.msra.mxu0 %v1066
    %1592 = vmatmul.bf16.gmra.mxu0 %v139
    %v1593 = vpop.f32.mrf.mxu0
    %v1594 = vadd.f32 %v1580, %v1593
    %v1595 = vpop.f32.mrf.mxu0
    %v1596 = vadd.f32 %v1582, %v1595
    %1597 = vdwg.mxu0
    %1598 = vmatpush.bf16.msra.mxu0 %v1126
    %1599 = vmatpush.bf16.msra.mxu0 %v1122
    %1600 = vmatpush.bf16.msra.mxu0 %v1118
    %1601 = vmatpush.bf16.msra.mxu0 %v1114
    %1602 = vmatpush.bf16.msra.mxu0 %v1110
    %1603 = vmatpush.bf16.msra.mxu0 %v1106
    %1604 = vmatpush.bf16.msra.mxu0 %v1102
    %1605 = vmatpush.bf16.msra.mxu0 %v1098
    %1606 = vmatmul.bf16.gmra.mxu0 %v140
    %v1607 = vpop.f32.mrf.mxu0
    %v1608 = vadd.f32 %v1594, %v1607
    %v1609 = vpop.f32.mrf.mxu0
    %v1610 = vadd.f32 %v1596, %v1609
    %1611 = vdwg.mxu0
    %1612 = vmatpush.bf16.msra.mxu0 0
    %1613 = vmatpush.bf16.msra.mxu0 0
    %1614 = vmatpush.bf16.msra.mxu0 0
    %1615 = vmatpush.bf16.msra.mxu0 0
    %1616 = vmatpush.bf16.msra.mxu0 0
    %1617 = vmatpush.bf16.msra.mxu0 0
    %1618 = vmatpush.bf16.msra.mxu0 0
    %1619 = vmatpush.bf16.msra.mxu0 %v1130
    %1620 = vmatmul.bf16.gmra.mxu0 %v1330
    %v1621 = vpop.f32.mrf.mxu0
    %v1622 = vadd.f32 %v1608, %v1621
    %v1623 = vpop.f32.mrf.mxu0
    %v1624 = vadd.f32 %v1610, %v1623
    %1625 = vdwg.mxu0
    %1626 = vmatpush.bf16.msra.mxu0 %v967
    %1627 = vmatpush.bf16.msra.mxu0 %v963
    %1628 = vmatpush.bf16.msra.mxu0 %v959
    %1629 = vmatpush.bf16.msra.mxu0 %v955
    %1630 = vmatpush.bf16.msra.mxu0 %v951
    %1631 = vmatpush.bf16.msra.mxu0 %v947
    %1632 = vmatpush.bf16.msra.mxu0 %v943
    %1633 = vmatpush.bf16.msra.mxu0 %v939
    %1634 = vmatmul.bf16.gmra.mxu0 %v135
    %v1635 = vpop.f32.mrf.mxu0
    %v1636 = vadd.f32 %v343, %v1635
    %v1637 = vpop.f32.mrf.mxu0
    %v1638 = vadd.f32 %v343, %v1637
    %1639 = vdwg.mxu0
    %1640 = vmatpush.bf16.msra.mxu0 %v999
    %1641 = vmatpush.bf16.msra.mxu0 %v995
    %1642 = vmatpush.bf16.msra.mxu0 %v991
    %1643 = vmatpush.bf16.msra.mxu0 %v987
    %1644 = vmatpush.bf16.msra.mxu0 %v983
    %1645 = vmatpush.bf16.msra.mxu0 %v979
    %1646 = vmatpush.bf16.msra.mxu0 %v975
    %1647 = vmatpush.bf16.msra.mxu0 %v971
    %1648 = vmatmul.bf16.gmra.mxu0 %v136
    %v1649 = vpop.f32.mrf.mxu0
    %v1650 = vadd.f32 %v1636, %v1649
    %v1651 = vpop.f32.mrf.mxu0
    %v1652 = vadd.f32 %v1638, %v1651
    %1653 = vdwg.mxu0
    %1654 = vmatpush.bf16.msra.mxu0 %v1031
    %1655 = vmatpush.bf16.msra.mxu0 %v1027
    %1656 = vmatpush.bf16.msra.mxu0 %v1023
    %1657 = vmatpush.bf16.msra.mxu0 %v1019
    %1658 = vmatpush.bf16.msra.mxu0 %v1015
    %1659 = vmatpush.bf16.msra.mxu0 %v1011
    %1660 = vmatpush.bf16.msra.mxu0 %v1007
    %1661 = vmatpush.bf16.msra.mxu0 %v1003
    %1662 = vmatmul.bf16.gmra.mxu0 %v137
    %v1663 = vpop.f32.mrf.mxu0
    %v1664 = vadd.f32 %v1650, %v1663
    %v1665 = vpop.f32.mrf.mxu0
    %v1666 = vadd.f32 %v1652, %v1665
    %1667 = vdwg.mxu0
    %1668 = vmatpush.bf16.msra.mxu0 %v1063
    %1669 = vmatpush.bf16.msra.mxu0 %v1059
    %1670 = vmatpush.bf16.msra.mxu0 %v1055
    %1671 = vmatpush.bf16.msra.mxu0 %v1051
    %1672 = vmatpush.bf16.msra.mxu0 %v1047
    %1673 = vmatpush.bf16.msra.mxu0 %v1043
    %1674 = vmatpush.bf16.msra.mxu0 %v1039
    %1675 = vmatpush.bf16.msra.mxu0 %v1035
    %1676 = vmatmul.bf16.gmra.mxu0 %v138
    %v1677 = vpop.f32.mrf.mxu0
    %v1678 = vadd.f32 %v1664, %v1677
    %v1679 = vpop.f32.mrf.mxu0
    %v1680 = vadd.f32 %v1666, %v1679
    %1681 = vdwg.mxu0
    %1682 = vmatpush.bf16.msra.mxu0 %v1095
    %1683 = vmatpush.bf16.msra.mxu0 %v1091
    %1684 = vmatpush.bf16.msra.mxu0 %v1087
    %1685 = vmatpush.bf16.msra.mxu0 %v1083
    %1686 = vmatpush.bf16.msra.mxu0 %v1079
    %1687 = vmatpush.bf16.msra.mxu0 %v1075
    %1688 = vmatpush.bf16.msra.mxu0 %v1071
    %1689 = vmatpush.bf16.msra.mxu0 %v1067
    %1690 = vmatmul.bf16.gmra.mxu0 %v139
    %v1691 = vpop.f32.mrf.mxu0
    %v1692 = vadd.f32 %v1678, %v1691
    %v1693 = vpop.f32.mrf.mxu0
    %v1694 = vadd.f32 %v1680, %v1693
    %1695 = vdwg.mxu0
    %1696 = vmatpush.bf16.msra.mxu0 %v1127
    %1697 = vmatpush.bf16.msra.mxu0 %v1123
    %1698 = vmatpush.bf16.msra.mxu0 %v1119
    %1699 = vmatpush.bf16.msra.mxu0 %v1115
    %1700 = vmatpush.bf16.msra.mxu0 %v1111
    %1701 = vmatpush.bf16.msra.mxu0 %v1107
    %1702 = vmatpush.bf16.msra.mxu0 %v1103
    %1703 = vmatpush.bf16.msra.mxu0 %v1099
    %1704 = vmatmul.bf16.gmra.mxu0 %v140
    %v1705 = vpop.f32.mrf.mxu0
    %v1706 = vadd.f32 %v1692, %v1705
    %v1707 = vpop.f32.mrf.mxu0
    %v1708 = vadd.f32 %v1694, %v1707
    %1709 = vdwg.mxu0
    %1710 = vmatpush.bf16.msra.mxu0 0
    %1711 = vmatpush.bf16.msra.mxu0 0
    %1712 = vmatpush.bf16.msra.mxu0 0
    %1713 = vmatpush.bf16.msra.mxu0 0
    %1714 = vmatpush.bf16.msra.mxu0 0
    %1715 = vmatpush.bf16.msra.mxu0 0
    %1716 = vmatpush.bf16.msra.mxu0 0
    %1717 = vmatpush.bf16.msra.mxu0 %v1131
    %1718 = vmatmul.bf16.gmra.mxu0 %v1330
    %v1719 = vpop.f32.mrf.mxu0
    %v1720 = vadd.f32 %v1706, %v1719
    %v1721 = vpop.f32.mrf.mxu0
    %v1722 = vadd.f32 %v1708, %v1721
    %1723 = vdwg.mxu0
    %v1724 = vmax.f32 %v1426, 0.0
    %v1725 = vmax.f32 %v1524, 0.0
    %v1726 = vmax.f32 %v1622, 0.0
    %v1727 = vmax.f32 %v1720, 0.0
    %v1728 = vmax.f32 %v1428, 0.0
    %v1729 = vmax.f32 %v1526, 0.0
    %v1730 = vmax.f32 %v1624, 0.0
    %v1731 = vmax.f32 %v1722, 0.0
    %v1732 = vpack.c.bf16 %v1728, %v1724
    %v1733 = vpack.c.bf16 %v1729, %v1725
    %v1734 = vpack.c.bf16 %v1730, %v1726
    %v1735 = vpack.c.bf16 %v1731, %v1727
    %v1736 = vld [vmem:[%s4] sm:$0xff]
    %v1737 = vld [vmem:[%s4 + $0x8] sm:$0xff]
    %v1738 = vld [vmem:[%s4 + $0x10] sm:$0xff]
    %v1739 = vld [vmem:[%s4 + $0x18] sm:$0xff]
    %v1740 = vld [vmem:[%s4 + $0x20] sm:$0xff]
    %v1741 = vld [vmem:[%s4 + $0x28] sm:$0xff]
    %v1742 = vld [vmem:[%s4 + $0x30] sm:$0xff]
    %v1743 = vld [vmem:[%s4 + $0x38] sm:$0xff]
    %v1744 = vld [vmem:[%s4 + $0x40] sm:$0xff]
    %v1745 = vld [vmem:[%s4 + $0x48] sm:$0xff]
    %v1746 = vld [vmem:[%s4 + $0x50] sm:$0xff]
    %v1747 = vld [vmem:[%s4 + $0x58] sm:$0xff]
    %v1748 = vld [vmem:[%s4 + $0x60] sm:$0xff]
    %v1749 = vld [vmem:[%s4 + $0x68] sm:$0xff]
    %v1750 = vld [vmem:[%s4 + $0x70] sm:$0xff]
    %v1751 = vld [vmem:[%s4 + $0x78] sm:$0xff]
    %v1752 = vld [vmem:[%s4 + $0x80] sm:$0xff]
    %v1753 = vld [vmem:[%s4 + $0x88] sm:$0xff]
    %v1754 = vld [vmem:[%s4 + $0x90] sm:$0xff]
    %v1755 = vld [vmem:[%s4 + $0x98] sm:$0xff]
    %v1756 = vld [vmem:[%s4 + $0xa0] sm:$0xff]
    %v1757 = vld [vmem:[%s4 + $0xa8] sm:$0xff]
    %v1758 = vld [vmem:[%s4 + $0xb0] sm:$0xff]
    %v1759 = vld [vmem:[%s4 + $0xb8] sm:$0xff]
    %v1760 = vld [vmem:[%s4 + $0xc0] sm:$0xff]
    %v1761 = vld [vmem:[%s4 + $0xc8] sm:$0xff]
    %v1762 = vld [vmem:[%s4 + $0xd0] sm:$0xff]
    %v1763 = vld [vmem:[%s4 + $0xd8] sm:$0xff]
    %v1764 = vld [vmem:[%s4 + $0xe0] sm:$0xff]
    %v1765 = vld [vmem:[%s4 + $0xe8] sm:$0xff]
    %v1766 = vld [vmem:[%s4 + $0xf0] sm:$0xff]
    %v1767 = vld [vmem:[%s4 + $0xf8] sm:$0xff]
    %v1768 = vld [vmem:[%s4 + $0x100] sm:$0xff]
    %v1769 = vld [vmem:[%s4 + $0x108] sm:$0xff]
    %v1770 = vld [vmem:[%s4 + $0x110] sm:$0xff]
    %v1771 = vld [vmem:[%s4 + $0x118] sm:$0xff]
    %v1772 = vld [vmem:[%s4 + $0x120] sm:$0xff]
    %v1773 = vld [vmem:[%s4 + $0x128] sm:$0xff]
    %v1774 = vld [vmem:[%s4 + $0x130] sm:$0xff]
    %v1775 = vld [vmem:[%s4 + $0x138] sm:$0xff]
    %v1776 = vld [vmem:[%s4 + $0x140] sm:$0xff]
    %v1777 = vld [vmem:[%s4 + $0x148] sm:$0xff]
    %v1778 = vld [vmem:[%s4 + $0x150] sm:$0xff]
    %v1779 = vld [vmem:[%s4 + $0x158] sm:$0xff]
    %v1780 = vld [vmem:[%s4 + $0x160] sm:$0xff]
    %v1781 = vld [vmem:[%s4 + $0x168] sm:$0xff]
    %v1782 = vld [vmem:[%s4 + $0x170] sm:$0xff]
    %v1783 = vld [vmem:[%s4 + $0x178] sm:$0xff]
    %v1784 = vld [vmem:[%s4 + $0x180] sm:$0xff]
    %v1785 = vld [vmem:[%s4 + $0x188] sm:$0xff]
    %v1786 = vld [vmem:[%s4 + $0x190] sm:$0xff]
    %v1787 = vld [vmem:[%s4 + $0x198] sm:$0xff]
    %v1788 = vld [vmem:[%s4 + $0x1a0] sm:$0xff]
    %v1789 = vld [vmem:[%s4 + $0x1a8] sm:$0xff]
    %v1790 = vld [vmem:[%s4 + $0x1b0] sm:$0xff]
    %v1791 = vld [vmem:[%s4 + $0x1b8] sm:$0xff]
    %v1792 = vld [vmem:[%s4 + $0x1c0] sm:$0xff]
    %v1793 = vld [vmem:[%s4 + $0x1c8] sm:$0xff]
    %v1794 = vld [vmem:[%s4 + $0x1d0] sm:$0xff]
    %v1795 = vld [vmem:[%s4 + $0x1d8] sm:$0xff]
    %v1796 = vld [vmem:[%s4 + $0x1e0] sm:$0xff]
    %v1797 = vld [vmem:[%s4 + $0x1e8] sm:$0xff]
    %v1798 = vld [vmem:[%s4 + $0x1f0] sm:$0xff]
    %v1799 = vld [vmem:[%s4 + $0x1f8] sm:$0xff]
    %v1800 = vld [vmem:[%s5] sm:$0x3]
    %v1802 = vperm.slane %v1800, 0
    %v1803 = vperm.slane %v1800, 1
    %v1870 = vunpack.c.l.b16 %v1736
    %v1871 = vunpack.c.h.b16 %v1736
    %v1872 = vunpack.c.l.b16 %v1737
    %v1873 = vunpack.c.h.b16 %v1737
    %v1874 = vunpack.c.l.b16 %v1738
    %v1875 = vunpack.c.h.b16 %v1738
    %v1876 = vunpack.c.l.b16 %v1739
    %v1877 = vunpack.c.h.b16 %v1739
    %v1878 = vunpack.c.l.b16 %v1740
    %v1879 = vunpack.c.h.b16 %v1740
    %v1880 = vunpack.c.l.b16 %v1741
    %v1881 = vunpack.c.h.b16 %v1741
    %v1882 = vunpack.c.l.b16 %v1742
    %v1883 = vunpack.c.h.b16 %v1742
    %v1884 = vunpack.c.l.b16 %v1743
    %v1885 = vunpack.c.h.b16 %v1743
    %v1886 = vunpack.c.l.b16 %v1744
    %v1887 = vunpack.c.h.b16 %v1744
    %v1888 = vunpack.c.l.b16 %v1745
    %v1889 = vunpack.c.h.b16 %v1745
    %v1890 = vunpack.c.l.b16 %v1746
    %v1891 = vunpack.c.h.b16 %v1746
    %v1892 = vunpack.c.l.b16 %v1747
    %v1893 = vunpack.c.h.b16 %v1747
    %v1894 = vunpack.c.l.b16 %v1748
    %v1895 = vunpack.c.h.b16 %v1748
    %v1896 = vunpack.c.l.b16 %v1749
    %v1897 = vunpack.c.h.b16 %v1749
    %v1898 = vunpack.c.l.b16 %v1750
    %v1899 = vunpack.c.h.b16 %v1750
    %v1900 = vunpack.c.l.b16 %v1751
    %v1901 = vunpack.c.h.b16 %v1751
    %v1902 = vunpack.c.l.b16 %v1752
    %v1903 = vunpack.c.h.b16 %v1752
    %v1904 = vunpack.c.l.b16 %v1753
    %v1905 = vunpack.c.h.b16 %v1753
    %v1906 = vunpack.c.l.b16 %v1754
    %v1907 = vunpack.c.h.b16 %v1754
    %v1908 = vunpack.c.l.b16 %v1755
    %v1909 = vunpack.c.h.b16 %v1755
    %v1910 = vunpack.c.l.b16 %v1756
    %v1911 = vunpack.c.h.b16 %v1756
    %v1912 = vunpack.c.l.b16 %v1757
    %v1913 = vunpack.c.h.b16 %v1757
    %v1914 = vunpack.c.l.b16 %v1758
    %v1915 = vunpack.c.h.b16 %v1758
    %v1916 = vunpack.c.l.b16 %v1759
    %v1917 = vunpack.c.h.b16 %v1759
    %v1918 = vunpack.c.l.b16 %v1760
    %v1919 = vunpack.c.h.b16 %v1760
    %v1920 = vunpack.c.l.b16 %v1761
    %v1921 = vunpack.c.h.b16 %v1761
    %v1922 = vunpack.c.l.b16 %v1762
    %v1923 = vunpack.c.h.b16 %v1762
    %v1924 = vunpack.c.l.b16 %v1763
    %v1925 = vunpack.c.h.b16 %v1763
    %v1926 = vunpack.c.l.b16 %v1764
    %v1927 = vunpack.c.h.b16 %v1764
    %v1928 = vunpack.c.l.b16 %v1765
    %v1929 = vunpack.c.h.b16 %v1765
    %v1930 = vunpack.c.l.b16 %v1766
    %v1931 = vunpack.c.h.b16 %v1766
    %v1932 = vunpack.c.l.b16 %v1767
    %v1933 = vunpack.c.h.b16 %v1767
    %v1934 = vunpack.c.l.b16 %v1768
    %v1935 = vunpack.c.h.b16 %v1768
    %v1936 = vunpack.c.l.b16 %v1769
    %v1937 = vunpack.c.h.b16 %v1769
    %v1938 = vunpack.c.l.b16 %v1770
    %v1939 = vunpack.c.h.b16 %v1770
    %v1940 = vunpack.c.l.b16 %v1771
    %v1941 = vunpack.c.h.b16 %v1771
    %v1942 = vunpack.c.l.b16 %v1772
    %v1943 = vunpack.c.h.b16 %v1772
    %v1944 = vunpack.c.l.b16 %v1773
    %v1945 = vunpack.c.h.b16 %v1773
    %v1946 = vunpack.c.l.b16 %v1774
    %v1947 = vunpack.c.h.b16 %v1774
    %v1948 = vunpack.c.l.b16 %v1775
    %v1949 = vunpack.c.h.b16 %v1775
    %v1950 = vunpack.c.l.b16 %v1776
    %v1951 = vunpack.c.h.b16 %v1776
    %v1952 = vunpack.c.l.b16 %v1777
    %v1953 = vunpack.c.h.b16 %v1777
    %v1954 = vunpack.c.l.b16 %v1778
    %v1955 = vunpack.c.h.b16 %v1778
    %v1956 = vunpack.c.l.b16 %v1779
    %v1957 = vunpack.c.h.b16 %v1779
    %v1958 = vunpack.c.l.b16 %v1780
    %v1959 = vunpack.c.h.b16 %v1780
    %v1960 = vunpack.c.l.b16 %v1781
    %v1961 = vunpack.c.h.b16 %v1781
    %v1962 = vunpack.c.l.b16 %v1782
    %v1963 = vunpack.c.h.b16 %v1782
    %v1964 = vunpack.c.l.b16 %v1783
    %v1965 = vunpack.c.h.b16 %v1783
    %v1966 = vunpack.c.l.b16 %v1784
    %v1967 = vunpack.c.h.b16 %v1784
    %v1968 = vunpack.c.l.b16 %v1785
    %v1969 = vunpack.c.h.b16 %v1785
    %v1970 = vunpack.c.l.b16 %v1786
    %v1971 = vunpack.c.h.b16 %v1786
    %v1972 = vunpack.c.l.b16 %v1787
    %v1973 = vunpack.c.h.b16 %v1787
    %v1974 = vunpack.c.l.b16 %v1788
    %v1975 = vunpack.c.h.b16 %v1788
    %v1976 = vunpack.c.l.b16 %v1789
    %v1977 = vunpack.c.h.b16 %v1789
    %v1978 = vunpack.c.l.b16 %v1790
    %v1979 = vunpack.c.h.b16 %v1790
    %v1980 = vunpack.c.l.b16 %v1791
    %v1981 = vunpack.c.h.b16 %v1791
    %v1982 = vunpack.c.l.b16 %v1792
    %v1983 = vunpack.c.h.b16 %v1792
    %v1984 = vunpack.c.l.b16 %v1793
    %v1985 = vunpack.c.h.b16 %v1793
    %v1986 = vunpack.c.l.b16 %v1794
    %v1987 = vunpack.c.h.b16 %v1794
    %v1988 = vunpack.c.l.b16 %v1795
    %v1989 = vunpack.c.h.b16 %v1795
    %v1990 = vunpack.c.l.b16 %v1796
    %v1991 = vunpack.c.h.b16 %v1796
    %v1992 = vunpack.c.l.b16 %v1797
    %v1993 = vunpack.c.h.b16 %v1797
    %v1994 = vunpack.c.l.b16 %v1798
    %v1995 = vunpack.c.h.b16 %v1798
    %v1996 = vunpack.c.l.b16 %v1799
    %v1997 = vunpack.c.h.b16 %v1799
    %v1998 = vpack.c.b16 %v1872, %v1870
    %v1999 = vpack.c.b16 %v1873, %v1871
    %v2000 = vpack.c.b16 %v1876, %v1874
    %v2001 = vpack.c.b16 %v1877, %v1875
    %v2002 = vpack.c.b16 %v1880, %v1878
    %v2003 = vpack.c.b16 %v1881, %v1879
    %v2004 = vpack.c.b16 %v1884, %v1882
    %v2005 = vpack.c.b16 %v1885, %v1883
    %v2006 = vpack.c.b16 %v1888, %v1886
    %v2007 = vpack.c.b16 %v1889, %v1887
    %v2008 = vpack.c.b16 %v1892, %v1890
    %v2009 = vpack.c.b16 %v1893, %v1891
    %v2010 = vpack.c.b16 %v1896, %v1894
    %v2011 = vpack.c.b16 %v1897, %v1895
    %v2012 = vpack.c.b16 %v1900, %v1898
    %v2013 = vpack.c.b16 %v1901, %v1899
    %v2014 = vpack.c.b16 %v1904, %v1902
    %v2015 = vpack.c.b16 %v1905, %v1903
    %v2016 = vpack.c.b16 %v1908, %v1906
    %v2017 = vpack.c.b16 %v1909, %v1907
    %v2018 = vpack.c.b16 %v1912, %v1910
    %v2019 = vpack.c.b16 %v1913, %v1911
    %v2020 = vpack.c.b16 %v1916, %v1914
    %v2021 = vpack.c.b16 %v1917, %v1915
    %v2022 = vpack.c.b16 %v1920, %v1918
    %v2023 = vpack.c.b16 %v1921, %v1919
    %v2024 = vpack.c.b16 %v1924, %v1922
    %v2025 = vpack.c.b16 %v1925, %v1923
    %v2026 = vpack.c.b16 %v1928, %v1926
    %v2027 = vpack.c.b16 %v1929, %v1927
    %v2028 = vpack.c.b16 %v1932, %v1930
    %v2029 = vpack.c.b16 %v1933, %v1931
    %v2030 = vpack.c.b16 %v1936, %v1934
    %v2031 = vpack.c.b16 %v1937, %v1935
    %v2032 = vpack.c.b16 %v1940, %v1938
    %v2033 = vpack.c.b16 %v1941, %v1939
    %v2034 = vpack.c.b16 %v1944, %v1942
    %v2035 = vpack.c.b16 %v1945, %v1943
    %v2036 = vpack.c.b16 %v1948, %v1946
    %v2037 = vpack.c.b16 %v1949, %v1947
    %v2038 = vpack.c.b16 %v1952, %v1950
    %v2039 = vpack.c.b16 %v1953, %v1951
    %v2040 = vpack.c.b16 %v1956, %v1954
    %v2041 = vpack.c.b16 %v1957, %v1955
    %v2042 = vpack.c.b16 %v1960, %v1958
    %v2043 = vpack.c.b16 %v1961, %v1959
    %v2044 = vpack.c.b16 %v1964, %v1962
    %v2045 = vpack.c.b16 %v1965, %v1963
    %v2046 = vpack.c.b16 %v1968, %v1966
    %v2047 = vpack.c.b16 %v1969, %v1967
    %v2048 = vpack.c.b16 %v1972, %v1970
    %v2049 = vpack.c.b16 %v1973, %v1971
    %v2050 = vpack.c.b16 %v1976, %v1974
    %v2051 = vpack.c.b16 %v1977, %v1975
    %v2052 = vpack.c.b16 %v1980, %v1978
    %v2053 = vpack.c.b16 %v1981, %v1979
    %v2054 = vpack.c.b16 %v1984, %v1982
    %v2055 = vpack.c.b16 %v1985, %v1983
    %v2056 = vpack.c.b16 %v1988, %v1986
    %v2057 = vpack.c.b16 %v1989, %v1987
    %v2058 = vpack.c.b16 %v1992, %v1990
    %v2059 = vpack.c.b16 %v1993, %v1991
    %v2060 = vpack.c.b16 %v1996, %v1994
    %v2061 = vpack.c.b16 %v1997, %v1995
    %2126 = vmatpush.bf16.msra.mxu0 %v2012
    %2127 = vmatpush.bf16.msra.mxu0 %v2010
    %2128 = vmatpush.bf16.msra.mxu0 %v2008
    %2129 = vmatpush.bf16.msra.mxu0 %v2006
    %2130 = vmatpush.bf16.msra.mxu0 %v2004
    %2131 = vmatpush.bf16.msra.mxu0 %v2002
    %2132 = vmatpush.bf16.msra.mxu0 %v2000
    %2133 = vmatpush.bf16.msra.mxu0 %v1998
    %2134 = vmatmul.bf16.gmra.mxu0 %v1732
    %v2135 = vpop.f32.mrf.mxu0
    %v2136 = vadd.f32 %v1802, %v2135
    %v2137 = vpop.f32.mrf.mxu0
    %v2138 = vadd.f32 %v1802, %v2137
    %2139 = vdwg.mxu0
    %2140 = vmatpush.bf16.msra.mxu0 %v2028
    %2141 = vmatpush.bf16.msra.mxu0 %v2026
    %2142 = vmatpush.bf16.msra.mxu0 %v2024
    %2143 = vmatpush.bf16.msra.mxu0 %v2022
    %2144 = vmatpush.bf16.msra.mxu0 %v2020
    %2145 = vmatpush.bf16.msra.mxu0 %v2018
    %2146 = vmatpush.bf16.msra.mxu0 %v2016
    %2147 = vmatpush.bf16.msra.mxu0 %v2014
    %2148 = vmatmul.bf16.gmra.mxu0 %v1733
    %v2149 = vpop.f32.mrf.mxu0
    %v2150 = vadd.f32 %v2136, %v2149
    %v2151 = vpop.f32.mrf.mxu0
    %v2152 = vadd.f32 %v2138, %v2151
    %2153 = vdwg.mxu0
    %2154 = vmatpush.bf16.msra.mxu0 %v2044
    %2155 = vmatpush.bf16.msra.mxu0 %v2042
    %2156 = vmatpush.bf16.msra.mxu0 %v2040
    %2157 = vmatpush.bf16.msra.mxu0 %v2038
    %2158 = vmatpush.bf16.msra.mxu0 %v2036
    %2159 = vmatpush.bf16.msra.mxu0 %v2034
    %2160 = vmatpush.bf16.msra.mxu0 %v2032
    %2161 = vmatpush.bf16.msra.mxu0 %v2030
    %2162 = vmatmul.bf16.gmra.mxu0 %v1734
    %v2163 = vpop.f32.mrf.mxu0
    %v2164 = vadd.f32 %v2150, %v2163
    %v2165 = vpop.f32.mrf.mxu0
    %v2166 = vadd.f32 %v2152, %v2165
    %2167 = vdwg.mxu0
    %2168 = vmatpush.bf16.msra.mxu0 %v2060
    %2169 = vmatpush.bf16.msra.mxu0 %v2058
    %2170 = vmatpush.bf16.msra.mxu0 %v2056
    %2171 = vmatpush.bf16.msra.mxu0 %v2054
    %2172 = vmatpush.bf16.msra.mxu0 %v2052
    %2173 = vmatpush.bf16.msra.mxu0 %v2050
    %2174 = vmatpush.bf16.msra.mxu0 %v2048
    %2175 = vmatpush.bf16.msra.mxu0 %v2046
    %2176 = vmatmul.bf16.gmra.mxu0 %v1735
    %v2177 = vpop.f32.mrf.mxu0
    %v2178 = vadd.f32 %v2164, %v2177
    %v2179 = vpop.f32.mrf.mxu0
    %v2180 = vadd.f32 %v2166, %v2179
    %2181 = vdwg.mxu0
    %2182 = vmatpush.bf16.msra.mxu0 %v2013
    %2183 = vmatpush.bf16.msra.mxu0 %v2011
    %2184 = vmatpush.bf16.msra.mxu0 %v2009
    %2185 = vmatpush.bf16.msra.mxu0 %v2007
    %2186 = vmatpush.bf16.msra.mxu0 %v2005
    %2187 = vmatpush.bf16.msra.mxu0 %v2003
    %2188 = vmatpush.bf16.msra.mxu0 %v2001
    %2189 = vmatpush.bf16.msra.mxu0 %v1999
    %2190 = vmatmul.bf16.gmra.mxu0 %v1732
    %v2191 = vpop.f32.mrf.mxu0
    %v2192 = vadd.f32 %v1803, %v2191
    %v2193 = vpop.f32.mrf.mxu0
    %v2194 = vadd.f32 %v1803, %v2193
    %2195 = vdwg.mxu0
    %2196 = vmatpush.bf16.msra.mxu0 %v2029
    %2197 = vmatpush.bf16.msra.mxu0 %v2027
    %2198 = vmatpush.bf16.msra.mxu0 %v2025
    %2199 = vmatpush.bf16.msra.mxu0 %v2023
    %2200 = vmatpush.bf16.msra.mxu0 %v2021
    %2201 = vmatpush.bf16.msra.mxu0 %v2019
    %2202 = vmatpush.bf16.msra.mxu0 %v2017
    %2203 = vmatpush.bf16.msra.mxu0 %v2015
    %2204 = vmatmul.bf16.gmra.mxu0 %v1733
    %v2205 = vpop.f32.mrf.mxu0
    %v2206 = vadd.f32 %v2192, %v2205
    %v2207 = vpop.f32.mrf.mxu0
    %v2208 = vadd.f32 %v2194, %v2207
    %2209 = vdwg.mxu0
    %2210 = vmatpush.bf16.msra.mxu0 %v2045
    %2211 = vmatpush.bf16.msra.mxu0 %v2043
    %2212 = vmatpush.bf16.msra.mxu0 %v2041
    %2213 = vmatpush.bf16.msra.mxu0 %v2039
    %2214 = vmatpush.bf16.msra.mxu0 %v2037
    %2215 = vmatpush.bf16.msra.mxu0 %v2035
    %2216 = vmatpush.bf16.msra.mxu0 %v2033
    %2217 = vmatpush.bf16.msra.mxu0 %v2031
    %2218 = vmatmul.bf16.gmra.mxu0 %v1734
    %v2219 = vpop.f32.mrf.mxu0
    %v2220 = vadd.f32 %v2206, %v2219
    %v2221 = vpop.f32.mrf.mxu0
    %v2222 = vadd.f32 %v2208, %v2221
    %2223 = vdwg.mxu0
    %2224 = vmatpush.bf16.msra.mxu0 %v2061
    %2225 = vmatpush.bf16.msra.mxu0 %v2059
    %2226 = vmatpush.bf16.msra.mxu0 %v2057
    %2227 = vmatpush.bf16.msra.mxu0 %v2055
    %2228 = vmatpush.bf16.msra.mxu0 %v2053
    %2229 = vmatpush.bf16.msra.mxu0 %v2051
    %2230 = vmatpush.bf16.msra.mxu0 %v2049
    %2231 = vmatpush.bf16.msra.mxu0 %v2047
    %2232 = vmatmul.bf16.gmra.mxu0 %v1735
    %v2233 = vpop.f32.mrf.mxu0
    %v2234 = vadd.f32 %v2220, %v2233
    %v2235 = vpop.f32.mrf.mxu0
    %v2236 = vadd.f32 %v2222, %v2235
    %2237 = vdwg.mxu0
    %v2238 = vmax.f32 %v2178, 0.0
    %v2239 = vmax.f32 %v2234, 0.0
    %v2240 = vmax.f32 %v2180, 0.0
    %v2241 = vmax.f32 %v2236, 0.0
    %v2242 = vpack.c.bf16 %v2240, %v2238
    %v2243 = vpack.c.bf16 %v2241, %v2239
    %v2244 = vld [vmem:[%s6] sm:$0xf]
    %v2245 = vld [vmem:[%s6 + $0x4] sm:$0xf]
    %v2246 = vld [vmem:[%s6 + $0x8] sm:$0xf]
    %v2247 = vld [vmem:[%s6 + $0xc] sm:$0xf]
    %v2248 = vld [vmem:[%s6 + $0x10] sm:$0xf]
    %v2249 = vld [vmem:[%s6 + $0x14] sm:$0xf]
    %v2250 = vld [vmem:[%s6 + $0x18] sm:$0xf]
    %v2251 = vld [vmem:[%s6 + $0x1c] sm:$0xf]
    %v2252 = vld [vmem:[%s6 + $0x20] sm:$0xf]
    %v2253 = vld [vmem:[%s6 + $0x24] sm:$0xf]
    %v2254 = vld [vmem:[%s6 + $0x28] sm:$0xf]
    %v2255 = vld [vmem:[%s6 + $0x2c] sm:$0xf]
    %v2256 = vld [vmem:[%s6 + $0x30] sm:$0xf]
    %v2257 = vld [vmem:[%s6 + $0x34] sm:$0xf]
    %v2258 = vld [vmem:[%s6 + $0x38] sm:$0xf]
    %v2259 = vld [vmem:[%s6 + $0x3c] sm:$0xf]
    %v2260 = vld [vmem:[%s6 + $0x40] sm:$0xf]
    %v2261 = vld [vmem:[%s6 + $0x44] sm:$0xf]
    %v2262 = vld [vmem:[%s6 + $0x48] sm:$0xf]
    %v2263 = vld [vmem:[%s6 + $0x4c] sm:$0xf]
    %v2264 = vld [vmem:[%s6 + $0x50] sm:$0xf]
    %v2265 = vld [vmem:[%s6 + $0x54] sm:$0xf]
    %v2266 = vld [vmem:[%s6 + $0x58] sm:$0xf]
    %v2267 = vld [vmem:[%s6 + $0x5c] sm:$0xf]
    %v2268 = vld [vmem:[%s6 + $0x60] sm:$0xf]
    %v2269 = vld [vmem:[%s6 + $0x64] sm:$0xf]
    %v2270 = vld [vmem:[%s6 + $0x68] sm:$0xf]
    %v2271 = vld [vmem:[%s6 + $0x6c] sm:$0xf]
    %v2272 = vld [vmem:[%s6 + $0x70] sm:$0xf]
    %v2273 = vld [vmem:[%s6 + $0x74] sm:$0xf]
    %v2274 = vld [vmem:[%s6 + $0x78] sm:$0xf]
    %v2275 = vld [vmem:[%s6 + $0x7c] sm:$0xf]
    %v2276 = vld [vmem:[%s7] sm:$0x1]
    %v2278 = vperm.slane %v2276, 0
    %v2312 = vunpack.c.l.b16 %v2244
    %v2313 = vunpack.c.l.b16 %v2245
    %v2314 = vunpack.c.l.b16 %v2246
    %v2315 = vunpack.c.l.b16 %v2247
    %v2316 = vunpack.c.l.b16 %v2248
    %v2317 = vunpack.c.l.b16 %v2249
    %v2318 = vunpack.c.l.b16 %v2250
    %v2319 = vunpack.c.l.b16 %v2251
    %v2320 = vunpack.c.l.b16 %v2252
    %v2321 = vunpack.c.l.b16 %v2253
    %v2322 = vunpack.c.l.b16 %v2254
    %v2323 = vunpack.c.l.b16 %v2255
    %v2324 = vunpack.c.l.b16 %v2256
    %v2325 = vunpack.c.l.b16 %v2257
    %v2326 = vunpack.c.l.b16 %v2258
    %v2327 = vunpack.c.l.b16 %v2259
    %v2328 = vunpack.c.l.b16 %v2260
    %v2329 = vunpack.c.l.b16 %v2261
    %v2330 = vunpack.c.l.b16 %v2262
    %v2331 = vunpack.c.l.b16 %v2263
    %v2332 = vunpack.c.l.b16 %v2264
    %v2333 = vunpack.c.l.b16 %v2265
    %v2334 = vunpack.c.l.b16 %v2266
    %v2335 = vunpack.c.l.b16 %v2267
    %v2336 = vunpack.c.l.b16 %v2268
    %v2337 = vunpack.c.l.b16 %v2269
    %v2338 = vunpack.c.l.b16 %v2270
    %v2339 = vunpack.c.l.b16 %v2271
    %v2340 = vunpack.c.l.b16 %v2272
    %v2341 = vunpack.c.l.b16 %v2273
    %v2342 = vunpack.c.l.b16 %v2274
    %v2343 = vunpack.c.l.b16 %v2275
    %v2344 = vpack.c.b16 %v2313, %v2312
    %v2345 = vpack.c.b16 %v2315, %v2314
    %v2346 = vpack.c.b16 %v2317, %v2316
    %v2347 = vpack.c.b16 %v2319, %v2318
    %v2348 = vpack.c.b16 %v2321, %v2320
    %v2349 = vpack.c.b16 %v2323, %v2322
    %v2350 = vpack.c.b16 %v2325, %v2324
    %v2351 = vpack.c.b16 %v2327, %v2326
    %v2352 = vpack.c.b16 %v2329, %v2328
    %v2353 = vpack.c.b16 %v2331, %v2330
    %v2354 = vpack.c.b16 %v2333, %v2332
    %v2355 = vpack.c.b16 %v2335, %v2334
    %v2356 = vpack.c.b16 %v2337, %v2336
    %v2357 = vpack.c.b16 %v2339, %v2338
    %v2358 = vpack.c.b16 %v2341, %v2340
    %v2359 = vpack.c.b16 %v2343, %v2342
    %2376 = vmatpush.bf16.msra.mxu0 %v2351
    %2377 = vmatpush.bf16.msra.mxu0 %v2350
    %2378 = vmatpush.bf16.msra.mxu0 %v2349
    %2379 = vmatpush.bf16.msra.mxu0 %v2348
    %2380 = vmatpush.bf16.msra.mxu0 %v2347
    %2381 = vmatpush.bf16.msra.mxu0 %v2346
    %2382 = vmatpush.bf16.msra.mxu0 %v2345
    %2383 = vmatpush.bf16.msra.mxu0 %v2344
    %2384 = vmatmul.bf16.gmra.mxu0 %v2242
    %v2385 = vpop.f32.mrf.mxu0
    %v2386 = vadd.f32 %v2278, %v2385
    %v2387 = vpop.f32.mrf.mxu0
    %v2388 = vadd.f32 %v2278, %v2387
    %2389 = vdwg.mxu0
    %2390 = vmatpush.bf16.msra.mxu0 %v2359
    %2391 = vmatpush.bf16.msra.mxu0 %v2358
    %2392 = vmatpush.bf16.msra.mxu0 %v2357
    %2393 = vmatpush.bf16.msra.mxu0 %v2356
    %2394 = vmatpush.bf16.msra.mxu0 %v2355
    %2395 = vmatpush.bf16.msra.mxu0 %v2354
    %2396 = vmatpush.bf16.msra.mxu0 %v2353
    %2397 = vmatpush.bf16.msra.mxu0 %v2352
    %2398 = vmatmul.bf16.gmra.mxu0 %v2243
    %v2399 = vpop.f32.mrf.mxu0
    %v2400 = vadd.f32 %v2386, %v2399
    %v2401 = vpop.f32.mrf.mxu0
    %v2402 = vadd.f32 %v2388, %v2401
    %2403 = vdwg.mxu0
    %v2404 = vld [vmem:[%s1] sm:$0xff]
    %v2405 = vld [vmem:[%s1 + $0x8] sm:$0xff]
    %v2406 = vmul.f32 %v2400, 0.5
    %v2407 = vmul.f32 %v2402, 0.5
    %v2408 = vmul.f32 %v2406, 1.442695
    %v2409 = vpow.pop %v2408
    %v2410 = vmul.f32 %v2407, 1.442695
    %v2411 = vpow.pop %v2410
    %2414 = vrot.lane.b32.xlu0 %v2409, 118
    %v2415 = vpop.permute.xlu0 %2414
    %2416 = vrot.lane.b32.xlu0 %v2411, 118
    %v2417 = vpop.permute.xlu0 %2416
    %v2420 = vmul.f32 %v2404, %v2415
    %v2421 = vmul.f32 %v2405, %v2417
    %v2422 = vadd.f32 %v2400, %v2420
    %v2423 = vadd.f32 %v2402, %v2421
    %v2424 = vpack.c.bf16 %v2423, %v2422
    %v2425 = vld [vmem:[%s8] sm:$0xff]
    %v2426 = vld [vmem:[%s8 + $0x8] sm:$0x11]
    %v2427 = vld [vmem:[%s9] sm:$0x3]
    %v2429 = vperm.slane %v2427, 0
    %v2430 = vperm.slane %v2427, 1
    %v2435 = vunpack.c.l.b16 %v2425
    %v2436 = vunpack.c.h.b16 %v2425
    %v2437 = vunpack.c.l.b16 %v2426
    %v2438 = vunpack.c.h.b16 %v2426
    %v2439 = vpack.c.b16 %v2437, %v2435
    %v2440 = vpack.c.b16 %v2438, %v2436
    %vm2441 = vcmask 80896
    %v2443 = vsel %vm2441, %v2424, 0
    %vm2445 = vcmask 1044480
    %v2447 = vsel %vm2445, %v2439, 0
    %v2450 = vsel %vm2445, %v2440, 0
    %2452 = vmatpush.bf16.msra.mxu0 0
    %2453 = vmatpush.bf16.msra.mxu0 0
    %2454 = vmatpush.bf16.msra.mxu0 0
    %2455 = vmatpush.bf16.msra.mxu0 0
    %2456 = vmatpush.bf16.msra.mxu0 0
    %2457 = vmatpush.bf16.msra.mxu0 0
    %2458 = vmatpush.bf16.msra.mxu0 0
    %2459 = vmatpush.bf16.msra.mxu0 %v2447
    %2460 = vmatmul.bf16.gmra.mxu0 %v2443
    %v2461 = vpop.f32.mrf.mxu0
    %v2462 = vadd.f32 %v2429, %v2461
    %v2463 = vpop.f32.mrf.mxu0
    %v2464 = vadd.f32 %v2429, %v2463
    %2465 = vdwg.mxu0
    %2466 = vmatpush.bf16.msra.mxu0 0
    %2467 = vmatpush.bf16.msra.mxu0 0
    %2468 = vmatpush.bf16.msra.mxu0 0
    %2469 = vmatpush.bf16.msra.mxu0 0
    %2470 = vmatpush.bf16.msra.mxu0 0
    %2471 = vmatpush.bf16.msra.mxu0 0
    %2472 = vmatpush.bf16.msra.mxu0 0
    %2473 = vmatpush.bf16.msra.mxu0 %v2450
    %2474 = vmatmul.bf16.gmra.mxu0 %v2443
    %v2475 = vpop.f32.mrf.mxu0
    %v2476 = vadd.f32 %v2430, %v2475
    %v2477 = vpop.f32.mrf.mxu0
    %v2478 = vadd.f32 %v2430, %v2477
    %2479 = vdwg.mxu0
    %v2480 = vmax.f32 %v2462, 0.0
    %v2481 = vmax.f32 %v2476, 0.0
    %v2482 = vmax.f32 %v2464, 0.0
    %v2483 = vmax.f32 %v2478, 0.0
    %v2484 = vpack.c.bf16 %v2482, %v2480
    %v2485 = vpack.c.bf16 %v2483, %v2481
    %v2486 = vld [vmem:[%s10] sm:$0xff]
    %v2487 = vld [vmem:[%s10 + $0x8] sm:$0xff]
    %v2488 = vld [vmem:[%s10 + $0x10] sm:$0xff]
    %v2489 = vld [vmem:[%s10 + $0x18] sm:$0xff]
    %v2490 = vld [vmem:[%s10 + $0x20] sm:$0xff]
    %v2491 = vld [vmem:[%s10 + $0x28] sm:$0xff]
    %v2492 = vld [vmem:[%s10 + $0x30] sm:$0xff]
    %v2493 = vld [vmem:[%s10 + $0x38] sm:$0xff]
    %v2494 = vld [vmem:[%s10 + $0x40] sm:$0xff]
    %v2495 = vld [vmem:[%s10 + $0x48] sm:$0xff]
    %v2496 = vld [vmem:[%s10 + $0x50] sm:$0xff]
    %v2497 = vld [vmem:[%s10 + $0x58] sm:$0xff]
    %v2498 = vld [vmem:[%s10 + $0x60] sm:$0xff]
    %v2499 = vld [vmem:[%s10 + $0x68] sm:$0xff]
    %v2500 = vld [vmem:[%s10 + $0x70] sm:$0xff]
    %v2501 = vld [vmem:[%s10 + $0x78] sm:$0xff]
    %v2502 = vld [vmem:[%s10 + $0x80] sm:$0xff]
    %v2503 = vld [vmem:[%s10 + $0x88] sm:$0xff]
    %v2504 = vld [vmem:[%s10 + $0x90] sm:$0xff]
    %v2505 = vld [vmem:[%s10 + $0x98] sm:$0xff]
    %v2506 = vld [vmem:[%s10 + $0xa0] sm:$0xff]
    %v2507 = vld [vmem:[%s10 + $0xa8] sm:$0xff]
    %v2508 = vld [vmem:[%s10 + $0xb0] sm:$0xff]
    %v2509 = vld [vmem:[%s10 + $0xb8] sm:$0xff]
    %v2510 = vld [vmem:[%s10 + $0xc0] sm:$0xff]
    %v2511 = vld [vmem:[%s10 + $0xc8] sm:$0xff]
    %v2512 = vld [vmem:[%s10 + $0xd0] sm:$0xff]
    %v2513 = vld [vmem:[%s10 + $0xd8] sm:$0xff]
    %v2514 = vld [vmem:[%s10 + $0xe0] sm:$0xff]
    %v2515 = vld [vmem:[%s10 + $0xe8] sm:$0xff]
    %v2516 = vld [vmem:[%s10 + $0xf0] sm:$0xff]
    %v2517 = vld [vmem:[%s10 + $0xf8] sm:$0xff]
    %v2518 = vld [vmem:[%s10 + $0x100] sm:$0xff]
    %v2519 = vld [vmem:[%s10 + $0x108] sm:$0xff]
    %v2520 = vld [vmem:[%s10 + $0x110] sm:$0xff]
    %v2521 = vld [vmem:[%s10 + $0x118] sm:$0xff]
    %v2522 = vld [vmem:[%s10 + $0x120] sm:$0xff]
    %v2523 = vld [vmem:[%s10 + $0x128] sm:$0xff]
    %v2524 = vld [vmem:[%s10 + $0x130] sm:$0xff]
    %v2525 = vld [vmem:[%s10 + $0x138] sm:$0xff]
    %v2526 = vld [vmem:[%s10 + $0x140] sm:$0xff]
    %v2527 = vld [vmem:[%s10 + $0x148] sm:$0xff]
    %v2528 = vld [vmem:[%s10 + $0x150] sm:$0xff]
    %v2529 = vld [vmem:[%s10 + $0x158] sm:$0xff]
    %v2530 = vld [vmem:[%s10 + $0x160] sm:$0xff]
    %v2531 = vld [vmem:[%s10 + $0x168] sm:$0xff]
    %v2532 = vld [vmem:[%s10 + $0x170] sm:$0xff]
    %v2533 = vld [vmem:[%s10 + $0x178] sm:$0xff]
    %v2534 = vld [vmem:[%s10 + $0x180] sm:$0xff]
    %v2535 = vld [vmem:[%s10 + $0x188] sm:$0xff]
    %v2536 = vld [vmem:[%s10 + $0x190] sm:$0xff]
    %v2537 = vld [vmem:[%s10 + $0x198] sm:$0xff]
    %v2538 = vld [vmem:[%s10 + $0x1a0] sm:$0xff]
    %v2539 = vld [vmem:[%s10 + $0x1a8] sm:$0xff]
    %v2540 = vld [vmem:[%s10 + $0x1b0] sm:$0xff]
    %v2541 = vld [vmem:[%s10 + $0x1b8] sm:$0xff]
    %v2542 = vld [vmem:[%s10 + $0x1c0] sm:$0xff]
    %v2543 = vld [vmem:[%s10 + $0x1c8] sm:$0xff]
    %v2544 = vld [vmem:[%s10 + $0x1d0] sm:$0xff]
    %v2545 = vld [vmem:[%s10 + $0x1d8] sm:$0xff]
    %v2546 = vld [vmem:[%s10 + $0x1e0] sm:$0xff]
    %v2547 = vld [vmem:[%s10 + $0x1e8] sm:$0xff]
    %v2548 = vld [vmem:[%s10 + $0x1f0] sm:$0xff]
    %v2549 = vld [vmem:[%s10 + $0x1f8] sm:$0xff]
    %v2550 = vld [vmem:[%s11] sm:$0xf]
    %v2552 = vperm.slane %v2550, 0
    %v2553 = vperm.slane %v2550, 1
    %v2554 = vperm.slane %v2550, 2
    %v2555 = vperm.slane %v2550, 3
    %v2624 = vunpack.c.l.b16 %v2486
    %v2625 = vunpack.c.h.b16 %v2486
    %v2626 = vunpack.c.l.b16 %v2487
    %v2627 = vunpack.c.h.b16 %v2487
    %v2628 = vunpack.c.l.b16 %v2488
    %v2629 = vunpack.c.h.b16 %v2488
    %v2630 = vunpack.c.l.b16 %v2489
    %v2631 = vunpack.c.h.b16 %v2489
    %v2632 = vunpack.c.l.b16 %v2490
    %v2633 = vunpack.c.h.b16 %v2490
    %v2634 = vunpack.c.l.b16 %v2491
    %v2635 = vunpack.c.h.b16 %v2491
    %v2636 = vunpack.c.l.b16 %v2492
    %v2637 = vunpack.c.h.b16 %v2492
    %v2638 = vunpack.c.l.b16 %v2493
    %v2639 = vunpack.c.h.b16 %v2493
    %v2640 = vunpack.c.l.b16 %v2494
    %v2641 = vunpack.c.h.b16 %v2494
    %v2642 = vunpack.c.l.b16 %v2495
    %v2643 = vunpack.c.h.b16 %v2495
    %v2644 = vunpack.c.l.b16 %v2496
    %v2645 = vunpack.c.h.b16 %v2496
    %v2646 = vunpack.c.l.b16 %v2497
    %v2647 = vunpack.c.h.b16 %v2497
    %v2648 = vunpack.c.l.b16 %v2498
    %v2649 = vunpack.c.h.b16 %v2498
    %v2650 = vunpack.c.l.b16 %v2499
    %v2651 = vunpack.c.h.b16 %v2499
    %v2652 = vunpack.c.l.b16 %v2500
    %v2653 = vunpack.c.h.b16 %v2500
    %v2654 = vunpack.c.l.b16 %v2501
    %v2655 = vunpack.c.h.b16 %v2501
    %v2656 = vunpack.c.l.b16 %v2502
    %v2657 = vunpack.c.h.b16 %v2502
    %v2658 = vunpack.c.l.b16 %v2503
    %v2659 = vunpack.c.h.b16 %v2503
    %v2660 = vunpack.c.l.b16 %v2504
    %v2661 = vunpack.c.h.b16 %v2504
    %v2662 = vunpack.c.l.b16 %v2505
    %v2663 = vunpack.c.h.b16 %v2505
    %v2664 = vunpack.c.l.b16 %v2506
    %v2665 = vunpack.c.h.b16 %v2506
    %v2666 = vunpack.c.l.b16 %v2507
    %v2667 = vunpack.c.h.b16 %v2507
    %v2668 = vunpack.c.l.b16 %v2508
    %v2669 = vunpack.c.h.b16 %v2508
    %v2670 = vunpack.c.l.b16 %v2509
    %v2671 = vunpack.c.h.b16 %v2509
    %v2672 = vunpack.c.l.b16 %v2510
    %v2673 = vunpack.c.h.b16 %v2510
    %v2674 = vunpack.c.l.b16 %v2511
    %v2675 = vunpack.c.h.b16 %v2511
    %v2676 = vunpack.c.l.b16 %v2512
    %v2677 = vunpack.c.h.b16 %v2512
    %v2678 = vunpack.c.l.b16 %v2513
    %v2679 = vunpack.c.h.b16 %v2513
    %v2680 = vunpack.c.l.b16 %v2514
    %v2681 = vunpack.c.h.b16 %v2514
    %v2682 = vunpack.c.l.b16 %v2515
    %v2683 = vunpack.c.h.b16 %v2515
    %v2684 = vunpack.c.l.b16 %v2516
    %v2685 = vunpack.c.h.b16 %v2516
    %v2686 = vunpack.c.l.b16 %v2517
    %v2687 = vunpack.c.h.b16 %v2517
    %v2688 = vunpack.c.l.b16 %v2518
    %v2689 = vunpack.c.h.b16 %v2518
    %v2690 = vunpack.c.l.b16 %v2519
    %v2691 = vunpack.c.h.b16 %v2519
    %v2692 = vunpack.c.l.b16 %v2520
    %v2693 = vunpack.c.h.b16 %v2520
    %v2694 = vunpack.c.l.b16 %v2521
    %v2695 = vunpack.c.h.b16 %v2521
    %v2696 = vunpack.c.l.b16 %v2522
    %v2697 = vunpack.c.h.b16 %v2522
    %v2698 = vunpack.c.l.b16 %v2523
    %v2699 = vunpack.c.h.b16 %v2523
    %v2700 = vunpack.c.l.b16 %v2524
    %v2701 = vunpack.c.h.b16 %v2524
    %v2702 = vunpack.c.l.b16 %v2525
    %v2703 = vunpack.c.h.b16 %v2525
    %v2704 = vunpack.c.l.b16 %v2526
    %v2705 = vunpack.c.h.b16 %v2526
    %v2706 = vunpack.c.l.b16 %v2527
    %v2707 = vunpack.c.h.b16 %v2527
    %v2708 = vunpack.c.l.b16 %v2528
    %v2709 = vunpack.c.h.b16 %v2528
    %v2710 = vunpack.c.l.b16 %v2529
    %v2711 = vunpack.c.h.b16 %v2529
    %v2712 = vunpack.c.l.b16 %v2530
    %v2713 = vunpack.c.h.b16 %v2530
    %v2714 = vunpack.c.l.b16 %v2531
    %v2715 = vunpack.c.h.b16 %v2531
    %v2716 = vunpack.c.l.b16 %v2532
    %v2717 = vunpack.c.h.b16 %v2532
    %v2718 = vunpack.c.l.b16 %v2533
    %v2719 = vunpack.c.h.b16 %v2533
    %v2720 = vunpack.c.l.b16 %v2534
    %v2721 = vunpack.c.h.b16 %v2534
    %v2722 = vunpack.c.l.b16 %v2535
    %v2723 = vunpack.c.h.b16 %v2535
    %v2724 = vunpack.c.l.b16 %v2536
    %v2725 = vunpack.c.h.b16 %v2536
    %v2726 = vunpack.c.l.b16 %v2537
    %v2727 = vunpack.c.h.b16 %v2537
    %v2728 = vunpack.c.l.b16 %v2538
    %v2729 = vunpack.c.h.b16 %v2538
    %v2730 = vunpack.c.l.b16 %v2539
    %v2731 = vunpack.c.h.b16 %v2539
    %v2732 = vunpack.c.l.b16 %v2540
    %v2733 = vunpack.c.h.b16 %v2540
    %v2734 = vunpack.c.l.b16 %v2541
    %v2735 = vunpack.c.h.b16 %v2541
    %v2736 = vunpack.c.l.b16 %v2542
    %v2737 = vunpack.c.h.b16 %v2542
    %v2738 = vunpack.c.l.b16 %v2543
    %v2739 = vunpack.c.h.b16 %v2543
    %v2740 = vunpack.c.l.b16 %v2544
    %v2741 = vunpack.c.h.b16 %v2544
    %v2742 = vunpack.c.l.b16 %v2545
    %v2743 = vunpack.c.h.b16 %v2545
    %v2744 = vunpack.c.l.b16 %v2546
    %v2745 = vunpack.c.h.b16 %v2546
    %v2746 = vunpack.c.l.b16 %v2547
    %v2747 = vunpack.c.h.b16 %v2547
    %v2748 = vunpack.c.l.b16 %v2548
    %v2749 = vunpack.c.h.b16 %v2548
    %v2750 = vunpack.c.l.b16 %v2549
    %v2751 = vunpack.c.h.b16 %v2549
    %v2752 = vpack.c.b16 %v2628, %v2624
    %v2753 = vpack.c.b16 %v2629, %v2625
    %v2754 = vpack.c.b16 %v2630, %v2626
    %v2755 = vpack.c.b16 %v2631, %v2627
    %v2756 = vpack.c.b16 %v2636, %v2632
    %v2757 = vpack.c.b16 %v2637, %v2633
    %v2758 = vpack.c.b16 %v2638, %v2634
    %v2759 = vpack.c.b16 %v2639, %v2635
    %v2760 = vpack.c.b16 %v2644, %v2640
    %v2761 = vpack.c.b16 %v2645, %v2641
    %v2762 = vpack.c.b16 %v2646, %v2642
    %v2763 = vpack.c.b16 %v2647, %v2643
    %v2764 = vpack.c.b16 %v2652, %v2648
    %v2765 = vpack.c.b16 %v2653, %v2649
    %v2766 = vpack.c.b16 %v2654, %v2650
    %v2767 = vpack.c.b16 %v2655, %v2651
    %v2768 = vpack.c.b16 %v2660, %v2656
    %v2769 = vpack.c.b16 %v2661, %v2657
    %v2770 = vpack.c.b16 %v2662, %v2658
    %v2771 = vpack.c.b16 %v2663, %v2659
    %v2772 = vpack.c.b16 %v2668, %v2664
    %v2773 = vpack.c.b16 %v2669, %v2665
    %v2774 = vpack.c.b16 %v2670, %v2666
    %v2775 = vpack.c.b16 %v2671, %v2667
    %v2776 = vpack.c.b16 %v2676, %v2672
    %v2777 = vpack.c.b16 %v2677, %v2673
    %v2778 = vpack.c.b16 %v2678, %v2674
    %v2779 = vpack.c.b16 %v2679, %v2675
    %v2780 = vpack.c.b16 %v2684, %v2680
    %v2781 = vpack.c.b16 %v2685, %v2681
    %v2782 = vpack.c.b16 %v2686, %v2682
    %v2783 = vpack.c.b16 %v2687, %v2683
    %v2784 = vpack.c.b16 %v2692, %v2688
    %v2785 = vpack.c.b16 %v2693, %v2689
    %v2786 = vpack.c.b16 %v2694, %v2690
    %v2787 = vpack.c.b16 %v2695, %v2691
    %v2788 = vpack.c.b16 %v2700, %v2696
    %v2789 = vpack.c.b16 %v2701, %v2697
    %v2790 = vpack.c.b16 %v2702, %v2698
    %v2791 = vpack.c.b16 %v2703, %v2699
    %v2792 = vpack.c.b16 %v2708, %v2704
    %v2793 = vpack.c.b16 %v2709, %v2705
    %v2794 = vpack.c.b16 %v2710, %v2706
    %v2795 = vpack.c.b16 %v2711, %v2707
    %v2796 = vpack.c.b16 %v2716, %v2712
    %v2797 = vpack.c.b16 %v2717, %v2713
    %v2798 = vpack.c.b16 %v2718, %v2714
    %v2799 = vpack.c.b16 %v2719, %v2715
    %v2800 = vpack.c.b16 %v2724, %v2720
    %v2801 = vpack.c.b16 %v2725, %v2721
    %v2802 = vpack.c.b16 %v2726, %v2722
    %v2803 = vpack.c.b16 %v2727, %v2723
    %v2804 = vpack.c.b16 %v2732, %v2728
    %v2805 = vpack.c.b16 %v2733, %v2729
    %v2806 = vpack.c.b16 %v2734, %v2730
    %v2807 = vpack.c.b16 %v2735, %v2731
    %v2808 = vpack.c.b16 %v2740, %v2736
    %v2809 = vpack.c.b16 %v2741, %v2737
    %v2810 = vpack.c.b16 %v2742, %v2738
    %v2811 = vpack.c.b16 %v2743, %v2739
    %v2812 = vpack.c.b16 %v2748, %v2744
    %v2813 = vpack.c.b16 %v2749, %v2745
    %v2814 = vpack.c.b16 %v2750, %v2746
    %v2815 = vpack.c.b16 %v2751, %v2747
    %2880 = vmatpush.bf16.msra.mxu0 %v2780
    %2881 = vmatpush.bf16.msra.mxu0 %v2776
    %2882 = vmatpush.bf16.msra.mxu0 %v2772
    %2883 = vmatpush.bf16.msra.mxu0 %v2768
    %2884 = vmatpush.bf16.msra.mxu0 %v2764
    %2885 = vmatpush.bf16.msra.mxu0 %v2760
    %2886 = vmatpush.bf16.msra.mxu0 %v2756
    %2887 = vmatpush.bf16.msra.mxu0 %v2752
    %2888 = vmatmul.bf16.gmra.mxu0 %v2484
    %v2889 = vpop.f32.mrf.mxu0
    %v2890 = vadd.f32 %v2552, %v2889
    %v2891 = vpop.f32.mrf.mxu0
    %v2892 = vadd.f32 %v2552, %v2891
    %2893 = vdwg.mxu0
    %2894 = vmatpush.bf16.msra.mxu0 %v2812
    %2895 = vmatpush.bf16.msra.mxu0 %v2808
    %2896 = vmatpush.bf16.msra.mxu0 %v2804
    %2897 = vmatpush.bf16.msra.mxu0 %v2800
    %2898 = vmatpush.bf16.msra.mxu0 %v2796
    %2899 = vmatpush.bf16.msra.mxu0 %v2792
    %2900 = vmatpush.bf16.msra.mxu0 %v2788
    %2901 = vmatpush.bf16.msra.mxu0 %v2784
    %2902 = vmatmul.bf16.gmra.mxu0 %v2485
    %v2903 = vpop.f32.mrf.mxu0
    %v2904 = vadd.f32 %v2890, %v2903
    %v2905 = vpop.f32.mrf.mxu0
    %v2906 = vadd.f32 %v2892, %v2905
    %2907 = vdwg.mxu0
    %2908 = vmatpush.bf16.msra.mxu0 %v2781
    %2909 = vmatpush.bf16.msra.mxu0 %v2777
    %2910 = vmatpush.bf16.msra.mxu0 %v2773
    %2911 = vmatpush.bf16.msra.mxu0 %v2769
    %2912 = vmatpush.bf16.msra.mxu0 %v2765
    %2913 = vmatpush.bf16.msra.mxu0 %v2761
    %2914 = vmatpush.bf16.msra.mxu0 %v2757
    %2915 = vmatpush.bf16.msra.mxu0 %v2753
    %2916 = vmatmul.bf16.gmra.mxu0 %v2484
    %v2917 = vpop.f32.mrf.mxu0
    %v2918 = vadd.f32 %v2553, %v2917
    %v2919 = vpop.f32.mrf.mxu0
    %v2920 = vadd.f32 %v2553, %v2919
    %2921 = vdwg.mxu0
    %2922 = vmatpush.bf16.msra.mxu0 %v2813
    %2923 = vmatpush.bf16.msra.mxu0 %v2809
    %2924 = vmatpush.bf16.msra.mxu0 %v2805
    %2925 = vmatpush.bf16.msra.mxu0 %v2801
    %2926 = vmatpush.bf16.msra.mxu0 %v2797
    %2927 = vmatpush.bf16.msra.mxu0 %v2793
    %2928 = vmatpush.bf16.msra.mxu0 %v2789
    %2929 = vmatpush.bf16.msra.mxu0 %v2785
    %2930 = vmatmul.bf16.gmra.mxu0 %v2485
    %v2931 = vpop.f32.mrf.mxu0
    %v2932 = vadd.f32 %v2918, %v2931
    %v2933 = vpop.f32.mrf.mxu0
    %v2934 = vadd.f32 %v2920, %v2933
    %2935 = vdwg.mxu0
    %2936 = vmatpush.bf16.msra.mxu0 %v2782
    %2937 = vmatpush.bf16.msra.mxu0 %v2778
    %2938 = vmatpush.bf16.msra.mxu0 %v2774
    %2939 = vmatpush.bf16.msra.mxu0 %v2770
    %2940 = vmatpush.bf16.msra.mxu0 %v2766
    %2941 = vmatpush.bf16.msra.mxu0 %v2762
    %2942 = vmatpush.bf16.msra.mxu0 %v2758
    %2943 = vmatpush.bf16.msra.mxu0 %v2754
    %2944 = vmatmul.bf16.gmra.mxu0 %v2484
    %v2945 = vpop.f32.mrf.mxu0
    %v2946 = vadd.f32 %v2554, %v2945
    %v2947 = vpop.f32.mrf.mxu0
    %v2948 = vadd.f32 %v2554, %v2947
    %2949 = vdwg.mxu0
    %2950 = vmatpush.bf16.msra.mxu0 %v2814
    %2951 = vmatpush.bf16.msra.mxu0 %v2810
    %2952 = vmatpush.bf16.msra.mxu0 %v2806
    %2953 = vmatpush.bf16.msra.mxu0 %v2802
    %2954 = vmatpush.bf16.msra.mxu0 %v2798
    %2955 = vmatpush.bf16.msra.mxu0 %v2794
    %2956 = vmatpush.bf16.msra.mxu0 %v2790
    %2957 = vmatpush.bf16.msra.mxu0 %v2786
    %2958 = vmatmul.bf16.gmra.mxu0 %v2485
    %v2959 = vpop.f32.mrf.mxu0
    %v2960 = vadd.f32 %v2946, %v2959
    %v2961 = vpop.f32.mrf.mxu0
    %v2962 = vadd.f32 %v2948, %v2961
    %2963 = vdwg.mxu0
    %2964 = vmatpush.bf16.msra.mxu0 %v2783
    %2965 = vmatpush.bf16.msra.mxu0 %v2779
    %2966 = vmatpush.bf16.msra.mxu0 %v2775
    %2967 = vmatpush.bf16.msra.mxu0 %v2771
    %2968 = vmatpush.bf16.msra.mxu0 %v2767
    %2969 = vmatpush.bf16.msra.mxu0 %v2763
    %2970 = vmatpush.bf16.msra.mxu0 %v2759
    %2971 = vmatpush.bf16.msra.mxu0 %v2755
    %2972 = vmatmul.bf16.gmra.mxu0 %v2484
    %v2973 = vpop.f32.mrf.mxu0
    %v2974 = vadd.f32 %v2555, %v2973
    %v2975 = vpop.f32.mrf.mxu0
    %v2976 = vadd.f32 %v2555, %v2975
    %2977 = vdwg.mxu0
    %2978 = vmatpush.bf16.msra.mxu0 %v2815
    %2979 = vmatpush.bf16.msra.mxu0 %v2811
    %2980 = vmatpush.bf16.msra.mxu0 %v2807
    %2981 = vmatpush.bf16.msra.mxu0 %v2803
    %2982 = vmatpush.bf16.msra.mxu0 %v2799
    %2983 = vmatpush.bf16.msra.mxu0 %v2795
    %2984 = vmatpush.bf16.msra.mxu0 %v2791
    %2985 = vmatpush.bf16.msra.mxu0 %v2787
    %2986 = vmatmul.bf16.gmra.mxu0 %v2485
    %v2987 = vpop.f32.mrf.mxu0
    %v2988 = vadd.f32 %v2974, %v2987
    %v2989 = vpop.f32.mrf.mxu0
    %v2990 = vadd.f32 %v2976, %v2989
    %2991 = vdwg.mxu0
    %v2992 = vmax.f32 %v2904, 0.0
    %v2993 = vmax.f32 %v2932, 0.0
    %v2994 = vmax.f32 %v2960, 0.0
    %v2995 = vmax.f32 %v2988, 0.0
    %v2996 = vmax.f32 %v2906, 0.0
    %v2997 = vmax.f32 %v2934, 0.0
    %v2998 = vmax.f32 %v2962, 0.0
    %v2999 = vmax.f32 %v2990, 0.0
    %v3000 = vpack.c.bf16 %v2996, %v2992
    %v3001 = vpack.c.bf16 %v2997, %v2993
    %v3002 = vpack.c.bf16 %v2998, %v2994
    %v3003 = vpack.c.bf16 %v2999, %v2995
    %v3004 = vld [vmem:[%s12] sm:$0xff]
    %v3005 = vld [vmem:[%s12 + $0x8] sm:$0xff]
    %v3006 = vld [vmem:[%s12 + $0x10] sm:$0xff]
    %v3007 = vld [vmem:[%s12 + $0x18] sm:$0xf]
    %v3008 = vld [vmem:[%s12 + $0x1c] sm:$0xff]
    %v3009 = vld [vmem:[%s12 + $0x24] sm:$0xff]
    %v3010 = vld [vmem:[%s12 + $0x2c] sm:$0xff]
    %v3011 = vld [vmem:[%s12 + $0x34] sm:$0xf]
    %v3012 = vld [vmem:[%s12 + $0x38] sm:$0xff]
    %v3013 = vld [vmem:[%s12 + $0x40] sm:$0xff]
    %v3014 = vld [vmem:[%s12 + $0x48] sm:$0xff]
    %v3015 = vld [vmem:[%s12 + $0x50] sm:$0xf]
    %v3016 = vld [vmem:[%s12 + $0x54] sm:$0xff]
    %v3017 = vld [vmem:[%s12 + $0x5c] sm:$0xff]
    %v3018 = vld [vmem:[%s12 + $0x64] sm:$0xff]
    %v3019 = vld [vmem:[%s12 + $0x6c] sm:$0xf]
    %v3020 = vld [vmem:[%s12 + $0x70] sm:$0xff]
    %v3021 = vld [vmem:[%s12 + $0x78] sm:$0xff]
    %v3022 = vld [vmem:[%s12 + $0x80] sm:$0xff]
    %v3023 = vld [vmem:[%s12 + $0x88] sm:$0xf]
    %v3024 = vld [vmem:[%s12 + $0x8c] sm:$0xff]
    %v3025 = vld [vmem:[%s12 + $0x94] sm:$0xff]
    %v3026 = vld [vmem:[%s12 + $0x9c] sm:$0xff]
    %v3027 = vld [vmem:[%s12 + $0xa4] sm:$0xf]
    %v3028 = vld [vmem:[%s12 + $0xa8] sm:$0xff]
    %v3029 = vld [vmem:[%s12 + $0xb0] sm:$0xff]
    %v3030 = vld [vmem:[%s12 + $0xb8] sm:$0xff]
    %v3031 = vld [vmem:[%s12 + $0xc0] sm:$0xf]
    %v3032 = vld [vmem:[%s12 + $0xc4] sm:$0xff]
    %v3033 = vld [vmem:[%s12 + $0xcc] sm:$0xff]
    %v3034 = vld [vmem:[%s12 + $0xd4] sm:$0xff]
    %v3035 = vld [vmem:[%s12 + $0xdc] sm:$0xf]
    %v3036 = vld [vmem:[%s12 + $0xe0] sm:$0xff]
    %v3037 = vld [vmem:[%s12 + $0xe8] sm:$0xff]
    %v3038 = vld [vmem:[%s12 + $0xf0] sm:$0xff]
    %v3039 = vld [vmem:[%s12 + $0xf8] sm:$0xf]
    %v3040 = vld [vmem:[%s12 + $0xfc] sm:$0xff]
    %v3041 = vld [vmem:[%s12 + $0x104] sm:$0xff]
    %v3042 = vld [vmem:[%s12 + $0x10c] sm:$0xff]
    %v3043 = vld [vmem:[%s12 + $0x114] sm:$0xf]
    %v3044 = vld [vmem:[%s12 + $0x118] sm:$0xff]
    %v3045 = vld [vmem:[%s12 + $0x120] sm:$0xff]
    %v3046 = vld [vmem:[%s12 + $0x128] sm:$0xff]
    %v3047 = vld [vmem:[%s12 + $0x130] sm:$0xf]
    %v3048 = vld [vmem:[%s12 + $0x134] sm:$0xff]
    %v3049 = vld [vmem:[%s12 + $0x13c] sm:$0xff]
    %v3050 = vld [vmem:[%s12 + $0x144] sm:$0xff]
    %v3051 = vld [vmem:[%s12 + $0x14c] sm:$0xf]
    %v3052 = vld [vmem:[%s12 + $0x150] sm:$0xff]
    %v3053 = vld [vmem:[%s12 + $0x158] sm:$0xff]
    %v3054 = vld [vmem:[%s12 + $0x160] sm:$0xff]
    %v3055 = vld [vmem:[%s12 + $0x168] sm:$0xf]
    %v3056 = vld [vmem:[%s12 + $0x16c] sm:$0xff]
    %v3057 = vld [vmem:[%s12 + $0x174] sm:$0xff]
    %v3058 = vld [vmem:[%s12 + $0x17c] sm:$0xff]
    %v3059 = vld [vmem:[%s12 + $0x184] sm:$0xf]
    %v3060 = vld [vmem:[%s12 + $0x188] sm:$0xff]
    %v3061 = vld [vmem:[%s12 + $0x190] sm:$0xff]
    %v3062 = vld [vmem:[%s12 + $0x198] sm:$0xff]
    %v3063 = vld [vmem:[%s12 + $0x1a0] sm:$0xf]
    %v3064 = vld [vmem:[%s12 + $0x1a4] sm:$0xff]
    %v3065 = vld [vmem:[%s12 + $0x1ac] sm:$0xff]
    %v3066 = vld [vmem:[%s12 + $0x1b4] sm:$0xff]
    %v3067 = vld [vmem:[%s12 + $0x1bc] sm:$0xf]
    %v3068 = vld [vmem:[%s12 + $0x1c0] sm:$0xff]
    %v3069 = vld [vmem:[%s12 + $0x1c8] sm:$0xff]
    %v3070 = vld [vmem:[%s12 + $0x1d0] sm:$0xff]
    %v3071 = vld [vmem:[%s12 + $0x1d8] sm:$0xf]
    %v3072 = vld [vmem:[%s12 + $0x1dc] sm:$0xff]
    %v3073 = vld [vmem:[%s12 + $0x1e4] sm:$0xff]
    %v3074 = vld [vmem:[%s12 + $0x1ec] sm:$0xff]
    %v3075 = vld [vmem:[%s12 + $0x1f4] sm:$0xf]
    %v3076 = vld [vmem:[%s12 + $0x1f8] sm:$0xff]
    %v3077 = vld [vmem:[%s12 + $0x200] sm:$0xff]
    %v3078 = vld [vmem:[%s12 + $0x208] sm:$0xff]
    %v3079 = vld [vmem:[%s12 + $0x210] sm:$0xf]
    %v3080 = vld [vmem:[%s12 + $0x214] sm:$0xff]
    %v3081 = vld [vmem:[%s12 + $0x21c] sm:$0xff]
    %v3082 = vld [vmem:[%s12 + $0x224] sm:$0xff]
    %v3083 = vld [vmem:[%s12 + $0x22c] sm:$0xf]
    %v3084 = vld [vmem:[%s12 + $0x230] sm:$0xff]
    %v3085 = vld [vmem:[%s12 + $0x238] sm:$0xff]
    %v3086 = vld [vmem:[%s12 + $0x240] sm:$0xff]
    %v3087 = vld [vmem:[%s12 + $0x248] sm:$0xf]
    %v3088 = vld [vmem:[%s12 + $0x24c] sm:$0xff]
    %v3089 = vld [vmem:[%s12 + $0x254] sm:$0xff]
    %v3090 = vld [vmem:[%s12 + $0x25c] sm:$0xff]
    %v3091 = vld [vmem:[%s12 + $0x264] sm:$0xf]
    %v3092 = vld [vmem:[%s12 + $0x268] sm:$0xff]
    %v3093 = vld [vmem:[%s12 + $0x270] sm:$0xff]
    %v3094 = vld [vmem:[%s12 + $0x278] sm:$0xff]
    %v3095 = vld [vmem:[%s12 + $0x280] sm:$0xf]
    %v3096 = vld [vmem:[%s12 + $0x284] sm:$0xff]
    %v3097 = vld [vmem:[%s12 + $0x28c] sm:$0xff]
    %v3098 = vld [vmem:[%s12 + $0x294] sm:$0xff]
    %v3099 = vld [vmem:[%s12 + $0x29c] sm:$0xf]
    %v3100 = vld [vmem:[%s12 + $0x2a0] sm:$0xff]
    %v3101 = vld [vmem:[%s12 + $0x2a8] sm:$0xff]
    %v3102 = vld [vmem:[%s12 + $0x2b0] sm:$0xff]
    %v3103 = vld [vmem:[%s12 + $0x2b8] sm:$0xf]
    %v3104 = vld [vmem:[%s12 + $0x2bc] sm:$0xff]
    %v3105 = vld [vmem:[%s12 + $0x2c4] sm:$0xff]
    %v3106 = vld [vmem:[%s12 + $0x2cc] sm:$0xff]
    %v3107 = vld [vmem:[%s12 + $0x2d4] sm:$0xf]
    %v3108 = vld [vmem:[%s12 + $0x2d8] sm:$0xff]
    %v3109 = vld [vmem:[%s12 + $0x2e0] sm:$0xff]
    %v3110 = vld [vmem:[%s12 + $0x2e8] sm:$0xff]
    %v3111 = vld [vmem:[%s12 + $0x2f0] sm:$0xf]
    %v3112 = vld [vmem:[%s12 + $0x2f4] sm:$0xff]
    %v3113 = vld [vmem:[%s12 + $0x2fc] sm:$0xff]
    %v3114 = vld [vmem:[%s12 + $0x304] sm:$0xff]
    %v3115 = vld [vmem:[%s12 + $0x30c] sm:$0xf]
    %v3116 = vld [vmem:[%s12 + $0x310] sm:$0xff]
    %v3117 = vld [vmem:[%s12 + $0x318] sm:$0xff]
    %v3118 = vld [vmem:[%s12 + $0x320] sm:$0xff]
    %v3119 = vld [vmem:[%s12 + $0x328] sm:$0xf]
    %v3120 = vld [vmem:[%s12 + $0x32c] sm:$0xff]
    %v3121 = vld [vmem:[%s12 + $0x334] sm:$0xff]
    %v3122 = vld [vmem:[%s12 + $0x33c] sm:$0xff]
    %v3123 = vld [vmem:[%s12 + $0x344] sm:$0xf]
    %v3124 = vld [vmem:[%s12 + $0x348] sm:$0xff]
    %v3125 = vld [vmem:[%s12 + $0x350] sm:$0xff]
    %v3126 = vld [vmem:[%s12 + $0x358] sm:$0xff]
    %v3127 = vld [vmem:[%s12 + $0x360] sm:$0xf]
    %v3128 = vld [vmem:[%s12 + $0x364] sm:$0xff]
    %v3129 = vld [vmem:[%s12 + $0x36c] sm:$0xff]
    %v3130 = vld [vmem:[%s12 + $0x374] sm:$0xff]
    %v3131 = vld [vmem:[%s12 + $0x37c] sm:$0xf]
    %v3132 = vld [vmem:[%s12 + $0x380] sm:$0xff]
    %v3133 = vld [vmem:[%s12 + $0x388] sm:$0xff]
    %v3134 = vld [vmem:[%s12 + $0x390] sm:$0xff]
    %v3135 = vld [vmem:[%s12 + $0x398] sm:$0xf]
    %v3136 = vld [vmem:[%s12 + $0x39c] sm:$0xff]
    %v3137 = vld [vmem:[%s12 + $0x3a4] sm:$0xff]
    %v3138 = vld [vmem:[%s12 + $0x3ac] sm:$0xff]
    %v3139 = vld [vmem:[%s12 + $0x3b4] sm:$0xf]
    %v3140 = vld [vmem:[%s12 + $0x3b8] sm:$0xff]
    %v3141 = vld [vmem:[%s12 + $0x3c0] sm:$0xff]
    %v3142 = vld [vmem:[%s12 + $0x3c8] sm:$0xff]
    %v3143 = vld [vmem:[%s12 + $0x3d0] sm:$0xf]
    %v3144 = vld [vmem:[%s12 + $0x3d4] sm:$0xff]
    %v3145 = vld [vmem:[%s12 + $0x3dc] sm:$0xff]
    %v3146 = vld [vmem:[%s12 + $0x3e4] sm:$0xff]
    %v3147 = vld [vmem:[%s12 + $0x3ec] sm:$0xf]
    %v3148 = vld [vmem:[%s12 + $0x3f0] sm:$0xff]
    %v3149 = vld [vmem:[%s12 + $0x3f8] sm:$0xff]
    %v3150 = vld [vmem:[%s12 + $0x400] sm:$0xff]
    %v3151 = vld [vmem:[%s12 + $0x408] sm:$0xf]
    %v3152 = vld [vmem:[%s12 + $0x40c] sm:$0xff]
    %v3153 = vld [vmem:[%s12 + $0x414] sm:$0xff]
    %v3154 = vld [vmem:[%s12 + $0x41c] sm:$0xff]
    %v3155 = vld [vmem:[%s12 + $0x424] sm:$0xf]
    %v3156 = vld [vmem:[%s12 + $0x428] sm:$0xff]
    %v3157 = vld [vmem:[%s12 + $0x430] sm:$0xff]
    %v3158 = vld [vmem:[%s12 + $0x438] sm:$0xff]
    %v3159 = vld [vmem:[%s12 + $0x440] sm:$0xf]
    %v3160 = vld [vmem:[%s12 + $0x444] sm:$0xff]
    %v3161 = vld [vmem:[%s12 + $0x44c] sm:$0xff]
    %v3162 = vld [vmem:[%s12 + $0x454] sm:$0xff]
    %v3163 = vld [vmem:[%s12 + $0x45c] sm:$0xf]
    %v3164 = vld [vmem:[%s12 + $0x460] sm:$0xff]
    %v3165 = vld [vmem:[%s12 + $0x468] sm:$0xff]
    %v3166 = vld [vmem:[%s12 + $0x470] sm:$0xff]
    %v3167 = vld [vmem:[%s12 + $0x478] sm:$0xf]
    %v3168 = vld [vmem:[%s12 + $0x47c] sm:$0xff]
    %v3169 = vld [vmem:[%s12 + $0x484] sm:$0xff]
    %v3170 = vld [vmem:[%s12 + $0x48c] sm:$0xff]
    %v3171 = vld [vmem:[%s12 + $0x494] sm:$0xf]
    %v3172 = vld [vmem:[%s12 + $0x498] sm:$0xff]
    %v3173 = vld [vmem:[%s12 + $0x4a0] sm:$0xff]
    %v3174 = vld [vmem:[%s12 + $0x4a8] sm:$0xff]
    %v3175 = vld [vmem:[%s12 + $0x4b0] sm:$0xf]
    %v3176 = vld [vmem:[%s12 + $0x4b4] sm:$0xff]
    %v3177 = vld [vmem:[%s12 + $0x4bc] sm:$0xff]
    %v3178 = vld [vmem:[%s12 + $0x4c4] sm:$0xff]
    %v3179 = vld [vmem:[%s12 + $0x4cc] sm:$0xf]
    %v3180 = vld [vmem:[%s12 + $0x4d0] sm:$0xff]
    %v3181 = vld [vmem:[%s12 + $0x4d8] sm:$0xff]
    %v3182 = vld [vmem:[%s12 + $0x4e0] sm:$0xff]
    %v3183 = vld [vmem:[%s12 + $0x4e8] sm:$0xf]
    %v3184 = vld [vmem:[%s12 + $0x4ec] sm:$0xff]
    %v3185 = vld [vmem:[%s12 + $0x4f4] sm:$0xff]
    %v3186 = vld [vmem:[%s12 + $0x4fc] sm:$0xff]
    %v3187 = vld [vmem:[%s12 + $0x504] sm:$0xf]
    %v3188 = vld [vmem:[%s12 + $0x508] sm:$0xff]
    %v3189 = vld [vmem:[%s12 + $0x510] sm:$0xff]
    %v3190 = vld [vmem:[%s12 + $0x518] sm:$0xff]
    %v3191 = vld [vmem:[%s12 + $0x520] sm:$0xf]
    %v3192 = vld [vmem:[%s12 + $0x524] sm:$0xff]
    %v3193 = vld [vmem:[%s12 + $0x52c] sm:$0xff]
    %v3194 = vld [vmem:[%s12 + $0x534] sm:$0xff]
    %v3195 = vld [vmem:[%s12 + $0x53c] sm:$0xf]
    %v3196 = vld [vmem:[%s12 + $0x540] sm:$0xff]
    %v3197 = vld [vmem:[%s12 + $0x548] sm:$0xff]
    %v3198 = vld [vmem:[%s12 + $0x550] sm:$0xff]
    %v3199 = vld [vmem:[%s12 + $0x558] sm:$0xf]
    %v3200 = vld [vmem:[%s12 + $0x55c] sm:$0xff]
    %v3201 = vld [vmem:[%s12 + $0x564] sm:$0xff]
    %v3202 = vld [vmem:[%s12 + $0x56c] sm:$0xff]
    %v3203 = vld [vmem:[%s12 + $0x574] sm:$0xf]
    %v3204 = vld [vmem:[%s12 + $0x578] sm:$0xff]
    %v3205 = vld [vmem:[%s12 + $0x580] sm:$0xff]
    %v3206 = vld [vmem:[%s12 + $0x588] sm:$0xff]
    %v3207 = vld [vmem:[%s12 + $0x590] sm:$0xf]
    %v3208 = vld [vmem:[%s12 + $0x594] sm:$0xff]
    %v3209 = vld [vmem:[%s12 + $0x59c] sm:$0xff]
    %v3210 = vld [vmem:[%s12 + $0x5a4] sm:$0xff]
    %v3211 = vld [vmem:[%s12 + $0x5ac] sm:$0xf]
    %v3212 = vld [vmem:[%s12 + $0x5b0] sm:$0xff]
    %v3213 = vld [vmem:[%s12 + $0x5b8] sm:$0xff]
    %v3214 = vld [vmem:[%s12 + $0x5c0] sm:$0xff]
    %v3215 = vld [vmem:[%s12 + $0x5c8] sm:$0xf]
    %v3216 = vld [vmem:[%s12 + $0x5cc] sm:$0xff]
    %v3217 = vld [vmem:[%s12 + $0x5d4] sm:$0xff]
    %v3218 = vld [vmem:[%s12 + $0x5dc] sm:$0xff]
    %v3219 = vld [vmem:[%s12 + $0x5e4] sm:$0xf]
    %v3220 = vld [vmem:[%s12 + $0x5e8] sm:$0xff]
    %v3221 = vld [vmem:[%s12 + $0x5f0] sm:$0xff]
    %v3222 = vld [vmem:[%s12 + $0x5f8] sm:$0xff]
    %v3223 = vld [vmem:[%s12 + $0x600] sm:$0xf]
    %v3224 = vld [vmem:[%s12 + $0x604] sm:$0xff]
    %v3225 = vld [vmem:[%s12 + $0x60c] sm:$0xff]
    %v3226 = vld [vmem:[%s12 + $0x614] sm:$0xff]
    %v3227 = vld [vmem:[%s12 + $0x61c] sm:$0xf]
    %v3228 = vld [vmem:[%s12 + $0x620] sm:$0xff]
    %v3229 = vld [vmem:[%s12 + $0x628] sm:$0xff]
    %v3230 = vld [vmem:[%s12 + $0x630] sm:$0xff]
    %v3231 = vld [vmem:[%s12 + $0x638] sm:$0xf]
    %v3232 = vld [vmem:[%s12 + $0x63c] sm:$0xff]
    %v3233 = vld [vmem:[%s12 + $0x644] sm:$0xff]
    %v3234 = vld [vmem:[%s12 + $0x64c] sm:$0xff]
    %v3235 = vld [vmem:[%s12 + $0x654] sm:$0xf]
    %v3236 = vld [vmem:[%s12 + $0x658] sm:$0xff]
    %v3237 = vld [vmem:[%s12 + $0x660] sm:$0xff]
    %v3238 = vld [vmem:[%s12 + $0x668] sm:$0xff]
    %v3239 = vld [vmem:[%s12 + $0x670] sm:$0xf]
    %v3240 = vld [vmem:[%s12 + $0x674] sm:$0xff]
    %v3241 = vld [vmem:[%s12 + $0x67c] sm:$0xff]
    %v3242 = vld [vmem:[%s12 + $0x684] sm:$0xff]
    %v3243 = vld [vmem:[%s12 + $0x68c] sm:$0xf]
    %v3244 = vld [vmem:[%s12 + $0x690] sm:$0xff]
    %v3245 = vld [vmem:[%s12 + $0x698] sm:$0xff]
    %v3246 = vld [vmem:[%s12 + $0x6a0] sm:$0xff]
    %v3247 = vld [vmem:[%s12 + $0x6a8] sm:$0xf]
    %v3248 = vld [vmem:[%s12 + $0x6ac] sm:$0xff]
    %v3249 = vld [vmem:[%s12 + $0x6b4] sm:$0xff]
    %v3250 = vld [vmem:[%s12 + $0x6bc] sm:$0xff]
    %v3251 = vld [vmem:[%s12 + $0x6c4] sm:$0xf]
    %v3252 = vld [vmem:[%s12 + $0x6c8] sm:$0xff]
    %v3253 = vld [vmem:[%s12 + $0x6d0] sm:$0xff]
    %v3254 = vld [vmem:[%s12 + $0x6d8] sm:$0xff]
    %v3255 = vld [vmem:[%s12 + $0x6e0] sm:$0xf]
    %v3256 = vld [vmem:[%s12 + $0x6e4] sm:$0xff]
    %v3257 = vld [vmem:[%s12 + $0x6ec] sm:$0xff]
    %v3258 = vld [vmem:[%s12 + $0x6f4] sm:$0xff]
    %v3259 = vld [vmem:[%s12 + $0x6fc] sm:$0xf]
    %v3260 = vld [vmem:[%s13] sm:$0x7f]
    %v3262 = vperm.slane %v3260, 0
    %v3263 = vperm.slane %v3260, 1
    %v3264 = vperm.slane %v3260, 2
    %v3265 = vperm.slane %v3260, 3
    %v3266 = vperm.slane %v3260, 4
    %v3267 = vperm.slane %v3260, 5
    %v3268 = vperm.slane %v3260, 6
    %v3532 = vunpack.c.l.b16 %v3004
    %v3533 = vunpack.c.h.b16 %v3004
    %v3534 = vunpack.c.l.b16 %v3005
    %v3535 = vunpack.c.h.b16 %v3005
    %v3536 = vunpack.c.l.b16 %v3006
    %v3537 = vunpack.c.h.b16 %v3006
    %v3538 = vunpack.c.l.b16 %v3007
    %v3539 = vunpack.c.l.b16 %v3008
    %v3540 = vunpack.c.h.b16 %v3008
    %v3541 = vunpack.c.l.b16 %v3009
    %v3542 = vunpack.c.h.b16 %v3009
    %v3543 = vunpack.c.l.b16 %v3010
    %v3544 = vunpack.c.h.b16 %v3010
    %v3545 = vunpack.c.l.b16 %v3011
    %v3546 = vunpack.c.l.b16 %v3012
    %v3547 = vunpack.c.h.b16 %v3012
    %v3548 = vunpack.c.l.b16 %v3013
    %v3549 = vunpack.c.h.b16 %v3013
    %v3550 = vunpack.c.l.b16 %v3014
    %v3551 = vunpack.c.h.b16 %v3014
    %v3552 = vunpack.c.l.b16 %v3015
    %v3553 = vunpack.c.l.b16 %v3016
    %v3554 = vunpack.c.h.b16 %v3016
    %v3555 = vunpack.c.l.b16 %v3017
    %v3556 = vunpack.c.h.b16 %v3017
    %v3557 = vunpack.c.l.b16 %v3018
    %v3558 = vunpack.c.h.b16 %v3018
    %v3559 = vunpack.c.l.b16 %v3019
    %v3560 = vunpack.c.l.b16 %v3020
    %v3561 = vunpack.c.h.b16 %v3020
    %v3562 = vunpack.c.l.b16 %v3021
    %v3563 = vunpack.c.h.b16 %v3021
    %v3564 = vunpack.c.l.b16 %v3022
    %v3565 = vunpack.c.h.b16 %v3022
    %v3566 = vunpack.c.l.b16 %v3023
    %v3567 = vunpack.c.l.b16 %v3024
    %v3568 = vunpack.c.h.b16 %v3024
    %v3569 = vunpack.c.l.b16 %v3025
    %v3570 = vunpack.c.h.b16 %v3025
    %v3571 = vunpack.c.l.b16 %v3026
    %v3572 = vunpack.c.h.b16 %v3026
    %v3573 = vunpack.c.l.b16 %v3027
    %v3574 = vunpack.c.l.b16 %v3028
    %v3575 = vunpack.c.h.b16 %v3028
    %v3576 = vunpack.c.l.b16 %v3029
    %v3577 = vunpack.c.h.b16 %v3029
    %v3578 = vunpack.c.l.b16 %v3030
    %v3579 = vunpack.c.h.b16 %v3030
    %v3580 = vunpack.c.l.b16 %v3031
    %v3581 = vunpack.c.l.b16 %v3032
    %v3582 = vunpack.c.h.b16 %v3032
    %v3583 = vunpack.c.l.b16 %v3033
    %v3584 = vunpack.c.h.b16 %v3033
    %v3585 = vunpack.c.l.b16 %v3034
    %v3586 = vunpack.c.h.b16 %v3034
    %v3587 = vunpack.c.l.b16 %v3035
    %v3588 = vunpack.c.l.b16 %v3036
    %v3589 = vunpack.c.h.b16 %v3036
    %v3590 = vunpack.c.l.b16 %v3037
    %v3591 = vunpack.c.h.b16 %v3037
    %v3592 = vunpack.c.l.b16 %v3038
    %v3593 = vunpack.c.h.b16 %v3038
    %v3594 = vunpack.c.l.b16 %v3039
    %v3595 = vunpack.c.l.b16 %v3040
    %v3596 = vunpack.c.h.b16 %v3040
    %v3597 = vunpack.c.l.b16 %v3041
    %v3598 = vunpack.c.h.b16 %v3041
    %v3599 = vunpack.c.l.b16 %v3042
    %v3600 = vunpack.c.h.b16 %v3042
    %v3601 = vunpack.c.l.b16 %v3043
    %v3602 = vunpack.c.l.b16 %v3044
    %v3603 = vunpack.c.h.b16 %v3044
    %v3604 = vunpack.c.l.b16 %v3045
    %v3605 = vunpack.c.h.b16 %v3045
    %v3606 = vunpack.c.l.b16 %v3046
    %v3607 = vunpack.c.h.b16 %v3046
    %v3608 = vunpack.c.l.b16 %v3047
    %v3609 = vunpack.c.l.b16 %v3048
    %v3610 = vunpack.c.h.b16 %v3048
    %v3611 = vunpack.c.l.b16 %v3049
    %v3612 = vunpack.c.h.b16 %v3049
    %v3613 = vunpack.c.l.b16 %v3050
    %v3614 = vunpack.c.h.b16 %v3050
    %v3615 = vunpack.c.l.b16 %v3051
    %v3616 = vunpack.c.l.b16 %v3052
    %v3617 = vunpack.c.h.b16 %v3052
    %v3618 = vunpack.c.l.b16 %v3053
    %v3619 = vunpack.c.h.b16 %v3053
    %v3620 = vunpack.c.l.b16 %v3054
    %v3621 = vunpack.c.h.b16 %v3054
    %v3622 = vunpack.c.l.b16 %v3055
    %v3623 = vunpack.c.l.b16 %v3056
    %v3624 = vunpack.c.h.b16 %v3056
    %v3625 = vunpack.c.l.b16 %v3057
    %v3626 = vunpack.c.h.b16 %v3057
    %v3627 = vunpack.c.l.b16 %v3058
    %v3628 = vunpack.c.h.b16 %v3058
    %v3629 = vunpack.c.l.b16 %v3059
    %v3630 = vunpack.c.l.b16 %v3060
    %v3631 = vunpack.c.h.b16 %v3060
    %v3632 = vunpack.c.l.b16 %v3061
    %v3633 = vunpack.c.h.b16 %v3061
    %v3634 = vunpack.c.l.b16 %v3062
    %v3635 = vunpack.c.h.b16 %v3062
    %v3636 = vunpack.c.l.b16 %v3063
    %v3637 = vunpack.c.l.b16 %v3064
    %v3638 = vunpack.c.h.b16 %v3064
    %v3639 = vunpack.c.l.b16 %v3065
    %v3640 = vunpack.c.h.b16 %v3065
    %v3641 = vunpack.c.l.b16 %v3066
    %v3642 = vunpack.c.h.b16 %v3066
    %v3643 = vunpack.c.l.b16 %v3067
    %v3644 = vunpack.c.l.b16 %v3068
    %v3645 = vunpack.c.h.b16 %v3068
    %v3646 = vunpack.c.l.b16 %v3069
    %v3647 = vunpack.c.h.b16 %v3069
    %v3648 = vunpack.c.l.b16 %v3070
    %v3649 = vunpack.c.h.b16 %v3070
    %v3650 = vunpack.c.l.b16 %v3071
    %v3651 = vunpack.c.l.b16 %v3072
    %v3652 = vunpack.c.h.b16 %v3072
    %v3653 = vunpack.c.l.b16 %v3073
    %v3654 = vunpack.c.h.b16 %v3073
    %v3655 = vunpack.c.l.b16 %v3074
    %v3656 = vunpack.c.h.b16 %v3074
    %v3657 = vunpack.c.l.b16 %v3075
    %v3658 = vunpack.c.l.b16 %v3076
    %v3659 = vunpack.c.h.b16 %v3076
    %v3660 = vunpack.c.l.b16 %v3077
    %v3661 = vunpack.c.h.b16 %v3077
    %v3662 = vunpack.c.l.b16 %v3078
    %v3663 = vunpack.c.h.b16 %v3078
    %v3664 = vunpack.c.l.b16 %v3079
    %v3665 = vunpack.c.l.b16 %v3080
    %v3666 = vunpack.c.h.b16 %v3080
    %v3667 = vunpack.c.l.b16 %v3081
    %v3668 = vunpack.c.h.b16 %v3081
    %v3669 = vunpack.c.l.b16 %v3082
    %v3670 = vunpack.c.h.b16 %v3082
    %v3671 = vunpack.c.l.b16 %v3083
    %v3672 = vunpack.c.l.b16 %v3084
    %v3673 = vunpack.c.h.b16 %v3084
    %v3674 = vunpack.c.l.b16 %v3085
    %v3675 = vunpack.c.h.b16 %v3085
    %v3676 = vunpack.c.l.b16 %v3086
    %v3677 = vunpack.c.h.b16 %v3086
    %v3678 = vunpack.c.l.b16 %v3087
    %v3679 = vunpack.c.l.b16 %v3088
    %v3680 = vunpack.c.h.b16 %v3088
    %v3681 = vunpack.c.l.b16 %v3089
    %v3682 = vunpack.c.h.b16 %v3089
    %v3683 = vunpack.c.l.b16 %v3090
    %v3684 = vunpack.c.h.b16 %v3090
    %v3685 = vunpack.c.l.b16 %v3091
    %v3686 = vunpack.c.l.b16 %v3092
    %v3687 = vunpack.c.h.b16 %v3092
    %v3688 = vunpack.c.l.b16 %v3093
    %v3689 = vunpack.c.h.b16 %v3093
    %v3690 = vunpack.c.l.b16 %v3094
    %v3691 = vunpack.c.h.b16 %v3094
    %v3692 = vunpack.c.l.b16 %v3095
    %v3693 = vunpack.c.l.b16 %v3096
    %v3694 = vunpack.c.h.b16 %v3096
    %v3695 = vunpack.c.l.b16 %v3097
    %v3696 = vunpack.c.h.b16 %v3097
    %v3697 = vunpack.c.l.b16 %v3098
    %v3698 = vunpack.c.h.b16 %v3098
    %v3699 = vunpack.c.l.b16 %v3099
    %v3700 = vunpack.c.l.b16 %v3100
    %v3701 = vunpack.c.h.b16 %v3100
    %v3702 = vunpack.c.l.b16 %v3101
    %v3703 = vunpack.c.h.b16 %v3101
    %v3704 = vunpack.c.l.b16 %v3102
    %v3705 = vunpack.c.h.b16 %v3102
    %v3706 = vunpack.c.l.b16 %v3103
    %v3707 = vunpack.c.l.b16 %v3104
    %v3708 = vunpack.c.h.b16 %v3104
    %v3709 = vunpack.c.l.b16 %v3105
    %v3710 = vunpack.c.h.b16 %v3105
    %v3711 = vunpack.c.l.b16 %v3106
    %v3712 = vunpack.c.h.b16 %v3106
    %v3713 = vunpack.c.l.b16 %v3107
    %v3714 = vunpack.c.l.b16 %v3108
    %v3715 = vunpack.c.h.b16 %v3108
    %v3716 = vunpack.c.l.b16 %v3109
    %v3717 = vunpack.c.h.b16 %v3109
    %v3718 = vunpack.c.l.b16 %v3110
    %v3719 = vunpack.c.h.b16 %v3110
    %v3720 = vunpack.c.l.b16 %v3111
    %v3721 = vunpack.c.l.b16 %v3112
    %v3722 = vunpack.c.h.b16 %v3112
    %v3723 = vunpack.c.l.b16 %v3113
    %v3724 = vunpack.c.h.b16 %v3113
    %v3725 = vunpack.c.l.b16 %v3114
    %v3726 = vunpack.c.h.b16 %v3114
    %v3727 = vunpack.c.l.b16 %v3115
    %v3728 = vunpack.c.l.b16 %v3116
    %v3729 = vunpack.c.h.b16 %v3116
    %v3730 = vunpack.c.l.b16 %v3117
    %v3731 = vunpack.c.h.b16 %v3117
    %v3732 = vunpack.c.l.b16 %v3118
    %v3733 = vunpack.c.h.b16 %v3118
    %v3734 = vunpack.c.l.b16 %v3119
    %v3735 = vunpack.c.l.b16 %v3120
    %v3736 = vunpack.c.h.b16 %v3120
    %v3737 = vunpack.c.l.b16 %v3121
    %v3738 = vunpack.c.h.b16 %v3121
    %v3739 = vunpack.c.l.b16 %v3122
    %v3740 = vunpack.c.h.b16 %v3122
    %v3741 = vunpack.c.l.b16 %v3123
    %v3742 = vunpack.c.l.b16 %v3124
    %v3743 = vunpack.c.h.b16 %v3124
    %v3744 = vunpack.c.l.b16 %v3125
    %v3745 = vunpack.c.h.b16 %v3125
    %v3746 = vunpack.c.l.b16 %v3126
    %v3747 = vunpack.c.h.b16 %v3126
    %v3748 = vunpack.c.l.b16 %v3127
    %v3749 = vunpack.c.l.b16 %v3128
    %v3750 = vunpack.c.h.b16 %v3128
    %v3751 = vunpack.c.l.b16 %v3129
    %v3752 = vunpack.c.h.b16 %v3129
    %v3753 = vunpack.c.l.b16 %v3130
    %v3754 = vunpack.c.h.b16 %v3130
    %v3755 = vunpack.c.l.b16 %v3131
    %v3756 = vunpack.c.l.b16 %v3132
    %v3757 = vunpack.c.h.b16 %v3132
    %v3758 = vunpack.c.l.b16 %v3133
    %v3759 = vunpack.c.h.b16 %v3133
    %v3760 = vunpack.c.l.b16 %v3134
    %v3761 = vunpack.c.h.b16 %v3134
    %v3762 = vunpack.c.l.b16 %v3135
    %v3763 = vunpack.c.l.b16 %v3136
    %v3764 = vunpack.c.h.b16 %v3136
    %v3765 = vunpack.c.l.b16 %v3137
    %v3766 = vunpack.c.h.b16 %v3137
    %v3767 = vunpack.c.l.b16 %v3138
    %v3768 = vunpack.c.h.b16 %v3138
    %v3769 = vunpack.c.l.b16 %v3139
    %v3770 = vunpack.c.l.b16 %v3140
    %v3771 = vunpack.c.h.b16 %v3140
    %v3772 = vunpack.c.l.b16 %v3141
    %v3773 = vunpack.c.h.b16 %v3141
    %v3774 = vunpack.c.l.b16 %v3142
    %v3775 = vunpack.c.h.b16 %v3142
    %v3776 = vunpack.c.l.b16 %v3143
    %v3777 = vunpack.c.l.b16 %v3144
    %v3778 = vunpack.c.h.b16 %v3144
    %v3779 = vunpack.c.l.b16 %v3145
    %v3780 = vunpack.c.h.b16 %v3145
    %v3781 = vunpack.c.l.b16 %v3146
    %v3782 = vunpack.c.h.b16 %v3146
    %v3783 = vunpack.c.l.b16 %v3147
    %v3784 = vunpack.c.l.b16 %v3148
    %v3785 = vunpack.c.h.b16 %v3148
    %v3786 = vunpack.c.l.b16 %v3149
    %v3787 = vunpack.c.h.b16 %v3149
    %v3788 = vunpack.c.l.b16 %v3150
    %v3789 = vunpack.c.h.b16 %v3150
    %v3790 = vunpack.c.l.b16 %v3151
    %v3791 = vunpack.c.l.b16 %v3152
    %v3792 = vunpack.c.h.b16 %v3152
    %v3793 = vunpack.c.l.b16 %v3153
    %v3794 = vunpack.c.h.b16 %v3153
    %v3795 = vunpack.c.l.b16 %v3154
    %v3796 = vunpack.c.h.b16 %v3154
    %v3797 = vunpack.c.l.b16 %v3155
    %v3798 = vunpack.c.l.b16 %v3156
    %v3799 = vunpack.c.h.b16 %v3156
    %v3800 = vunpack.c.l.b16 %v3157
    %v3801 = vunpack.c.h.b16 %v3157
    %v3802 = vunpack.c.l.b16 %v3158
    %v3803 = vunpack.c.h.b16 %v3158
    %v3804 = vunpack.c.l.b16 %v3159
    %v3805 = vunpack.c.l.b16 %v3160
    %v3806 = vunpack.c.h.b16 %v3160
    %v3807 = vunpack.c.l.b16 %v3161
    %v3808 = vunpack.c.h.b16 %v3161
    %v3809 = vunpack.c.l.b16 %v3162
    %v3810 = vunpack.c.h.b16 %v3162
    %v3811 = vunpack.c.l.b16 %v3163
    %v3812 = vunpack.c.l.b16 %v3164
    %v3813 = vunpack.c.h.b16 %v3164
    %v3814 = vunpack.c.l.b16 %v3165
    %v3815 = vunpack.c.h.b16 %v3165
    %v3816 = vunpack.c.l.b16 %v3166
    %v3817 = vunpack.c.h.b16 %v3166
    %v3818 = vunpack.c.l.b16 %v3167
    %v3819 = vunpack.c.l.b16 %v3168
    %v3820 = vunpack.c.h.b16 %v3168
    %v3821 = vunpack.c.l.b16 %v3169
    %v3822 = vunpack.c.h.b16 %v3169
    %v3823 = vunpack.c.l.b16 %v3170
    %v3824 = vunpack.c.h.b16 %v3170
    %v3825 = vunpack.c.l.b16 %v3171
    %v3826 = vunpack.c.l.b16 %v3172
    %v3827 = vunpack.c.h.b16 %v3172
    %v3828 = vunpack.c.l.b16 %v3173
    %v3829 = vunpack.c.h.b16 %v3173
    %v3830 = vunpack.c.l.b16 %v3174
    %v3831 = vunpack.c.h.b16 %v3174
    %v3832 = vunpack.c.l.b16 %v3175
    %v3833 = vunpack.c.l.b16 %v3176
    %v3834 = vunpack.c.h.b16 %v3176
    %v3835 = vunpack.c.l.b16 %v3177
    %v3836 = vunpack.c.h.b16 %v3177
    %v3837 = vunpack.c.l.b16 %v3178
    %v3838 = vunpack.c.h.b16 %v3178
    %v3839 = vunpack.c.l.b16 %v3179
    %v3840 = vunpack.c.l.b16 %v3180
    %v3841 = vunpack.c.h.b16 %v3180
    %v3842 = vunpack.c.l.b16 %v3181
    %v3843 = vunpack.c.h.b16 %v3181
    %v3844 = vunpack.c.l.b16 %v3182
    %v3845 = vunpack.c.h.b16 %v3182
    %v3846 = vunpack.c.l.b16 %v3183
    %v3847 = vunpack.c.l.b16 %v3184
    %v3848 = vunpack.c.h.b16 %v3184
    %v3849 = vunpack.c.l.b16 %v3185
    %v3850 = vunpack.c.h.b16 %v3185
    %v3851 = vunpack.c.l.b16 %v3186
    %v3852 = vunpack.c.h.b16 %v3186
    %v3853 = vunpack.c.l.b16 %v3187
    %v3854 = vunpack.c.l.b16 %v3188
    %v3855 = vunpack.c.h.b16 %v3188
    %v3856 = vunpack.c.l.b16 %v3189
    %v3857 = vunpack.c.h.b16 %v3189
    %v3858 = vunpack.c.l.b16 %v3190
    %v3859 = vunpack.c.h.b16 %v3190
    %v3860 = vunpack.c.l.b16 %v3191
    %v3861 = vunpack.c.l.b16 %v3192
    %v3862 = vunpack.c.h.b16 %v3192
    %v3863 = vunpack.c.l.b16 %v3193
    %v3864 = vunpack.c.h.b16 %v3193
    %v3865 = vunpack.c.l.b16 %v3194
    %v3866 = vunpack.c.h.b16 %v3194
    %v3867 = vunpack.c.l.b16 %v3195
    %v3868 = vunpack.c.l.b16 %v3196
    %v3869 = vunpack.c.h.b16 %v3196
    %v3870 = vunpack.c.l.b16 %v3197
    %v3871 = vunpack.c.h.b16 %v3197
    %v3872 = vunpack.c.l.b16 %v3198
    %v3873 = vunpack.c.h.b16 %v3198
    %v3874 = vunpack.c.l.b16 %v3199
    %v3875 = vunpack.c.l.b16 %v3200
    %v3876 = vunpack.c.h.b16 %v3200
    %v3877 = vunpack.c.l.b16 %v3201
    %v3878 = vunpack.c.h.b16 %v3201
    %v3879 = vunpack.c.l.b16 %v3202
    %v3880 = vunpack.c.h.b16 %v3202
    %v3881 = vunpack.c.l.b16 %v3203
    %v3882 = vunpack.c.l.b16 %v3204
    %v3883 = vunpack.c.h.b16 %v3204
    %v3884 = vunpack.c.l.b16 %v3205
    %v3885 = vunpack.c.h.b16 %v3205
    %v3886 = vunpack.c.l.b16 %v3206
    %v3887 = vunpack.c.h.b16 %v3206
    %v3888 = vunpack.c.l.b16 %v3207
    %v3889 = vunpack.c.l.b16 %v3208
    %v3890 = vunpack.c.h.b16 %v3208
    %v3891 = vunpack.c.l.b16 %v3209
    %v3892 = vunpack.c.h.b16 %v3209
    %v3893 = vunpack.c.l.b16 %v3210
    %v3894 = vunpack.c.h.b16 %v3210
    %v3895 = vunpack.c.l.b16 %v3211
    %v3896 = vunpack.c.l.b16 %v3212
    %v3897 = vunpack.c.h.b16 %v3212
    %v3898 = vunpack.c.l.b16 %v3213
    %v3899 = vunpack.c.h.b16 %v3213
    %v3900 = vunpack.c.l.b16 %v3214
    %v3901 = vunpack.c.h.b16 %v3214
    %v3902 = vunpack.c.l.b16 %v3215
    %v3903 = vunpack.c.l.b16 %v3216
    %v3904 = vunpack.c.h.b16 %v3216
    %v3905 = vunpack.c.l.b16 %v3217
    %v3906 = vunpack.c.h.b16 %v3217
    %v3907 = vunpack.c.l.b16 %v3218
    %v3908 = vunpack.c.h.b16 %v3218
    %v3909 = vunpack.c.l.b16 %v3219
    %v3910 = vunpack.c.l.b16 %v3220
    %v3911 = vunpack.c.h.b16 %v3220
    %v3912 = vunpack.c.l.b16 %v3221
    %v3913 = vunpack.c.h.b16 %v3221
    %v3914 = vunpack.c.l.b16 %v3222
    %v3915 = vunpack.c.h.b16 %v3222
    %v3916 = vunpack.c.l.b16 %v3223
    %v3917 = vunpack.c.l.b16 %v3224
    %v3918 = vunpack.c.h.b16 %v3224
    %v3919 = vunpack.c.l.b16 %v3225
    %v3920 = vunpack.c.h.b16 %v3225
    %v3921 = vunpack.c.l.b16 %v3226
    %v3922 = vunpack.c.h.b16 %v3226
    %v3923 = vunpack.c.l.b16 %v3227
    %v3924 = vunpack.c.l.b16 %v3228
    %v3925 = vunpack.c.h.b16 %v3228
    %v3926 = vunpack.c.l.b16 %v3229
    %v3927 = vunpack.c.h.b16 %v3229
    %v3928 = vunpack.c.l.b16 %v3230
    %v3929 = vunpack.c.h.b16 %v3230
    %v3930 = vunpack.c.l.b16 %v3231
    %v3931 = vunpack.c.l.b16 %v3232
    %v3932 = vunpack.c.h.b16 %v3232
    %v3933 = vunpack.c.l.b16 %v3233
    %v3934 = vunpack.c.h.b16 %v3233
    %v3935 = vunpack.c.l.b16 %v3234
    %v3936 = vunpack.c.h.b16 %v3234
    %v3937 = vunpack.c.l.b16 %v3235
    %v3938 = vunpack.c.l.b16 %v3236
    %v3939 = vunpack.c.h.b16 %v3236
    %v3940 = vunpack.c.l.b16 %v3237
    %v3941 = vunpack.c.h.b16 %v3237
    %v3942 = vunpack.c.l.b16 %v3238
    %v3943 = vunpack.c.h.b16 %v3238
    %v3944 = vunpack.c.l.b16 %v3239
    %v3945 = vunpack.c.l.b16 %v3240
    %v3946 = vunpack.c.h.b16 %v3240
    %v3947 = vunpack.c.l.b16 %v3241
    %v3948 = vunpack.c.h.b16 %v3241
    %v3949 = vunpack.c.l.b16 %v3242
    %v3950 = vunpack.c.h.b16 %v3242
    %v3951 = vunpack.c.l.b16 %v3243
    %v3952 = vunpack.c.l.b16 %v3244
    %v3953 = vunpack.c.h.b16 %v3244
    %v3954 = vunpack.c.l.b16 %v3245
    %v3955 = vunpack.c.h.b16 %v3245
    %v3956 = vunpack.c.l.b16 %v3246
    %v3957 = vunpack.c.h.b16 %v3246
    %v3958 = vunpack.c.l.b16 %v3247
    %v3959 = vunpack.c.l.b16 %v3248
    %v3960 = vunpack.c.h.b16 %v3248
    %v3961 = vunpack.c.l.b16 %v3249
    %v3962 = vunpack.c.h.b16 %v3249
    %v3963 = vunpack.c.l.b16 %v3250
    %v3964 = vunpack.c.h.b16 %v3250
    %v3965 = vunpack.c.l.b16 %v3251
    %v3966 = vunpack.c.l.b16 %v3252
    %v3967 = vunpack.c.h.b16 %v3252
    %v3968 = vunpack.c.l.b16 %v3253
    %v3969 = vunpack.c.h.b16 %v3253
    %v3970 = vunpack.c.l.b16 %v3254
    %v3971 = vunpack.c.h.b16 %v3254
    %v3972 = vunpack.c.l.b16 %v3255
    %v3973 = vunpack.c.l.b16 %v3256
    %v3974 = vunpack.c.h.b16 %v3256
    %v3975 = vunpack.c.l.b16 %v3257
    %v3976 = vunpack.c.h.b16 %v3257
    %v3977 = vunpack.c.l.b16 %v3258
    %v3978 = vunpack.c.h.b16 %v3258
    %v3979 = vunpack.c.l.b16 %v3259
    %v3980 = vpack.c.b16 %v3539, %v3532
    %v3981 = vpack.c.b16 %v3540, %v3533
    %v3982 = vpack.c.b16 %v3541, %v3534
    %v3983 = vpack.c.b16 %v3542, %v3535
    %v3984 = vpack.c.b16 %v3543, %v3536
    %v3985 = vpack.c.b16 %v3544, %v3537
    %v3986 = vpack.c.b16 %v3545, %v3538
    %v3987 = vpack.c.b16 %v3553, %v3546
    %v3988 = vpack.c.b16 %v3554, %v3547
    %v3989 = vpack.c.b16 %v3555, %v3548
    %v3990 = vpack.c.b16 %v3556, %v3549
    %v3991 = vpack.c.b16 %v3557, %v3550
    %v3992 = vpack.c.b16 %v3558, %v3551
    %v3993 = vpack.c.b16 %v3559, %v3552
    %v3994 = vpack.c.b16 %v3567, %v3560
    %v3995 = vpack.c.b16 %v3568, %v3561
    %v3996 = vpack.c.b16 %v3569, %v3562
    %v3997 = vpack.c.b16 %v3570, %v3563
    %v3998 = vpack.c.b16 %v3571, %v3564
    %v3999 = vpack.c.b16 %v3572, %v3565
    %v4000 = vpack.c.b16 %v3573, %v3566
    %v4001 = vpack.c.b16 %v3581, %v3574
    %v4002 = vpack.c.b16 %v3582, %v3575
    %v4003 = vpack.c.b16 %v3583, %v3576
    %v4004 = vpack.c.b16 %v3584, %v3577
    %v4005 = vpack.c.b16 %v3585, %v3578
    %v4006 = vpack.c.b16 %v3586, %v3579
    %v4007 = vpack.c.b16 %v3587, %v3580
    %v4008 = vpack.c.b16 %v3595, %v3588
    %v4009 = vpack.c.b16 %v3596, %v3589
    %v4010 = vpack.c.b16 %v3597, %v3590
    %v4011 = vpack.c.b16 %v3598, %v3591
    %v4012 = vpack.c.b16 %v3599, %v3592
    %v4013 = vpack.c.b16 %v3600, %v3593
    %v4014 = vpack.c.b16 %v3601, %v3594
    %v4015 = vpack.c.b16 %v3609, %v3602
    %v4016 = vpack.c.b16 %v3610, %v3603
    %v4017 = vpack.c.b16 %v3611, %v3604
    %v4018 = vpack.c.b16 %v3612, %v3605
    %v4019 = vpack.c.b16 %v3613, %v3606
    %v4020 = vpack.c.b16 %v3614, %v3607
    %v4021 = vpack.c.b16 %v3615, %v3608
    %v4022 = vpack.c.b16 %v3623, %v3616
    %v4023 = vpack.c.b16 %v3624, %v3617
    %v4024 = vpack.c.b16 %v3625, %v3618
    %v4025 = vpack.c.b16 %v3626, %v3619
    %v4026 = vpack.c.b16 %v3627, %v3620
    %v4027 = vpack.c.b16 %v3628, %v3621
    %v4028 = vpack.c.b16 %v3629, %v3622
    %v4029 = vpack.c.b16 %v3637, %v3630
    %v4030 = vpack.c.b16 %v3638, %v3631
    %v4031 = vpack.c.b16 %v3639, %v3632
    %v4032 = vpack.c.b16 %v3640, %v3633
    %v4033 = vpack.c.b16 %v3641, %v3634
    %v4034 = vpack.c.b16 %v3642, %v3635
    %v4035 = vpack.c.b16 %v3643, %v3636
    %v4036 = vpack.c.b16 %v3651, %v3644
    %v4037 = vpack.c.b16 %v3652, %v3645
    %v4038 = vpack.c.b16 %v3653, %v3646
    %v4039 = vpack.c.b16 %v3654, %v3647
    %v4040 = vpack.c.b16 %v3655, %v3648
    %v4041 = vpack.c.b16 %v3656, %v3649
    %v4042 = vpack.c.b16 %v3657, %v3650
    %v4043 = vpack.c.b16 %v3665, %v3658
    %v4044 = vpack.c.b16 %v3666, %v3659
    %v4045 = vpack.c.b16 %v3667, %v3660
    %v4046 = vpack.c.b16 %v3668, %v3661
    %v4047 = vpack.c.b16 %v3669, %v3662
    %v4048 = vpack.c.b16 %v3670, %v3663
    %v4049 = vpack.c.b16 %v3671, %v3664
    %v4050 = vpack.c.b16 %v3679, %v3672
    %v4051 = vpack.c.b16 %v3680, %v3673
    %v4052 = vpack.c.b16 %v3681, %v3674
    %v4053 = vpack.c.b16 %v3682, %v3675
    %v4054 = vpack.c.b16 %v3683, %v3676
    %v4055 = vpack.c.b16 %v3684, %v3677
    %v4056 = vpack.c.b16 %v3685, %v3678
    %v4057 = vpack.c.b16 %v3693, %v3686
    %v4058 = vpack.c.b16 %v3694, %v3687
    %v4059 = vpack.c.b16 %v3695, %v3688
    %v4060 = vpack.c.b16 %v3696, %v3689
    %v4061 = vpack.c.b16 %v3697, %v3690
    %v4062 = vpack.c.b16 %v3698, %v3691
    %v4063 = vpack.c.b16 %v3699, %v3692
    %v4064 = vpack.c.b16 %v3707, %v3700
    %v4065 = vpack.c.b16 %v3708, %v3701
    %v4066 = vpack.c.b16 %v3709, %v3702
    %v4067 = vpack.c.b16 %v3710, %v3703
    %v4068 = vpack.c.b16 %v3711, %v3704
    %v4069 = vpack.c.b16 %v3712, %v3705
    %v4070 = vpack.c.b16 %v3713, %v3706
    %v4071 = vpack.c.b16 %v3721, %v3714
    %v4072 = vpack.c.b16 %v3722, %v3715
    %v4073 = vpack.c.b16 %v3723, %v3716
    %v4074 = vpack.c.b16 %v3724, %v3717
    %v4075 = vpack.c.b16 %v3725, %v3718
    %v4076 = vpack.c.b16 %v3726, %v3719
    %v4077 = vpack.c.b16 %v3727, %v3720
    %v4078 = vpack.c.b16 %v3735, %v3728
    %v4079 = vpack.c.b16 %v3736, %v3729
    %v4080 = vpack.c.b16 %v3737, %v3730
    %v4081 = vpack.c.b16 %v3738, %v3731
    %v4082 = vpack.c.b16 %v3739, %v3732
    %v4083 = vpack.c.b16 %v3740, %v3733
    %v4084 = vpack.c.b16 %v3741, %v3734
    %v4085 = vpack.c.b16 %v3749, %v3742
    %v4086 = vpack.c.b16 %v3750, %v3743
    %v4087 = vpack.c.b16 %v3751, %v3744
    %v4088 = vpack.c.b16 %v3752, %v3745
    %v4089 = vpack.c.b16 %v3753, %v3746
    %v4090 = vpack.c.b16 %v3754, %v3747
    %v4091 = vpack.c.b16 %v3755, %v3748
    %v4092 = vpack.c.b16 %v3763, %v3756
    %v4093 = vpack.c.b16 %v3764, %v3757
    %v4094 = vpack.c.b16 %v3765, %v3758
    %v4095 = vpack.c.b16 %v3766, %v3759
    %v4096 = vpack.c.b16 %v3767, %v3760
    %v4097 = vpack.c.b16 %v3768, %v3761
    %v4098 = vpack.c.b16 %v3769, %v3762
    %v4099 = vpack.c.b16 %v3777, %v3770
    %v4100 = vpack.c.b16 %v3778, %v3771
    %v4101 = vpack.c.b16 %v3779, %v3772
    %v4102 = vpack.c.b16 %v3780, %v3773
    %v4103 = vpack.c.b16 %v3781, %v3774
    %v4104 = vpack.c.b16 %v3782, %v3775
    %v4105 = vpack.c.b16 %v3783, %v3776
    %v4106 = vpack.c.b16 %v3791, %v3784
    %v4107 = vpack.c.b16 %v3792, %v3785
    %v4108 = vpack.c.b16 %v3793, %v3786
    %v4109 = vpack.c.b16 %v3794, %v3787
    %v4110 = vpack.c.b16 %v3795, %v3788
    %v4111 = vpack.c.b16 %v3796, %v3789
    %v4112 = vpack.c.b16 %v3797, %v3790
    %v4113 = vpack.c.b16 %v3805, %v3798
    %v4114 = vpack.c.b16 %v3806, %v3799
    %v4115 = vpack.c.b16 %v3807, %v3800
    %v4116 = vpack.c.b16 %v3808, %v3801
    %v4117 = vpack.c.b16 %v3809, %v3802
    %v4118 = vpack.c.b16 %v3810, %v3803
    %v4119 = vpack.c.b16 %v3811, %v3804
    %v4120 = vpack.c.b16 %v3819, %v3812
    %v4121 = vpack.c.b16 %v3820, %v3813
    %v4122 = vpack.c.b16 %v3821, %v3814
    %v4123 = vpack.c.b16 %v3822, %v3815
    %v4124 = vpack.c.b16 %v3823, %v3816
    %v4125 = vpack.c.b16 %v3824, %v3817
    %v4126 = vpack.c.b16 %v3825, %v3818
    %v4127 = vpack.c.b16 %v3833, %v3826
    %v4128 = vpack.c.b16 %v3834, %v3827
    %v4129 = vpack.c.b16 %v3835, %v3828
    %v4130 = vpack.c.b16 %v3836, %v3829
    %v4131 = vpack.c.b16 %v3837, %v3830
    %v4132 = vpack.c.b16 %v3838, %v3831
    %v4133 = vpack.c.b16 %v3839, %v3832
    %v4134 = vpack.c.b16 %v3847, %v3840
    %v4135 = vpack.c.b16 %v3848, %v3841
    %v4136 = vpack.c.b16 %v3849, %v3842
    %v4137 = vpack.c.b16 %v3850, %v3843
    %v4138 = vpack.c.b16 %v3851, %v3844
    %v4139 = vpack.c.b16 %v3852, %v3845
    %v4140 = vpack.c.b16 %v3853, %v3846
    %v4141 = vpack.c.b16 %v3861, %v3854
    %v4142 = vpack.c.b16 %v3862, %v3855
    %v4143 = vpack.c.b16 %v3863, %v3856
    %v4144 = vpack.c.b16 %v3864, %v3857
    %v4145 = vpack.c.b16 %v3865, %v3858
    %v4146 = vpack.c.b16 %v3866, %v3859
    %v4147 = vpack.c.b16 %v3867, %v3860
    %v4148 = vpack.c.b16 %v3875, %v3868
    %v4149 = vpack.c.b16 %v3876, %v3869
    %v4150 = vpack.c.b16 %v3877, %v3870
    %v4151 = vpack.c.b16 %v3878, %v3871
    %v4152 = vpack.c.b16 %v3879, %v3872
    %v4153 = vpack.c.b16 %v3880, %v3873
    %v4154 = vpack.c.b16 %v3881, %v3874
    %v4155 = vpack.c.b16 %v3889, %v3882
    %v4156 = vpack.c.b16 %v3890, %v3883
    %v4157 = vpack.c.b16 %v3891, %v3884
    %v4158 = vpack.c.b16 %v3892, %v3885
    %v4159 = vpack.c.b16 %v3893, %v3886
    %v4160 = vpack.c.b16 %v3894, %v3887
    %v4161 = vpack.c.b16 %v3895, %v3888
    %v4162 = vpack.c.b16 %v3903, %v3896
    %v4163 = vpack.c.b16 %v3904, %v3897
    %v4164 = vpack.c.b16 %v3905, %v3898
    %v4165 = vpack.c.b16 %v3906, %v3899
    %v4166 = vpack.c.b16 %v3907, %v3900
    %v4167 = vpack.c.b16 %v3908, %v3901
    %v4168 = vpack.c.b16 %v3909, %v3902
    %v4169 = vpack.c.b16 %v3917, %v3910
    %v4170 = vpack.c.b16 %v3918, %v3911
    %v4171 = vpack.c.b16 %v3919, %v3912
    %v4172 = vpack.c.b16 %v3920, %v3913
    %v4173 = vpack.c.b16 %v3921, %v3914
    %v4174 = vpack.c.b16 %v3922, %v3915
    %v4175 = vpack.c.b16 %v3923, %v3916
    %v4176 = vpack.c.b16 %v3931, %v3924
    %v4177 = vpack.c.b16 %v3932, %v3925
    %v4178 = vpack.c.b16 %v3933, %v3926
    %v4179 = vpack.c.b16 %v3934, %v3927
    %v4180 = vpack.c.b16 %v3935, %v3928
    %v4181 = vpack.c.b16 %v3936, %v3929
    %v4182 = vpack.c.b16 %v3937, %v3930
    %v4183 = vpack.c.b16 %v3945, %v3938
    %v4184 = vpack.c.b16 %v3946, %v3939
    %v4185 = vpack.c.b16 %v3947, %v3940
    %v4186 = vpack.c.b16 %v3948, %v3941
    %v4187 = vpack.c.b16 %v3949, %v3942
    %v4188 = vpack.c.b16 %v3950, %v3943
    %v4189 = vpack.c.b16 %v3951, %v3944
    %v4190 = vpack.c.b16 %v3959, %v3952
    %v4191 = vpack.c.b16 %v3960, %v3953
    %v4192 = vpack.c.b16 %v3961, %v3954
    %v4193 = vpack.c.b16 %v3962, %v3955
    %v4194 = vpack.c.b16 %v3963, %v3956
    %v4195 = vpack.c.b16 %v3964, %v3957
    %v4196 = vpack.c.b16 %v3965, %v3958
    %v4197 = vpack.c.b16 %v3973, %v3966
    %v4198 = vpack.c.b16 %v3974, %v3967
    %v4199 = vpack.c.b16 %v3975, %v3968
    %v4200 = vpack.c.b16 %v3976, %v3969
    %v4201 = vpack.c.b16 %v3977, %v3970
    %v4202 = vpack.c.b16 %v3978, %v3971
    %v4203 = vpack.c.b16 %v3979, %v3972
    %4428 = vmatpush.bf16.msra.mxu0 %v4029
    %4429 = vmatpush.bf16.msra.mxu0 %v4022
    %4430 = vmatpush.bf16.msra.mxu0 %v4015
    %4431 = vmatpush.bf16.msra.mxu0 %v4008
    %4432 = vmatpush.bf16.msra.mxu0 %v4001
    %4433 = vmatpush.bf16.msra.mxu0 %v3994
    %4434 = vmatpush.bf16.msra.mxu0 %v3987
    %4435 = vmatpush.bf16.msra.mxu0 %v3980
    %4436 = vmatmul.bf16.gmra.mxu0 %v3000
    %v4437 = vpop.f32.mrf.mxu0
    %v4438 = vadd.f32 %v3262, %v4437
    %v4439 = vpop.f32.mrf.mxu0
    %v4440 = vadd.f32 %v3262, %v4439
    %4441 = vdwg.mxu0
    %4442 = vmatpush.bf16.msra.mxu0 %v4085
    %4443 = vmatpush.bf16.msra.mxu0 %v4078
    %4444 = vmatpush.bf16.msra.mxu0 %v4071
    %4445 = vmatpush.bf16.msra.mxu0 %v4064
    %4446 = vmatpush.bf16.msra.mxu0 %v4057
    %4447 = vmatpush.bf16.msra.mxu0 %v4050
    %4448 = vmatpush.bf16.msra.mxu0 %v4043
    %4449 = vmatpush.bf16.msra.mxu0 %v4036
    %4450 = vmatmul.bf16.gmra.mxu0 %v3001
    %v4451 = vpop.f32.mrf.mxu0
    %v4452 = vadd.f32 %v4438, %v4451
    %v4453 = vpop.f32.mrf.mxu0
    %v4454 = vadd.f32 %v4440, %v4453
    %4455 = vdwg.mxu0
    %4456 = vmatpush.bf16.msra.mxu0 %v4141
    %4457 = vmatpush.bf16.msra.mxu0 %v4134
    %4458 = vmatpush.bf16.msra.mxu0 %v4127
    %4459 = vmatpush.bf16.msra.mxu0 %v4120
    %4460 = vmatpush.bf16.msra.mxu0 %v4113
    %4461 = vmatpush.bf16.msra.mxu0 %v4106
    %4462 = vmatpush.bf16.msra.mxu0 %v4099
    %4463 = vmatpush.bf16.msra.mxu0 %v4092
    %4464 = vmatmul.bf16.gmra.mxu0 %v3002
    %v4465 = vpop.f32.mrf.mxu0
    %v4466 = vadd.f32 %v4452, %v4465
    %v4467 = vpop.f32.mrf.mxu0
    %v4468 = vadd.f32 %v4454, %v4467
    %4469 = vdwg.mxu0
    %4470 = vmatpush.bf16.msra.mxu0 %v4197
    %4471 = vmatpush.bf16.msra.mxu0 %v4190
    %4472 = vmatpush.bf16.msra.mxu0 %v4183
    %4473 = vmatpush.bf16.msra.mxu0 %v4176
    %4474 = vmatpush.bf16.msra.mxu0 %v4169
    %4475 = vmatpush.bf16.msra.mxu0 %v4162
    %4476 = vmatpush.bf16.msra.mxu0 %v4155
    %4477 = vmatpush.bf16.msra.mxu0 %v4148
    %4478 = vmatmul.bf16.gmra.mxu0 %v3003
    %v4479 = vpop.f32.mrf.mxu0
    %v4480 = vadd.f32 %v4466, %v4479
    %v4481 = vpop.f32.mrf.mxu0
    %v4482 = vadd.f32 %v4468, %v4481
    %4483 = vdwg.mxu0
    %4484 = vmatpush.bf16.msra.mxu0 %v4030
    %4485 = vmatpush.bf16.msra.mxu0 %v4023
    %4486 = vmatpush.bf16.msra.mxu0 %v4016
    %4487 = vmatpush.bf16.msra.mxu0 %v4009
    %4488 = vmatpush.bf16.msra.mxu0 %v4002
    %4489 = vmatpush.bf16.msra.mxu0 %v3995
    %4490 = vmatpush.bf16.msra.mxu0 %v3988
    %4491 = vmatpush.bf16.msra.mxu0 %v3981
    %4492 = vmatmul.bf16.gmra.mxu0 %v3000
    %v4493 = vpop.f32.mrf.mxu0
    %v4494 = vadd.f32 %v3263, %v4493
    %v4495 = vpop.f32.mrf.mxu0
    %v4496 = vadd.f32 %v3263, %v4495
    %4497 = vdwg.mxu0
    %4498 = vmatpush.bf16.msra.mxu0 %v4086
    %4499 = vmatpush.bf16.msra.mxu0 %v4079
    %4500 = vmatpush.bf16.msra.mxu0 %v4072
    %4501 = vmatpush.bf16.msra.mxu0 %v4065
    %4502 = vmatpush.bf16.msra.mxu0 %v4058
    %4503 = vmatpush.bf16.msra.mxu0 %v4051
    %4504 = vmatpush.bf16.msra.mxu0 %v4044
    %4505 = vmatpush.bf16.msra.mxu0 %v4037
    %4506 = vmatmul.bf16.gmra.mxu0 %v3001
    %v4507 = vpop.f32.mrf.mxu0
    %v4508 = vadd.f32 %v4494, %v4507
    %v4509 = vpop.f32.mrf.mxu0
    %v4510 = vadd.f32 %v4496, %v4509
    %4511 = vdwg.mxu0
    %4512 = vmatpush.bf16.msra.mxu0 %v4142
    %4513 = vmatpush.bf16.msra.mxu0 %v4135
    %4514 = vmatpush.bf16.msra.mxu0 %v4128
    %4515 = vmatpush.bf16.msra.mxu0 %v4121
    %4516 = vmatpush.bf16.msra.mxu0 %v4114
    %4517 = vmatpush.bf16.msra.mxu0 %v4107
    %4518 = vmatpush.bf16.msra.mxu0 %v4100
    %4519 = vmatpush.bf16.msra.mxu0 %v4093
    %4520 = vmatmul.bf16.gmra.mxu0 %v3002
    %v4521 = vpop.f32.mrf.mxu0
    %v4522 = vadd.f32 %v4508, %v4521
    %v4523 = vpop.f32.mrf.mxu0
    %v4524 = vadd.f32 %v4510, %v4523
    %4525 = vdwg.mxu0
    %4526 = vmatpush.bf16.msra.mxu0 %v4198
    %4527 = vmatpush.bf16.msra.mxu0 %v4191
    %4528 = vmatpush.bf16.msra.mxu0 %v4184
    %4529 = vmatpush.bf16.msra.mxu0 %v4177
    %4530 = vmatpush.bf16.msra.mxu0 %v4170
    %4531 = vmatpush.bf16.msra.mxu0 %v4163
    %4532 = vmatpush.bf16.msra.mxu0 %v4156
    %4533 = vmatpush.bf16.msra.mxu0 %v4149
    %4534 = vmatmul.bf16.gmra.mxu0 %v3003
    %v4535 = vpop.f32.mrf.mxu0
    %v4536 = vadd.f32 %v4522, %v4535
    %v4537 = vpop.f32.mrf.mxu0
    %v4538 = vadd.f32 %v4524, %v4537
    %4539 = vdwg.mxu0
    %4540 = vmatpush.bf16.msra.mxu0 %v4031
    %4541 = vmatpush.bf16.msra.mxu0 %v4024
    %4542 = vmatpush.bf16.msra.mxu0 %v4017
    %4543 = vmatpush.bf16.msra.mxu0 %v4010
    %4544 = vmatpush.bf16.msra.mxu0 %v4003
    %4545 = vmatpush.bf16.msra.mxu0 %v3996
    %4546 = vmatpush.bf16.msra.mxu0 %v3989
    %4547 = vmatpush.bf16.msra.mxu0 %v3982
    %4548 = vmatmul.bf16.gmra.mxu0 %v3000
    %v4549 = vpop.f32.mrf.mxu0
    %v4550 = vadd.f32 %v3264, %v4549
    %v4551 = vpop.f32.mrf.mxu0
    %v4552 = vadd.f32 %v3264, %v4551
    %4553 = vdwg.mxu0
    %4554 = vmatpush.bf16.msra.mxu0 %v4087
    %4555 = vmatpush.bf16.msra.mxu0 %v4080
    %4556 = vmatpush.bf16.msra.mxu0 %v4073
    %4557 = vmatpush.bf16.msra.mxu0 %v4066
    %4558 = vmatpush.bf16.msra.mxu0 %v4059
    %4559 = vmatpush.bf16.msra.mxu0 %v4052
    %4560 = vmatpush.bf16.msra.mxu0 %v4045
    %4561 = vmatpush.bf16.msra.mxu0 %v4038
    %4562 = vmatmul.bf16.gmra.mxu0 %v3001
    %v4563 = vpop.f32.mrf.mxu0
    %v4564 = vadd.f32 %v4550, %v4563
    %v4565 = vpop.f32.mrf.mxu0
    %v4566 = vadd.f32 %v4552, %v4565
    %4567 = vdwg.mxu0
    %4568 = vmatpush.bf16.msra.mxu0 %v4143
    %4569 = vmatpush.bf16.msra.mxu0 %v4136
    %4570 = vmatpush.bf16.msra.mxu0 %v4129
    %4571 = vmatpush.bf16.msra.mxu0 %v4122
    %4572 = vmatpush.bf16.msra.mxu0 %v4115
    %4573 = vmatpush.bf16.msra.mxu0 %v4108
    %4574 = vmatpush.bf16.msra.mxu0 %v4101
    %4575 = vmatpush.bf16.msra.mxu0 %v4094
    %4576 = vmatmul.bf16.gmra.mxu0 %v3002
    %v4577 = vpop.f32.mrf.mxu0
    %v4578 = vadd.f32 %v4564, %v4577
    %v4579 = vpop.f32.mrf.mxu0
    %v4580 = vadd.f32 %v4566, %v4579
    %4581 = vdwg.mxu0
    %4582 = vmatpush.bf16.msra.mxu0 %v4199
    %4583 = vmatpush.bf16.msra.mxu0 %v4192
    %4584 = vmatpush.bf16.msra.mxu0 %v4185
    %4585 = vmatpush.bf16.msra.mxu0 %v4178
    %4586 = vmatpush.bf16.msra.mxu0 %v4171
    %4587 = vmatpush.bf16.msra.mxu0 %v4164
    %4588 = vmatpush.bf16.msra.mxu0 %v4157
    %4589 = vmatpush.bf16.msra.mxu0 %v4150
    %4590 = vmatmul.bf16.gmra.mxu0 %v3003
    %v4591 = vpop.f32.mrf.mxu0
    %v4592 = vadd.f32 %v4578, %v4591
    %v4593 = vpop.f32.mrf.mxu0
    %v4594 = vadd.f32 %v4580, %v4593
    %4595 = vdwg.mxu0
    %4596 = vmatpush.bf16.msra.mxu0 %v4032
    %4597 = vmatpush.bf16.msra.mxu0 %v4025
    %4598 = vmatpush.bf16.msra.mxu0 %v4018
    %4599 = vmatpush.bf16.msra.mxu0 %v4011
    %4600 = vmatpush.bf16.msra.mxu0 %v4004
    %4601 = vmatpush.bf16.msra.mxu0 %v3997
    %4602 = vmatpush.bf16.msra.mxu0 %v3990
    %4603 = vmatpush.bf16.msra.mxu0 %v3983
    %4604 = vmatmul.bf16.gmra.mxu0 %v3000
    %v4605 = vpop.f32.mrf.mxu0
    %v4606 = vadd.f32 %v3265, %v4605
    %v4607 = vpop.f32.mrf.mxu0
    %v4608 = vadd.f32 %v3265, %v4607
    %4609 = vdwg.mxu0
    %4610 = vmatpush.bf16.msra.mxu0 %v4088
    %4611 = vmatpush.bf16.msra.mxu0 %v4081
    %4612 = vmatpush.bf16.msra.mxu0 %v4074
    %4613 = vmatpush.bf16.msra.mxu0 %v4067
    %4614 = vmatpush.bf16.msra.mxu0 %v4060
    %4615 = vmatpush.bf16.msra.mxu0 %v4053
    %4616 = vmatpush.bf16.msra.mxu0 %v4046
    %4617 = vmatpush.bf16.msra.mxu0 %v4039
    %4618 = vmatmul.bf16.gmra.mxu0 %v3001
    %v4619 = vpop.f32.mrf.mxu0
    %v4620 = vadd.f32 %v4606, %v4619
    %v4621 = vpop.f32.mrf.mxu0
    %v4622 = vadd.f32 %v4608, %v4621
    %4623 = vdwg.mxu0
    %4624 = vmatpush.bf16.msra.mxu0 %v4144
    %4625 = vmatpush.bf16.msra.mxu0 %v4137
    %4626 = vmatpush.bf16.msra.mxu0 %v4130
    %4627 = vmatpush.bf16.msra.mxu0 %v4123
    %4628 = vmatpush.bf16.msra.mxu0 %v4116
    %4629 = vmatpush.bf16.msra.mxu0 %v4109
    %4630 = vmatpush.bf16.msra.mxu0 %v4102
    %4631 = vmatpush.bf16.msra.mxu0 %v4095
    %4632 = vmatmul.bf16.gmra.mxu0 %v3002
    %v4633 = vpop.f32.mrf.mxu0
    %v4634 = vadd.f32 %v4620, %v4633
    %v4635 = vpop.f32.mrf.mxu0
    %v4636 = vadd.f32 %v4622, %v4635
    %4637 = vdwg.mxu0
    %4638 = vmatpush.bf16.msra.mxu0 %v4200
    %4639 = vmatpush.bf16.msra.mxu0 %v4193
    %4640 = vmatpush.bf16.msra.mxu0 %v4186
    %4641 = vmatpush.bf16.msra.mxu0 %v4179
    %4642 = vmatpush.bf16.msra.mxu0 %v4172
    %4643 = vmatpush.bf16.msra.mxu0 %v4165
    %4644 = vmatpush.bf16.msra.mxu0 %v4158
    %4645 = vmatpush.bf16.msra.mxu0 %v4151
    %4646 = vmatmul.bf16.gmra.mxu0 %v3003
    %v4647 = vpop.f32.mrf.mxu0
    %v4648 = vadd.f32 %v4634, %v4647
    %v4649 = vpop.f32.mrf.mxu0
    %v4650 = vadd.f32 %v4636, %v4649
    %4651 = vdwg.mxu0
    %4652 = vmatpush.bf16.msra.mxu0 %v4033
    %4653 = vmatpush.bf16.msra.mxu0 %v4026
    %4654 = vmatpush.bf16.msra.mxu0 %v4019
    %4655 = vmatpush.bf16.msra.mxu0 %v4012
    %4656 = vmatpush.bf16.msra.mxu0 %v4005
    %4657 = vmatpush.bf16.msra.mxu0 %v3998
    %4658 = vmatpush.bf16.msra.mxu0 %v3991
    %4659 = vmatpush.bf16.msra.mxu0 %v3984
    %4660 = vmatmul.bf16.gmra.mxu0 %v3000
    %v4661 = vpop.f32.mrf.mxu0
    %v4662 = vadd.f32 %v3266, %v4661
    %v4663 = vpop.f32.mrf.mxu0
    %v4664 = vadd.f32 %v3266, %v4663
    %4665 = vdwg.mxu0
    %4666 = vmatpush.bf16.msra.mxu0 %v4089
    %4667 = vmatpush.bf16.msra.mxu0 %v4082
    %4668 = vmatpush.bf16.msra.mxu0 %v4075
    %4669 = vmatpush.bf16.msra.mxu0 %v4068
    %4670 = vmatpush.bf16.msra.mxu0 %v4061
    %4671 = vmatpush.bf16.msra.mxu0 %v4054
    %4672 = vmatpush.bf16.msra.mxu0 %v4047
    %4673 = vmatpush.bf16.msra.mxu0 %v4040
    %4674 = vmatmul.bf16.gmra.mxu0 %v3001
    %v4675 = vpop.f32.mrf.mxu0
    %v4676 = vadd.f32 %v4662, %v4675
    %v4677 = vpop.f32.mrf.mxu0
    %v4678 = vadd.f32 %v4664, %v4677
    %4679 = vdwg.mxu0
    %4680 = vmatpush.bf16.msra.mxu0 %v4145
    %4681 = vmatpush.bf16.msra.mxu0 %v4138
    %4682 = vmatpush.bf16.msra.mxu0 %v4131
    %4683 = vmatpush.bf16.msra.mxu0 %v4124
    %4684 = vmatpush.bf16.msra.mxu0 %v4117
    %4685 = vmatpush.bf16.msra.mxu0 %v4110
    %4686 = vmatpush.bf16.msra.mxu0 %v4103
    %4687 = vmatpush.bf16.msra.mxu0 %v4096
    %4688 = vmatmul.bf16.gmra.mxu0 %v3002
    %v4689 = vpop.f32.mrf.mxu0
    %v4690 = vadd.f32 %v4676, %v4689
    %v4691 = vpop.f32.mrf.mxu0
    %v4692 = vadd.f32 %v4678, %v4691
    %4693 = vdwg.mxu0
    %4694 = vmatpush.bf16.msra.mxu0 %v4201
    %4695 = vmatpush.bf16.msra.mxu0 %v4194
    %4696 = vmatpush.bf16.msra.mxu0 %v4187
    %4697 = vmatpush.bf16.msra.mxu0 %v4180
    %4698 = vmatpush.bf16.msra.mxu0 %v4173
    %4699 = vmatpush.bf16.msra.mxu0 %v4166
    %4700 = vmatpush.bf16.msra.mxu0 %v4159
    %4701 = vmatpush.bf16.msra.mxu0 %v4152
    %4702 = vmatmul.bf16.gmra.mxu0 %v3003
    %v4703 = vpop.f32.mrf.mxu0
    %v4704 = vadd.f32 %v4690, %v4703
    %v4705 = vpop.f32.mrf.mxu0
    %v4706 = vadd.f32 %v4692, %v4705
    %4707 = vdwg.mxu0
    %4708 = vmatpush.bf16.msra.mxu0 %v4034
    %4709 = vmatpush.bf16.msra.mxu0 %v4027
    %4710 = vmatpush.bf16.msra.mxu0 %v4020
    %4711 = vmatpush.bf16.msra.mxu0 %v4013
    %4712 = vmatpush.bf16.msra.mxu0 %v4006
    %4713 = vmatpush.bf16.msra.mxu0 %v3999
    %4714 = vmatpush.bf16.msra.mxu0 %v3992
    %4715 = vmatpush.bf16.msra.mxu0 %v3985
    %4716 = vmatmul.bf16.gmra.mxu0 %v3000
    %v4717 = vpop.f32.mrf.mxu0
    %v4718 = vadd.f32 %v3267, %v4717
    %v4719 = vpop.f32.mrf.mxu0
    %v4720 = vadd.f32 %v3267, %v4719
    %4721 = vdwg.mxu0
    %4722 = vmatpush.bf16.msra.mxu0 %v4090
    %4723 = vmatpush.bf16.msra.mxu0 %v4083
    %4724 = vmatpush.bf16.msra.mxu0 %v4076
    %4725 = vmatpush.bf16.msra.mxu0 %v4069
    %4726 = vmatpush.bf16.msra.mxu0 %v4062
    %4727 = vmatpush.bf16.msra.mxu0 %v4055
    %4728 = vmatpush.bf16.msra.mxu0 %v4048
    %4729 = vmatpush.bf16.msra.mxu0 %v4041
    %4730 = vmatmul.bf16.gmra.mxu0 %v3001
    %v4731 = vpop.f32.mrf.mxu0
    %v4732 = vadd.f32 %v4718, %v4731
    %v4733 = vpop.f32.mrf.mxu0
    %v4734 = vadd.f32 %v4720, %v4733
    %4735 = vdwg.mxu0
    %4736 = vmatpush.bf16.msra.mxu0 %v4146
    %4737 = vmatpush.bf16.msra.mxu0 %v4139
    %4738 = vmatpush.bf16.msra.mxu0 %v4132
    %4739 = vmatpush.bf16.msra.mxu0 %v4125
    %4740 = vmatpush.bf16.msra.mxu0 %v4118
    %4741 = vmatpush.bf16.msra.mxu0 %v4111
    %4742 = vmatpush.bf16.msra.mxu0 %v4104
    %4743 = vmatpush.bf16.msra.mxu0 %v4097
    %4744 = vmatmul.bf16.gmra.mxu0 %v3002
    %v4745 = vpop.f32.mrf.mxu0
    %v4746 = vadd.f32 %v4732, %v4745
    %v4747 = vpop.f32.mrf.mxu0
    %v4748 = vadd.f32 %v4734, %v4747
    %4749 = vdwg.mxu0
    %4750 = vmatpush.bf16.msra.mxu0 %v4202
    %4751 = vmatpush.bf16.msra.mxu0 %v4195
    %4752 = vmatpush.bf16.msra.mxu0 %v4188
    %4753 = vmatpush.bf16.msra.mxu0 %v4181
    %4754 = vmatpush.bf16.msra.mxu0 %v4174
    %4755 = vmatpush.bf16.msra.mxu0 %v4167
    %4756 = vmatpush.bf16.msra.mxu0 %v4160
    %4757 = vmatpush.bf16.msra.mxu0 %v4153
    %4758 = vmatmul.bf16.gmra.mxu0 %v3003
    %v4759 = vpop.f32.mrf.mxu0
    %v4760 = vadd.f32 %v4746, %v4759
    %v4761 = vpop.f32.mrf.mxu0
    %v4762 = vadd.f32 %v4748, %v4761
    %4763 = vdwg.mxu0
    %4764 = vmatpush.bf16.msra.mxu0 %v4035
    %4765 = vmatpush.bf16.msra.mxu0 %v4028
    %4766 = vmatpush.bf16.msra.mxu0 %v4021
    %4767 = vmatpush.bf16.msra.mxu0 %v4014
    %4768 = vmatpush.bf16.msra.mxu0 %v4007
    %4769 = vmatpush.bf16.msra.mxu0 %v4000
    %4770 = vmatpush.bf16.msra.mxu0 %v3993
    %4771 = vmatpush.bf16.msra.mxu0 %v3986
    %4772 = vmatmul.bf16.gmra.mxu0 %v3000
    %v4773 = vpop.f32.mrf.mxu0
    %v4774 = vadd.f32 %v3268, %v4773
    %v4775 = vpop.f32.mrf.mxu0
    %v4776 = vadd.f32 %v3268, %v4775
    %4777 = vdwg.mxu0
    %4778 = vmatpush.bf16.msra.mxu0 %v4091
    %4779 = vmatpush.bf16.msra.mxu0 %v4084
    %4780 = vmatpush.bf16.msra.mxu0 %v4077
    %4781 = vmatpush.bf16.msra.mxu0 %v4070
    %4782 = vmatpush.bf16.msra.mxu0 %v4063
    %4783 = vmatpush.bf16.msra.mxu0 %v4056
    %4784 = vmatpush.bf16.msra.mxu0 %v4049
    %4785 = vmatpush.bf16.msra.mxu0 %v4042
    %4786 = vmatmul.bf16.gmra.mxu0 %v3001
    %v4787 = vpop.f32.mrf.mxu0
    %v4788 = vadd.f32 %v4774, %v4787
    %v4789 = vpop.f32.mrf.mxu0
    %v4790 = vadd.f32 %v4776, %v4789
    %4791 = vdwg.mxu0
    %4792 = vmatpush.bf16.msra.mxu0 %v4147
    %4793 = vmatpush.bf16.msra.mxu0 %v4140
    %4794 = vmatpush.bf16.msra.mxu0 %v4133
    %4795 = vmatpush.bf16.msra.mxu0 %v4126
    %4796 = vmatpush.bf16.msra.mxu0 %v4119
    %4797 = vmatpush.bf16.msra.mxu0 %v4112
    %4798 = vmatpush.bf16.msra.mxu0 %v4105
    %4799 = vmatpush.bf16.msra.mxu0 %v4098
    %4800 = vmatmul.bf16.gmra.mxu0 %v3002
    %v4801 = vpop.f32.mrf.mxu0
    %v4802 = vadd.f32 %v4788, %v4801
    %v4803 = vpop.f32.mrf.mxu0
    %v4804 = vadd.f32 %v4790, %v4803
    %4805 = vdwg.mxu0
    %4806 = vmatpush.bf16.msra.mxu0 %v4203
    %4807 = vmatpush.bf16.msra.mxu0 %v4196
    %4808 = vmatpush.bf16.msra.mxu0 %v4189
    %4809 = vmatpush.bf16.msra.mxu0 %v4182
    %4810 = vmatpush.bf16.msra.mxu0 %v4175
    %4811 = vmatpush.bf16.msra.mxu0 %v4168
    %4812 = vmatpush.bf16.msra.mxu0 %v4161
    %4813 = vmatpush.bf16.msra.mxu0 %v4154
    %4814 = vmatmul.bf16.gmra.mxu0 %v3003
    %v4815 = vpop.f32.mrf.mxu0
    %v4816 = vadd.f32 %v4802, %v4815
    %v4817 = vpop.f32.mrf.mxu0
    %v4818 = vadd.f32 %v4804, %v4817
    %4819 = vdwg.mxu0
    %v4820 = vmul.f32 %v4480, 0.5
    %v4821 = vmul.f32 %v4536, 0.5
    %v4822 = vmul.f32 %v4592, 0.5
    %v4823 = vmul.f32 %v4648, 0.5
    %v4824 = vmul.f32 %v4704, 0.5
    %v4825 = vmul.f32 %v4760, 0.5
    %v4826 = vmul.f32 %v4816, 0.5
    %v4827 = vmul.f32 %v4482, 0.5
    %v4828 = vmul.f32 %v4538, 0.5
    %v4829 = vmul.f32 %v4594, 0.5
    %v4830 = vmul.f32 %v4650, 0.5
    %v4831 = vmul.f32 %v4706, 0.5
    %v4832 = vmul.f32 %v4762, 0.5
    %v4833 = vmul.f32 %v4818, 0.5
    %v4834 = vtanh.pop %v4820
    %v4835 = vtanh.pop %v4821
    %v4836 = vtanh.pop %v4822
    %v4837 = vtanh.pop %v4823
    %v4838 = vtanh.pop %v4824
    %v4839 = vtanh.pop %v4825
    %v4840 = vtanh.pop %v4826
    %v4841 = vtanh.pop %v4827
    %v4842 = vtanh.pop %v4828
    %v4843 = vtanh.pop %v4829
    %v4844 = vtanh.pop %v4830
    %v4845 = vtanh.pop %v4831
    %v4846 = vtanh.pop %v4832
    %v4847 = vtanh.pop %v4833
    %v4848 = vadd.f32 %v4834, 1.0
    %v4849 = vadd.f32 %v4835, 1.0
    %v4850 = vadd.f32 %v4836, 1.0
    %v4851 = vadd.f32 %v4837, 1.0
    %v4852 = vadd.f32 %v4838, 1.0
    %v4853 = vadd.f32 %v4839, 1.0
    %v4854 = vadd.f32 %v4840, 1.0
    %v4855 = vadd.f32 %v4841, 1.0
    %v4856 = vadd.f32 %v4842, 1.0
    %v4857 = vadd.f32 %v4843, 1.0
    %v4858 = vadd.f32 %v4844, 1.0
    %v4859 = vadd.f32 %v4845, 1.0
    %v4860 = vadd.f32 %v4846, 1.0
    %v4861 = vadd.f32 %v4847, 1.0
    %v4862 = vmul.f32 %v4848, 0.5
    %v4863 = vmul.f32 %v4849, 0.5
    %v4864 = vmul.f32 %v4850, 0.5
    %v4865 = vmul.f32 %v4851, 0.5
    %v4866 = vmul.f32 %v4852, 0.5
    %v4867 = vmul.f32 %v4853, 0.5
    %v4868 = vmul.f32 %v4854, 0.5
    %v4869 = vmul.f32 %v4855, 0.5
    %v4870 = vmul.f32 %v4856, 0.5
    %v4871 = vmul.f32 %v4857, 0.5
    %v4872 = vmul.f32 %v4858, 0.5
    %v4873 = vmul.f32 %v4859, 0.5
    %v4874 = vmul.f32 %v4860, 0.5
    %v4875 = vmul.f32 %v4861, 0.5
    %v4876 = vpack.c.bf16 %v4863, %v4862
    %v4877 = vpack.c.bf16 %v4865, %v4864
    %v4878 = vpack.c.bf16 %v4867, %v4866
    %v4879 = vpack.c.bf16 %v4868, %v4868
    %v4880 = vpack.c.bf16 %v4870, %v4869
    %v4881 = vpack.c.bf16 %v4872, %v4871
    %v4882 = vpack.c.bf16 %v4874, %v4873
    %v4883 = vpack.c.bf16 %v4875, %v4875
    %v4892 = vrot.slane %v4876, 3
    %v4893 = vrot.slane %v4877, 6
    %v4894 = vrot.slane %v4877, 1
    %v4895 = vrot.slane %v4878, 4
    %v4896 = vrot.slane %v4878, 7
    %v4897 = vrot.slane %v4879, 2
    %v4898 = vrot.slane %v4879, 5
    %v4899 = vrot.slane %v4880, 3
    %v4900 = vrot.slane %v4881, 6
    %v4901 = vrot.slane %v4881, 1
    %v4902 = vrot.slane %v4882, 4
    %v4903 = vrot.slane %v4882, 7
    %v4904 = vrot.slane %v4883, 2
    %v4905 = vrot.slane %v4883, 5
    %vm4906 = vcmask 1040384
    %v4909 = vsel %vm4906, %v4876, %v4892
    %vm4910 = vcmask 1042434
    %v4913 = vsel %vm4910, %v4893, %v4894
    %vm4914 = vcmask 1041408
    %v4915 = vsel %vm4914, %v4909, %v4913
    %vm4916 = vcmask 1044484
    %v4919 = vsel %vm4916, %v4895, %v4896
    %vm4920 = vcmask 1046534
    %v4923 = vsel %vm4920, %v4897, %v4898
    %vm4924 = vcmask 1045508
    %v4925 = vsel %vm4924, %v4919, %v4923
    %vm4926 = vcmask 1043456
    %v4927 = vsel %vm4926, %v4915, %v4925
    %vm4928 = vcmask 1041409
    %v4929 = vsel %vm4928, %v4876, %v4892
    %vm4930 = vcmask 1043459
    %v4931 = vsel %vm4930, %v4893, %v4894
    %vm4932 = vcmask 1042433
    %v4933 = vsel %vm4932, %v4929, %v4931
    %vm4934 = vcmask 1045509
    %v4935 = vsel %vm4934, %v4895, %v4896
    %vm4936 = vcmask 1046528
    %v4937 = vsel %vm4936, %v4898, %v4897
    %vm4938 = vcmask 1046533
    %v4939 = vsel %vm4938, %v4935, %v4937
    %vm4940 = vcmask 1044481
    %v4941 = vsel %vm4940, %v4933, %v4939
    %v4943 = vrot.slane %v4941, 1
    %v4944 = vsel %vm4910, %v4876, %v4892
    %v4945 = vsel %vm4916, %v4893, %v4894
    %vm4946 = vcmask 1043458
    %v4947 = vsel %vm4946, %v4944, %v4945
    %v4948 = vsel %vm4920, %v4895, %v4896
    %v4949 = vsel %vm4906, %v4897, %v4898
    %vm4950 = vcmask 1045504
    %v4951 = vsel %vm4950, %v4949, %v4948
    %vm4952 = vcmask 1045506
    %v4953 = vsel %vm4952, %v4947, %v4951
    %v4955 = vrot.slane %v4953, 2
    %v4956 = vsel %vm4930, %v4876, %v4892
    %v4957 = vsel %vm4934, %v4893, %v4894
    %vm4958 = vcmask 1044483
    %v4959 = vsel %vm4958, %v4956, %v4957
    %v4960 = vsel %vm4936, %v4896, %v4895
    %v4961 = vsel %vm4928, %v4897, %v4898
    %vm4962 = vcmask 1046529
    %v4963 = vsel %vm4962, %v4961, %v4960
    %vm4964 = vcmask 1046531
    %v4965 = vsel %vm4964, %v4959, %v4963
    %v4967 = vrot.slane %v4965, 3
    %v4970 = vsel %vm4906, %v4880, %v4899
    %v4973 = vsel %vm4910, %v4900, %v4901
    %v4974 = vsel %vm4914, %v4970, %v4973
    %v4977 = vsel %vm4916, %v4902, %v4903
    %v4980 = vsel %vm4920, %v4904, %v4905
    %v4981 = vsel %vm4924, %v4977, %v4980
    %v4982 = vsel %vm4926, %v4974, %v4981
    %v4983 = vsel %vm4928, %v4880, %v4899
    %v4984 = vsel %vm4930, %v4900, %v4901
    %v4985 = vsel %vm4932, %v4983, %v4984
    %v4986 = vsel %vm4934, %v4902, %v4903
    %v4987 = vsel %vm4936, %v4905, %v4904
    %v4988 = vsel %vm4938, %v4986, %v4987
    %v4989 = vsel %vm4940, %v4985, %v4988
    %v4991 = vrot.slane %v4989, 1
    %v4992 = vsel %vm4910, %v4880, %v4899
    %v4993 = vsel %vm4916, %v4900, %v4901
    %v4994 = vsel %vm4946, %v4992, %v4993
    %v4995 = vsel %vm4920, %v4902, %v4903
    %v4996 = vsel %vm4906, %v4904, %v4905
    %v4997 = vsel %vm4950, %v4996, %v4995
    %v4998 = vsel %vm4952, %v4994, %v4997
    %v5000 = vrot.slane %v4998, 2
    %v5001 = vsel %vm4930, %v4880, %v4899
    %v5002 = vsel %vm4934, %v4900, %v4901
    %v5003 = vsel %vm4958, %v5001, %v5002
    %v5004 = vsel %vm4936, %v4903, %v4902
    %v5005 = vsel %vm4928, %v4904, %v4905
    %v5006 = vsel %vm4962, %v5005, %v5004
    %v5007 = vsel %vm4964, %v5003, %v5006
    %v5009 = vrot.slane %v5007, 3
    %vm5018 = vmor %vm4928, %vm4906
    %vm5019 = vmor %vm4910, %vm5018
    %vm5020 = vmor %vm4930, %vm5019
    %vm5021 = vmor %vm4916, %vm5020
    %vm5022 = vmor %vm4934, %vm5021
    %vm5023 = vcmask 129030
    %vm5024 = vmor %vm5023, %vm5022
    %5025 = vst.msk [vmem:[#allocation2] sm:$0x7f] %vm5024, %v4927
    %5026 = vst.msk [vmem:[#allocation2 + $0x7] sm:$0x7f] %vm5024, %v4943
    %5027 = vst.msk [vmem:[#allocation2 + $0xe] sm:$0x7f] %vm5024, %v4955
    %5028 = vst.msk [vmem:[#allocation2 + $0x15] sm:$0x7f] %vm5024, %v4967
    %5029 = vst.msk [vmem:[#allocation2 + $0x1c] sm:$0x7f] %vm5024, %v4982
    %5030 = vst.msk [vmem:[#allocation2 + $0x23] sm:$0x7f] %vm5024, %v4991
    %5031 = vst.msk [vmem:[#allocation2 + $0x2a] sm:$0x7f] %vm5024, %v5000
    %5032 = vst.msk [vmem:[#allocation2 + $0x31] sm:$0x7f] %vm5024, %v5009
    %vm5033 = vcmask 162816
    %5034 = vst.msk [vmem:[#allocation4] sm:$0xff] %vm5033, %v2400
    %5035 = vst.msk [vmem:[#allocation4 + $0x8] sm:$0xff] %vm5033, %v2402
    // Predicated region
    $region58: #{tpu_custom_call.1} parent=1 // pred_check
      _
    $region59: #{tpu_custom_call.1} parent=1 // pred_check_branch
      %5037 = sbr.rel (0) target = $region61
    $region60: #{tpu_custom_call.1} parent=1 // pred_region
      %5039 = vsyncadd [#allocation3], 784
      %s5040 = sshll.u32 [#allocation2], 4
      %s5041 = int_to_ptr.vmem [resolvable:$true] %s5040
      %s5042 = sshll.u32 %s14, 4
      %s5043 = int_to_ptr.hbm [resolvable:$true] %s5042
      %5048 = dma.vmem_to_hbm [thread:$0]  %s5041, 112, %s5043, [#allocation3], 112, 112, 7
    $region61: #{tpu_custom_call.1} parent=1 // pred_fallthru
      _
    // Predicated region
    $region62: #{tpu_custom_call.1} parent=1 // pred_check
      _
    $region63: #{tpu_custom_call.1} parent=1 // pred_check_branch
      %5050 = sbr.rel (0) target = $region65
    $region64: #{tpu_custom_call.1} parent=1 // pred_region
      %5052 = vsyncadd [#allocation5], 224
      %s5053 = sshll.u32 [#allocation4], 4
      %s5054 = int_to_ptr.vmem [resolvable:$true] %s5053
      %s5055 = sshll.u32 %s15, 4
      %s5056 = int_to_ptr.hbm [resolvable:$true] %s5055
      %5061 = dma.vmem_to_hbm [thread:$0]  %s5054, 32, %s5056, [#allocation5], 32, 32, 2
    $region65: #{tpu_custom_call.1} parent=1 // pred_fallthru
      _
    // Predicated region
    $region66: #{tpu_custom_call.1} parent=1 // pred_check
      _
    $region67: #{tpu_custom_call.1} parent=1 // pred_check_branch
      %5063 = sbr.rel (0) target = $region69
    $region68: #{tpu_custom_call.1} parent=1 // pred_region
      %5065 = dma.done [#allocation3], 896
    $region69: #{tpu_custom_call.1} parent=1 // pred_fallthru
      _
    // Predicated region
    $region70: #{tpu_custom_call.1} parent=1 // pred_check
      _
    $region71: #{tpu_custom_call.1} parent=1 // pred_check_branch
      %5067 = sbr.rel (0) target = $region73
    $region72: #{tpu_custom_call.1} parent=1 // pred_region
      %5069 = dma.done [#allocation5], 256
    $region73: #{tpu_custom_call.1} parent=1 // pred_fallthru
      _
    %5070 = vsyncpa [#allocation3], 1
    %5071 = vsyncpa [#allocation5], 1

// kernel: tpu_custom_call.1
$region0: #{tpu_custom_call.1}
  #allocation0 [shape = 'u32[]', space=smem, size = 0x4, offset = 0x4, fixed_abs, tag = 'smem constant byte address 0x4 - core index']
  #allocation1 [shape = 'u32[72,128]{1,0:T(1,128)}', space=vmem, size = 0x9000, scoped, tag = 'internal scratch']
  %s0 = inlined_call_operand.vmem [shape: f32[2,784], index: 0, kind: input, shape index: {}]
  %s1 = inlined_call_operand.vmem [shape: f32[2,10], index: 1, kind: input, shape index: {}]
  %s2 = inlined_call_operand.vmem [shape: bf16[784,512], index: 2, kind: input, shape index: {}]
  %s3 = inlined_call_operand.vmem [shape: f32[1,512], index: 3, kind: input, shape index: {}]
  %s4 = inlined_call_operand.vmem [shape: bf16[512,256], index: 4, kind: input, shape index: {}]
  %s5 = inlined_call_operand.vmem [shape: f32[1,256], index: 5, kind: input, shape index: {}]
  %s6 = inlined_call_operand.vmem [shape: bf16[256,20], index: 6, kind: input, shape index: {}]
  %s7 = inlined_call_operand.vmem [shape: f32[1,20], index: 7, kind: input, shape index: {}]
  %s8 = inlined_call_operand.vmem [shape: bf16[10,256], index: 8, kind: input, shape index: {}]
  %s9 = inlined_call_operand.vmem [shape: f32[1,256], index: 9, kind: input, shape index: {}]
  %s10 = inlined_call_operand.vmem [shape: bf16[256,512], index: 10, kind: input, shape index: {}]
  %s11 = inlined_call_operand.vmem [shape: f32[1,512], index: 11, kind: input, shape index: {}]
  %s12 = inlined_call_operand.vmem [shape: bf16[512,784], index: 12, kind: input, shape index: {}]
  %s13 = inlined_call_operand.vmem [shape: f32[1,784], index: 13, kind: input, shape index: {}]
  %s14 = inlined_call_operand.hbm [shape: bf16[2,784], index: 14, kind: output, shape index: {0}]
  %s15 = inlined_call_operand.hbm [shape: f32[2,20], index: 15, kind: output, shape index: {1}]
  %16 = xla_tuple %s14, %s15
  %s17 = sld [smem:[#allocation0]]
  $region74: #{tpu_custom_call.1} parent=0
    _
  %s19 = ssub.s32 1, %s17
  %s20 = scalar_select 0, %s19, %s17
  $region1: #{tpu_custom_call.1} parent=0
    #allocation2 [shape = 'u8[28672]{0}', space=vmem, size = 0x7000, scoped, tag = 'output window, operand 0, single buffered']
    #allocation3 [shape = 's32[1]{0}', space=sflag, size = 0x4, scoped, tag = 'scoped memory for tpu_custom_call.1']
    #allocation4 [shape = 'u8[8192]{0}', space=vmem, size = 0x2000, scoped, tag = 'output window, operand 1, single buffered']
    #allocation5 [shape = 's32[1]{0}', space=sflag, size = 0x4, scoped, tag = 'scoped memory for tpu_custom_call.1']
    %21 = vsyncpa [#allocation3], 0
    %22 = vsyncpa [#allocation5], 0
    // Predicated region
    $region2: #{tpu_custom_call.1} parent=1 // pred_check
      _
    $region3: #{tpu_custom_call.1} parent=1 // pred_check_branch
      %24 = sbr.rel (0) target = $region5
    $region4: #{tpu_custom_call.1} parent=1 // pred_region
      _
    $region5: #{tpu_custom_call.1} parent=1 // pred_fallthru
      _
    // Predicated region
    $region6: #{tpu_custom_call.1} parent=1 // pred_check
      _
    $region7: #{tpu_custom_call.1} parent=1 // pred_check_branch
      %26 = sbr.rel (0) target = $region9
    $region8: #{tpu_custom_call.1} parent=1 // pred_region
      _
    $region9: #{tpu_custom_call.1} parent=1 // pred_fallthru
      _
    // Predicated region
    $region10: #{tpu_custom_call.1} parent=1 // pred_check
      _
    $region11: #{tpu_custom_call.1} parent=1 // pred_check_branch
      %28 = sbr.rel (0) target = $region13
    $region12: #{tpu_custom_call.1} parent=1 // pred_region
      _
    $region13: #{tpu_custom_call.1} parent=1 // pred_fallthru
      _
    // Predicated region
    $region14: #{tpu_custom_call.1} parent=1 // pred_check
      _
    $region15: #{tpu_custom_call.1} parent=1 // pred_check_branch
      %30 = sbr.rel (0) target = $region17
    $region16: #{tpu_custom_call.1} parent=1 // pred_region
      _
    $region17: #{tpu_custom_call.1} parent=1 // pred_fallthru
      _
    // Predicated region
    $region18: #{tpu_custom_call.1} parent=1 // pred_check
      _
    $region19: #{tpu_custom_call.1} parent=1 // pred_check_branch
      %32 = sbr.rel (0) target = $region21
    $region20: #{tpu_custom_call.1} parent=1 // pred_region
      _
    $region21: #{tpu_custom_call.1} parent=1 // pred_fallthru
      _
    // Predicated region
    $region22: #{tpu_custom_call.1} parent=1 // pred_check
      _
    $region23: #{tpu_custom_call.1} parent=1 // pred_check_branch
      %34 = sbr.rel (0) target = $region25
    $region24: #{tpu_custom_call.1} parent=1 // pred_region
      _
    $region25: #{tpu_custom_call.1} parent=1 // pred_fallthru
      _
    // Predicated region
    $region26: #{tpu_custom_call.1} parent=1 // pred_check
      _
    $region27: #{tpu_custom_call.1} parent=1 // pred_check_branch
      %36 = sbr.rel (0) target = $region29
    $region28: #{tpu_custom_call.1} parent=1 // pred_region
      _
    $region29: #{tpu_custom_call.1} parent=1 // pred_fallthru
      _
    // Predicated region
    $region30: #{tpu_custom_call.1} parent=1 // pred_check
      _
    $region31: #{tpu_custom_call.1} parent=1 // pred_check_branch
      %38 = sbr.rel (0) target = $region33
    $region32: #{tpu_custom_call.1} parent=1 // pred_region
      _
    $region33: #{tpu_custom_call.1} parent=1 // pred_fallthru
      _
    // Predicated region
    $region34: #{tpu_custom_call.1} parent=1 // pred_check
      _
    $region35: #{tpu_custom_call.1} parent=1 // pred_check_branch
      %40 = sbr.rel (0) target = $region37
    $region36: #{tpu_custom_call.1} parent=1 // pred_region
      _
    $region37: #{tpu_custom_call.1} parent=1 // pred_fallthru
      _
    // Predicated region
    $region38: #{tpu_custom_call.1} parent=1 // pred_check
      _
    $region39: #{tpu_custom_call.1} parent=1 // pred_check_branch
      %42 = sbr.rel (0) target = $region41
    $region40: #{tpu_custom_call.1} parent=1 // pred_region
      _
    $region41: #{tpu_custom_call.1} parent=1 // pred_fallthru
      _
    // Predicated region
    $region42: #{tpu_custom_call.1} parent=1 // pred_check
      _
    $region43: #{tpu_custom_call.1} parent=1 // pred_check_branch
      %44 = sbr.rel (0) target = $region45
    $region44: #{tpu_custom_call.1} parent=1 // pred_region
      _
    $region45: #{tpu_custom_call.1} parent=1 // pred_fallthru
      _
    // Predicated region
    $region46: #{tpu_custom_call.1} parent=1 // pred_check
      _
    $region47: #{tpu_custom_call.1} parent=1 // pred_check_branch
      %46 = sbr.rel (0) target = $region49
    $region48: #{tpu_custom_call.1} parent=1 // pred_region
      _
    $region49: #{tpu_custom_call.1} parent=1 // pred_fallthru
      _
    // Predicated region
    $region50: #{tpu_custom_call.1} parent=1 // pred_check
      _
    $region51: #{tpu_custom_call.1} parent=1 // pred_check_branch
      %48 = sbr.rel (0) target = $region53
    $region52: #{tpu_custom_call.1} parent=1 // pred_region
      _
    $region53: #{tpu_custom_call.1} parent=1 // pred_fallthru
      _
    // Predicated region
    $region54: #{tpu_custom_call.1} parent=1 // pred_check
      _
    $region55: #{tpu_custom_call.1} parent=1 // pred_check_branch
      %50 = sbr.rel (0) target = $region57
    $region56: #{tpu_custom_call.1} parent=1 // pred_region
      _
    $region57: #{tpu_custom_call.1} parent=1 // pred_fallthru
      _
    %v52 = vld [vmem:[%s0] sm:$0xff]
    %v53 = vld [vmem:[%s0 + $0x8] sm:$0x3f]
    %v54 = vld [vmem:[%s0 + $0xe] sm:$0xff]
    %v55 = vld [vmem:[%s0 + $0x16] sm:$0x3f]
    %v56 = vld [vmem:[%s0 + $0x1c] sm:$0xff]
    %v57 = vld [vmem:[%s0 + $0x24] sm:$0x3f]
    %v58 = vld [vmem:[%s0 + $0x2a] sm:$0xff]
    %v59 = vld [vmem:[%s0 + $0x32] sm:$0x3f]
    %v60 = vld [vmem:[%s0 + $0x38] sm:$0xff]
    %v61 = vld [vmem:[%s0 + $0x40] sm:$0x3f]
    %v62 = vld [vmem:[%s0 + $0x46] sm:$0xff]
    %v63 = vld [vmem:[%s0 + $0x4e] sm:$0x3f]
    %v64 = vld [vmem:[%s0 + $0x54] sm:$0xff]
    %v65 = vld [vmem:[%s0 + $0x5c] sm:$0x3f]
    %v66 = vld [vmem:[%s0 + $0x62] sm:$0xff]
    %v67 = vld [vmem:[%s0 + $0x6a] sm:$0x3f]
    %84 = vst [vmem:[#allocation1] ss:$4 sm:$0xff] %v52
    %s85 = scalar_lea.vmem [#allocation1], 1
    %86 = vst [vmem:[%s85] ss:$4 sm:$0xff] %v54
    %s87 = scalar_lea.vmem [#allocation1], 2
    %88 = vst [vmem:[%s87] ss:$4 sm:$0xff] %v56
    %s89 = scalar_lea.vmem [#allocation1], 3
    %90 = vst [vmem:[%s89] ss:$4 sm:$0xff] %v58
    %s91 = scalar_lea.vmem [#allocation1], 32
    %92 = vst [vmem:[%s91] ss:$4 sm:$0xff] %v53
    %s93 = scalar_lea.vmem [#allocation1], 33
    %94 = vst [vmem:[%s93] ss:$4 sm:$0xff] %v55
    %s95 = scalar_lea.vmem [#allocation1], 34
    %96 = vst [vmem:[%s95] ss:$4 sm:$0xff] %v57
    %s97 = scalar_lea.vmem [#allocation1], 35
    %98 = vst [vmem:[%s97] ss:$4 sm:$0xff] %v59
    %v99 = vld.sshfl [vmem:[#allocation1] sm:$0xff pattern:$0x73625140]
    %v100 = vld.sshfl [vmem:[#allocation1 + $0x8] sm:$0xff pattern:$0x73625140]
    %v101 = vld.sshfl [vmem:[#allocation1 + $0x10] sm:$0xff pattern:$0x73625140]
    %v102 = vld.sshfl [vmem:[#allocation1 + $0x18] sm:$0xff pattern:$0x73625140]
    %v103 = vld.sshfl [vmem:[#allocation1 + $0x20] sm:$0xff pattern:$0x73625140]
    %v104 = vld.sshfl [vmem:[#allocation1 + $0x28] sm:$0xff pattern:$0x73625140]
    %v105 = vld.sshfl [vmem:[#allocation1 + $0x30] sm:$0xff pattern:$0x73625140]
    %106 = vst [vmem:[#allocation1] ss:$4 sm:$0xff] %v60
    %107 = vst [vmem:[%s85] ss:$4 sm:$0xff] %v62
    %108 = vst [vmem:[%s87] ss:$4 sm:$0xff] %v64
    %109 = vst [vmem:[%s89] ss:$4 sm:$0xff] %v66
    %110 = vst [vmem:[%s91] ss:$4 sm:$0xff] %v61
    %111 = vst [vmem:[%s93] ss:$4 sm:$0xff] %v63
    %112 = vst [vmem:[%s95] ss:$4 sm:$0xff] %v65
    %113 = vst [vmem:[%s97] ss:$4 sm:$0xff] %v67
    %v114 = vld.sshfl [vmem:[#allocation1] sm:$0xff pattern:$0x73625140]
    %v115 = vld.sshfl [vmem:[#allocation1 + $0x8] sm:$0xff pattern:$0x73625140]
    %v116 = vld.sshfl [vmem:[#allocation1 + $0x10] sm:$0xff pattern:$0x73625140]
    %v117 = vld.sshfl [vmem:[#allocation1 + $0x18] sm:$0xff pattern:$0x73625140]
    %v118 = vld.sshfl [vmem:[#allocation1 + $0x20] sm:$0xff pattern:$0x73625140]
    %v119 = vld.sshfl [vmem:[#allocation1 + $0x28] sm:$0xff pattern:$0x73625140]
    %v120 = vld.sshfl [vmem:[#allocation1 + $0x30] sm:$0xff pattern:$0x73625140]
    %v135 = vpack.c.bf16 %v114, %v99
    %v136 = vpack.c.bf16 %v115, %v100
    %v137 = vpack.c.bf16 %v116, %v101
    %v138 = vpack.c.bf16 %v117, %v102
    %v139 = vpack.c.bf16 %v118, %v103
    %v140 = vpack.c.bf16 %v119, %v104
    %v141 = vpack.c.bf16 %v120, %v105
    %v142 = vld [vmem:[%s2] sm:$0xff]
    %v143 = vld [vmem:[%s2 + $0x8] sm:$0xff]
    %v144 = vld [vmem:[%s2 + $0x10] sm:$0xff]
    %v145 = vld [vmem:[%s2 + $0x18] sm:$0xff]
    %v146 = vld [vmem:[%s2 + $0x20] sm:$0xff]
    %v147 = vld [vmem:[%s2 + $0x28] sm:$0xff]
    %v148 = vld [vmem:[%s2 + $0x30] sm:$0xff]
    %v149 = vld [vmem:[%s2 + $0x38] sm:$0xff]
    %v150 = vld [vmem:[%s2 + $0x40] sm:$0xff]
    %v151 = vld [vmem:[%s2 + $0x48] sm:$0xff]
    %v152 = vld [vmem:[%s2 + $0x50] sm:$0xff]
    %v153 = vld [vmem:[%s2 + $0x58] sm:$0xff]
    %v154 = vld [vmem:[%s2 + $0x60] sm:$0xff]
    %v155 = vld [vmem:[%s2 + $0x68] sm:$0xff]
    %v156 = vld [vmem:[%s2 + $0x70] sm:$0xff]
    %v157 = vld [vmem:[%s2 + $0x78] sm:$0xff]
    %v158 = vld [vmem:[%s2 + $0x80] sm:$0xff]
    %v159 = vld [vmem:[%s2 + $0x88] sm:$0xff]
    %v160 = vld [vmem:[%s2 + $0x90] sm:$0xff]
    %v161 = vld [vmem:[%s2 + $0x98] sm:$0xff]
    %v162 = vld [vmem:[%s2 + $0xa0] sm:$0xff]
    %v163 = vld [vmem:[%s2 + $0xa8] sm:$0xff]
    %v164 = vld [vmem:[%s2 + $0xb0] sm:$0xff]
    %v165 = vld [vmem:[%s2 + $0xb8] sm:$0xff]
    %v166 = vld [vmem:[%s2 + $0xc0] sm:$0xff]
    %v167 = vld [vmem:[%s2 + $0xc8] sm:$0xff]
    %v168 = vld [vmem:[%s2 + $0xd0] sm:$0xff]
    %v169 = vld [vmem:[%s2 + $0xd8] sm:$0xff]
    %v170 = vld [vmem:[%s2 + $0xe0] sm:$0xff]
    %v171 = vld [vmem:[%s2 + $0xe8] sm:$0xff]
    %v172 = vld [vmem:[%s2 + $0xf0] sm:$0xff]
    %v173 = vld [vmem:[%s2 + $0xf8] sm:$0xff]
    %v174 = vld [vmem:[%s2 + $0x100] sm:$0xff]
    %v175 = vld [vmem:[%s2 + $0x108] sm:$0xff]
    %v176 = vld [vmem:[%s2 + $0x110] sm:$0xff]
    %v177 = vld [vmem:[%s2 + $0x118] sm:$0xff]
    %v178 = vld [vmem:[%s2 + $0x120] sm:$0xff]
    %v179 = vld [vmem:[%s2 + $0x128] sm:$0xff]
    %v180 = vld [vmem:[%s2 + $0x130] sm:$0xff]
    %v181 = vld [vmem:[%s2 + $0x138] sm:$0xff]
    %v182 = vld [vmem:[%s2 + $0x140] sm:$0xff]
    %v183 = vld [vmem:[%s2 + $0x148] sm:$0xff]
    %v184 = vld [vmem:[%s2 + $0x150] sm:$0xff]
    %v185 = vld [vmem:[%s2 + $0x158] sm:$0xff]
    %v186 = vld [vmem:[%s2 + $0x160] sm:$0xff]
    %v187 = vld [vmem:[%s2 + $0x168] sm:$0xff]
    %v188 = vld [vmem:[%s2 + $0x170] sm:$0xff]
    %v189 = vld [vmem:[%s2 + $0x178] sm:$0xff]
    %v190 = vld [vmem:[%s2 + $0x180] sm:$0xff]
    %v191 = vld [vmem:[%s2 + $0x188] sm:$0xff]
    %v192 = vld [vmem:[%s2 + $0x190] sm:$0xff]
    %v193 = vld [vmem:[%s2 + $0x198] sm:$0xff]
    %v194 = vld [vmem:[%s2 + $0x1a0] sm:$0xff]
    %v195 = vld [vmem:[%s2 + $0x1a8] sm:$0xff]
    %v196 = vld [vmem:[%s2 + $0x1b0] sm:$0xff]
    %v197 = vld [vmem:[%s2 + $0x1b8] sm:$0xff]
    %v198 = vld [vmem:[%s2 + $0x1c0] sm:$0xff]
    %v199 = vld [vmem:[%s2 + $0x1c8] sm:$0xff]
    %v200 = vld [vmem:[%s2 + $0x1d0] sm:$0xff]
    %v201 = vld [vmem:[%s2 + $0x1d8] sm:$0xff]
    %v202 = vld [vmem:[%s2 + $0x1e0] sm:$0xff]
    %v203 = vld [vmem:[%s2 + $0x1e8] sm:$0xff]
    %v204 = vld [vmem:[%s2 + $0x1f0] sm:$0xff]
    %v205 = vld [vmem:[%s2 + $0x1f8] sm:$0xff]
    %v206 = vld [vmem:[%s2 + $0x200] sm:$0xff]
    %v207 = vld [vmem:[%s2 + $0x208] sm:$0xff]
    %v208 = vld [vmem:[%s2 + $0x210] sm:$0xff]
    %v209 = vld [vmem:[%s2 + $0x218] sm:$0xff]
    %v210 = vld [vmem:[%s2 + $0x220] sm:$0xff]
    %v211 = vld [vmem:[%s2 + $0x228] sm:$0xff]
    %v212 = vld [vmem:[%s2 + $0x230] sm:$0xff]
    %v213 = vld [vmem:[%s2 + $0x238] sm:$0xff]
    %v214 = vld [vmem:[%s2 + $0x240] sm:$0xff]
    %v215 = vld [vmem:[%s2 + $0x248] sm:$0xff]
    %v216 = vld [vmem:[%s2 + $0x250] sm:$0xff]
    %v217 = vld [vmem:[%s2 + $0x258] sm:$0xff]
    %v218 = vld [vmem:[%s2 + $0x260] sm:$0xff]
    %v219 = vld [vmem:[%s2 + $0x268] sm:$0xff]
    %v220 = vld [vmem:[%s2 + $0x270] sm:$0xff]
    %v221 = vld [vmem:[%s2 + $0x278] sm:$0xff]
    %v222 = vld [vmem:[%s2 + $0x280] sm:$0xff]
    %v223 = vld [vmem:[%s2 + $0x288] sm:$0xff]
    %v224 = vld [vmem:[%s2 + $0x290] sm:$0xff]
    %v225 = vld [vmem:[%s2 + $0x298] sm:$0xff]
    %v226 = vld [vmem:[%s2 + $0x2a0] sm:$0xff]
    %v227 = vld [vmem:[%s2 + $0x2a8] sm:$0xff]
    %v228 = vld [vmem:[%s2 + $0x2b0] sm:$0xff]
    %v229 = vld [vmem:[%s2 + $0x2b8] sm:$0xff]
    %v230 = vld [vmem:[%s2 + $0x2c0] sm:$0xff]
    %v231 = vld [vmem:[%s2 + $0x2c8] sm:$0xff]
    %v232 = vld [vmem:[%s2 + $0x2d0] sm:$0xff]
    %v233 = vld [vmem:[%s2 + $0x2d8] sm:$0xff]
    %v234 = vld [vmem:[%s2 + $0x2e0] sm:$0xff]
    %v235 = vld [vmem:[%s2 + $0x2e8] sm:$0xff]
    %v236 = vld [vmem:[%s2 + $0x2f0] sm:$0xff]
    %v237 = vld [vmem:[%s2 + $0x2f8] sm:$0xff]
    %v238 = vld [vmem:[%s2 + $0x300] sm:$0xff]
    %v239 = vld [vmem:[%s2 + $0x308] sm:$0xff]
    %v240 = vld [vmem:[%s2 + $0x310] sm:$0xff]
    %v241 = vld [vmem:[%s2 + $0x318] sm:$0xff]
    %v242 = vld [vmem:[%s2 + $0x320] sm:$0xff]
    %v243 = vld [vmem:[%s2 + $0x328] sm:$0xff]
    %v244 = vld [vmem:[%s2 + $0x330] sm:$0xff]
    %v245 = vld [vmem:[%s2 + $0x338] sm:$0xff]
    %v246 = vld [vmem:[%s2 + $0x340] sm:$0xff]
    %v247 = vld [vmem:[%s2 + $0x348] sm:$0xff]
    %v248 = vld [vmem:[%s2 + $0x350] sm:$0xff]
    %v249 = vld [vmem:[%s2 + $0x358] sm:$0xff]
    %v250 = vld [vmem:[%s2 + $0x360] sm:$0xff]
    %v251 = vld [vmem:[%s2 + $0x368] sm:$0xff]
    %v252 = vld [vmem:[%s2 + $0x370] sm:$0xff]
    %v253 = vld [vmem:[%s2 + $0x378] sm:$0xff]
    %v254 = vld [vmem:[%s2 + $0x380] sm:$0xff]
    %v255 = vld [vmem:[%s2 + $0x388] sm:$0xff]
    %v256 = vld [vmem:[%s2 + $0x390] sm:$0xff]
    %v257 = vld [vmem:[%s2 + $0x398] sm:$0xff]
    %v258 = vld [vmem:[%s2 + $0x3a0] sm:$0xff]
    %v259 = vld [vmem:[%s2 + $0x3a8] sm:$0xff]
    %v260 = vld [vmem:[%s2 + $0x3b0] sm:$0xff]
    %v261 = vld [vmem:[%s2 + $0x3b8] sm:$0xff]
    %v262 = vld [vmem:[%s2 + $0x3c0] sm:$0xff]
    %v263 = vld [vmem:[%s2 + $0x3c8] sm:$0xff]
    %v264 = vld [vmem:[%s2 + $0x3d0] sm:$0xff]
    %v265 = vld [vmem:[%s2 + $0x3d8] sm:$0xff]
    %v266 = vld [vmem:[%s2 + $0x3e0] sm:$0xff]
    %v267 = vld [vmem:[%s2 + $0x3e8] sm:$0xff]
    %v268 = vld [vmem:[%s2 + $0x3f0] sm:$0xff]
    %v269 = vld [vmem:[%s2 + $0x3f8] sm:$0xff]
    %v270 = vld [vmem:[%s2 + $0x400] sm:$0xff]
    %v271 = vld [vmem:[%s2 + $0x408] sm:$0xff]
    %v272 = vld [vmem:[%s2 + $0x410] sm:$0xff]
    %v273 = vld [vmem:[%s2 + $0x418] sm:$0xff]
    %v274 = vld [vmem:[%s2 + $0x420] sm:$0xff]
    %v275 = vld [vmem:[%s2 + $0x428] sm:$0xff]
    %v276 = vld [vmem:[%s2 + $0x430] sm:$0xff]
    %v277 = vld [vmem:[%s2 + $0x438] sm:$0xff]
    %v278 = vld [vmem:[%s2 + $0x440] sm:$0xff]
    %v279 = vld [vmem:[%s2 + $0x448] sm:$0xff]
    %v280 = vld [vmem:[%s2 + $0x450] sm:$0xff]
    %v281 = vld [vmem:[%s2 + $0x458] sm:$0xff]
    %v282 = vld [vmem:[%s2 + $0x460] sm:$0xff]
    %v283 = vld [vmem:[%s2 + $0x468] sm:$0xff]
    %v284 = vld [vmem:[%s2 + $0x470] sm:$0xff]
    %v285 = vld [vmem:[%s2 + $0x478] sm:$0xff]
    %v286 = vld [vmem:[%s2 + $0x480] sm:$0xff]
    %v287 = vld [vmem:[%s2 + $0x488] sm:$0xff]
    %v288 = vld [vmem:[%s2 + $0x490] sm:$0xff]
    %v289 = vld [vmem:[%s2 + $0x498] sm:$0xff]
    %v290 = vld [vmem:[%s2 + $0x4a0] sm:$0xff]
    %v291 = vld [vmem:[%s2 + $0x4a8] sm:$0xff]
    %v292 = vld [vmem:[%s2 + $0x4b0] sm:$0xff]
    %v293 = vld [vmem:[%s2 + $0x4b8] sm:$0xff]
    %v294 = vld [vmem:[%s2 + $0x4c0] sm:$0xff]
    %v295 = vld [vmem:[%s2 + $0x4c8] sm:$0xff]
    %v296 = vld [vmem:[%s2 + $0x4d0] sm:$0xff]
    %v297 = vld [vmem:[%s2 + $0x4d8] sm:$0xff]
    %v298 = vld [vmem:[%s2 + $0x4e0] sm:$0xff]
    %v299 = vld [vmem:[%s2 + $0x4e8] sm:$0xff]
    %v300 = vld [vmem:[%s2 + $0x4f0] sm:$0xff]
    %v301 = vld [vmem:[%s2 + $0x4f8] sm:$0xff]
    %v302 = vld [vmem:[%s2 + $0x500] sm:$0xff]
    %v303 = vld [vmem:[%s2 + $0x508] sm:$0xff]
    %v304 = vld [vmem:[%s2 + $0x510] sm:$0xff]
    %v305 = vld [vmem:[%s2 + $0x518] sm:$0xff]
    %v306 = vld [vmem:[%s2 + $0x520] sm:$0xff]
    %v307 = vld [vmem:[%s2 + $0x528] sm:$0xff]
    %v308 = vld [vmem:[%s2 + $0x530] sm:$0xff]
    %v309 = vld [vmem:[%s2 + $0x538] sm:$0xff]
    %v310 = vld [vmem:[%s2 + $0x540] sm:$0xff]
    %v311 = vld [vmem:[%s2 + $0x548] sm:$0xff]
    %v312 = vld [vmem:[%s2 + $0x550] sm:$0xff]
    %v313 = vld [vmem:[%s2 + $0x558] sm:$0xff]
    %v314 = vld [vmem:[%s2 + $0x560] sm:$0xff]
    %v315 = vld [vmem:[%s2 + $0x568] sm:$0xff]
    %v316 = vld [vmem:[%s2 + $0x570] sm:$0xff]
    %v317 = vld [vmem:[%s2 + $0x578] sm:$0xff]
    %v318 = vld [vmem:[%s2 + $0x580] sm:$0xff]
    %v319 = vld [vmem:[%s2 + $0x588] sm:$0xff]
    %v320 = vld [vmem:[%s2 + $0x590] sm:$0xff]
    %v321 = vld [vmem:[%s2 + $0x598] sm:$0xff]
    %v322 = vld [vmem:[%s2 + $0x5a0] sm:$0xff]
    %v323 = vld [vmem:[%s2 + $0x5a8] sm:$0xff]
    %v324 = vld [vmem:[%s2 + $0x5b0] sm:$0xff]
    %v325 = vld [vmem:[%s2 + $0x5b8] sm:$0xff]
    %v326 = vld [vmem:[%s2 + $0x5c0] sm:$0xff]
    %v327 = vld [vmem:[%s2 + $0x5c8] sm:$0xff]
    %v328 = vld [vmem:[%s2 + $0x5d0] sm:$0xff]
    %v329 = vld [vmem:[%s2 + $0x5d8] sm:$0xff]
    %v330 = vld [vmem:[%s2 + $0x5e0] sm:$0xff]
    %v331 = vld [vmem:[%s2 + $0x5e8] sm:$0xff]
    %v332 = vld [vmem:[%s2 + $0x5f0] sm:$0xff]
    %v333 = vld [vmem:[%s2 + $0x5f8] sm:$0xff]
    %v334 = vld [vmem:[%s2 + $0x600] sm:$0xff]
    %v335 = vld [vmem:[%s2 + $0x608] sm:$0xff]
    %v336 = vld [vmem:[%s2 + $0x610] sm:$0xff]
    %v337 = vld [vmem:[%s2 + $0x618] sm:$0xff]
    %v338 = vld [vmem:[%s3] sm:$0xf]
    %v340 = vperm.slane %v338, 0
    %v341 = vperm.slane %v338, 1
    %v342 = vperm.slane %v338, 2
    %v343 = vperm.slane %v338, 3
    %v544 = vunpack.c.l.b16 %v142
    %v545 = vunpack.c.h.b16 %v142
    %v546 = vunpack.c.l.b16 %v143
    %v547 = vunpack.c.h.b16 %v143
    %v548 = vunpack.c.l.b16 %v144
    %v549 = vunpack.c.h.b16 %v144
    %v550 = vunpack.c.l.b16 %v145
    %v551 = vunpack.c.h.b16 %v145
    %v552 = vunpack.c.l.b16 %v146
    %v553 = vunpack.c.h.b16 %v146
    %v554 = vunpack.c.l.b16 %v147
    %v555 = vunpack.c.h.b16 %v147
    %v556 = vunpack.c.l.b16 %v148
    %v557 = vunpack.c.h.b16 %v148
    %v558 = vunpack.c.l.b16 %v149
    %v559 = vunpack.c.h.b16 %v149
    %v560 = vunpack.c.l.b16 %v150
    %v561 = vunpack.c.h.b16 %v150
    %v562 = vunpack.c.l.b16 %v151
    %v563 = vunpack.c.h.b16 %v151
    %v564 = vunpack.c.l.b16 %v152
    %v565 = vunpack.c.h.b16 %v152
    %v566 = vunpack.c.l.b16 %v153
    %v567 = vunpack.c.h.b16 %v153
    %v568 = vunpack.c.l.b16 %v154
    %v569 = vunpack.c.h.b16 %v154
    %v570 = vunpack.c.l.b16 %v155
    %v571 = vunpack.c.h.b16 %v155
    %v572 = vunpack.c.l.b16 %v156
    %v573 = vunpack.c.h.b16 %v156
    %v574 = vunpack.c.l.b16 %v157
    %v575 = vunpack.c.h.b16 %v157
    %v576 = vunpack.c.l.b16 %v158
    %v577 = vunpack.c.h.b16 %v158
    %v578 = vunpack.c.l.b16 %v159
    %v579 = vunpack.c.h.b16 %v159
    %v580 = vunpack.c.l.b16 %v160
    %v581 = vunpack.c.h.b16 %v160
    %v582 = vunpack.c.l.b16 %v161
    %v583 = vunpack.c.h.b16 %v161
    %v584 = vunpack.c.l.b16 %v162
    %v585 = vunpack.c.h.b16 %v162
    %v586 = vunpack.c.l.b16 %v163
    %v587 = vunpack.c.h.b16 %v163
    %v588 = vunpack.c.l.b16 %v164
    %v589 = vunpack.c.h.b16 %v164
    %v590 = vunpack.c.l.b16 %v165
    %v591 = vunpack.c.h.b16 %v165
    %v592 = vunpack.c.l.b16 %v166
    %v593 = vunpack.c.h.b16 %v166
    %v594 = vunpack.c.l.b16 %v167
    %v595 = vunpack.c.h.b16 %v167
    %v596 = vunpack.c.l.b16 %v168
    %v597 = vunpack.c.h.b16 %v168
    %v598 = vunpack.c.l.b16 %v169
    %v599 = vunpack.c.h.b16 %v169
    %v600 = vunpack.c.l.b16 %v170
    %v601 = vunpack.c.h.b16 %v170
    %v602 = vunpack.c.l.b16 %v171
    %v603 = vunpack.c.h.b16 %v171
    %v604 = vunpack.c.l.b16 %v172
    %v605 = vunpack.c.h.b16 %v172
    %v606 = vunpack.c.l.b16 %v173
    %v607 = vunpack.c.h.b16 %v173
    %v608 = vunpack.c.l.b16 %v174
    %v609 = vunpack.c.h.b16 %v174
    %v610 = vunpack.c.l.b16 %v175
    %v611 = vunpack.c.h.b16 %v175
    %v612 = vunpack.c.l.b16 %v176
    %v613 = vunpack.c.h.b16 %v176
    %v614 = vunpack.c.l.b16 %v177
    %v615 = vunpack.c.h.b16 %v177
    %v616 = vunpack.c.l.b16 %v178
    %v617 = vunpack.c.h.b16 %v178
    %v618 = vunpack.c.l.b16 %v179
    %v619 = vunpack.c.h.b16 %v179
    %v620 = vunpack.c.l.b16 %v180
    %v621 = vunpack.c.h.b16 %v180
    %v622 = vunpack.c.l.b16 %v181
    %v623 = vunpack.c.h.b16 %v181
    %v624 = vunpack.c.l.b16 %v182
    %v625 = vunpack.c.h.b16 %v182
    %v626 = vunpack.c.l.b16 %v183
    %v627 = vunpack.c.h.b16 %v183
    %v628 = vunpack.c.l.b16 %v184
    %v629 = vunpack.c.h.b16 %v184
    %v630 = vunpack.c.l.b16 %v185
    %v631 = vunpack.c.h.b16 %v185
    %v632 = vunpack.c.l.b16 %v186
    %v633 = vunpack.c.h.b16 %v186
    %v634 = vunpack.c.l.b16 %v187
    %v635 = vunpack.c.h.b16 %v187
    %v636 = vunpack.c.l.b16 %v188
    %v637 = vunpack.c.h.b16 %v188
    %v638 = vunpack.c.l.b16 %v189
    %v639 = vunpack.c.h.b16 %v189
    %v640 = vunpack.c.l.b16 %v190
    %v641 = vunpack.c.h.b16 %v190
    %v642 = vunpack.c.l.b16 %v191
    %v643 = vunpack.c.h.b16 %v191
    %v644 = vunpack.c.l.b16 %v192
    %v645 = vunpack.c.h.b16 %v192
    %v646 = vunpack.c.l.b16 %v193
    %v647 = vunpack.c.h.b16 %v193
    %v648 = vunpack.c.l.b16 %v194
    %v649 = vunpack.c.h.b16 %v194
    %v650 = vunpack.c.l.b16 %v195
    %v651 = vunpack.c.h.b16 %v195
    %v652 = vunpack.c.l.b16 %v196
    %v653 = vunpack.c.h.b16 %v196
    %v654 = vunpack.c.l.b16 %v197
    %v655 = vunpack.c.h.b16 %v197
    %v656 = vunpack.c.l.b16 %v198
    %v657 = vunpack.c.h.b16 %v198
    %v658 = vunpack.c.l.b16 %v199
    %v659 = vunpack.c.h.b16 %v199
    %v660 = vunpack.c.l.b16 %v200
    %v661 = vunpack.c.h.b16 %v200
    %v662 = vunpack.c.l.b16 %v201
    %v663 = vunpack.c.h.b16 %v201
    %v664 = vunpack.c.l.b16 %v202
    %v665 = vunpack.c.h.b16 %v202
    %v666 = vunpack.c.l.b16 %v203
    %v667 = vunpack.c.h.b16 %v203
    %v668 = vunpack.c.l.b16 %v204
    %v669 = vunpack.c.h.b16 %v204
    %v670 = vunpack.c.l.b16 %v205
    %v671 = vunpack.c.h.b16 %v205
    %v672 = vunpack.c.l.b16 %v206
    %v673 = vunpack.c.h.b16 %v206
    %v674 = vunpack.c.l.b16 %v207
    %v675 = vunpack.c.h.b16 %v207
    %v676 = vunpack.c.l.b16 %v208
    %v677 = vunpack.c.h.b16 %v208
    %v678 = vunpack.c.l.b16 %v209
    %v679 = vunpack.c.h.b16 %v209
    %v680 = vunpack.c.l.b16 %v210
    %v681 = vunpack.c.h.b16 %v210
    %v682 = vunpack.c.l.b16 %v211
    %v683 = vunpack.c.h.b16 %v211
    %v684 = vunpack.c.l.b16 %v212
    %v685 = vunpack.c.h.b16 %v212
    %v686 = vunpack.c.l.b16 %v213
    %v687 = vunpack.c.h.b16 %v213
    %v688 = vunpack.c.l.b16 %v214
    %v689 = vunpack.c.h.b16 %v214
    %v690 = vunpack.c.l.b16 %v215
    %v691 = vunpack.c.h.b16 %v215
    %v692 = vunpack.c.l.b16 %v216
    %v693 = vunpack.c.h.b16 %v216
    %v694 = vunpack.c.l.b16 %v217
    %v695 = vunpack.c.h.b16 %v217
    %v696 = vunpack.c.l.b16 %v218
    %v697 = vunpack.c.h.b16 %v218
    %v698 = vunpack.c.l.b16 %v219
    %v699 = vunpack.c.h.b16 %v219
    %v700 = vunpack.c.l.b16 %v220
    %v701 = vunpack.c.h.b16 %v220
    %v702 = vunpack.c.l.b16 %v221
    %v703 = vunpack.c.h.b16 %v221
    %v704 = vunpack.c.l.b16 %v222
    %v705 = vunpack.c.h.b16 %v222
    %v706 = vunpack.c.l.b16 %v223
    %v707 = vunpack.c.h.b16 %v223
    %v708 = vunpack.c.l.b16 %v224
    %v709 = vunpack.c.h.b16 %v224
    %v710 = vunpack.c.l.b16 %v225
    %v711 = vunpack.c.h.b16 %v225
    %v712 = vunpack.c.l.b16 %v226
    %v713 = vunpack.c.h.b16 %v226
    %v714 = vunpack.c.l.b16 %v227
    %v715 = vunpack.c.h.b16 %v227
    %v716 = vunpack.c.l.b16 %v228
    %v717 = vunpack.c.h.b16 %v228
    %v718 = vunpack.c.l.b16 %v229
    %v719 = vunpack.c.h.b16 %v229
    %v720 = vunpack.c.l.b16 %v230
    %v721 = vunpack.c.h.b16 %v230
    %v722 = vunpack.c.l.b16 %v231
    %v723 = vunpack.c.h.b16 %v231
    %v724 = vunpack.c.l.b16 %v232
    %v725 = vunpack.c.h.b16 %v232
    %v726 = vunpack.c.l.b16 %v233
    %v727 = vunpack.c.h.b16 %v233
    %v728 = vunpack.c.l.b16 %v234
    %v729 = vunpack.c.h.b16 %v234
    %v730 = vunpack.c.l.b16 %v235
    %v731 = vunpack.c.h.b16 %v235
    %v732 = vunpack.c.l.b16 %v236
    %v733 = vunpack.c.h.b16 %v236
    %v734 = vunpack.c.l.b16 %v237
    %v735 = vunpack.c.h.b16 %v237
    %v736 = vunpack.c.l.b16 %v238
    %v737 = vunpack.c.h.b16 %v238
    %v738 = vunpack.c.l.b16 %v239
    %v739 = vunpack.c.h.b16 %v239
    %v740 = vunpack.c.l.b16 %v240
    %v741 = vunpack.c.h.b16 %v240
    %v742 = vunpack.c.l.b16 %v241
    %v743 = vunpack.c.h.b16 %v241
    %v744 = vunpack.c.l.b16 %v242
    %v745 = vunpack.c.h.b16 %v242
    %v746 = vunpack.c.l.b16 %v243
    %v747 = vunpack.c.h.b16 %v243
    %v748 = vunpack.c.l.b16 %v244
    %v749 = vunpack.c.h.b16 %v244
    %v750 = vunpack.c.l.b16 %v245
    %v751 = vunpack.c.h.b16 %v245
    %v752 = vunpack.c.l.b16 %v246
    %v753 = vunpack.c.h.b16 %v246
    %v754 = vunpack.c.l.b16 %v247
    %v755 = vunpack.c.h.b16 %v247
    %v756 = vunpack.c.l.b16 %v248
    %v757 = vunpack.c.h.b16 %v248
    %v758 = vunpack.c.l.b16 %v249
    %v759 = vunpack.c.h.b16 %v249
    %v760 = vunpack.c.l.b16 %v250
    %v761 = vunpack.c.h.b16 %v250
    %v762 = vunpack.c.l.b16 %v251
    %v763 = vunpack.c.h.b16 %v251
    %v764 = vunpack.c.l.b16 %v252
    %v765 = vunpack.c.h.b16 %v252
    %v766 = vunpack.c.l.b16 %v253
    %v767 = vunpack.c.h.b16 %v253
    %v768 = vunpack.c.l.b16 %v254
    %v769 = vunpack.c.h.b16 %v254
    %v770 = vunpack.c.l.b16 %v255
    %v771 = vunpack.c.h.b16 %v255
    %v772 = vunpack.c.l.b16 %v256
    %v773 = vunpack.c.h.b16 %v256
    %v774 = vunpack.c.l.b16 %v257
    %v775 = vunpack.c.h.b16 %v257
    %v776 = vunpack.c.l.b16 %v258
    %v777 = vunpack.c.h.b16 %v258
    %v778 = vunpack.c.l.b16 %v259
    %v779 = vunpack.c.h.b16 %v259
    %v780 = vunpack.c.l.b16 %v260
    %v781 = vunpack.c.h.b16 %v260
    %v782 = vunpack.c.l.b16 %v261
    %v783 = vunpack.c.h.b16 %v261
    %v784 = vunpack.c.l.b16 %v262
    %v785 = vunpack.c.h.b16 %v262
    %v786 = vunpack.c.l.b16 %v263
    %v787 = vunpack.c.h.b16 %v263
    %v788 = vunpack.c.l.b16 %v264
    %v789 = vunpack.c.h.b16 %v264
    %v790 = vunpack.c.l.b16 %v265
    %v791 = vunpack.c.h.b16 %v265
    %v792 = vunpack.c.l.b16 %v266
    %v793 = vunpack.c.h.b16 %v266
    %v794 = vunpack.c.l.b16 %v267
    %v795 = vunpack.c.h.b16 %v267
    %v796 = vunpack.c.l.b16 %v268
    %v797 = vunpack.c.h.b16 %v268
    %v798 = vunpack.c.l.b16 %v269
    %v799 = vunpack.c.h.b16 %v269
    %v800 = vunpack.c.l.b16 %v270
    %v801 = vunpack.c.h.b16 %v270
    %v802 = vunpack.c.l.b16 %v271
    %v803 = vunpack.c.h.b16 %v271
    %v804 = vunpack.c.l.b16 %v272
    %v805 = vunpack.c.h.b16 %v272
    %v806 = vunpack.c.l.b16 %v273
    %v807 = vunpack.c.h.b16 %v273
    %v808 = vunpack.c.l.b16 %v274
    %v809 = vunpack.c.h.b16 %v274
    %v810 = vunpack.c.l.b16 %v275
    %v811 = vunpack.c.h.b16 %v275
    %v812 = vunpack.c.l.b16 %v276
    %v813 = vunpack.c.h.b16 %v276
    %v814 = vunpack.c.l.b16 %v277
    %v815 = vunpack.c.h.b16 %v277
    %v816 = vunpack.c.l.b16 %v278
    %v817 = vunpack.c.h.b16 %v278
    %v818 = vunpack.c.l.b16 %v279
    %v819 = vunpack.c.h.b16 %v279
    %v820 = vunpack.c.l.b16 %v280
    %v821 = vunpack.c.h.b16 %v280
    %v822 = vunpack.c.l.b16 %v281
    %v823 = vunpack.c.h.b16 %v281
    %v824 = vunpack.c.l.b16 %v282
    %v825 = vunpack.c.h.b16 %v282
    %v826 = vunpack.c.l.b16 %v283
    %v827 = vunpack.c.h.b16 %v283
    %v828 = vunpack.c.l.b16 %v284
    %v829 = vunpack.c.h.b16 %v284
    %v830 = vunpack.c.l.b16 %v285
    %v831 = vunpack.c.h.b16 %v285
    %v832 = vunpack.c.l.b16 %v286
    %v833 = vunpack.c.h.b16 %v286
    %v834 = vunpack.c.l.b16 %v287
    %v835 = vunpack.c.h.b16 %v287
    %v836 = vunpack.c.l.b16 %v288
    %v837 = vunpack.c.h.b16 %v288
    %v838 = vunpack.c.l.b16 %v289
    %v839 = vunpack.c.h.b16 %v289
    %v840 = vunpack.c.l.b16 %v290
    %v841 = vunpack.c.h.b16 %v290
    %v842 = vunpack.c.l.b16 %v291
    %v843 = vunpack.c.h.b16 %v291
    %v844 = vunpack.c.l.b16 %v292
    %v845 = vunpack.c.h.b16 %v292
    %v846 = vunpack.c.l.b16 %v293
    %v847 = vunpack.c.h.b16 %v293
    %v848 = vunpack.c.l.b16 %v294
    %v849 = vunpack.c.h.b16 %v294
    %v850 = vunpack.c.l.b16 %v295
    %v851 = vunpack.c.h.b16 %v295
    %v852 = vunpack.c.l.b16 %v296
    %v853 = vunpack.c.h.b16 %v296
    %v854 = vunpack.c.l.b16 %v297
    %v855 = vunpack.c.h.b16 %v297
    %v856 = vunpack.c.l.b16 %v298
    %v857 = vunpack.c.h.b16 %v298
    %v858 = vunpack.c.l.b16 %v299
    %v859 = vunpack.c.h.b16 %v299
    %v860 = vunpack.c.l.b16 %v300
    %v861 = vunpack.c.h.b16 %v300
    %v862 = vunpack.c.l.b16 %v301
    %v863 = vunpack.c.h.b16 %v301
    %v864 = vunpack.c.l.b16 %v302
    %v865 = vunpack.c.h.b16 %v302
    %v866 = vunpack.c.l.b16 %v303
    %v867 = vunpack.c.h.b16 %v303
    %v868 = vunpack.c.l.b16 %v304
    %v869 = vunpack.c.h.b16 %v304
    %v870 = vunpack.c.l.b16 %v305
    %v871 = vunpack.c.h.b16 %v305
    %v872 = vunpack.c.l.b16 %v306
    %v873 = vunpack.c.h.b16 %v306
    %v874 = vunpack.c.l.b16 %v307
    %v875 = vunpack.c.h.b16 %v307
    %v876 = vunpack.c.l.b16 %v308
    %v877 = vunpack.c.h.b16 %v308
    %v878 = vunpack.c.l.b16 %v309
    %v879 = vunpack.c.h.b16 %v309
    %v880 = vunpack.c.l.b16 %v310
    %v881 = vunpack.c.h.b16 %v310
    %v882 = vunpack.c.l.b16 %v311
    %v883 = vunpack.c.h.b16 %v311
    %v884 = vunpack.c.l.b16 %v312
    %v885 = vunpack.c.h.b16 %v312
    %v886 = vunpack.c.l.b16 %v313
    %v887 = vunpack.c.h.b16 %v313
    %v888 = vunpack.c.l.b16 %v314
    %v889 = vunpack.c.h.b16 %v314
    %v890 = vunpack.c.l.b16 %v315
    %v891 = vunpack.c.h.b16 %v315
    %v892 = vunpack.c.l.b16 %v316
    %v893 = vunpack.c.h.b16 %v316
    %v894 = vunpack.c.l.b16 %v317
    %v895 = vunpack.c.h.b16 %v317
    %v896 = vunpack.c.l.b16 %v318
    %v897 = vunpack.c.h.b16 %v318
    %v898 = vunpack.c.l.b16 %v319
    %v899 = vunpack.c.h.b16 %v319
    %v900 = vunpack.c.l.b16 %v320
    %v901 = vunpack.c.h.b16 %v320
    %v902 = vunpack.c.l.b16 %v321
    %v903 = vunpack.c.h.b16 %v321
    %v904 = vunpack.c.l.b16 %v322
    %v905 = vunpack.c.h.b16 %v322
    %v906 = vunpack.c.l.b16 %v323
    %v907 = vunpack.c.h.b16 %v323
    %v908 = vunpack.c.l.b16 %v324
    %v909 = vunpack.c.h.b16 %v324
    %v910 = vunpack.c.l.b16 %v325
    %v911 = vunpack.c.h.b16 %v325
    %v912 = vunpack.c.l.b16 %v326
    %v913 = vunpack.c.h.b16 %v326
    %v914 = vunpack.c.l.b16 %v327
    %v915 = vunpack.c.h.b16 %v327
    %v916 = vunpack.c.l.b16 %v328
    %v917 = vunpack.c.h.b16 %v328
    %v918 = vunpack.c.l.b16 %v329
    %v919 = vunpack.c.h.b16 %v329
    %v920 = vunpack.c.l.b16 %v330
    %v921 = vunpack.c.h.b16 %v330
    %v922 = vunpack.c.l.b16 %v331
    %v923 = vunpack.c.h.b16 %v331
    %v924 = vunpack.c.l.b16 %v332
    %v925 = vunpack.c.h.b16 %v332
    %v926 = vunpack.c.l.b16 %v333
    %v927 = vunpack.c.h.b16 %v333
    %v928 = vunpack.c.l.b16 %v334
    %v929 = vunpack.c.h.b16 %v334
    %v930 = vunpack.c.l.b16 %v335
    %v931 = vunpack.c.h.b16 %v335
    %v932 = vunpack.c.l.b16 %v336
    %v933 = vunpack.c.h.b16 %v336
    %v934 = vunpack.c.l.b16 %v337
    %v935 = vunpack.c.h.b16 %v337
    %v936 = vpack.c.b16 %v548, %v544
    %v937 = vpack.c.b16 %v549, %v545
    %v938 = vpack.c.b16 %v550, %v546
    %v939 = vpack.c.b16 %v551, %v547
    %v940 = vpack.c.b16 %v556, %v552
    %v941 = vpack.c.b16 %v557, %v553
    %v942 = vpack.c.b16 %v558, %v554
    %v943 = vpack.c.b16 %v559, %v555
    %v944 = vpack.c.b16 %v564, %v560
    %v945 = vpack.c.b16 %v565, %v561
    %v946 = vpack.c.b16 %v566, %v562
    %v947 = vpack.c.b16 %v567, %v563
    %v948 = vpack.c.b16 %v572, %v568
    %v949 = vpack.c.b16 %v573, %v569
    %v950 = vpack.c.b16 %v574, %v570
    %v951 = vpack.c.b16 %v575, %v571
    %v952 = vpack.c.b16 %v580, %v576
    %v953 = vpack.c.b16 %v581, %v577
    %v954 = vpack.c.b16 %v582, %v578
    %v955 = vpack.c.b16 %v583, %v579
    %v956 = vpack.c.b16 %v588, %v584
    %v957 = vpack.c.b16 %v589, %v585
    %v958 = vpack.c.b16 %v590, %v586
    %v959 = vpack.c.b16 %v591, %v587
    %v960 = vpack.c.b16 %v596, %v592
    %v961 = vpack.c.b16 %v597, %v593
    %v962 = vpack.c.b16 %v598, %v594
    %v963 = vpack.c.b16 %v599, %v595
    %v964 = vpack.c.b16 %v604, %v600
    %v965 = vpack.c.b16 %v605, %v601
    %v966 = vpack.c.b16 %v606, %v602
    %v967 = vpack.c.b16 %v607, %v603
    %v968 = vpack.c.b16 %v612, %v608
    %v969 = vpack.c.b16 %v613, %v609
    %v970 = vpack.c.b16 %v614, %v610
    %v971 = vpack.c.b16 %v615, %v611
    %v972 = vpack.c.b16 %v620, %v616
    %v973 = vpack.c.b16 %v621, %v617
    %v974 = vpack.c.b16 %v622, %v618
    %v975 = vpack.c.b16 %v623, %v619
    %v976 = vpack.c.b16 %v628, %v624
    %v977 = vpack.c.b16 %v629, %v625
    %v978 = vpack.c.b16 %v630, %v626
    %v979 = vpack.c.b16 %v631, %v627
    %v980 = vpack.c.b16 %v636, %v632
    %v981 = vpack.c.b16 %v637, %v633
    %v982 = vpack.c.b16 %v638, %v634
    %v983 = vpack.c.b16 %v639, %v635
    %v984 = vpack.c.b16 %v644, %v640
    %v985 = vpack.c.b16 %v645, %v641
    %v986 = vpack.c.b16 %v646, %v642
    %v987 = vpack.c.b16 %v647, %v643
    %v988 = vpack.c.b16 %v652, %v648
    %v989 = vpack.c.b16 %v653, %v649
    %v990 = vpack.c.b16 %v654, %v650
    %v991 = vpack.c.b16 %v655, %v651
    %v992 = vpack.c.b16 %v660, %v656
    %v993 = vpack.c.b16 %v661, %v657
    %v994 = vpack.c.b16 %v662, %v658
    %v995 = vpack.c.b16 %v663, %v659
    %v996 = vpack.c.b16 %v668, %v664
    %v997 = vpack.c.b16 %v669, %v665
    %v998 = vpack.c.b16 %v670, %v666
    %v999 = vpack.c.b16 %v671, %v667
    %v1000 = vpack.c.b16 %v676, %v672
    %v1001 = vpack.c.b16 %v677, %v673
    %v1002 = vpack.c.b16 %v678, %v674
    %v1003 = vpack.c.b16 %v679, %v675
    %v1004 = vpack.c.b16 %v684, %v680
    %v1005 = vpack.c.b16 %v685, %v681
    %v1006 = vpack.c.b16 %v686, %v682
    %v1007 = vpack.c.b16 %v687, %v683
    %v1008 = vpack.c.b16 %v692, %v688
    %v1009 = vpack.c.b16 %v693, %v689
    %v1010 = vpack.c.b16 %v694, %v690
    %v1011 = vpack.c.b16 %v695, %v691
    %v1012 = vpack.c.b16 %v700, %v696
    %v1013 = vpack.c.b16 %v701, %v697
    %v1014 = vpack.c.b16 %v702, %v698
    %v1015 = vpack.c.b16 %v703, %v699
    %v1016 = vpack.c.b16 %v708, %v704
    %v1017 = vpack.c.b16 %v709, %v705
    %v1018 = vpack.c.b16 %v710, %v706
    %v1019 = vpack.c.b16 %v711, %v707
    %v1020 = vpack.c.b16 %v716, %v712
    %v1021 = vpack.c.b16 %v717, %v713
    %v1022 = vpack.c.b16 %v718, %v714
    %v1023 = vpack.c.b16 %v719, %v715
    %v1024 = vpack.c.b16 %v724, %v720
    %v1025 = vpack.c.b16 %v725, %v721
    %v1026 = vpack.c.b16 %v726, %v722
    %v1027 = vpack.c.b16 %v727, %v723
    %v1028 = vpack.c.b16 %v732, %v728
    %v1029 = vpack.c.b16 %v733, %v729
    %v1030 = vpack.c.b16 %v734, %v730
    %v1031 = vpack.c.b16 %v735, %v731
    %v1032 = vpack.c.b16 %v740, %v736
    %v1033 = vpack.c.b16 %v741, %v737
    %v1034 = vpack.c.b16 %v742, %v738
    %v1035 = vpack.c.b16 %v743, %v739
    %v1036 = vpack.c.b16 %v748, %v744
    %v1037 = vpack.c.b16 %v749, %v745
    %v1038 = vpack.c.b16 %v750, %v746
    %v1039 = vpack.c.b16 %v751, %v747
    %v1040 = vpack.c.b16 %v756, %v752
    %v1041 = vpack.c.b16 %v757, %v753
    %v1042 = vpack.c.b16 %v758, %v754
    %v1043 = vpack.c.b16 %v759, %v755
    %v1044 = vpack.c.b16 %v764, %v760
    %v1045 = vpack.c.b16 %v765, %v761
    %v1046 = vpack.c.b16 %v766, %v762
    %v1047 = vpack.c.b16 %v767, %v763
    %v1048 = vpack.c.b16 %v772, %v768
    %v1049 = vpack.c.b16 %v773, %v769
    %v1050 = vpack.c.b16 %v774, %v770
    %v1051 = vpack.c.b16 %v775, %v771
    %v1052 = vpack.c.b16 %v780, %v776
    %v1053 = vpack.c.b16 %v781, %v777
    %v1054 = vpack.c.b16 %v782, %v778
    %v1055 = vpack.c.b16 %v783, %v779
    %v1056 = vpack.c.b16 %v788, %v784
    %v1057 = vpack.c.b16 %v789, %v785
    %v1058 = vpack.c.b16 %v790, %v786
    %v1059 = vpack.c.b16 %v791, %v787
    %v1060 = vpack.c.b16 %v796, %v792
    %v1061 = vpack.c.b16 %v797, %v793
    %v1062 = vpack.c.b16 %v798, %v794
    %v1063 = vpack.c.b16 %v799, %v795
    %v1064 = vpack.c.b16 %v804, %v800
    %v1065 = vpack.c.b16 %v805, %v801
    %v1066 = vpack.c.b16 %v806, %v802
    %v1067 = vpack.c.b16 %v807, %v803
    %v1068 = vpack.c.b16 %v812, %v808
    %v1069 = vpack.c.b16 %v813, %v809
    %v1070 = vpack.c.b16 %v814, %v810
    %v1071 = vpack.c.b16 %v815, %v811
    %v1072 = vpack.c.b16 %v820, %v816
    %v1073 = vpack.c.b16 %v821, %v817
    %v1074 = vpack.c.b16 %v822, %v818
    %v1075 = vpack.c.b16 %v823, %v819
    %v1076 = vpack.c.b16 %v828, %v824
    %v1077 = vpack.c.b16 %v829, %v825
    %v1078 = vpack.c.b16 %v830, %v826
    %v1079 = vpack.c.b16 %v831, %v827
    %v1080 = vpack.c.b16 %v836, %v832
    %v1081 = vpack.c.b16 %v837, %v833
    %v1082 = vpack.c.b16 %v838, %v834
    %v1083 = vpack.c.b16 %v839, %v835
    %v1084 = vpack.c.b16 %v844, %v840
    %v1085 = vpack.c.b16 %v845, %v841
    %v1086 = vpack.c.b16 %v846, %v842
    %v1087 = vpack.c.b16 %v847, %v843
    %v1088 = vpack.c.b16 %v852, %v848
    %v1089 = vpack.c.b16 %v853, %v849
    %v1090 = vpack.c.b16 %v854, %v850
    %v1091 = vpack.c.b16 %v855, %v851
    %v1092 = vpack.c.b16 %v860, %v856
    %v1093 = vpack.c.b16 %v861, %v857
    %v1094 = vpack.c.b16 %v862, %v858
    %v1095 = vpack.c.b16 %v863, %v859
    %v1096 = vpack.c.b16 %v868, %v864
    %v1097 = vpack.c.b16 %v869, %v865
    %v1098 = vpack.c.b16 %v870, %v866
    %v1099 = vpack.c.b16 %v871, %v867
    %v1100 = vpack.c.b16 %v876, %v872
    %v1101 = vpack.c.b16 %v877, %v873
    %v1102 = vpack.c.b16 %v878, %v874
    %v1103 = vpack.c.b16 %v879, %v875
    %v1104 = vpack.c.b16 %v884, %v880
    %v1105 = vpack.c.b16 %v885, %v881
    %v1106 = vpack.c.b16 %v886, %v882
    %v1107 = vpack.c.b16 %v887, %v883
    %v1108 = vpack.c.b16 %v892, %v888
    %v1109 = vpack.c.b16 %v893, %v889
    %v1110 = vpack.c.b16 %v894, %v890
    %v1111 = vpack.c.b16 %v895, %v891
    %v1112 = vpack.c.b16 %v900, %v896
    %v1113 = vpack.c.b16 %v901, %v897
    %v1114 = vpack.c.b16 %v902, %v898
    %v1115 = vpack.c.b16 %v903, %v899
    %v1116 = vpack.c.b16 %v908, %v904
    %v1117 = vpack.c.b16 %v909, %v905
    %v1118 = vpack.c.b16 %v910, %v906
    %v1119 = vpack.c.b16 %v911, %v907
    %v1120 = vpack.c.b16 %v916, %v912
    %v1121 = vpack.c.b16 %v917, %v913
    %v1122 = vpack.c.b16 %v918, %v914
    %v1123 = vpack.c.b16 %v919, %v915
    %v1124 = vpack.c.b16 %v924, %v920
    %v1125 = vpack.c.b16 %v925, %v921
    %v1126 = vpack.c.b16 %v926, %v922
    %v1127 = vpack.c.b16 %v927, %v923
    %v1128 = vpack.c.b16 %v932, %v928
    %v1129 = vpack.c.b16 %v933, %v929
    %v1130 = vpack.c.b16 %v934, %v930
    %v1131 = vpack.c.b16 %v935, %v931
    %vm1328 = vcmask 130048
    %v1330 = vsel %vm1328, %v141, 0
    %1332 = vmatpush.bf16.msra.mxu0 %v964
    %1333 = vmatpush.bf16.msra.mxu0 %v960
    %1334 = vmatpush.bf16.msra.mxu0 %v956
    %1335 = vmatpush.bf16.msra.mxu0 %v952
    %1336 = vmatpush.bf16.msra.mxu0 %v948
    %1337 = vmatpush.bf16.msra.mxu0 %v944
    %1338 = vmatpush.bf16.msra.mxu0 %v940
    %1339 = vmatpush.bf16.msra.mxu0 %v936
    %1340 = vmatmul.bf16.gmra.mxu0 %v135
    %v1341 = vpop.f32.mrf.mxu0
    %v1342 = vadd.f32 %v340, %v1341
    %v1343 = vpop.f32.mrf.mxu0
    %v1344 = vadd.f32 %v340, %v1343
    %1345 = vdwg.mxu0
    %1346 = vmatpush.bf16.msra.mxu0 %v996
    %1347 = vmatpush.bf16.msra.mxu0 %v992
    %1348 = vmatpush.bf16.msra.mxu0 %v988
    %1349 = vmatpush.bf16.msra.mxu0 %v984
    %1350 = vmatpush.bf16.msra.mxu0 %v980
    %1351 = vmatpush.bf16.msra.mxu0 %v976
    %1352 = vmatpush.bf16.msra.mxu0 %v972
    %1353 = vmatpush.bf16.msra.mxu0 %v968
    %1354 = vmatmul.bf16.gmra.mxu0 %v136
    %v1355 = vpop.f32.mrf.mxu0
    %v1356 = vadd.f32 %v1342, %v1355
    %v1357 = vpop.f32.mrf.mxu0
    %v1358 = vadd.f32 %v1344, %v1357
    %1359 = vdwg.mxu0
    %1360 = vmatpush.bf16.msra.mxu0 %v1028
    %1361 = vmatpush.bf16.msra.mxu0 %v1024
    %1362 = vmatpush.bf16.msra.mxu0 %v1020
    %1363 = vmatpush.bf16.msra.mxu0 %v1016
    %1364 = vmatpush.bf16.msra.mxu0 %v1012
    %1365 = vmatpush.bf16.msra.mxu0 %v1008
    %1366 = vmatpush.bf16.msra.mxu0 %v1004
    %1367 = vmatpush.bf16.msra.mxu0 %v1000
    %1368 = vmatmul.bf16.gmra.mxu0 %v137
    %v1369 = vpop.f32.mrf.mxu0
    %v1370 = vadd.f32 %v1356, %v1369
    %v1371 = vpop.f32.mrf.mxu0
    %v1372 = vadd.f32 %v1358, %v1371
    %1373 = vdwg.mxu0
    %1374 = vmatpush.bf16.msra.mxu0 %v1060
    %1375 = vmatpush.bf16.msra.mxu0 %v1056
    %1376 = vmatpush.bf16.msra.mxu0 %v1052
    %1377 = vmatpush.bf16.msra.mxu0 %v1048
    %1378 = vmatpush.bf16.msra.mxu0 %v1044
    %1379 = vmatpush.bf16.msra.mxu0 %v1040
    %1380 = vmatpush.bf16.msra.mxu0 %v1036
    %1381 = vmatpush.bf16.msra.mxu0 %v1032
    %1382 = vmatmul.bf16.gmra.mxu0 %v138
    %v1383 = vpop.f32.mrf.mxu0
    %v1384 = vadd.f32 %v1370, %v1383
    %v1385 = vpop.f32.mrf.mxu0
    %v1386 = vadd.f32 %v1372, %v1385
    %1387 = vdwg.mxu0
    %1388 = vmatpush.bf16.msra.mxu0 %v1092
    %1389 = vmatpush.bf16.msra.mxu0 %v1088
    %1390 = vmatpush.bf16.msra.mxu0 %v1084
    %1391 = vmatpush.bf16.msra.mxu0 %v1080
    %1392 = vmatpush.bf16.msra.mxu0 %v1076
    %1393 = vmatpush.bf16.msra.mxu0 %v1072
    %1394 = vmatpush.bf16.msra.mxu0 %v1068
    %1395 = vmatpush.bf16.msra.mxu0 %v1064
    %1396 = vmatmul.bf16.gmra.mxu0 %v139
    %v1397 = vpop.f32.mrf.mxu0
    %v1398 = vadd.f32 %v1384, %v1397
    %v1399 = vpop.f32.mrf.mxu0
    %v1400 = vadd.f32 %v1386, %v1399
    %1401 = vdwg.mxu0
    %1402 = vmatpush.bf16.msra.mxu0 %v1124
    %1403 = vmatpush.bf16.msra.mxu0 %v1120
    %1404 = vmatpush.bf16.msra.mxu0 %v1116
    %1405 = vmatpush.bf16.msra.mxu0 %v1112
    %1406 = vmatpush.bf16.msra.mxu0 %v1108
    %1407 = vmatpush.bf16.msra.mxu0 %v1104
    %1408 = vmatpush.bf16.msra.mxu0 %v1100
    %1409 = vmatpush.bf16.msra.mxu0 %v1096
    %1410 = vmatmul.bf16.gmra.mxu0 %v140
    %v1411 = vpop.f32.mrf.mxu0
    %v1412 = vadd.f32 %v1398, %v1411
    %v1413 = vpop.f32.mrf.mxu0
    %v1414 = vadd.f32 %v1400, %v1413
    %1415 = vdwg.mxu0
    %1416 = vmatpush.bf16.msra.mxu0 0
    %1417 = vmatpush.bf16.msra.mxu0 0
    %1418 = vmatpush.bf16.msra.mxu0 0
    %1419 = vmatpush.bf16.msra.mxu0 0
    %1420 = vmatpush.bf16.msra.mxu0 0
    %1421 = vmatpush.bf16.msra.mxu0 0
    %1422 = vmatpush.bf16.msra.mxu0 0
    %1423 = vmatpush.bf16.msra.mxu0 %v1128
    %1424 = vmatmul.bf16.gmra.mxu0 %v1330
    %v1425 = vpop.f32.mrf.mxu0
    %v1426 = vadd.f32 %v1412, %v1425
    %v1427 = vpop.f32.mrf.mxu0
    %v1428 = vadd.f32 %v1414, %v1427
    %1429 = vdwg.mxu0
    %1430 = vmatpush.bf16.msra.mxu0 %v965
    %1431 = vmatpush.bf16.msra.mxu0 %v961
    %1432 = vmatpush.bf16.msra.mxu0 %v957
    %1433 = vmatpush.bf16.msra.mxu0 %v953
    %1434 = vmatpush.bf16.msra.mxu0 %v949
    %1435 = vmatpush.bf16.msra.mxu0 %v945
    %1436 = vmatpush.bf16.msra.mxu0 %v941
    %1437 = vmatpush.bf16.msra.mxu0 %v937
    %1438 = vmatmul.bf16.gmra.mxu0 %v135
    %v1439 = vpop.f32.mrf.mxu0
    %v1440 = vadd.f32 %v341, %v1439
    %v1441 = vpop.f32.mrf.mxu0
    %v1442 = vadd.f32 %v341, %v1441
    %1443 = vdwg.mxu0
    %1444 = vmatpush.bf16.msra.mxu0 %v997
    %1445 = vmatpush.bf16.msra.mxu0 %v993
    %1446 = vmatpush.bf16.msra.mxu0 %v989
    %1447 = vmatpush.bf16.msra.mxu0 %v985
    %1448 = vmatpush.bf16.msra.mxu0 %v981
    %1449 = vmatpush.bf16.msra.mxu0 %v977
    %1450 = vmatpush.bf16.msra.mxu0 %v973
    %1451 = vmatpush.bf16.msra.mxu0 %v969
    %1452 = vmatmul.bf16.gmra.mxu0 %v136
    %v1453 = vpop.f32.mrf.mxu0
    %v1454 = vadd.f32 %v1440, %v1453
    %v1455 = vpop.f32.mrf.mxu0
    %v1456 = vadd.f32 %v1442, %v1455
    %1457 = vdwg.mxu0
    %1458 = vmatpush.bf16.msra.mxu0 %v1029
    %1459 = vmatpush.bf16.msra.mxu0 %v1025
    %1460 = vmatpush.bf16.msra.mxu0 %v1021
    %1461 = vmatpush.bf16.msra.mxu0 %v1017
    %1462 = vmatpush.bf16.msra.mxu0 %v1013
    %1463 = vmatpush.bf16.msra.mxu0 %v1009
    %1464 = vmatpush.bf16.msra.mxu0 %v1005
    %1465 = vmatpush.bf16.msra.mxu0 %v1001
    %1466 = vmatmul.bf16.gmra.mxu0 %v137
    %v1467 = vpop.f32.mrf.mxu0
    %v1468 = vadd.f32 %v1454, %v1467
    %v1469 = vpop.f32.mrf.mxu0
    %v1470 = vadd.f32 %v1456, %v1469
    %1471 = vdwg.mxu0
    %1472 = vmatpush.bf16.msra.mxu0 %v1061
    %1473 = vmatpush.bf16.msra.mxu0 %v1057
    %1474 = vmatpush.bf16.msra.mxu0 %v1053
    %1475 = vmatpush.bf16.msra.mxu0 %v1049
    %1476 = vmatpush.bf16.msra.mxu0 %v1045
    %1477 = vmatpush.bf16.msra.mxu0 %v1041
    %1478 = vmatpush.bf16.msra.mxu0 %v1037
    %1479 = vmatpush.bf16.msra.mxu0 %v1033
    %1480 = vmatmul.bf16.gmra.mxu0 %v138
    %v1481 = vpop.f32.mrf.mxu0
    %v1482 = vadd.f32 %v1468, %v1481
    %v1483 = vpop.f32.mrf.mxu0
    %v1484 = vadd.f32 %v1470, %v1483
    %1485 = vdwg.mxu0
    %1486 = vmatpush.bf16.msra.mxu0 %v1093
    %1487 = vmatpush.bf16.msra.mxu0 %v1089
    %1488 = vmatpush.bf16.msra.mxu0 %v1085
    %1489 = vmatpush.bf16.msra.mxu0 %v1081
    %1490 = vmatpush.bf16.msra.mxu0 %v1077
    %1491 = vmatpush.bf16.msra.mxu0 %v1073
    %1492 = vmatpush.bf16.msra.mxu0 %v1069
    %1493 = vmatpush.bf16.msra.mxu0 %v1065
    %1494 = vmatmul.bf16.gmra.mxu0 %v139
    %v1495 = vpop.f32.mrf.mxu0
    %v1496 = vadd.f32 %v1482, %v1495
    %v1497 = vpop.f32.mrf.mxu0
    %v1498 = vadd.f32 %v1484, %v1497
    %1499 = vdwg.mxu0
    %1500 = vmatpush.bf16.msra.mxu0 %v1125
    %1501 = vmatpush.bf16.msra.mxu0 %v1121
    %1502 = vmatpush.bf16.msra.mxu0 %v1117
    %1503 = vmatpush.bf16.msra.mxu0 %v1113
    %1504 = vmatpush.bf16.msra.mxu0 %v1109
    %1505 = vmatpush.bf16.msra.mxu0 %v1105
    %1506 = vmatpush.bf16.msra.mxu0 %v1101
    %1507 = vmatpush.bf16.msra.mxu0 %v1097
    %1508 = vmatmul.bf16.gmra.mxu0 %v140
    %v1509 = vpop.f32.mrf.mxu0
    %v1510 = vadd.f32 %v1496, %v1509
    %v1511 = vpop.f32.mrf.mxu0
    %v1512 = vadd.f32 %v1498, %v1511
    %1513 = vdwg.mxu0
    %1514 = vmatpush.bf16.msra.mxu0 0
    %1515 = vmatpush.bf16.msra.mxu0 0
    %1516 = vmatpush.bf16.msra.mxu0 0
    %1517 = vmatpush.bf16.msra.mxu0 0
    %1518 = vmatpush.bf16.msra.mxu0 0
    %1519 = vmatpush.bf16.msra.mxu0 0
    %1520 = vmatpush.bf16.msra.mxu0 0
    %1521 = vmatpush.bf16.msra.mxu0 %v1129
    %1522 = vmatmul.bf16.gmra.mxu0 %v1330
    %v1523 = vpop.f32.mrf.mxu0
    %v1524 = vadd.f32 %v1510, %v1523
    %v1525 = vpop.f32.mrf.mxu0
    %v1526 = vadd.f32 %v1512, %v1525
    %1527 = vdwg.mxu0
    %1528 = vmatpush.bf16.msra.mxu0 %v966
    %1529 = vmatpush.bf16.msra.mxu0 %v962
    %1530 = vmatpush.bf16.msra.mxu0 %v958
    %1531 = vmatpush.bf16.msra.mxu0 %v954
    %1532 = vmatpush.bf16.msra.mxu0 %v950
    %1533 = vmatpush.bf16.msra.mxu0 %v946
    %1534 = vmatpush.bf16.msra.mxu0 %v942
    %1535 = vmatpush.bf16.msra.mxu0 %v938
    %1536 = vmatmul.bf16.gmra.mxu0 %v135
    %v1537 = vpop.f32.mrf.mxu0
    %v1538 = vadd.f32 %v342, %v1537
    %v1539 = vpop.f32.mrf.mxu0
    %v1540 = vadd.f32 %v342, %v1539
    %1541 = vdwg.mxu0
    %1542 = vmatpush.bf16.msra.mxu0 %v998
    %1543 = vmatpush.bf16.msra.mxu0 %v994
    %1544 = vmatpush.bf16.msra.mxu0 %v990
    %1545 = vmatpush.bf16.msra.mxu0 %v986
    %1546 = vmatpush.bf16.msra.mxu0 %v982
    %1547 = vmatpush.bf16.msra.mxu0 %v978
    %1548 = vmatpush.bf16.msra.mxu0 %v974
    %1549 = vmatpush.bf16.msra.mxu0 %v970
    %1550 = vmatmul.bf16.gmra.mxu0 %v136
    %v1551 = vpop.f32.mrf.mxu0
    %v1552 = vadd.f32 %v1538, %v1551
    %v1553 = vpop.f32.mrf.mxu0
    %v1554 = vadd.f32 %v1540, %v1553
    %1555 = vdwg.mxu0
    %1556 = vmatpush.bf16.msra.mxu0 %v1030
    %1557 = vmatpush.bf16.msra.mxu0 %v1026
    %1558 = vmatpush.bf16.msra.mxu0 %v1022
    %1559 = vmatpush.bf16.msra.mxu0 %v1018
    %1560 = vmatpush.bf16.msra.mxu0 %v1014
    %1561 = vmatpush.bf16.msra.mxu0 %v1010
    %1562 = vmatpush.bf16.msra.mxu0 %v1006
    %1563 = vmatpush.bf16.msra.mxu0 %v1002
    %1564 = vmatmul.bf16.gmra.mxu0 %v137
    %v1565 = vpop.f32.mrf.mxu0
    %v1566 = vadd.f32 %v1552, %v1565
    %v1567 = vpop.f32.mrf.mxu0
    %v1568 = vadd.f32 %v1554, %v1567
    %1569 = vdwg.mxu0
    %1570 = vmatpush.bf16.msra.mxu0 %v1062
    %1571 = vmatpush.bf16.msra.mxu0 %v1058
    %1572 = vmatpush.bf16.msra.mxu0 %v1054
    %1573 = vmatpush.bf16.msra.mxu0 %v1050
    %1574 = vmatpush.bf16.msra.mxu0 %v1046
    %1575 = vmatpush.bf16.msra.mxu0 %v1042
    %1576 = vmatpush.bf16.msra.mxu0 %v1038
    %1577 = vmatpush.bf16.msra.mxu0 %v1034
    %1578 = vmatmul.bf16.gmra.mxu0 %v138
    %v1579 = vpop.f32.mrf.mxu0
    %v1580 = vadd.f32 %v1566, %v1579
    %v1581 = vpop.f32.mrf.mxu0
    %v1582 = vadd.f32 %v1568, %v1581
    %1583 = vdwg.mxu0
    %1584 = vmatpush.bf16.msra.mxu0 %v1094
    %1585 = vmatpush.bf16.msra.mxu0 %v1090
    %1586 = vmatpush.bf16.msra.mxu0 %v1086
    %1587 = vmatpush.bf16.msra.mxu0 %v1082
    %1588 = vmatpush.bf16.msra.mxu0 %v1078
    %1589 = vmatpush.bf16.msra.mxu0 %v1074
    %1590 = vmatpush.bf16.msra.mxu0 %v1070
    %1591 = vmatpush.bf16.msra.mxu0 %v1066
    %1592 = vmatmul.bf16.gmra.mxu0 %v139
    %v1593 = vpop.f32.mrf.mxu0
    %v1594 = vadd.f32 %v1580, %v1593
    %v1595 = vpop.f32.mrf.mxu0
    %v1596 = vadd.f32 %v1582, %v1595
    %1597 = vdwg.mxu0
    %1598 = vmatpush.bf16.msra.mxu0 %v1126
    %1599 = vmatpush.bf16.msra.mxu0 %v1122
    %1600 = vmatpush.bf16.msra.mxu0 %v1118
    %1601 = vmatpush.bf16.msra.mxu0 %v1114
    %1602 = vmatpush.bf16.msra.mxu0 %v1110
    %1603 = vmatpush.bf16.msra.mxu0 %v1106
    %1604 = vmatpush.bf16.msra.mxu0 %v1102
    %1605 = vmatpush.bf16.msra.mxu0 %v1098
    %1606 = vmatmul.bf16.gmra.mxu0 %v140
    %v1607 = vpop.f32.mrf.mxu0
    %v1608 = vadd.f32 %v1594, %v1607
    %v1609 = vpop.f32.mrf.mxu0
    %v1610 = vadd.f32 %v1596, %v1609
    %1611 = vdwg.mxu0
    %1612 = vmatpush.bf16.msra.mxu0 0
    %1613 = vmatpush.bf16.msra.mxu0 0
    %1614 = vmatpush.bf16.msra.mxu0 0
    %1615 = vmatpush.bf16.msra.mxu0 0
    %1616 = vmatpush.bf16.msra.mxu0 0
    %1617 = vmatpush.bf16.msra.mxu0 0
    %1618 = vmatpush.bf16.msra.mxu0 0
    %1619 = vmatpush.bf16.msra.mxu0 %v1130
    %1620 = vmatmul.bf16.gmra.mxu0 %v1330
    %v1621 = vpop.f32.mrf.mxu0
    %v1622 = vadd.f32 %v1608, %v1621
    %v1623 = vpop.f32.mrf.mxu0
    %v1624 = vadd.f32 %v1610, %v1623
    %1625 = vdwg.mxu0
    %1626 = vmatpush.bf16.msra.mxu0 %v967
    %1627 = vmatpush.bf16.msra.mxu0 %v963
    %1628 = vmatpush.bf16.msra.mxu0 %v959
    %1629 = vmatpush.bf16.msra.mxu0 %v955
    %1630 = vmatpush.bf16.msra.mxu0 %v951
    %1631 = vmatpush.bf16.msra.mxu0 %v947
    %1632 = vmatpush.bf16.msra.mxu0 %v943
    %1633 = vmatpush.bf16.msra.mxu0 %v939
    %1634 = vmatmul.bf16.gmra.mxu0 %v135
    %v1635 = vpop.f32.mrf.mxu0
    %v1636 = vadd.f32 %v343, %v1635
    %v1637 = vpop.f32.mrf.mxu0
    %v1638 = vadd.f32 %v343, %v1637
    %1639 = vdwg.mxu0
    %1640 = vmatpush.bf16.msra.mxu0 %v999
    %1641 = vmatpush.bf16.msra.mxu0 %v995
    %1642 = vmatpush.bf16.msra.mxu0 %v991
    %1643 = vmatpush.bf16.msra.mxu0 %v987
    %1644 = vmatpush.bf16.msra.mxu0 %v983
    %1645 = vmatpush.bf16.msra.mxu0 %v979
    %1646 = vmatpush.bf16.msra.mxu0 %v975
    %1647 = vmatpush.bf16.msra.mxu0 %v971
    %1648 = vmatmul.bf16.gmra.mxu0 %v136
    %v1649 = vpop.f32.mrf.mxu0
    %v1650 = vadd.f32 %v1636, %v1649
    %v1651 = vpop.f32.mrf.mxu0
    %v1652 = vadd.f32 %v1638, %v1651
    %1653 = vdwg.mxu0
    %1654 = vmatpush.bf16.msra.mxu0 %v1031
    %1655 = vmatpush.bf16.msra.mxu0 %v1027
    %1656 = vmatpush.bf16.msra.mxu0 %v1023
    %1657 = vmatpush.bf16.msra.mxu0 %v1019
    %1658 = vmatpush.bf16.msra.mxu0 %v1015
    %1659 = vmatpush.bf16.msra.mxu0 %v1011
    %1660 = vmatpush.bf16.msra.mxu0 %v1007
    %1661 = vmatpush.bf16.msra.mxu0 %v1003
    %1662 = vmatmul.bf16.gmra.mxu0 %v137
    %v1663 = vpop.f32.mrf.mxu0
    %v1664 = vadd.f32 %v1650, %v1663
    %v1665 = vpop.f32.mrf.mxu0
    %v1666 = vadd.f32 %v1652, %v1665
    %1667 = vdwg.mxu0
    %1668 = vmatpush.bf16.msra.mxu0 %v1063
    %1669 = vmatpush.bf16.msra.mxu0 %v1059
    %1670 = vmatpush.bf16.msra.mxu0 %v1055
    %1671 = vmatpush.bf16.msra.mxu0 %v1051
    %1672 = vmatpush.bf16.msra.mxu0 %v1047
    %1673 = vmatpush.bf16.msra.mxu0 %v1043
    %1674 = vmatpush.bf16.msra.mxu0 %v1039
    %1675 = vmatpush.bf16.msra.mxu0 %v1035
    %1676 = vmatmul.bf16.gmra.mxu0 %v138
    %v1677 = vpop.f32.mrf.mxu0
    %v1678 = vadd.f32 %v1664, %v1677
    %v1679 = vpop.f32.mrf.mxu0
    %v1680 = vadd.f32 %v1666, %v1679
    %1681 = vdwg.mxu0
    %1682 = vmatpush.bf16.msra.mxu0 %v1095
    %1683 = vmatpush.bf16.msra.mxu0 %v1091
    %1684 = vmatpush.bf16.msra.mxu0 %v1087
    %1685 = vmatpush.bf16.msra.mxu0 %v1083
    %1686 = vmatpush.bf16.msra.mxu0 %v1079
    %1687 = vmatpush.bf16.msra.mxu0 %v1075
    %1688 = vmatpush.bf16.msra.mxu0 %v1071
    %1689 = vmatpush.bf16.msra.mxu0 %v1067
    %1690 = vmatmul.bf16.gmra.mxu0 %v139
    %v1691 = vpop.f32.mrf.mxu0
    %v1692 = vadd.f32 %v1678, %v1691
    %v1693 = vpop.f32.mrf.mxu0
    %v1694 = vadd.f32 %v1680, %v1693
    %1695 = vdwg.mxu0
    %1696 = vmatpush.bf16.msra.mxu0 %v1127
    %1697 = vmatpush.bf16.msra.mxu0 %v1123
    %1698 = vmatpush.bf16.msra.mxu0 %v1119
    %1699 = vmatpush.bf16.msra.mxu0 %v1115
    %1700 = vmatpush.bf16.msra.mxu0 %v1111
    %1701 = vmatpush.bf16.msra.mxu0 %v1107
    %1702 = vmatpush.bf16.msra.mxu0 %v1103
    %1703 = vmatpush.bf16.msra.mxu0 %v1099
    %1704 = vmatmul.bf16.gmra.mxu0 %v140
    %v1705 = vpop.f32.mrf.mxu0
    %v1706 = vadd.f32 %v1692, %v1705
    %v1707 = vpop.f32.mrf.mxu0
    %v1708 = vadd.f32 %v1694, %v1707
    %1709 = vdwg.mxu0
    %1710 = vmatpush.bf16.msra.mxu0 0
    %1711 = vmatpush.bf16.msra.mxu0 0
    %1712 = vmatpush.bf16.msra.mxu0 0
    %1713 = vmatpush.bf16.msra.mxu0 0
    %1714 = vmatpush.bf16.msra.mxu0 0
    %1715 = vmatpush.bf16.msra.mxu0 0
    %1716 = vmatpush.bf16.msra.mxu0 0
    %1717 = vmatpush.bf16.msra.mxu0 %v1131
    %1718 = vmatmul.bf16.gmra.mxu0 %v1330
    %v1719 = vpop.f32.mrf.mxu0
    %v1720 = vadd.f32 %v1706, %v1719
    %v1721 = vpop.f32.mrf.mxu0
    %v1722 = vadd.f32 %v1708, %v1721
    %1723 = vdwg.mxu0
    %v1724 = vmax.f32 %v1426, 0.0
    %v1725 = vmax.f32 %v1524, 0.0
    %v1726 = vmax.f32 %v1622, 0.0
    %v1727 = vmax.f32 %v1720, 0.0
    %v1728 = vmax.f32 %v1428, 0.0
    %v1729 = vmax.f32 %v1526, 0.0
    %v1730 = vmax.f32 %v1624, 0.0
    %v1731 = vmax.f32 %v1722, 0.0
    %v1732 = vpack.c.bf16 %v1728, %v1724
    %v1733 = vpack.c.bf16 %v1729, %v1725
    %v1734 = vpack.c.bf16 %v1730, %v1726
    %v1735 = vpack.c.bf16 %v1731, %v1727
    %v1736 = vld [vmem:[%s4] sm:$0xff]
    %v1737 = vld [vmem:[%s4 + $0x8] sm:$0xff]
    %v1738 = vld [vmem:[%s4 + $0x10] sm:$0xff]
    %v1739 = vld [vmem:[%s4 + $0x18] sm:$0xff]
    %v1740 = vld [vmem:[%s4 + $0x20] sm:$0xff]
    %v1741 = vld [vmem:[%s4 + $0x28] sm:$0xff]
    %v1742 = vld [vmem:[%s4 + $0x30] sm:$0xff]
    %v1743 = vld [vmem:[%s4 + $0x38] sm:$0xff]
    %v1744 = vld [vmem:[%s4 + $0x40] sm:$0xff]
    %v1745 = vld [vmem:[%s4 + $0x48] sm:$0xff]
    %v1746 = vld [vmem:[%s4 + $0x50] sm:$0xff]
    %v1747 = vld [vmem:[%s4 + $0x58] sm:$0xff]
    %v1748 = vld [vmem:[%s4 + $0x60] sm:$0xff]
    %v1749 = vld [vmem:[%s4 + $0x68] sm:$0xff]
    %v1750 = vld [vmem:[%s4 + $0x70] sm:$0xff]
    %v1751 = vld [vmem:[%s4 + $0x78] sm:$0xff]
    %v1752 = vld [vmem:[%s4 + $0x80] sm:$0xff]
    %v1753 = vld [vmem:[%s4 + $0x88] sm:$0xff]
    %v1754 = vld [vmem:[%s4 + $0x90] sm:$0xff]
    %v1755 = vld [vmem:[%s4 + $0x98] sm:$0xff]
    %v1756 = vld [vmem:[%s4 + $0xa0] sm:$0xff]
    %v1757 = vld [vmem:[%s4 + $0xa8] sm:$0xff]
    %v1758 = vld [vmem:[%s4 + $0xb0] sm:$0xff]
    %v1759 = vld [vmem:[%s4 + $0xb8] sm:$0xff]
    %v1760 = vld [vmem:[%s4 + $0xc0] sm:$0xff]
    %v1761 = vld [vmem:[%s4 + $0xc8] sm:$0xff]
    %v1762 = vld [vmem:[%s4 + $0xd0] sm:$0xff]
    %v1763 = vld [vmem:[%s4 + $0xd8] sm:$0xff]
    %v1764 = vld [vmem:[%s4 + $0xe0] sm:$0xff]
    %v1765 = vld [vmem:[%s4 + $0xe8] sm:$0xff]
    %v1766 = vld [vmem:[%s4 + $0xf0] sm:$0xff]
    %v1767 = vld [vmem:[%s4 + $0xf8] sm:$0xff]
    %v1768 = vld [vmem:[%s4 + $0x100] sm:$0xff]
    %v1769 = vld [vmem:[%s4 + $0x108] sm:$0xff]
    %v1770 = vld [vmem:[%s4 + $0x110] sm:$0xff]
    %v1771 = vld [vmem:[%s4 + $0x118] sm:$0xff]
    %v1772 = vld [vmem:[%s4 + $0x120] sm:$0xff]
    %v1773 = vld [vmem:[%s4 + $0x128] sm:$0xff]
    %v1774 = vld [vmem:[%s4 + $0x130] sm:$0xff]
    %v1775 = vld [vmem:[%s4 + $0x138] sm:$0xff]
    %v1776 = vld [vmem:[%s4 + $0x140] sm:$0xff]
    %v1777 = vld [vmem:[%s4 + $0x148] sm:$0xff]
    %v1778 = vld [vmem:[%s4 + $0x150] sm:$0xff]
    %v1779 = vld [vmem:[%s4 + $0x158] sm:$0xff]
    %v1780 = vld [vmem:[%s4 + $0x160] sm:$0xff]
    %v1781 = vld [vmem:[%s4 + $0x168] sm:$0xff]
    %v1782 = vld [vmem:[%s4 + $0x170] sm:$0xff]
    %v1783 = vld [vmem:[%s4 + $0x178] sm:$0xff]
    %v1784 = vld [vmem:[%s4 + $0x180] sm:$0xff]
    %v1785 = vld [vmem:[%s4 + $0x188] sm:$0xff]
    %v1786 = vld [vmem:[%s4 + $0x190] sm:$0xff]
    %v1787 = vld [vmem:[%s4 + $0x198] sm:$0xff]
    %v1788 = vld [vmem:[%s4 + $0x1a0] sm:$0xff]
    %v1789 = vld [vmem:[%s4 + $0x1a8] sm:$0xff]
    %v1790 = vld [vmem:[%s4 + $0x1b0] sm:$0xff]
    %v1791 = vld [vmem:[%s4 + $0x1b8] sm:$0xff]
    %v1792 = vld [vmem:[%s4 + $0x1c0] sm:$0xff]
    %v1793 = vld [vmem:[%s4 + $0x1c8] sm:$0xff]
    %v1794 = vld [vmem:[%s4 + $0x1d0] sm:$0xff]
    %v1795 = vld [vmem:[%s4 + $0x1d8] sm:$0xff]
    %v1796 = vld [vmem:[%s4 + $0x1e0] sm:$0xff]
    %v1797 = vld [vmem:[%s4 + $0x1e8] sm:$0xff]
    %v1798 = vld [vmem:[%s4 + $0x1f0] sm:$0xff]
    %v1799 = vld [vmem:[%s4 + $0x1f8] sm:$0xff]
    %v1800 = vld [vmem:[%s5] sm:$0x3]
    %v1802 = vperm.slane %v1800, 0
    %v1803 = vperm.slane %v1800, 1
    %v1870 = vunpack.c.l.b16 %v1736
    %v1871 = vunpack.c.h.b16 %v1736
    %v1872 = vunpack.c.l.b16 %v1737
    %v1873 = vunpack.c.h.b16 %v1737
    %v1874 = vunpack.c.l.b16 %v1738
    %v1875 = vunpack.c.h.b16 %v1738
    %v1876 = vunpack.c.l.b16 %v1739
    %v1877 = vunpack.c.h.b16 %v1739
    %v1878 = vunpack.c.l.b16 %v1740
    %v1879 = vunpack.c.h.b16 %v1740
    %v1880 = vunpack.c.l.b16 %v1741
    %v1881 = vunpack.c.h.b16 %v1741
    %v1882 = vunpack.c.l.b16 %v1742
    %v1883 = vunpack.c.h.b16 %v1742
    %v1884 = vunpack.c.l.b16 %v1743
    %v1885 = vunpack.c.h.b16 %v1743
    %v1886 = vunpack.c.l.b16 %v1744
    %v1887 = vunpack.c.h.b16 %v1744
    %v1888 = vunpack.c.l.b16 %v1745
    %v1889 = vunpack.c.h.b16 %v1745
    %v1890 = vunpack.c.l.b16 %v1746
    %v1891 = vunpack.c.h.b16 %v1746
    %v1892 = vunpack.c.l.b16 %v1747
    %v1893 = vunpack.c.h.b16 %v1747
    %v1894 = vunpack.c.l.b16 %v1748
    %v1895 = vunpack.c.h.b16 %v1748
    %v1896 = vunpack.c.l.b16 %v1749
    %v1897 = vunpack.c.h.b16 %v1749
    %v1898 = vunpack.c.l.b16 %v1750
    %v1899 = vunpack.c.h.b16 %v1750
    %v1900 = vunpack.c.l.b16 %v1751
    %v1901 = vunpack.c.h.b16 %v1751
    %v1902 = vunpack.c.l.b16 %v1752
    %v1903 = vunpack.c.h.b16 %v1752
    %v1904 = vunpack.c.l.b16 %v1753
    %v1905 = vunpack.c.h.b16 %v1753
    %v1906 = vunpack.c.l.b16 %v1754
    %v1907 = vunpack.c.h.b16 %v1754
    %v1908 = vunpack.c.l.b16 %v1755
    %v1909 = vunpack.c.h.b16 %v1755
    %v1910 = vunpack.c.l.b16 %v1756
    %v1911 = vunpack.c.h.b16 %v1756
    %v1912 = vunpack.c.l.b16 %v1757
    %v1913 = vunpack.c.h.b16 %v1757
    %v1914 = vunpack.c.l.b16 %v1758
    %v1915 = vunpack.c.h.b16 %v1758
    %v1916 = vunpack.c.l.b16 %v1759
    %v1917 = vunpack.c.h.b16 %v1759
    %v1918 = vunpack.c.l.b16 %v1760
    %v1919 = vunpack.c.h.b16 %v1760
    %v1920 = vunpack.c.l.b16 %v1761
    %v1921 = vunpack.c.h.b16 %v1761
    %v1922 = vunpack.c.l.b16 %v1762
    %v1923 = vunpack.c.h.b16 %v1762
    %v1924 = vunpack.c.l.b16 %v1763
    %v1925 = vunpack.c.h.b16 %v1763
    %v1926 = vunpack.c.l.b16 %v1764
    %v1927 = vunpack.c.h.b16 %v1764
    %v1928 = vunpack.c.l.b16 %v1765
    %v1929 = vunpack.c.h.b16 %v1765
    %v1930 = vunpack.c.l.b16 %v1766
    %v1931 = vunpack.c.h.b16 %v1766
    %v1932 = vunpack.c.l.b16 %v1767
    %v1933 = vunpack.c.h.b16 %v1767
    %v1934 = vunpack.c.l.b16 %v1768
    %v1935 = vunpack.c.h.b16 %v1768
    %v1936 = vunpack.c.l.b16 %v1769
    %v1937 = vunpack.c.h.b16 %v1769
    %v1938 = vunpack.c.l.b16 %v1770
    %v1939 = vunpack.c.h.b16 %v1770
    %v1940 = vunpack.c.l.b16 %v1771
    %v1941 = vunpack.c.h.b16 %v1771
    %v1942 = vunpack.c.l.b16 %v1772
    %v1943 = vunpack.c.h.b16 %v1772
    %v1944 = vunpack.c.l.b16 %v1773
    %v1945 = vunpack.c.h.b16 %v1773
    %v1946 = vunpack.c.l.b16 %v1774
    %v1947 = vunpack.c.h.b16 %v1774
    %v1948 = vunpack.c.l.b16 %v1775
    %v1949 = vunpack.c.h.b16 %v1775
    %v1950 = vunpack.c.l.b16 %v1776
    %v1951 = vunpack.c.h.b16 %v1776
    %v1952 = vunpack.c.l.b16 %v1777
    %v1953 = vunpack.c.h.b16 %v1777
    %v1954 = vunpack.c.l.b16 %v1778
    %v1955 = vunpack.c.h.b16 %v1778
    %v1956 = vunpack.c.l.b16 %v1779
    %v1957 = vunpack.c.h.b16 %v1779
    %v1958 = vunpack.c.l.b16 %v1780
    %v1959 = vunpack.c.h.b16 %v1780
    %v1960 = vunpack.c.l.b16 %v1781
    %v1961 = vunpack.c.h.b16 %v1781
    %v1962 = vunpack.c.l.b16 %v1782
    %v1963 = vunpack.c.h.b16 %v1782
    %v1964 = vunpack.c.l.b16 %v1783
    %v1965 = vunpack.c.h.b16 %v1783
    %v1966 = vunpack.c.l.b16 %v1784
    %v1967 = vunpack.c.h.b16 %v1784
    %v1968 = vunpack.c.l.b16 %v1785
    %v1969 = vunpack.c.h.b16 %v1785
    %v1970 = vunpack.c.l.b16 %v1786
    %v1971 = vunpack.c.h.b16 %v1786
    %v1972 = vunpack.c.l.b16 %v1787
    %v1973 = vunpack.c.h.b16 %v1787
    %v1974 = vunpack.c.l.b16 %v1788
    %v1975 = vunpack.c.h.b16 %v1788
    %v1976 = vunpack.c.l.b16 %v1789
    %v1977 = vunpack.c.h.b16 %v1789
    %v1978 = vunpack.c.l.b16 %v1790
    %v1979 = vunpack.c.h.b16 %v1790
    %v1980 = vunpack.c.l.b16 %v1791
    %v1981 = vunpack.c.h.b16 %v1791
    %v1982 = vunpack.c.l.b16 %v1792
    %v1983 = vunpack.c.h.b16 %v1792
    %v1984 = vunpack.c.l.b16 %v1793
    %v1985 = vunpack.c.h.b16 %v1793
    %v1986 = vunpack.c.l.b16 %v1794
    %v1987 = vunpack.c.h.b16 %v1794
    %v1988 = vunpack.c.l.b16 %v1795
    %v1989 = vunpack.c.h.b16 %v1795
    %v1990 = vunpack.c.l.b16 %v1796
    %v1991 = vunpack.c.h.b16 %v1796
    %v1992 = vunpack.c.l.b16 %v1797
    %v1993 = vunpack.c.h.b16 %v1797
    %v1994 = vunpack.c.l.b16 %v1798
    %v1995 = vunpack.c.h.b16 %v1798
    %v1996 = vunpack.c.l.b16 %v1799
    %v1997 = vunpack.c.h.b16 %v1799
    %v1998 = vpack.c.b16 %v1872, %v1870
    %v1999 = vpack.c.b16 %v1873, %v1871
    %v2000 = vpack.c.b16 %v1876, %v1874
    %v2001 = vpack.c.b16 %v1877, %v1875
    %v2002 = vpack.c.b16 %v1880, %v1878
    %v2003 = vpack.c.b16 %v1881, %v1879
    %v2004 = vpack.c.b16 %v1884, %v1882
    %v2005 = vpack.c.b16 %v1885, %v1883
    %v2006 = vpack.c.b16 %v1888, %v1886
    %v2007 = vpack.c.b16 %v1889, %v1887
    %v2008 = vpack.c.b16 %v1892, %v1890
    %v2009 = vpack.c.b16 %v1893, %v1891
    %v2010 = vpack.c.b16 %v1896, %v1894
    %v2011 = vpack.c.b16 %v1897, %v1895
    %v2012 = vpack.c.b16 %v1900, %v1898
    %v2013 = vpack.c.b16 %v1901, %v1899
    %v2014 = vpack.c.b16 %v1904, %v1902
    %v2015 = vpack.c.b16 %v1905, %v1903
    %v2016 = vpack.c.b16 %v1908, %v1906
    %v2017 = vpack.c.b16 %v1909, %v1907
    %v2018 = vpack.c.b16 %v1912, %v1910
    %v2019 = vpack.c.b16 %v1913, %v1911
    %v2020 = vpack.c.b16 %v1916, %v1914
    %v2021 = vpack.c.b16 %v1917, %v1915
    %v2022 = vpack.c.b16 %v1920, %v1918
    %v2023 = vpack.c.b16 %v1921, %v1919
    %v2024 = vpack.c.b16 %v1924, %v1922
    %v2025 = vpack.c.b16 %v1925, %v1923
    %v2026 = vpack.c.b16 %v1928, %v1926
    %v2027 = vpack.c.b16 %v1929, %v1927
    %v2028 = vpack.c.b16 %v1932, %v1930
    %v2029 = vpack.c.b16 %v1933, %v1931
    %v2030 = vpack.c.b16 %v1936, %v1934
    %v2031 = vpack.c.b16 %v1937, %v1935
    %v2032 = vpack.c.b16 %v1940, %v1938
    %v2033 = vpack.c.b16 %v1941, %v1939
    %v2034 = vpack.c.b16 %v1944, %v1942
    %v2035 = vpack.c.b16 %v1945, %v1943
    %v2036 = vpack.c.b16 %v1948, %v1946
    %v2037 = vpack.c.b16 %v1949, %v1947
    %v2038 = vpack.c.b16 %v1952, %v1950
    %v2039 = vpack.c.b16 %v1953, %v1951
    %v2040 = vpack.c.b16 %v1956, %v1954
    %v2041 = vpack.c.b16 %v1957, %v1955
    %v2042 = vpack.c.b16 %v1960, %v1958
    %v2043 = vpack.c.b16 %v1961, %v1959
    %v2044 = vpack.c.b16 %v1964, %v1962
    %v2045 = vpack.c.b16 %v1965, %v1963
    %v2046 = vpack.c.b16 %v1968, %v1966
    %v2047 = vpack.c.b16 %v1969, %v1967
    %v2048 = vpack.c.b16 %v1972, %v1970
    %v2049 = vpack.c.b16 %v1973, %v1971
    %v2050 = vpack.c.b16 %v1976, %v1974
    %v2051 = vpack.c.b16 %v1977, %v1975
    %v2052 = vpack.c.b16 %v1980, %v1978
    %v2053 = vpack.c.b16 %v1981, %v1979
    %v2054 = vpack.c.b16 %v1984, %v1982
    %v2055 = vpack.c.b16 %v1985, %v1983
    %v2056 = vpack.c.b16 %v1988, %v1986
    %v2057 = vpack.c.b16 %v1989, %v1987
    %v2058 = vpack.c.b16 %v1992, %v1990
    %v2059 = vpack.c.b16 %v1993, %v1991
    %v2060 = vpack.c.b16 %v1996, %v1994
    %v2061 = vpack.c.b16 %v1997, %v1995
    %2126 = vmatpush.bf16.msra.mxu0 %v2012
    %2127 = vmatpush.bf16.msra.mxu0 %v2010
    %2128 = vmatpush.bf16.msra.mxu0 %v2008
    %2129 = vmatpush.bf16.msra.mxu0 %v2006
    %2130 = vmatpush.bf16.msra.mxu0 %v2004
    %2131 = vmatpush.bf16.msra.mxu0 %v2002
    %2132 = vmatpush.bf16.msra.mxu0 %v2000
    %2133 = vmatpush.bf16.msra.mxu0 %v1998
    %2134 = vmatmul.bf16.gmra.mxu0 %v1732
    %v2135 = vpop.f32.mrf.mxu0
    %v2136 = vadd.f32 %v1802, %v2135
    %v2137 = vpop.f32.mrf.mxu0
    %v2138 = vadd.f32 %v1802, %v2137
    %2139 = vdwg.mxu0
    %2140 = vmatpush.bf16.msra.mxu0 %v2028
    %2141 = vmatpush.bf16.msra.mxu0 %v2026
    %2142 = vmatpush.bf16.msra.mxu0 %v2024
    %2143 = vmatpush.bf16.msra.mxu0 %v2022
    %2144 = vmatpush.bf16.msra.mxu0 %v2020
    %2145 = vmatpush.bf16.msra.mxu0 %v2018
    %2146 = vmatpush.bf16.msra.mxu0 %v2016
    %2147 = vmatpush.bf16.msra.mxu0 %v2014
    %2148 = vmatmul.bf16.gmra.mxu0 %v1733
    %v2149 = vpop.f32.mrf.mxu0
    %v2150 = vadd.f32 %v2136, %v2149
    %v2151 = vpop.f32.mrf.mxu0
    %v2152 = vadd.f32 %v2138, %v2151
    %2153 = vdwg.mxu0
    %2154 = vmatpush.bf16.msra.mxu0 %v2044
    %2155 = vmatpush.bf16.msra.mxu0 %v2042
    %2156 = vmatpush.bf16.msra.mxu0 %v2040
    %2157 = vmatpush.bf16.msra.mxu0 %v2038
    %2158 = vmatpush.bf16.msra.mxu0 %v2036
    %2159 = vmatpush.bf16.msra.mxu0 %v2034
    %2160 = vmatpush.bf16.msra.mxu0 %v2032
    %2161 = vmatpush.bf16.msra.mxu0 %v2030
    %2162 = vmatmul.bf16.gmra.mxu0 %v1734
    %v2163 = vpop.f32.mrf.mxu0
    %v2164 = vadd.f32 %v2150, %v2163
    %v2165 = vpop.f32.mrf.mxu0
    %v2166 = vadd.f32 %v2152, %v2165
    %2167 = vdwg.mxu0
    %2168 = vmatpush.bf16.msra.mxu0 %v2060
    %2169 = vmatpush.bf16.msra.mxu0 %v2058
    %2170 = vmatpush.bf16.msra.mxu0 %v2056
    %2171 = vmatpush.bf16.msra.mxu0 %v2054
    %2172 = vmatpush.bf16.msra.mxu0 %v2052
    %2173 = vmatpush.bf16.msra.mxu0 %v2050
    %2174 = vmatpush.bf16.msra.mxu0 %v2048
    %2175 = vmatpush.bf16.msra.mxu0 %v2046
    %2176 = vmatmul.bf16.gmra.mxu0 %v1735
    %v2177 = vpop.f32.mrf.mxu0
    %v2178 = vadd.f32 %v2164, %v2177
    %v2179 = vpop.f32.mrf.mxu0
    %v2180 = vadd.f32 %v2166, %v2179
    %2181 = vdwg.mxu0
    %2182 = vmatpush.bf16.msra.mxu0 %v2013
    %2183 = vmatpush.bf16.msra.mxu0 %v2011
    %2184 = vmatpush.bf16.msra.mxu0 %v2009
    %2185 = vmatpush.bf16.msra.mxu0 %v2007
    %2186 = vmatpush.bf16.msra.mxu0 %v2005
    %2187 = vmatpush.bf16.msra.mxu0 %v2003
    %2188 = vmatpush.bf16.msra.mxu0 %v2001
    %2189 = vmatpush.bf16.msra.mxu0 %v1999
    %2190 = vmatmul.bf16.gmra.mxu0 %v1732
    %v2191 = vpop.f32.mrf.mxu0
    %v2192 = vadd.f32 %v1803, %v2191
    %v2193 = vpop.f32.mrf.mxu0
    %v2194 = vadd.f32 %v1803, %v2193
    %2195 = vdwg.mxu0
    %2196 = vmatpush.bf16.msra.mxu0 %v2029
    %2197 = vmatpush.bf16.msra.mxu0 %v2027
    %2198 = vmatpush.bf16.msra.mxu0 %v2025
    %2199 = vmatpush.bf16.msra.mxu0 %v2023
    %2200 = vmatpush.bf16.msra.mxu0 %v2021
    %2201 = vmatpush.bf16.msra.mxu0 %v2019
    %2202 = vmatpush.bf16.msra.mxu0 %v2017
    %2203 = vmatpush.bf16.msra.mxu0 %v2015
    %2204 = vmatmul.bf16.gmra.mxu0 %v1733
    %v2205 = vpop.f32.mrf.mxu0
    %v2206 = vadd.f32 %v2192, %v2205
    %v2207 = vpop.f32.mrf.mxu0
    %v2208 = vadd.f32 %v2194, %v2207
    %2209 = vdwg.mxu0
    %2210 = vmatpush.bf16.msra.mxu0 %v2045
    %2211 = vmatpush.bf16.msra.mxu0 %v2043
    %2212 = vmatpush.bf16.msra.mxu0 %v2041
    %2213 = vmatpush.bf16.msra.mxu0 %v2039
    %2214 = vmatpush.bf16.msra.mxu0 %v2037
    %2215 = vmatpush.bf16.msra.mxu0 %v2035
    %2216 = vmatpush.bf16.msra.mxu0 %v2033
    %2217 = vmatpush.bf16.msra.mxu0 %v2031
    %2218 = vmatmul.bf16.gmra.mxu0 %v1734
    %v2219 = vpop.f32.mrf.mxu0
    %v2220 = vadd.f32 %v2206, %v2219
    %v2221 = vpop.f32.mrf.mxu0
    %v2222 = vadd.f32 %v2208, %v2221
    %2223 = vdwg.mxu0
    %2224 = vmatpush.bf16.msra.mxu0 %v2061
    %2225 = vmatpush.bf16.msra.mxu0 %v2059
    %2226 = vmatpush.bf16.msra.mxu0 %v2057
    %2227 = vmatpush.bf16.msra.mxu0 %v2055
    %2228 = vmatpush.bf16.msra.mxu0 %v2053
    %2229 = vmatpush.bf16.msra.mxu0 %v2051
    %2230 = vmatpush.bf16.msra.mxu0 %v2049
    %2231 = vmatpush.bf16.msra.mxu0 %v2047
    %2232 = vmatmul.bf16.gmra.mxu0 %v1735
    %v2233 = vpop.f32.mrf.mxu0
    %v2234 = vadd.f32 %v2220, %v2233
    %v2235 = vpop.f32.mrf.mxu0
    %v2236 = vadd.f32 %v2222, %v2235
    %2237 = vdwg.mxu0
    %v2238 = vmax.f32 %v2178, 0.0
    %v2239 = vmax.f32 %v2234, 0.0
    %v2240 = vmax.f32 %v2180, 0.0
    %v2241 = vmax.f32 %v2236, 0.0
    %v2242 = vpack.c.bf16 %v2240, %v2238
    %v2243 = vpack.c.bf16 %v2241, %v2239
    %v2244 = vld [vmem:[%s6] sm:$0xf]
    %v2245 = vld [vmem:[%s6 + $0x4] sm:$0xf]
    %v2246 = vld [vmem:[%s6 + $0x8] sm:$0xf]
    %v2247 = vld [vmem:[%s6 + $0xc] sm:$0xf]
    %v2248 = vld [vmem:[%s6 + $0x10] sm:$0xf]
    %v2249 = vld [vmem:[%s6 + $0x14] sm:$0xf]
    %v2250 = vld [vmem:[%s6 + $0x18] sm:$0xf]
    %v2251 = vld [vmem:[%s6 + $0x1c] sm:$0xf]
    %v2252 = vld [vmem:[%s6 + $0x20] sm:$0xf]
    %v2253 = vld [vmem:[%s6 + $0x24] sm:$0xf]
    %v2254 = vld [vmem:[%s6 + $0x28] sm:$0xf]
    %v2255 = vld [vmem:[%s6 + $0x2c] sm:$0xf]
    %v2256 = vld [vmem:[%s6 + $0x30] sm:$0xf]
    %v2257 = vld [vmem:[%s6 + $0x34] sm:$0xf]
    %v2258 = vld [vmem:[%s6 + $0x38] sm:$0xf]
    %v2259 = vld [vmem:[%s6 + $0x3c] sm:$0xf]
    %v2260 = vld [vmem:[%s6 + $0x40] sm:$0xf]
    %v2261 = vld [vmem:[%s6 + $0x44] sm:$0xf]
    %v2262 = vld [vmem:[%s6 + $0x48] sm:$0xf]
    %v2263 = vld [vmem:[%s6 + $0x4c] sm:$0xf]
    %v2264 = vld [vmem:[%s6 + $0x50] sm:$0xf]
    %v2265 = vld [vmem:[%s6 + $0x54] sm:$0xf]
    %v2266 = vld [vmem:[%s6 + $0x58] sm:$0xf]
    %v2267 = vld [vmem:[%s6 + $0x5c] sm:$0xf]
    %v2268 = vld [vmem:[%s6 + $0x60] sm:$0xf]
    %v2269 = vld [vmem:[%s6 + $0x64] sm:$0xf]
    %v2270 = vld [vmem:[%s6 + $0x68] sm:$0xf]
    %v2271 = vld [vmem:[%s6 + $0x6c] sm:$0xf]
    %v2272 = vld [vmem:[%s6 + $0x70] sm:$0xf]
    %v2273 = vld [vmem:[%s6 + $0x74] sm:$0xf]
    %v2274 = vld [vmem:[%s6 + $0x78] sm:$0xf]
    %v2275 = vld [vmem:[%s6 + $0x7c] sm:$0xf]
    %v2276 = vld [vmem:[%s7] sm:$0x1]
    %v2278 = vperm.slane %v2276, 0
    %v2312 = vunpack.c.l.b16 %v2244
    %v2313 = vunpack.c.l.b16 %v2245
    %v2314 = vunpack.c.l.b16 %v2246
    %v2315 = vunpack.c.l.b16 %v2247
    %v2316 = vunpack.c.l.b16 %v2248
    %v2317 = vunpack.c.l.b16 %v2249
    %v2318 = vunpack.c.l.b16 %v2250
    %v2319 = vunpack.c.l.b16 %v2251
    %v2320 = vunpack.c.l.b16 %v2252
    %v2321 = vunpack.c.l.b16 %v2253
    %v2322 = vunpack.c.l.b16 %v2254
    %v2323 = vunpack.c.l.b16 %v2255
    %v2324 = vunpack.c.l.b16 %v2256
    %v2325 = vunpack.c.l.b16 %v2257
    %v2326 = vunpack.c.l.b16 %v2258
    %v2327 = vunpack.c.l.b16 %v2259
    %v2328 = vunpack.c.l.b16 %v2260
    %v2329 = vunpack.c.l.b16 %v2261
    %v2330 = vunpack.c.l.b16 %v2262
    %v2331 = vunpack.c.l.b16 %v2263
    %v2332 = vunpack.c.l.b16 %v2264
    %v2333 = vunpack.c.l.b16 %v2265
    %v2334 = vunpack.c.l.b16 %v2266
    %v2335 = vunpack.c.l.b16 %v2267
    %v2336 = vunpack.c.l.b16 %v2268
    %v2337 = vunpack.c.l.b16 %v2269
    %v2338 = vunpack.c.l.b16 %v2270
    %v2339 = vunpack.c.l.b16 %v2271
    %v2340 = vunpack.c.l.b16 %v2272
    %v2341 = vunpack.c.l.b16 %v2273
    %v2342 = vunpack.c.l.b16 %v2274
    %v2343 = vunpack.c.l.b16 %v2275
    %v2344 = vpack.c.b16 %v2313, %v2312
    %v2345 = vpack.c.b16 %v2315, %v2314
    %v2346 = vpack.c.b16 %v2317, %v2316
    %v2347 = vpack.c.b16 %v2319, %v2318
    %v2348 = vpack.c.b16 %v2321, %v2320
    %v2349 = vpack.c.b16 %v2323, %v2322
    %v2350 = vpack.c.b16 %v2325, %v2324
    %v2351 = vpack.c.b16 %v2327, %v2326
    %v2352 = vpack.c.b16 %v2329, %v2328
    %v2353 = vpack.c.b16 %v2331, %v2330
    %v2354 = vpack.c.b16 %v2333, %v2332
    %v2355 = vpack.c.b16 %v2335, %v2334
    %v2356 = vpack.c.b16 %v2337, %v2336
    %v2357 = vpack.c.b16 %v2339, %v2338
    %v2358 = vpack.c.b16 %v2341, %v2340
    %v2359 = vpack.c.b16 %v2343, %v2342
    %2376 = vmatpush.bf16.msra.mxu0 %v2351
    %2377 = vmatpush.bf16.msra.mxu0 %v2350
    %2378 = vmatpush.bf16.msra.mxu0 %v2349
    %2379 = vmatpush.bf16.msra.mxu0 %v2348
    %2380 = vmatpush.bf16.msra.mxu0 %v2347
    %2381 = vmatpush.bf16.msra.mxu0 %v2346
    %2382 = vmatpush.bf16.msra.mxu0 %v2345
    %2383 = vmatpush.bf16.msra.mxu0 %v2344
    %2384 = vmatmul.bf16.gmra.mxu0 %v2242
    %v2385 = vpop.f32.mrf.mxu0
    %v2386 = vadd.f32 %v2278, %v2385
    %v2387 = vpop.f32.mrf.mxu0
    %v2388 = vadd.f32 %v2278, %v2387
    %2389 = vdwg.mxu0
    %2390 = vmatpush.bf16.msra.mxu0 %v2359
    %2391 = vmatpush.bf16.msra.mxu0 %v2358
    %2392 = vmatpush.bf16.msra.mxu0 %v2357
    %2393 = vmatpush.bf16.msra.mxu0 %v2356
    %2394 = vmatpush.bf16.msra.mxu0 %v2355
    %2395 = vmatpush.bf16.msra.mxu0 %v2354
    %2396 = vmatpush.bf16.msra.mxu0 %v2353
    %2397 = vmatpush.bf16.msra.mxu0 %v2352
    %2398 = vmatmul.bf16.gmra.mxu0 %v2243
    %v2399 = vpop.f32.mrf.mxu0
    %v2400 = vadd.f32 %v2386, %v2399
    %v2401 = vpop.f32.mrf.mxu0
    %v2402 = vadd.f32 %v2388, %v2401
    %2403 = vdwg.mxu0
    %v2404 = vld [vmem:[%s1] sm:$0xff]
    %v2405 = vld [vmem:[%s1 + $0x8] sm:$0xff]
    %v2406 = vmul.f32 %v2400, 0.5
    %v2407 = vmul.f32 %v2402, 0.5
    %v2408 = vmul.f32 %v2406, 1.442695
    %v2409 = vpow.pop %v2408
    %v2410 = vmul.f32 %v2407, 1.442695
    %v2411 = vpow.pop %v2410
    %2414 = vrot.lane.b32.xlu0 %v2409, 118
    %v2415 = vpop.permute.xlu0 %2414
    %2416 = vrot.lane.b32.xlu0 %v2411, 118
    %v2417 = vpop.permute.xlu0 %2416
    %v2420 = vmul.f32 %v2404, %v2415
    %v2421 = vmul.f32 %v2405, %v2417
    %v2422 = vadd.f32 %v2400, %v2420
    %v2423 = vadd.f32 %v2402, %v2421
    %v2424 = vpack.c.bf16 %v2423, %v2422
    %v2425 = vld [vmem:[%s8] sm:$0xff]
    %v2426 = vld [vmem:[%s8 + $0x8] sm:$0x11]
    %v2427 = vld [vmem:[%s9] sm:$0x3]
    %v2429 = vperm.slane %v2427, 0
    %v2430 = vperm.slane %v2427, 1
    %v2435 = vunpack.c.l.b16 %v2425
    %v2436 = vunpack.c.h.b16 %v2425
    %v2437 = vunpack.c.l.b16 %v2426
    %v2438 = vunpack.c.h.b16 %v2426
    %v2439 = vpack.c.b16 %v2437, %v2435
    %v2440 = vpack.c.b16 %v2438, %v2436
    %vm2441 = vcmask 80896
    %v2443 = vsel %vm2441, %v2424, 0
    %vm2445 = vcmask 1044480
    %v2447 = vsel %vm2445, %v2439, 0
    %v2450 = vsel %vm2445, %v2440, 0
    %2452 = vmatpush.bf16.msra.mxu0 0
    %2453 = vmatpush.bf16.msra.mxu0 0
    %2454 = vmatpush.bf16.msra.mxu0 0
    %2455 = vmatpush.bf16.msra.mxu0 0
    %2456 = vmatpush.bf16.msra.mxu0 0
    %2457 = vmatpush.bf16.msra.mxu0 0
    %2458 = vmatpush.bf16.msra.mxu0 0
    %2459 = vmatpush.bf16.msra.mxu0 %v2447
    %2460 = vmatmul.bf16.gmra.mxu0 %v2443
    %v2461 = vpop.f32.mrf.mxu0
    %v2462 = vadd.f32 %v2429, %v2461
    %v2463 = vpop.f32.mrf.mxu0
    %v2464 = vadd.f32 %v2429, %v2463
    %2465 = vdwg.mxu0
    %2466 = vmatpush.bf16.msra.mxu0 0
    %2467 = vmatpush.bf16.msra.mxu0 0
    %2468 = vmatpush.bf16.msra.mxu0 0
    %2469 = vmatpush.bf16.msra.mxu0 0
    %2470 = vmatpush.bf16.msra.mxu0 0
    %2471 = vmatpush.bf16.msra.mxu0 0
    %2472 = vmatpush.bf16.msra.mxu0 0
    %2473 = vmatpush.bf16.msra.mxu0 %v2450
    %2474 = vmatmul.bf16.gmra.mxu0 %v2443
    %v2475 = vpop.f32.mrf.mxu0
    %v2476 = vadd.f32 %v2430, %v2475
    %v2477 = vpop.f32.mrf.mxu0
    %v2478 = vadd.f32 %v2430, %v2477
    %2479 = vdwg.mxu0
    %v2480 = vmax.f32 %v2462, 0.0
    %v2481 = vmax.f32 %v2476, 0.0
    %v2482 = vmax.f32 %v2464, 0.0
    %v2483 = vmax.f32 %v2478, 0.0
    %v2484 = vpack.c.bf16 %v2482, %v2480
    %v2485 = vpack.c.bf16 %v2483, %v2481
    %v2486 = vld [vmem:[%s10] sm:$0xff]
    %v2487 = vld [vmem:[%s10 + $0x8] sm:$0xff]
    %v2488 = vld [vmem:[%s10 + $0x10] sm:$0xff]
    %v2489 = vld [vmem:[%s10 + $0x18] sm:$0xff]
    %v2490 = vld [vmem:[%s10 + $0x20] sm:$0xff]
    %v2491 = vld [vmem:[%s10 + $0x28] sm:$0xff]
    %v2492 = vld [vmem:[%s10 + $0x30] sm:$0xff]
    %v2493 = vld [vmem:[%s10 + $0x38] sm:$0xff]
    %v2494 = vld [vmem:[%s10 + $0x40] sm:$0xff]
    %v2495 = vld [vmem:[%s10 + $0x48] sm:$0xff]
    %v2496 = vld [vmem:[%s10 + $0x50] sm:$0xff]
    %v2497 = vld [vmem:[%s10 + $0x58] sm:$0xff]
    %v2498 = vld [vmem:[%s10 + $0x60] sm:$0xff]
    %v2499 = vld [vmem:[%s10 + $0x68] sm:$0xff]
    %v2500 = vld [vmem:[%s10 + $0x70] sm:$0xff]
    %v2501 = vld [vmem:[%s10 + $0x78] sm:$0xff]
    %v2502 = vld [vmem:[%s10 + $0x80] sm:$0xff]
    %v2503 = vld [vmem:[%s10 + $0x88] sm:$0xff]
    %v2504 = vld [vmem:[%s10 + $0x90] sm:$0xff]
    %v2505 = vld [vmem:[%s10 + $0x98] sm:$0xff]
    %v2506 = vld [vmem:[%s10 + $0xa0] sm:$0xff]
    %v2507 = vld [vmem:[%s10 + $0xa8] sm:$0xff]
    %v2508 = vld [vmem:[%s10 + $0xb0] sm:$0xff]
    %v2509 = vld [vmem:[%s10 + $0xb8] sm:$0xff]
    %v2510 = vld [vmem:[%s10 + $0xc0] sm:$0xff]
    %v2511 = vld [vmem:[%s10 + $0xc8] sm:$0xff]
    %v2512 = vld [vmem:[%s10 + $0xd0] sm:$0xff]
    %v2513 = vld [vmem:[%s10 + $0xd8] sm:$0xff]
    %v2514 = vld [vmem:[%s10 + $0xe0] sm:$0xff]
    %v2515 = vld [vmem:[%s10 + $0xe8] sm:$0xff]
    %v2516 = vld [vmem:[%s10 + $0xf0] sm:$0xff]
    %v2517 = vld [vmem:[%s10 + $0xf8] sm:$0xff]
    %v2518 = vld [vmem:[%s10 + $0x100] sm:$0xff]
    %v2519 = vld [vmem:[%s10 + $0x108] sm:$0xff]
    %v2520 = vld [vmem:[%s10 + $0x110] sm:$0xff]
    %v2521 = vld [vmem:[%s10 + $0x118] sm:$0xff]
    %v2522 = vld [vmem:[%s10 + $0x120] sm:$0xff]
    %v2523 = vld [vmem:[%s10 + $0x128] sm:$0xff]
    %v2524 = vld [vmem:[%s10 + $0x130] sm:$0xff]
    %v2525 = vld [vmem:[%s10 + $0x138] sm:$0xff]
    %v2526 = vld [vmem:[%s10 + $0x140] sm:$0xff]
    %v2527 = vld [vmem:[%s10 + $0x148] sm:$0xff]
    %v2528 = vld [vmem:[%s10 + $0x150] sm:$0xff]
    %v2529 = vld [vmem:[%s10 + $0x158] sm:$0xff]
    %v2530 = vld [vmem:[%s10 + $0x160] sm:$0xff]
    %v2531 = vld [vmem:[%s10 + $0x168] sm:$0xff]
    %v2532 = vld [vmem:[%s10 + $0x170] sm:$0xff]
    %v2533 = vld [vmem:[%s10 + $0x178] sm:$0xff]
    %v2534 = vld [vmem:[%s10 + $0x180] sm:$0xff]
    %v2535 = vld [vmem:[%s10 + $0x188] sm:$0xff]
    %v2536 = vld [vmem:[%s10 + $0x190] sm:$0xff]
    %v2537 = vld [vmem:[%s10 + $0x198] sm:$0xff]
    %v2538 = vld [vmem:[%s10 + $0x1a0] sm:$0xff]
    %v2539 = vld [vmem:[%s10 + $0x1a8] sm:$0xff]
    %v2540 = vld [vmem:[%s10 + $0x1b0] sm:$0xff]
    %v2541 = vld [vmem:[%s10 + $0x1b8] sm:$0xff]
    %v2542 = vld [vmem:[%s10 + $0x1c0] sm:$0xff]
    %v2543 = vld [vmem:[%s10 + $0x1c8] sm:$0xff]
    %v2544 = vld [vmem:[%s10 + $0x1d0] sm:$0xff]
    %v2545 = vld [vmem:[%s10 + $0x1d8] sm:$0xff]
    %v2546 = vld [vmem:[%s10 + $0x1e0] sm:$0xff]
    %v2547 = vld [vmem:[%s10 + $0x1e8] sm:$0xff]
    %v2548 = vld [vmem:[%s10 + $0x1f0] sm:$0xff]
    %v2549 = vld [vmem:[%s10 + $0x1f8] sm:$0xff]
    %v2550 = vld [vmem:[%s11] sm:$0xf]
    %v2552 = vperm.slane %v2550, 0
    %v2553 = vperm.slane %v2550, 1
    %v2554 = vperm.slane %v2550, 2
    %v2555 = vperm.slane %v2550, 3
    %v2624 = vunpack.c.l.b16 %v2486
    %v2625 = vunpack.c.h.b16 %v2486
    %v2626 = vunpack.c.l.b16 %v2487
    %v2627 = vunpack.c.h.b16 %v2487
    %v2628 = vunpack.c.l.b16 %v2488
    %v2629 = vunpack.c.h.b16 %v2488
    %v2630 = vunpack.c.l.b16 %v2489
    %v2631 = vunpack.c.h.b16 %v2489
    %v2632 = vunpack.c.l.b16 %v2490
    %v2633 = vunpack.c.h.b16 %v2490
    %v2634 = vunpack.c.l.b16 %v2491
    %v2635 = vunpack.c.h.b16 %v2491
    %v2636 = vunpack.c.l.b16 %v2492
    %v2637 = vunpack.c.h.b16 %v2492
    %v2638 = vunpack.c.l.b16 %v2493
    %v2639 = vunpack.c.h.b16 %v2493
    %v2640 = vunpack.c.l.b16 %v2494
    %v2641 = vunpack.c.h.b16 %v2494
    %v2642 = vunpack.c.l.b16 %v2495
    %v2643 = vunpack.c.h.b16 %v2495
    %v2644 = vunpack.c.l.b16 %v2496
    %v2645 = vunpack.c.h.b16 %v2496
    %v2646 = vunpack.c.l.b16 %v2497
    %v2647 = vunpack.c.h.b16 %v2497
    %v2648 = vunpack.c.l.b16 %v2498
    %v2649 = vunpack.c.h.b16 %v2498
    %v2650 = vunpack.c.l.b16 %v2499
    %v2651 = vunpack.c.h.b16 %v2499
    %v2652 = vunpack.c.l.b16 %v2500
    %v2653 = vunpack.c.h.b16 %v2500
    %v2654 = vunpack.c.l.b16 %v2501
    %v2655 = vunpack.c.h.b16 %v2501
    %v2656 = vunpack.c.l.b16 %v2502
    %v2657 = vunpack.c.h.b16 %v2502
    %v2658 = vunpack.c.l.b16 %v2503
    %v2659 = vunpack.c.h.b16 %v2503
    %v2660 = vunpack.c.l.b16 %v2504
    %v2661 = vunpack.c.h.b16 %v2504
    %v2662 = vunpack.c.l.b16 %v2505
    %v2663 = vunpack.c.h.b16 %v2505
    %v2664 = vunpack.c.l.b16 %v2506
    %v2665 = vunpack.c.h.b16 %v2506
    %v2666 = vunpack.c.l.b16 %v2507
    %v2667 = vunpack.c.h.b16 %v2507
    %v2668 = vunpack.c.l.b16 %v2508
    %v2669 = vunpack.c.h.b16 %v2508
    %v2670 = vunpack.c.l.b16 %v2509
    %v2671 = vunpack.c.h.b16 %v2509
    %v2672 = vunpack.c.l.b16 %v2510
    %v2673 = vunpack.c.h.b16 %v2510
    %v2674 = vunpack.c.l.b16 %v2511
    %v2675 = vunpack.c.h.b16 %v2511
    %v2676 = vunpack.c.l.b16 %v2512
    %v2677 = vunpack.c.h.b16 %v2512
    %v2678 = vunpack.c.l.b16 %v2513
    %v2679 = vunpack.c.h.b16 %v2513
    %v2680 = vunpack.c.l.b16 %v2514
    %v2681 = vunpack.c.h.b16 %v2514
    %v2682 = vunpack.c.l.b16 %v2515
    %v2683 = vunpack.c.h.b16 %v2515
    %v2684 = vunpack.c.l.b16 %v2516
    %v2685 = vunpack.c.h.b16 %v2516
    %v2686 = vunpack.c.l.b16 %v2517
    %v2687 = vunpack.c.h.b16 %v2517
    %v2688 = vunpack.c.l.b16 %v2518
    %v2689 = vunpack.c.h.b16 %v2518
    %v2690 = vunpack.c.l.b16 %v2519
    %v2691 = vunpack.c.h.b16 %v2519
    %v2692 = vunpack.c.l.b16 %v2520
    %v2693 = vunpack.c.h.b16 %v2520
    %v2694 = vunpack.c.l.b16 %v2521
    %v2695 = vunpack.c.h.b16 %v2521
    %v2696 = vunpack.c.l.b16 %v2522
    %v2697 = vunpack.c.h.b16 %v2522
    %v2698 = vunpack.c.l.b16 %v2523
    %v2699 = vunpack.c.h.b16 %v2523
    %v2700 = vunpack.c.l.b16 %v2524
    %v2701 = vunpack.c.h.b16 %v2524
    %v2702 = vunpack.c.l.b16 %v2525
    %v2703 = vunpack.c.h.b16 %v2525
    %v2704 = vunpack.c.l.b16 %v2526
    %v2705 = vunpack.c.h.b16 %v2526
    %v2706 = vunpack.c.l.b16 %v2527
    %v2707 = vunpack.c.h.b16 %v2527
    %v2708 = vunpack.c.l.b16 %v2528
    %v2709 = vunpack.c.h.b16 %v2528
    %v2710 = vunpack.c.l.b16 %v2529
    %v2711 = vunpack.c.h.b16 %v2529
    %v2712 = vunpack.c.l.b16 %v2530
    %v2713 = vunpack.c.h.b16 %v2530
    %v2714 = vunpack.c.l.b16 %v2531
    %v2715 = vunpack.c.h.b16 %v2531
    %v2716 = vunpack.c.l.b16 %v2532
    %v2717 = vunpack.c.h.b16 %v2532
    %v2718 = vunpack.c.l.b16 %v2533
    %v2719 = vunpack.c.h.b16 %v2533
    %v2720 = vunpack.c.l.b16 %v2534
    %v2721 = vunpack.c.h.b16 %v2534
    %v2722 = vunpack.c.l.b16 %v2535
    %v2723 = vunpack.c.h.b16 %v2535
    %v2724 = vunpack.c.l.b16 %v2536
    %v2725 = vunpack.c.h.b16 %v2536
    %v2726 = vunpack.c.l.b16 %v2537
    %v2727 = vunpack.c.h.b16 %v2537
    %v2728 = vunpack.c.l.b16 %v2538
    %v2729 = vunpack.c.h.b16 %v2538
    %v2730 = vunpack.c.l.b16 %v2539
    %v2731 = vunpack.c.h.b16 %v2539
    %v2732 = vunpack.c.l.b16 %v2540
    %v2733 = vunpack.c.h.b16 %v2540
    %v2734 = vunpack.c.l.b16 %v2541
    %v2735 = vunpack.c.h.b16 %v2541
    %v2736 = vunpack.c.l.b16 %v2542
    %v2737 = vunpack.c.h.b16 %v2542
    %v2738 = vunpack.c.l.b16 %v2543
    %v2739 = vunpack.c.h.b16 %v2543
    %v2740 = vunpack.c.l.b16 %v2544
    %v2741 = vunpack.c.h.b16 %v2544
    %v2742 = vunpack.c.l.b16 %v2545
    %v2743 = vunpack.c.h.b16 %v2545
    %v2744 = vunpack.c.l.b16 %v2546
    %v2745 = vunpack.c.h.b16 %v2546
    %v2746 = vunpack.c.l.b16 %v2547
    %v2747 = vunpack.c.h.b16 %v2547
    %v2748 = vunpack.c.l.b16 %v2548
    %v2749 = vunpack.c.h.b16 %v2548
    %v2750 = vunpack.c.l.b16 %v2549
    %v2751 = vunpack.c.h.b16 %v2549
    %v2752 = vpack.c.b16 %v2628, %v2624
    %v2753 = vpack.c.b16 %v2629, %v2625
    %v2754 = vpack.c.b16 %v2630, %v2626
    %v2755 = vpack.c.b16 %v2631, %v2627
    %v2756 = vpack.c.b16 %v2636, %v2632
    %v2757 = vpack.c.b16 %v2637, %v2633
    %v2758 = vpack.c.b16 %v2638, %v2634
    %v2759 = vpack.c.b16 %v2639, %v2635
    %v2760 = vpack.c.b16 %v2644, %v2640
    %v2761 = vpack.c.b16 %v2645, %v2641
    %v2762 = vpack.c.b16 %v2646, %v2642
    %v2763 = vpack.c.b16 %v2647, %v2643
    %v2764 = vpack.c.b16 %v2652, %v2648
    %v2765 = vpack.c.b16 %v2653, %v2649
    %v2766 = vpack.c.b16 %v2654, %v2650
    %v2767 = vpack.c.b16 %v2655, %v2651
    %v2768 = vpack.c.b16 %v2660, %v2656
    %v2769 = vpack.c.b16 %v2661, %v2657
    %v2770 = vpack.c.b16 %v2662, %v2658
    %v2771 = vpack.c.b16 %v2663, %v2659
    %v2772 = vpack.c.b16 %v2668, %v2664
    %v2773 = vpack.c.b16 %v2669, %v2665
    %v2774 = vpack.c.b16 %v2670, %v2666
    %v2775 = vpack.c.b16 %v2671, %v2667
    %v2776 = vpack.c.b16 %v2676, %v2672
    %v2777 = vpack.c.b16 %v2677, %v2673
    %v2778 = vpack.c.b16 %v2678, %v2674
    %v2779 = vpack.c.b16 %v2679, %v2675
    %v2780 = vpack.c.b16 %v2684, %v2680
    %v2781 = vpack.c.b16 %v2685, %v2681
    %v2782 = vpack.c.b16 %v2686, %v2682
    %v2783 = vpack.c.b16 %v2687, %v2683
    %v2784 = vpack.c.b16 %v2692, %v2688
    %v2785 = vpack.c.b16 %v2693, %v2689
    %v2786 = vpack.c.b16 %v2694, %v2690
    %v2787 = vpack.c.b16 %v2695, %v2691
    %v2788 = vpack.c.b16 %v2700, %v2696
    %v2789 = vpack.c.b16 %v2701, %v2697
    %v2790 = vpack.c.b16 %v2702, %v2698
    %v2791 = vpack.c.b16 %v2703, %v2699
    %v2792 = vpack.c.b16 %v2708, %v2704
    %v2793 = vpack.c.b16 %v2709, %v2705
    %v2794 = vpack.c.b16 %v2710, %v2706
    %v2795 = vpack.c.b16 %v2711, %v2707
    %v2796 = vpack.c.b16 %v2716, %v2712
    %v2797 = vpack.c.b16 %v2717, %v2713
    %v2798 = vpack.c.b16 %v2718, %v2714
    %v2799 = vpack.c.b16 %v2719, %v2715
    %v2800 = vpack.c.b16 %v2724, %v2720
    %v2801 = vpack.c.b16 %v2725, %v2721
    %v2802 = vpack.c.b16 %v2726, %v2722
    %v2803 = vpack.c.b16 %v2727, %v2723
    %v2804 = vpack.c.b16 %v2732, %v2728
    %v2805 = vpack.c.b16 %v2733, %v2729
    %v2806 = vpack.c.b16 %v2734, %v2730
    %v2807 = vpack.c.b16 %v2735, %v2731
    %v2808 = vpack.c.b16 %v2740, %v2736
    %v2809 = vpack.c.b16 %v2741, %v2737
    %v2810 = vpack.c.b16 %v2742, %v2738
    %v2811 = vpack.c.b16 %v2743, %v2739
    %v2812 = vpack.c.b16 %v2748, %v2744
    %v2813 = vpack.c.b16 %v2749, %v2745
    %v2814 = vpack.c.b16 %v2750, %v2746
    %v2815 = vpack.c.b16 %v2751, %v2747
    %2880 = vmatpush.bf16.msra.mxu0 %v2780
    %2881 = vmatpush.bf16.msra.mxu0 %v2776
    %2882 = vmatpush.bf16.msra.mxu0 %v2772
    %2883 = vmatpush.bf16.msra.mxu0 %v2768
    %2884 = vmatpush.bf16.msra.mxu0 %v2764
    %2885 = vmatpush.bf16.msra.mxu0 %v2760
    %2886 = vmatpush.bf16.msra.mxu0 %v2756
    %2887 = vmatpush.bf16.msra.mxu0 %v2752
    %2888 = vmatmul.bf16.gmra.mxu0 %v2484
    %v2889 = vpop.f32.mrf.mxu0
    %v2890 = vadd.f32 %v2552, %v2889
    %v2891 = vpop.f32.mrf.mxu0
    %v2892 = vadd.f32 %v2552, %v2891
    %2893 = vdwg.mxu0
    %2894 = vmatpush.bf16.msra.mxu0 %v2812
    %2895 = vmatpush.bf16.msra.mxu0 %v2808
    %2896 = vmatpush.bf16.msra.mxu0 %v2804
    %2897 = vmatpush.bf16.msra.mxu0 %v2800
    %2898 = vmatpush.bf16.msra.mxu0 %v2796
    %2899 = vmatpush.bf16.msra.mxu0 %v2792
    %2900 = vmatpush.bf16.msra.mxu0 %v2788
    %2901 = vmatpush.bf16.msra.mxu0 %v2784
    %2902 = vmatmul.bf16.gmra.mxu0 %v2485
    %v2903 = vpop.f32.mrf.mxu0
    %v2904 = vadd.f32 %v2890, %v2903
    %v2905 = vpop.f32.mrf.mxu0
    %v2906 = vadd.f32 %v2892, %v2905
    %2907 = vdwg.mxu0
    %2908 = vmatpush.bf16.msra.mxu0 %v2781
    %2909 = vmatpush.bf16.msra.mxu0 %v2777
    %2910 = vmatpush.bf16.msra.mxu0 %v2773
    %2911 = vmatpush.bf16.msra.mxu0 %v2769
    %2912 = vmatpush.bf16.msra.mxu0 %v2765
    %2913 = vmatpush.bf16.msra.mxu0 %v2761
    %2914 = vmatpush.bf16.msra.mxu0 %v2757
    %2915 = vmatpush.bf16.msra.mxu0 %v2753
    %2916 = vmatmul.bf16.gmra.mxu0 %v2484
    %v2917 = vpop.f32.mrf.mxu0
    %v2918 = vadd.f32 %v2553, %v2917
    %v2919 = vpop.f32.mrf.mxu0
    %v2920 = vadd.f32 %v2553, %v2919
    %2921 = vdwg.mxu0
    %2922 = vmatpush.bf16.msra.mxu0 %v2813
    %2923 = vmatpush.bf16.msra.mxu0 %v2809
    %2924 = vmatpush.bf16.msra.mxu0 %v2805
    %2925 = vmatpush.bf16.msra.mxu0 %v2801
    %2926 = vmatpush.bf16.msra.mxu0 %v2797
    %2927 = vmatpush.bf16.msra.mxu0 %v2793
    %2928 = vmatpush.bf16.msra.mxu0 %v2789
    %2929 = vmatpush.bf16.msra.mxu0 %v2785
    %2930 = vmatmul.bf16.gmra.mxu0 %v2485
    %v2931 = vpop.f32.mrf.mxu0
    %v2932 = vadd.f32 %v2918, %v2931
    %v2933 = vpop.f32.mrf.mxu0
    %v2934 = vadd.f32 %v2920, %v2933
    %2935 = vdwg.mxu0
    %2936 = vmatpush.bf16.msra.mxu0 %v2782
    %2937 = vmatpush.bf16.msra.mxu0 %v2778
    %2938 = vmatpush.bf16.msra.mxu0 %v2774
    %2939 = vmatpush.bf16.msra.mxu0 %v2770
    %2940 = vmatpush.bf16.msra.mxu0 %v2766
    %2941 = vmatpush.bf16.msra.mxu0 %v2762
    %2942 = vmatpush.bf16.msra.mxu0 %v2758
    %2943 = vmatpush.bf16.msra.mxu0 %v2754
    %2944 = vmatmul.bf16.gmra.mxu0 %v2484
    %v2945 = vpop.f32.mrf.mxu0
    %v2946 = vadd.f32 %v2554, %v2945
    %v2947 = vpop.f32.mrf.mxu0
    %v2948 = vadd.f32 %v2554, %v2947
    %2949 = vdwg.mxu0
    %2950 = vmatpush.bf16.msra.mxu0 %v2814
    %2951 = vmatpush.bf16.msra.mxu0 %v2810
    %2952 = vmatpush.bf16.msra.mxu0 %v2806
    %2953 = vmatpush.bf16.msra.mxu0 %v2802
    %2954 = vmatpush.bf16.msra.mxu0 %v2798
    %2955 = vmatpush.bf16.msra.mxu0 %v2794
    %2956 = vmatpush.bf16.msra.mxu0 %v2790
    %2957 = vmatpush.bf16.msra.mxu0 %v2786
    %2958 = vmatmul.bf16.gmra.mxu0 %v2485
    %v2959 = vpop.f32.mrf.mxu0
    %v2960 = vadd.f32 %v2946, %v2959
    %v2961 = vpop.f32.mrf.mxu0
    %v2962 = vadd.f32 %v2948, %v2961
    %2963 = vdwg.mxu0
    %2964 = vmatpush.bf16.msra.mxu0 %v2783
    %2965 = vmatpush.bf16.msra.mxu0 %v2779
    %2966 = vmatpush.bf16.msra.mxu0 %v2775
    %2967 = vmatpush.bf16.msra.mxu0 %v2771
    %2968 = vmatpush.bf16.msra.mxu0 %v2767
    %2969 = vmatpush.bf16.msra.mxu0 %v2763
    %2970 = vmatpush.bf16.msra.mxu0 %v2759
    %2971 = vmatpush.bf16.msra.mxu0 %v2755
    %2972 = vmatmul.bf16.gmra.mxu0 %v2484
    %v2973 = vpop.f32.mrf.mxu0
    %v2974 = vadd.f32 %v2555, %v2973
    %v2975 = vpop.f32.mrf.mxu0
    %v2976 = vadd.f32 %v2555, %v2975
    %2977 = vdwg.mxu0
    %2978 = vmatpush.bf16.msra.mxu0 %v2815
    %2979 = vmatpush.bf16.msra.mxu0 %v2811
    %2980 = vmatpush.bf16.msra.mxu0 %v2807
    %2981 = vmatpush.bf16.msra.mxu0 %v2803
    %2982 = vmatpush.bf16.msra.mxu0 %v2799
    %2983 = vmatpush.bf16.msra.mxu0 %v2795
    %2984 = vmatpush.bf16.msra.mxu0 %v2791
    %2985 = vmatpush.bf16.msra.mxu0 %v2787
    %2986 = vmatmul.bf16.gmra.mxu0 %v2485
    %v2987 = vpop.f32.mrf.mxu0
    %v2988 = vadd.f32 %v2974, %v2987
    %v2989 = vpop.f32.mrf.mxu0
    %v2990 = vadd.f32 %v2976, %v2989
    %2991 = vdwg.mxu0
    %v2992 = vmax.f32 %v2904, 0.0
    %v2993 = vmax.f32 %v2932, 0.0
    %v2994 = vmax.f32 %v2960, 0.0
    %v2995 = vmax.f32 %v2988, 0.0
    %v2996 = vmax.f32 %v2906, 0.0
    %v2997 = vmax.f32 %v2934, 0.0
    %v2998 = vmax.f32 %v2962, 0.0
    %v2999 = vmax.f32 %v2990, 0.0
    %v3000 = vpack.c.bf16 %v2996, %v2992
    %v3001 = vpack.c.bf16 %v2997, %v2993
    %v3002 = vpack.c.bf16 %v2998, %v2994
    %v3003 = vpack.c.bf16 %v2999, %v2995
    %v3004 = vld [vmem:[%s12] sm:$0xff]
    %v3005 = vld [vmem:[%s12 + $0x8] sm:$0xff]
    %v3006 = vld [vmem:[%s12 + $0x10] sm:$0xff]
    %v3007 = vld [vmem:[%s12 + $0x18] sm:$0xf]
    %v3008 = vld [vmem:[%s12 + $0x1c] sm:$0xff]
    %v3009 = vld [vmem:[%s12 + $0x24] sm:$0xff]
    %v3010 = vld [vmem:[%s12 + $0x2c] sm:$0xff]
    %v3011 = vld [vmem:[%s12 + $0x34] sm:$0xf]
    %v3012 = vld [vmem:[%s12 + $0x38] sm:$0xff]
    %v3013 = vld [vmem:[%s12 + $0x40] sm:$0xff]
    %v3014 = vld [vmem:[%s12 + $0x48] sm:$0xff]
    %v3015 = vld [vmem:[%s12 + $0x50] sm:$0xf]
    %v3016 = vld [vmem:[%s12 + $0x54] sm:$0xff]
    %v3017 = vld [vmem:[%s12 + $0x5c] sm:$0xff]
    %v3018 = vld [vmem:[%s12 + $0x64] sm:$0xff]
    %v3019 = vld [vmem:[%s12 + $0x6c] sm:$0xf]
    %v3020 = vld [vmem:[%s12 + $0x70] sm:$0xff]
    %v3021 = vld [vmem:[%s12 + $0x78] sm:$0xff]
    %v3022 = vld [vmem:[%s12 + $0x80] sm:$0xff]
    %v3023 = vld [vmem:[%s12 + $0x88] sm:$0xf]
    %v3024 = vld [vmem:[%s12 + $0x8c] sm:$0xff]
    %v3025 = vld [vmem:[%s12 + $0x94] sm:$0xff]
    %v3026 = vld [vmem:[%s12 + $0x9c] sm:$0xff]
    %v3027 = vld [vmem:[%s12 + $0xa4] sm:$0xf]
    %v3028 = vld [vmem:[%s12 + $0xa8] sm:$0xff]
    %v3029 = vld [vmem:[%s12 + $0xb0] sm:$0xff]
    %v3030 = vld [vmem:[%s12 + $0xb8] sm:$0xff]
    %v3031 = vld [vmem:[%s12 + $0xc0] sm:$0xf]
    %v3032 = vld [vmem:[%s12 + $0xc4] sm:$0xff]
    %v3033 = vld [vmem:[%s12 + $0xcc] sm:$0xff]
    %v3034 = vld [vmem:[%s12 + $0xd4] sm:$0xff]
    %v3035 = vld [vmem:[%s12 + $0xdc] sm:$0xf]
    %v3036 = vld [vmem:[%s12 + $0xe0] sm:$0xff]
    %v3037 = vld [vmem:[%s12 + $0xe8] sm:$0xff]
    %v3038 = vld [vmem:[%s12 + $0xf0] sm:$0xff]
    %v3039 = vld [vmem:[%s12 + $0xf8] sm:$0xf]
    %v3040 = vld [vmem:[%s12 + $0xfc] sm:$0xff]
    %v3041 = vld [vmem:[%s12 + $0x104] sm:$0xff]
    %v3042 = vld [vmem:[%s12 + $0x10c] sm:$0xff]
    %v3043 = vld [vmem:[%s12 + $0x114] sm:$0xf]
    %v3044 = vld [vmem:[%s12 + $0x118] sm:$0xff]
    %v3045 = vld [vmem:[%s12 + $0x120] sm:$0xff]
    %v3046 = vld [vmem:[%s12 + $0x128] sm:$0xff]
    %v3047 = vld [vmem:[%s12 + $0x130] sm:$0xf]
    %v3048 = vld [vmem:[%s12 + $0x134] sm:$0xff]
    %v3049 = vld [vmem:[%s12 + $0x13c] sm:$0xff]
    %v3050 = vld [vmem:[%s12 + $0x144] sm:$0xff]
    %v3051 = vld [vmem:[%s12 + $0x14c] sm:$0xf]
    %v3052 = vld [vmem:[%s12 + $0x150] sm:$0xff]
    %v3053 = vld [vmem:[%s12 + $0x158] sm:$0xff]
    %v3054 = vld [vmem:[%s12 + $0x160] sm:$0xff]
    %v3055 = vld [vmem:[%s12 + $0x168] sm:$0xf]
    %v3056 = vld [vmem:[%s12 + $0x16c] sm:$0xff]
    %v3057 = vld [vmem:[%s12 + $0x174] sm:$0xff]
    %v3058 = vld [vmem:[%s12 + $0x17c] sm:$0xff]
    %v3059 = vld [vmem:[%s12 + $0x184] sm:$0xf]
    %v3060 = vld [vmem:[%s12 + $0x188] sm:$0xff]
    %v3061 = vld [vmem:[%s12 + $0x190] sm:$0xff]
    %v3062 = vld [vmem:[%s12 + $0x198] sm:$0xff]
    %v3063 = vld [vmem:[%s12 + $0x1a0] sm:$0xf]
    %v3064 = vld [vmem:[%s12 + $0x1a4] sm:$0xff]
    %v3065 = vld [vmem:[%s12 + $0x1ac] sm:$0xff]
    %v3066 = vld [vmem:[%s12 + $0x1b4] sm:$0xff]
    %v3067 = vld [vmem:[%s12 + $0x1bc] sm:$0xf]
    %v3068 = vld [vmem:[%s12 + $0x1c0] sm:$0xff]
    %v3069 = vld [vmem:[%s12 + $0x1c8] sm:$0xff]
    %v3070 = vld [vmem:[%s12 + $0x1d0] sm:$0xff]
    %v3071 = vld [vmem:[%s12 + $0x1d8] sm:$0xf]
    %v3072 = vld [vmem:[%s12 + $0x1dc] sm:$0xff]
    %v3073 = vld [vmem:[%s12 + $0x1e4] sm:$0xff]
    %v3074 = vld [vmem:[%s12 + $0x1ec] sm:$0xff]
    %v3075 = vld [vmem:[%s12 + $0x1f4] sm:$0xf]
    %v3076 = vld [vmem:[%s12 + $0x1f8] sm:$0xff]
    %v3077 = vld [vmem:[%s12 + $0x200] sm:$0xff]
    %v3078 = vld [vmem:[%s12 + $0x208] sm:$0xff]
    %v3079 = vld [vmem:[%s12 + $0x210] sm:$0xf]
    %v3080 = vld [vmem:[%s12 + $0x214] sm:$0xff]
    %v3081 = vld [vmem:[%s12 + $0x21c] sm:$0xff]
    %v3082 = vld [vmem:[%s12 + $0x224] sm:$0xff]
    %v3083 = vld [vmem:[%s12 + $0x22c] sm:$0xf]
    %v3084 = vld [vmem:[%s12 + $0x230] sm:$0xff]
    %v3085 = vld [vmem:[%s12 + $0x238] sm:$0xff]
    %v3086 = vld [vmem:[%s12 + $0x240] sm:$0xff]
    %v3087 = vld [vmem:[%s12 + $0x248] sm:$0xf]
    %v3088 = vld [vmem:[%s12 + $0x24c] sm:$0xff]
    %v3089 = vld [vmem:[%s12 + $0x254] sm:$0xff]
    %v3090 = vld [vmem:[%s12 + $0x25c] sm:$0xff]
    %v3091 = vld [vmem:[%s12 + $0x264] sm:$0xf]
    %v3092 = vld [vmem:[%s12 + $0x268] sm:$0xff]
    %v3093 = vld [vmem:[%s12 + $0x270] sm:$0xff]
    %v3094 = vld [vmem:[%s12 + $0x278] sm:$0xff]
    %v3095 = vld [vmem:[%s12 + $0x280] sm:$0xf]
    %v3096 = vld [vmem:[%s12 + $0x284] sm:$0xff]
    %v3097 = vld [vmem:[%s12 + $0x28c] sm:$0xff]
    %v3098 = vld [vmem:[%s12 + $0x294] sm:$0xff]
    %v3099 = vld [vmem:[%s12 + $0x29c] sm:$0xf]
    %v3100 = vld [vmem:[%s12 + $0x2a0] sm:$0xff]
    %v3101 = vld [vmem:[%s12 + $0x2a8] sm:$0xff]
    %v3102 = vld [vmem:[%s12 + $0x2b0] sm:$0xff]
    %v3103 = vld [vmem:[%s12 + $0x2b8] sm:$0xf]
    %v3104 = vld [vmem:[%s12 + $0x2bc] sm:$0xff]
    %v3105 = vld [vmem:[%s12 + $0x2c4] sm:$0xff]
    %v3106 = vld [vmem:[%s12 + $0x2cc] sm:$0xff]
    %v3107 = vld [vmem:[%s12 + $0x2d4] sm:$0xf]
    %v3108 = vld [vmem:[%s12 + $0x2d8] sm:$0xff]
    %v3109 = vld [vmem:[%s12 + $0x2e0] sm:$0xff]
    %v3110 = vld [vmem:[%s12 + $0x2e8] sm:$0xff]
    %v3111 = vld [vmem:[%s12 + $0x2f0] sm:$0xf]
    %v3112 = vld [vmem:[%s12 + $0x2f4] sm:$0xff]
    %v3113 = vld [vmem:[%s12 + $0x2fc] sm:$0xff]
    %v3114 = vld [vmem:[%s12 + $0x304] sm:$0xff]
    %v3115 = vld [vmem:[%s12 + $0x30c] sm:$0xf]
    %v3116 = vld [vmem:[%s12 + $0x310] sm:$0xff]
    %v3117 = vld [vmem:[%s12 + $0x318] sm:$0xff]
    %v3118 = vld [vmem:[%s12 + $0x320] sm:$0xff]
    %v3119 = vld [vmem:[%s12 + $0x328] sm:$0xf]
    %v3120 = vld [vmem:[%s12 + $0x32c] sm:$0xff]
    %v3121 = vld [vmem:[%s12 + $0x334] sm:$0xff]
    %v3122 = vld [vmem:[%s12 + $0x33c] sm:$0xff]
    %v3123 = vld [vmem:[%s12 + $0x344] sm:$0xf]
    %v3124 = vld [vmem:[%s12 + $0x348] sm:$0xff]
    %v3125 = vld [vmem:[%s12 + $0x350] sm:$0xff]
    %v3126 = vld [vmem:[%s12 + $0x358] sm:$0xff]
    %v3127 = vld [vmem:[%s12 + $0x360] sm:$0xf]
    %v3128 = vld [vmem:[%s12 + $0x364] sm:$0xff]
    %v3129 = vld [vmem:[%s12 + $0x36c] sm:$0xff]
    %v3130 = vld [vmem:[%s12 + $0x374] sm:$0xff]
    %v3131 = vld [vmem:[%s12 + $0x37c] sm:$0xf]
    %v3132 = vld [vmem:[%s12 + $0x380] sm:$0xff]
    %v3133 = vld [vmem:[%s12 + $0x388] sm:$0xff]
    %v3134 = vld [vmem:[%s12 + $0x390] sm:$0xff]
    %v3135 = vld [vmem:[%s12 + $0x398] sm:$0xf]
    %v3136 = vld [vmem:[%s12 + $0x39c] sm:$0xff]
    %v3137 = vld [vmem:[%s12 + $0x3a4] sm:$0xff]
    %v3138 = vld [vmem:[%s12 + $0x3ac] sm:$0xff]
    %v3139 = vld [vmem:[%s12 + $0x3b4] sm:$0xf]
    %v3140 = vld [vmem:[%s12 + $0x3b8] sm:$0xff]
    %v3141 = vld [vmem:[%s12 + $0x3c0] sm:$0xff]
    %v3142 = vld [vmem:[%s12 + $0x3c8] sm:$0xff]
    %v3143 = vld [vmem:[%s12 + $0x3d0] sm:$0xf]
    %v3144 = vld [vmem:[%s12 + $0x3d4] sm:$0xff]
    %v3145 = vld [vmem:[%s12 + $0x3dc] sm:$0xff]
    %v3146 = vld [vmem:[%s12 + $0x3e4] sm:$0xff]
    %v3147 = vld [vmem:[%s12 + $0x3ec] sm:$0xf]
    %v3148 = vld [vmem:[%s12 + $0x3f0] sm:$0xff]
    %v3149 = vld [vmem:[%s12 + $0x3f8] sm:$0xff]
    %v3150 = vld [vmem:[%s12 + $0x400] sm:$0xff]
    %v3151 = vld [vmem:[%s12 + $0x408] sm:$0xf]
    %v3152 = vld [vmem:[%s12 + $0x40c] sm:$0xff]
    %v3153 = vld [vmem:[%s12 + $0x414] sm:$0xff]
    %v3154 = vld [vmem:[%s12 + $0x41c] sm:$0xff]
    %v3155 = vld [vmem:[%s12 + $0x424] sm:$0xf]
    %v3156 = vld [vmem:[%s12 + $0x428] sm:$0xff]
    %v3157 = vld [vmem:[%s12 + $0x430] sm:$0xff]
    %v3158 = vld [vmem:[%s12 + $0x438] sm:$0xff]
    %v3159 = vld [vmem:[%s12 + $0x440] sm:$0xf]
    %v3160 = vld [vmem:[%s12 + $0x444] sm:$0xff]
    %v3161 = vld [vmem:[%s12 + $0x44c] sm:$0xff]
    %v3162 = vld [vmem:[%s12 + $0x454] sm:$0xff]
    %v3163 = vld [vmem:[%s12 + $0x45c] sm:$0xf]
    %v3164 = vld [vmem:[%s12 + $0x460] sm:$0xff]
    %v3165 = vld [vmem:[%s12 + $0x468] sm:$0xff]
    %v3166 = vld [vmem:[%s12 + $0x470] sm:$0xff]
    %v3167 = vld [vmem:[%s12 + $0x478] sm:$0xf]
    %v3168 = vld [vmem:[%s12 + $0x47c] sm:$0xff]
    %v3169 = vld [vmem:[%s12 + $0x484] sm:$0xff]
    %v3170 = vld [vmem:[%s12 + $0x48c] sm:$0xff]
    %v3171 = vld [vmem:[%s12 + $0x494] sm:$0xf]
    %v3172 = vld [vmem:[%s12 + $0x498] sm:$0xff]
    %v3173 = vld [vmem:[%s12 + $0x4a0] sm:$0xff]
    %v3174 = vld [vmem:[%s12 + $0x4a8] sm:$0xff]
    %v3175 = vld [vmem:[%s12 + $0x4b0] sm:$0xf]
    %v3176 = vld [vmem:[%s12 + $0x4b4] sm:$0xff]
    %v3177 = vld [vmem:[%s12 + $0x4bc] sm:$0xff]
    %v3178 = vld [vmem:[%s12 + $0x4c4] sm:$0xff]
    %v3179 = vld [vmem:[%s12 + $0x4cc] sm:$0xf]
    %v3180 = vld [vmem:[%s12 + $0x4d0] sm:$0xff]
    %v3181 = vld [vmem:[%s12 + $0x4d8] sm:$0xff]
    %v3182 = vld [vmem:[%s12 + $0x4e0] sm:$0xff]
    %v3183 = vld [vmem:[%s12 + $0x4e8] sm:$0xf]
    %v3184 = vld [vmem:[%s12 + $0x4ec] sm:$0xff]
    %v3185 = vld [vmem:[%s12 + $0x4f4] sm:$0xff]
    %v3186 = vld [vmem:[%s12 + $0x4fc] sm:$0xff]
    %v3187 = vld [vmem:[%s12 + $0x504] sm:$0xf]
    %v3188 = vld [vmem:[%s12 + $0x508] sm:$0xff]
    %v3189 = vld [vmem:[%s12 + $0x510] sm:$0xff]
    %v3190 = vld [vmem:[%s12 + $0x518] sm:$0xff]
    %v3191 = vld [vmem:[%s12 + $0x520] sm:$0xf]
    %v3192 = vld [vmem:[%s12 + $0x524] sm:$0xff]
    %v3193 = vld [vmem:[%s12 + $0x52c] sm:$0xff]
    %v3194 = vld [vmem:[%s12 + $0x534] sm:$0xff]
    %v3195 = vld [vmem:[%s12 + $0x53c] sm:$0xf]
    %v3196 = vld [vmem:[%s12 + $0x540] sm:$0xff]
    %v3197 = vld [vmem:[%s12 + $0x548] sm:$0xff]
    %v3198 = vld [vmem:[%s12 + $0x550] sm:$0xff]
    %v3199 = vld [vmem:[%s12 + $0x558] sm:$0xf]
    %v3200 = vld [vmem:[%s12 + $0x55c] sm:$0xff]
    %v3201 = vld [vmem:[%s12 + $0x564] sm:$0xff]
    %v3202 = vld [vmem:[%s12 + $0x56c] sm:$0xff]
    %v3203 = vld [vmem:[%s12 + $0x574] sm:$0xf]
    %v3204 = vld [vmem:[%s12 + $0x578] sm:$0xff]
    %v3205 = vld [vmem:[%s12 + $0x580] sm:$0xff]
    %v3206 = vld [vmem:[%s12 + $0x588] sm:$0xff]
    %v3207 = vld [vmem:[%s12 + $0x590] sm:$0xf]
    %v3208 = vld [vmem:[%s12 + $0x594] sm:$0xff]
    %v3209 = vld [vmem:[%s12 + $0x59c] sm:$0xff]
    %v3210 = vld [vmem:[%s12 + $0x5a4] sm:$0xff]
    %v3211 = vld [vmem:[%s12 + $0x5ac] sm:$0xf]
    %v3212 = vld [vmem:[%s12 + $0x5b0] sm:$0xff]
    %v3213 = vld [vmem:[%s12 + $0x5b8] sm:$0xff]
    %v3214 = vld [vmem:[%s12 + $0x5c0] sm:$0xff]
    %v3215 = vld [vmem:[%s12 + $0x5c8] sm:$0xf]
    %v3216 = vld [vmem:[%s12 + $0x5cc] sm:$0xff]
    %v3217 = vld [vmem:[%s12 + $0x5d4] sm:$0xff]
    %v3218 = vld [vmem:[%s12 + $0x5dc] sm:$0xff]
    %v3219 = vld [vmem:[%s12 + $0x5e4] sm:$0xf]
    %v3220 = vld [vmem:[%s12 + $0x5e8] sm:$0xff]
    %v3221 = vld [vmem:[%s12 + $0x5f0] sm:$0xff]
    %v3222 = vld [vmem:[%s12 + $0x5f8] sm:$0xff]
    %v3223 = vld [vmem:[%s12 + $0x600] sm:$0xf]
    %v3224 = vld [vmem:[%s12 + $0x604] sm:$0xff]
    %v3225 = vld [vmem:[%s12 + $0x60c] sm:$0xff]
    %v3226 = vld [vmem:[%s12 + $0x614] sm:$0xff]
    %v3227 = vld [vmem:[%s12 + $0x61c] sm:$0xf]
    %v3228 = vld [vmem:[%s12 + $0x620] sm:$0xff]
    %v3229 = vld [vmem:[%s12 + $0x628] sm:$0xff]
    %v3230 = vld [vmem:[%s12 + $0x630] sm:$0xff]
    %v3231 = vld [vmem:[%s12 + $0x638] sm:$0xf]
    %v3232 = vld [vmem:[%s12 + $0x63c] sm:$0xff]
    %v3233 = vld [vmem:[%s12 + $0x644] sm:$0xff]
    %v3234 = vld [vmem:[%s12 + $0x64c] sm:$0xff]
    %v3235 = vld [vmem:[%s12 + $0x654] sm:$0xf]
    %v3236 = vld [vmem:[%s12 + $0x658] sm:$0xff]
    %v3237 = vld [vmem:[%s12 + $0x660] sm:$0xff]
    %v3238 = vld [vmem:[%s12 + $0x668] sm:$0xff]
    %v3239 = vld [vmem:[%s12 + $0x670] sm:$0xf]
    %v3240 = vld [vmem:[%s12 + $0x674] sm:$0xff]
    %v3241 = vld [vmem:[%s12 + $0x67c] sm:$0xff]
    %v3242 = vld [vmem:[%s12 + $0x684] sm:$0xff]
    %v3243 = vld [vmem:[%s12 + $0x68c] sm:$0xf]
    %v3244 = vld [vmem:[%s12 + $0x690] sm:$0xff]
    %v3245 = vld [vmem:[%s12 + $0x698] sm:$0xff]
    %v3246 = vld [vmem:[%s12 + $0x6a0] sm:$0xff]
    %v3247 = vld [vmem:[%s12 + $0x6a8] sm:$0xf]
    %v3248 = vld [vmem:[%s12 + $0x6ac] sm:$0xff]
    %v3249 = vld [vmem:[%s12 + $0x6b4] sm:$0xff]
    %v3250 = vld [vmem:[%s12 + $0x6bc] sm:$0xff]
    %v3251 = vld [vmem:[%s12 + $0x6c4] sm:$0xf]
    %v3252 = vld [vmem:[%s12 + $0x6c8] sm:$0xff]
    %v3253 = vld [vmem:[%s12 + $0x6d0] sm:$0xff]
    %v3254 = vld [vmem:[%s12 + $0x6d8] sm:$0xff]
    %v3255 = vld [vmem:[%s12 + $0x6e0] sm:$0xf]
    %v3256 = vld [vmem:[%s12 + $0x6e4] sm:$0xff]
    %v3257 = vld [vmem:[%s12 + $0x6ec] sm:$0xff]
    %v3258 = vld [vmem:[%s12 + $0x6f4] sm:$0xff]
    %v3259 = vld [vmem:[%s12 + $0x6fc] sm:$0xf]
    %v3260 = vld [vmem:[%s13] sm:$0x7f]
    %v3262 = vperm.slane %v3260, 0
    %v3263 = vperm.slane %v3260, 1
    %v3264 = vperm.slane %v3260, 2
    %v3265 = vperm.slane %v3260, 3
    %v3266 = vperm.slane %v3260, 4
    %v3267 = vperm.slane %v3260, 5
    %v3268 = vperm.slane %v3260, 6
    %v3532 = vunpack.c.l.b16 %v3004
    %v3533 = vunpack.c.h.b16 %v3004
    %v3534 = vunpack.c.l.b16 %v3005
    %v3535 = vunpack.c.h.b16 %v3005
    %v3536 = vunpack.c.l.b16 %v3006
    %v3537 = vunpack.c.h.b16 %v3006
    %v3538 = vunpack.c.l.b16 %v3007
    %v3539 = vunpack.c.l.b16 %v3008
    %v3540 = vunpack.c.h.b16 %v3008
    %v3541 = vunpack.c.l.b16 %v3009
    %v3542 = vunpack.c.h.b16 %v3009
    %v3543 = vunpack.c.l.b16 %v3010
    %v3544 = vunpack.c.h.b16 %v3010
    %v3545 = vunpack.c.l.b16 %v3011
    %v3546 = vunpack.c.l.b16 %v3012
    %v3547 = vunpack.c.h.b16 %v3012
    %v3548 = vunpack.c.l.b16 %v3013
    %v3549 = vunpack.c.h.b16 %v3013
    %v3550 = vunpack.c.l.b16 %v3014
    %v3551 = vunpack.c.h.b16 %v3014
    %v3552 = vunpack.c.l.b16 %v3015
    %v3553 = vunpack.c.l.b16 %v3016
    %v3554 = vunpack.c.h.b16 %v3016
    %v3555 = vunpack.c.l.b16 %v3017
    %v3556 = vunpack.c.h.b16 %v3017
    %v3557 = vunpack.c.l.b16 %v3018
    %v3558 = vunpack.c.h.b16 %v3018
    %v3559 = vunpack.c.l.b16 %v3019
    %v3560 = vunpack.c.l.b16 %v3020
    %v3561 = vunpack.c.h.b16 %v3020
    %v3562 = vunpack.c.l.b16 %v3021
    %v3563 = vunpack.c.h.b16 %v3021
    %v3564 = vunpack.c.l.b16 %v3022
    %v3565 = vunpack.c.h.b16 %v3022
    %v3566 = vunpack.c.l.b16 %v3023
    %v3567 = vunpack.c.l.b16 %v3024
    %v3568 = vunpack.c.h.b16 %v3024
    %v3569 = vunpack.c.l.b16 %v3025
    %v3570 = vunpack.c.h.b16 %v3025
    %v3571 = vunpack.c.l.b16 %v3026
    %v3572 = vunpack.c.h.b16 %v3026
    %v3573 = vunpack.c.l.b16 %v3027
    %v3574 = vunpack.c.l.b16 %v3028
    %v3575 = vunpack.c.h.b16 %v3028
    %v3576 = vunpack.c.l.b16 %v3029
    %v3577 = vunpack.c.h.b16 %v3029
    %v3578 = vunpack.c.l.b16 %v3030
    %v3579 = vunpack.c.h.b16 %v3030
    %v3580 = vunpack.c.l.b16 %v3031
    %v3581 = vunpack.c.l.b16 %v3032
    %v3582 = vunpack.c.h.b16 %v3032
    %v3583 = vunpack.c.l.b16 %v3033
    %v3584 = vunpack.c.h.b16 %v3033
    %v3585 = vunpack.c.l.b16 %v3034
    %v3586 = vunpack.c.h.b16 %v3034
    %v3587 = vunpack.c.l.b16 %v3035
    %v3588 = vunpack.c.l.b16 %v3036
    %v3589 = vunpack.c.h.b16 %v3036
    %v3590 = vunpack.c.l.b16 %v3037
    %v3591 = vunpack.c.h.b16 %v3037
    %v3592 = vunpack.c.l.b16 %v3038
    %v3593 = vunpack.c.h.b16 %v3038
    %v3594 = vunpack.c.l.b16 %v3039
    %v3595 = vunpack.c.l.b16 %v3040
    %v3596 = vunpack.c.h.b16 %v3040
    %v3597 = vunpack.c.l.b16 %v3041
    %v3598 = vunpack.c.h.b16 %v3041
    %v3599 = vunpack.c.l.b16 %v3042
    %v3600 = vunpack.c.h.b16 %v3042
    %v3601 = vunpack.c.l.b16 %v3043
    %v3602 = vunpack.c.l.b16 %v3044
    %v3603 = vunpack.c.h.b16 %v3044
    %v3604 = vunpack.c.l.b16 %v3045
    %v3605 = vunpack.c.h.b16 %v3045
    %v3606 = vunpack.c.l.b16 %v3046
    %v3607 = vunpack.c.h.b16 %v3046
    %v3608 = vunpack.c.l.b16 %v3047
    %v3609 = vunpack.c.l.b16 %v3048
    %v3610 = vunpack.c.h.b16 %v3048
    %v3611 = vunpack.c.l.b16 %v3049
    %v3612 = vunpack.c.h.b16 %v3049
    %v3613 = vunpack.c.l.b16 %v3050
    %v3614 = vunpack.c.h.b16 %v3050
    %v3615 = vunpack.c.l.b16 %v3051
    %v3616 = vunpack.c.l.b16 %v3052
    %v3617 = vunpack.c.h.b16 %v3052
    %v3618 = vunpack.c.l.b16 %v3053
    %v3619 = vunpack.c.h.b16 %v3053
    %v3620 = vunpack.c.l.b16 %v3054
    %v3621 = vunpack.c.h.b16 %v3054
    %v3622 = vunpack.c.l.b16 %v3055
    %v3623 = vunpack.c.l.b16 %v3056
    %v3624 = vunpack.c.h.b16 %v3056
    %v3625 = vunpack.c.l.b16 %v3057
    %v3626 = vunpack.c.h.b16 %v3057
    %v3627 = vunpack.c.l.b16 %v3058
    %v3628 = vunpack.c.h.b16 %v3058
    %v3629 = vunpack.c.l.b16 %v3059
    %v3630 = vunpack.c.l.b16 %v3060
    %v3631 = vunpack.c.h.b16 %v3060
    %v3632 = vunpack.c.l.b16 %v3061
    %v3633 = vunpack.c.h.b16 %v3061
    %v3634 = vunpack.c.l.b16 %v3062
    %v3635 = vunpack.c.h.b16 %v3062
    %v3636 = vunpack.c.l.b16 %v3063
    %v3637 = vunpack.c.l.b16 %v3064
    %v3638 = vunpack.c.h.b16 %v3064
    %v3639 = vunpack.c.l.b16 %v3065
    %v3640 = vunpack.c.h.b16 %v3065
    %v3641 = vunpack.c.l.b16 %v3066
    %v3642 = vunpack.c.h.b16 %v3066
    %v3643 = vunpack.c.l.b16 %v3067
    %v3644 = vunpack.c.l.b16 %v3068
    %v3645 = vunpack.c.h.b16 %v3068
    %v3646 = vunpack.c.l.b16 %v3069
    %v3647 = vunpack.c.h.b16 %v3069
    %v3648 = vunpack.c.l.b16 %v3070
    %v3649 = vunpack.c.h.b16 %v3070
    %v3650 = vunpack.c.l.b16 %v3071
    %v3651 = vunpack.c.l.b16 %v3072
    %v3652 = vunpack.c.h.b16 %v3072
    %v3653 = vunpack.c.l.b16 %v3073
    %v3654 = vunpack.c.h.b16 %v3073
    %v3655 = vunpack.c.l.b16 %v3074
    %v3656 = vunpack.c.h.b16 %v3074
    %v3657 = vunpack.c.l.b16 %v3075
    %v3658 = vunpack.c.l.b16 %v3076
    %v3659 = vunpack.c.h.b16 %v3076
    %v3660 = vunpack.c.l.b16 %v3077
    %v3661 = vunpack.c.h.b16 %v3077
    %v3662 = vunpack.c.l.b16 %v3078
    %v3663 = vunpack.c.h.b16 %v3078
    %v3664 = vunpack.c.l.b16 %v3079
    %v3665 = vunpack.c.l.b16 %v3080
    %v3666 = vunpack.c.h.b16 %v3080
    %v3667 = vunpack.c.l.b16 %v3081
    %v3668 = vunpack.c.h.b16 %v3081
    %v3669 = vunpack.c.l.b16 %v3082
    %v3670 = vunpack.c.h.b16 %v3082
    %v3671 = vunpack.c.l.b16 %v3083
    %v3672 = vunpack.c.l.b16 %v3084
    %v3673 = vunpack.c.h.b16 %v3084
    %v3674 = vunpack.c.l.b16 %v3085
    %v3675 = vunpack.c.h.b16 %v3085
    %v3676 = vunpack.c.l.b16 %v3086
    %v3677 = vunpack.c.h.b16 %v3086
    %v3678 = vunpack.c.l.b16 %v3087
    %v3679 = vunpack.c.l.b16 %v3088
    %v3680 = vunpack.c.h.b16 %v3088
    %v3681 = vunpack.c.l.b16 %v3089
    %v3682 = vunpack.c.h.b16 %v3089
    %v3683 = vunpack.c.l.b16 %v3090
    %v3684 = vunpack.c.h.b16 %v3090
    %v3685 = vunpack.c.l.b16 %v3091
    %v3686 = vunpack.c.l.b16 %v3092
    %v3687 = vunpack.c.h.b16 %v3092
    %v3688 = vunpack.c.l.b16 %v3093
    %v3689 = vunpack.c.h.b16 %v3093
    %v3690 = vunpack.c.l.b16 %v3094
    %v3691 = vunpack.c.h.b16 %v3094
    %v3692 = vunpack.c.l.b16 %v3095
    %v3693 = vunpack.c.l.b16 %v3096
    %v3694 = vunpack.c.h.b16 %v3096
    %v3695 = vunpack.c.l.b16 %v3097
    %v3696 = vunpack.c.h.b16 %v3097
    %v3697 = vunpack.c.l.b16 %v3098
    %v3698 = vunpack.c.h.b16 %v3098
    %v3699 = vunpack.c.l.b16 %v3099
    %v3700 = vunpack.c.l.b16 %v3100
    %v3701 = vunpack.c.h.b16 %v3100
    %v3702 = vunpack.c.l.b16 %v3101
    %v3703 = vunpack.c.h.b16 %v3101
    %v3704 = vunpack.c.l.b16 %v3102
    %v3705 = vunpack.c.h.b16 %v3102
    %v3706 = vunpack.c.l.b16 %v3103
    %v3707 = vunpack.c.l.b16 %v3104
    %v3708 = vunpack.c.h.b16 %v3104
    %v3709 = vunpack.c.l.b16 %v3105
    %v3710 = vunpack.c.h.b16 %v3105
    %v3711 = vunpack.c.l.b16 %v3106
    %v3712 = vunpack.c.h.b16 %v3106
    %v3713 = vunpack.c.l.b16 %v3107
    %v3714 = vunpack.c.l.b16 %v3108
    %v3715 = vunpack.c.h.b16 %v3108
    %v3716 = vunpack.c.l.b16 %v3109
    %v3717 = vunpack.c.h.b16 %v3109
    %v3718 = vunpack.c.l.b16 %v3110
    %v3719 = vunpack.c.h.b16 %v3110
    %v3720 = vunpack.c.l.b16 %v3111
    %v3721 = vunpack.c.l.b16 %v3112
    %v3722 = vunpack.c.h.b16 %v3112
    %v3723 = vunpack.c.l.b16 %v3113
    %v3724 = vunpack.c.h.b16 %v3113
    %v3725 = vunpack.c.l.b16 %v3114
    %v3726 = vunpack.c.h.b16 %v3114
    %v3727 = vunpack.c.l.b16 %v3115
    %v3728 = vunpack.c.l.b16 %v3116
    %v3729 = vunpack.c.h.b16 %v3116
    %v3730 = vunpack.c.l.b16 %v3117
    %v3731 = vunpack.c.h.b16 %v3117
    %v3732 = vunpack.c.l.b16 %v3118
    %v3733 = vunpack.c.h.b16 %v3118
    %v3734 = vunpack.c.l.b16 %v3119
    %v3735 = vunpack.c.l.b16 %v3120
    %v3736 = vunpack.c.h.b16 %v3120
    %v3737 = vunpack.c.l.b16 %v3121
    %v3738 = vunpack.c.h.b16 %v3121
    %v3739 = vunpack.c.l.b16 %v3122
    %v3740 = vunpack.c.h.b16 %v3122
    %v3741 = vunpack.c.l.b16 %v3123
    %v3742 = vunpack.c.l.b16 %v3124
    %v3743 = vunpack.c.h.b16 %v3124
    %v3744 = vunpack.c.l.b16 %v3125
    %v3745 = vunpack.c.h.b16 %v3125
    %v3746 = vunpack.c.l.b16 %v3126
    %v3747 = vunpack.c.h.b16 %v3126
    %v3748 = vunpack.c.l.b16 %v3127
    %v3749 = vunpack.c.l.b16 %v3128
    %v3750 = vunpack.c.h.b16 %v3128
    %v3751 = vunpack.c.l.b16 %v3129
    %v3752 = vunpack.c.h.b16 %v3129
    %v3753 = vunpack.c.l.b16 %v3130
    %v3754 = vunpack.c.h.b16 %v3130
    %v3755 = vunpack.c.l.b16 %v3131
    %v3756 = vunpack.c.l.b16 %v3132
    %v3757 = vunpack.c.h.b16 %v3132
    %v3758 = vunpack.c.l.b16 %v3133
    %v3759 = vunpack.c.h.b16 %v3133
    %v3760 = vunpack.c.l.b16 %v3134
    %v3761 = vunpack.c.h.b16 %v3134
    %v3762 = vunpack.c.l.b16 %v3135
    %v3763 = vunpack.c.l.b16 %v3136
    %v3764 = vunpack.c.h.b16 %v3136
    %v3765 = vunpack.c.l.b16 %v3137
    %v3766 = vunpack.c.h.b16 %v3137
    %v3767 = vunpack.c.l.b16 %v3138
    %v3768 = vunpack.c.h.b16 %v3138
    %v3769 = vunpack.c.l.b16 %v3139
    %v3770 = vunpack.c.l.b16 %v3140
    %v3771 = vunpack.c.h.b16 %v3140
    %v3772 = vunpack.c.l.b16 %v3141
    %v3773 = vunpack.c.h.b16 %v3141
    %v3774 = vunpack.c.l.b16 %v3142
    %v3775 = vunpack.c.h.b16 %v3142
    %v3776 = vunpack.c.l.b16 %v3143
    %v3777 = vunpack.c.l.b16 %v3144
    %v3778 = vunpack.c.h.b16 %v3144
    %v3779 = vunpack.c.l.b16 %v3145
    %v3780 = vunpack.c.h.b16 %v3145
    %v3781 = vunpack.c.l.b16 %v3146
    %v3782 = vunpack.c.h.b16 %v3146
    %v3783 = vunpack.c.l.b16 %v3147
    %v3784 = vunpack.c.l.b16 %v3148
    %v3785 = vunpack.c.h.b16 %v3148
    %v3786 = vunpack.c.l.b16 %v3149
    %v3787 = vunpack.c.h.b16 %v3149
    %v3788 = vunpack.c.l.b16 %v3150
    %v3789 = vunpack.c.h.b16 %v3150
    %v3790 = vunpack.c.l.b16 %v3151
    %v3791 = vunpack.c.l.b16 %v3152
    %v3792 = vunpack.c.h.b16 %v3152
    %v3793 = vunpack.c.l.b16 %v3153
    %v3794 = vunpack.c.h.b16 %v3153
    %v3795 = vunpack.c.l.b16 %v3154
    %v3796 = vunpack.c.h.b16 %v3154
    %v3797 = vunpack.c.l.b16 %v3155
    %v3798 = vunpack.c.l.b16 %v3156
    %v3799 = vunpack.c.h.b16 %v3156
    %v3800 = vunpack.c.l.b16 %v3157
    %v3801 = vunpack.c.h.b16 %v3157
    %v3802 = vunpack.c.l.b16 %v3158
    %v3803 = vunpack.c.h.b16 %v3158
    %v3804 = vunpack.c.l.b16 %v3159
    %v3805 = vunpack.c.l.b16 %v3160
    %v3806 = vunpack.c.h.b16 %v3160
    %v3807 = vunpack.c.l.b16 %v3161
    %v3808 = vunpack.c.h.b16 %v3161
    %v3809 = vunpack.c.l.b16 %v3162
    %v3810 = vunpack.c.h.b16 %v3162
    %v3811 = vunpack.c.l.b16 %v3163
    %v3812 = vunpack.c.l.b16 %v3164
    %v3813 = vunpack.c.h.b16 %v3164
    %v3814 = vunpack.c.l.b16 %v3165
    %v3815 = vunpack.c.h.b16 %v3165
    %v3816 = vunpack.c.l.b16 %v3166
    %v3817 = vunpack.c.h.b16 %v3166
    %v3818 = vunpack.c.l.b16 %v3167
    %v3819 = vunpack.c.l.b16 %v3168
    %v3820 = vunpack.c.h.b16 %v3168
    %v3821 = vunpack.c.l.b16 %v3169
    %v3822 = vunpack.c.h.b16 %v3169
    %v3823 = vunpack.c.l.b16 %v3170
    %v3824 = vunpack.c.h.b16 %v3170
    %v3825 = vunpack.c.l.b16 %v3171
    %v3826 = vunpack.c.l.b16 %v3172
    %v3827 = vunpack.c.h.b16 %v3172
    %v3828 = vunpack.c.l.b16 %v3173
    %v3829 = vunpack.c.h.b16 %v3173
    %v3830 = vunpack.c.l.b16 %v3174
    %v3831 = vunpack.c.h.b16 %v3174
    %v3832 = vunpack.c.l.b16 %v3175
    %v3833 = vunpack.c.l.b16 %v3176
    %v3834 = vunpack.c.h.b16 %v3176
    %v3835 = vunpack.c.l.b16 %v3177
    %v3836 = vunpack.c.h.b16 %v3177
    %v3837 = vunpack.c.l.b16 %v3178
    %v3838 = vunpack.c.h.b16 %v3178
    %v3839 = vunpack.c.l.b16 %v3179
    %v3840 = vunpack.c.l.b16 %v3180
    %v3841 = vunpack.c.h.b16 %v3180
    %v3842 = vunpack.c.l.b16 %v3181
    %v3843 = vunpack.c.h.b16 %v3181
    %v3844 = vunpack.c.l.b16 %v3182
    %v3845 = vunpack.c.h.b16 %v3182
    %v3846 = vunpack.c.l.b16 %v3183
    %v3847 = vunpack.c.l.b16 %v3184
    %v3848 = vunpack.c.h.b16 %v3184
    %v3849 = vunpack.c.l.b16 %v3185
    %v3850 = vunpack.c.h.b16 %v3185
    %v3851 = vunpack.c.l.b16 %v3186
    %v3852 = vunpack.c.h.b16 %v3186
    %v3853 = vunpack.c.l.b16 %v3187
    %v3854 = vunpack.c.l.b16 %v3188
    %v3855 = vunpack.c.h.b16 %v3188
    %v3856 = vunpack.c.l.b16 %v3189
    %v3857 = vunpack.c.h.b16 %v3189
    %v3858 = vunpack.c.l.b16 %v3190
    %v3859 = vunpack.c.h.b16 %v3190
    %v3860 = vunpack.c.l.b16 %v3191
    %v3861 = vunpack.c.l.b16 %v3192
    %v3862 = vunpack.c.h.b16 %v3192
    %v3863 = vunpack.c.l.b16 %v3193
    %v3864 = vunpack.c.h.b16 %v3193
    %v3865 = vunpack.c.l.b16 %v3194
    %v3866 = vunpack.c.h.b16 %v3194
    %v3867 = vunpack.c.l.b16 %v3195
    %v3868 = vunpack.c.l.b16 %v3196
    %v3869 = vunpack.c.h.b16 %v3196
    %v3870 = vunpack.c.l.b16 %v3197
    %v3871 = vunpack.c.h.b16 %v3197
    %v3872 = vunpack.c.l.b16 %v3198
    %v3873 = vunpack.c.h.b16 %v3198
    %v3874 = vunpack.c.l.b16 %v3199
    %v3875 = vunpack.c.l.b16 %v3200
    %v3876 = vunpack.c.h.b16 %v3200
    %v3877 = vunpack.c.l.b16 %v3201
    %v3878 = vunpack.c.h.b16 %v3201
    %v3879 = vunpack.c.l.b16 %v3202
    %v3880 = vunpack.c.h.b16 %v3202
    %v3881 = vunpack.c.l.b16 %v3203
    %v3882 = vunpack.c.l.b16 %v3204
    %v3883 = vunpack.c.h.b16 %v3204
    %v3884 = vunpack.c.l.b16 %v3205
    %v3885 = vunpack.c.h.b16 %v3205
    %v3886 = vunpack.c.l.b16 %v3206
    %v3887 = vunpack.c.h.b16 %v3206
    %v3888 = vunpack.c.l.b16 %v3207
    %v3889 = vunpack.c.l.b16 %v3208
    %v3890 = vunpack.c.h.b16 %v3208
    %v3891 = vunpack.c.l.b16 %v3209
    %v3892 = vunpack.c.h.b16 %v3209
    %v3893 = vunpack.c.l.b16 %v3210
    %v3894 = vunpack.c.h.b16 %v3210
    %v3895 = vunpack.c.l.b16 %v3211
    %v3896 = vunpack.c.l.b16 %v3212
    %v3897 = vunpack.c.h.b16 %v3212
    %v3898 = vunpack.c.l.b16 %v3213
    %v3899 = vunpack.c.h.b16 %v3213
    %v3900 = vunpack.c.l.b16 %v3214
    %v3901 = vunpack.c.h.b16 %v3214
    %v3902 = vunpack.c.l.b16 %v3215
    %v3903 = vunpack.c.l.b16 %v3216
    %v3904 = vunpack.c.h.b16 %v3216
    %v3905 = vunpack.c.l.b16 %v3217
    %v3906 = vunpack.c.h.b16 %v3217
    %v3907 = vunpack.c.l.b16 %v3218
    %v3908 = vunpack.c.h.b16 %v3218
    %v3909 = vunpack.c.l.b16 %v3219
    %v3910 = vunpack.c.l.b16 %v3220
    %v3911 = vunpack.c.h.b16 %v3220
    %v3912 = vunpack.c.l.b16 %v3221
    %v3913 = vunpack.c.h.b16 %v3221
    %v3914 = vunpack.c.l.b16 %v3222
    %v3915 = vunpack.c.h.b16 %v3222
    %v3916 = vunpack.c.l.b16 %v3223
    %v3917 = vunpack.c.l.b16 %v3224
    %v3918 = vunpack.c.h.b16 %v3224
    %v3919 = vunpack.c.l.b16 %v3225
    %v3920 = vunpack.c.h.b16 %v3225
    %v3921 = vunpack.c.l.b16 %v3226
    %v3922 = vunpack.c.h.b16 %v3226
    %v3923 = vunpack.c.l.b16 %v3227
    %v3924 = vunpack.c.l.b16 %v3228
    %v3925 = vunpack.c.h.b16 %v3228
    %v3926 = vunpack.c.l.b16 %v3229
    %v3927 = vunpack.c.h.b16 %v3229
    %v3928 = vunpack.c.l.b16 %v3230
    %v3929 = vunpack.c.h.b16 %v3230
    %v3930 = vunpack.c.l.b16 %v3231
    %v3931 = vunpack.c.l.b16 %v3232
    %v3932 = vunpack.c.h.b16 %v3232
    %v3933 = vunpack.c.l.b16 %v3233
    %v3934 = vunpack.c.h.b16 %v3233
    %v3935 = vunpack.c.l.b16 %v3234
    %v3936 = vunpack.c.h.b16 %v3234
    %v3937 = vunpack.c.l.b16 %v3235
    %v3938 = vunpack.c.l.b16 %v3236
    %v3939 = vunpack.c.h.b16 %v3236
    %v3940 = vunpack.c.l.b16 %v3237
    %v3941 = vunpack.c.h.b16 %v3237
    %v3942 = vunpack.c.l.b16 %v3238
    %v3943 = vunpack.c.h.b16 %v3238
    %v3944 = vunpack.c.l.b16 %v3239
    %v3945 = vunpack.c.l.b16 %v3240
    %v3946 = vunpack.c.h.b16 %v3240
    %v3947 = vunpack.c.l.b16 %v3241
    %v3948 = vunpack.c.h.b16 %v3241
    %v3949 = vunpack.c.l.b16 %v3242
    %v3950 = vunpack.c.h.b16 %v3242
    %v3951 = vunpack.c.l.b16 %v3243
    %v3952 = vunpack.c.l.b16 %v3244
    %v3953 = vunpack.c.h.b16 %v3244
    %v3954 = vunpack.c.l.b16 %v3245
    %v3955 = vunpack.c.h.b16 %v3245
    %v3956 = vunpack.c.l.b16 %v3246
    %v3957 = vunpack.c.h.b16 %v3246
    %v3958 = vunpack.c.l.b16 %v3247
    %v3959 = vunpack.c.l.b16 %v3248
    %v3960 = vunpack.c.h.b16 %v3248
    %v3961 = vunpack.c.l.b16 %v3249
    %v3962 = vunpack.c.h.b16 %v3249
    %v3963 = vunpack.c.l.b16 %v3250
    %v3964 = vunpack.c.h.b16 %v3250
    %v3965 = vunpack.c.l.b16 %v3251
    %v3966 = vunpack.c.l.b16 %v3252
    %v3967 = vunpack.c.h.b16 %v3252
    %v3968 = vunpack.c.l.b16 %v3253
    %v3969 = vunpack.c.h.b16 %v3253
    %v3970 = vunpack.c.l.b16 %v3254
    %v3971 = vunpack.c.h.b16 %v3254
    %v3972 = vunpack.c.l.b16 %v3255
    %v3973 = vunpack.c.l.b16 %v3256
    %v3974 = vunpack.c.h.b16 %v3256
    %v3975 = vunpack.c.l.b16 %v3257
    %v3976 = vunpack.c.h.b16 %v3257
    %v3977 = vunpack.c.l.b16 %v3258
    %v3978 = vunpack.c.h.b16 %v3258
    %v3979 = vunpack.c.l.b16 %v3259
    %v3980 = vpack.c.b16 %v3539, %v3532
    %v3981 = vpack.c.b16 %v3540, %v3533
    %v3982 = vpack.c.b16 %v3541, %v3534
    %v3983 = vpack.c.b16 %v3542, %v3535
    %v3984 = vpack.c.b16 %v3543, %v3536
    %v3985 = vpack.c.b16 %v3544, %v3537
    %v3986 = vpack.c.b16 %v3545, %v3538
    %v3987 = vpack.c.b16 %v3553, %v3546
    %v3988 = vpack.c.b16 %v3554, %v3547
    %v3989 = vpack.c.b16 %v3555, %v3548
    %v3990 = vpack.c.b16 %v3556, %v3549
    %v3991 = vpack.c.b16 %v3557, %v3550
    %v3992 = vpack.c.b16 %v3558, %v3551
    %v3993 = vpack.c.b16 %v3559, %v3552
    %v3994 = vpack.c.b16 %v3567, %v3560
    %v3995 = vpack.c.b16 %v3568, %v3561
    %v3996 = vpack.c.b16 %v3569, %v3562
    %v3997 = vpack.c.b16 %v3570, %v3563
    %v3998 = vpack.c.b16 %v3571, %v3564
    %v3999 = vpack.c.b16 %v3572, %v3565
    %v4000 = vpack.c.b16 %v3573, %v3566
    %v4001 = vpack.c.b16 %v3581, %v3574
    %v4002 = vpack.c.b16 %v3582, %v3575
    %v4003 = vpack.c.b16 %v3583, %v3576
    %v4004 = vpack.c.b16 %v3584, %v3577
    %v4005 = vpack.c.b16 %v3585, %v3578
    %v4006 = vpack.c.b16 %v3586, %v3579
    %v4007 = vpack.c.b16 %v3587, %v3580
    %v4008 = vpack.c.b16 %v3595, %v3588
    %v4009 = vpack.c.b16 %v3596, %v3589
    %v4010 = vpack.c.b16 %v3597, %v3590
    %v4011 = vpack.c.b16 %v3598, %v3591
    %v4012 = vpack.c.b16 %v3599, %v3592
    %v4013 = vpack.c.b16 %v3600, %v3593
    %v4014 = vpack.c.b16 %v3601, %v3594
    %v4015 = vpack.c.b16 %v3609, %v3602
    %v4016 = vpack.c.b16 %v3610, %v3603
    %v4017 = vpack.c.b16 %v3611, %v3604
    %v4018 = vpack.c.b16 %v3612, %v3605
    %v4019 = vpack.c.b16 %v3613, %v3606
    %v4020 = vpack.c.b16 %v3614, %v3607
    %v4021 = vpack.c.b16 %v3615, %v3608
    %v4022 = vpack.c.b16 %v3623, %v3616
    %v4023 = vpack.c.b16 %v3624, %v3617
    %v4024 = vpack.c.b16 %v3625, %v3618
    %v4025 = vpack.c.b16 %v3626, %v3619
    %v4026 = vpack.c.b16 %v3627, %v3620
    %v4027 = vpack.c.b16 %v3628, %v3621
    %v4028 = vpack.c.b16 %v3629, %v3622
    %v4029 = vpack.c.b16 %v3637, %v3630
    %v4030 = vpack.c.b16 %v3638, %v3631
    %v4031 = vpack.c.b16 %v3639, %v3632
    %v4032 = vpack.c.b16 %v3640, %v3633
    %v4033 = vpack.c.b16 %v3641, %v3634
    %v4034 = vpack.c.b16 %v3642, %v3635
    %v4035 = vpack.c.b16 %v3643, %v3636
    %v4036 = vpack.c.b16 %v3651, %v3644
    %v4037 = vpack.c.b16 %v3652, %v3645
    %v4038 = vpack.c.b16 %v3653, %v3646
    %v4039 = vpack.c.b16 %v3654, %v3647
    %v4040 = vpack.c.b16 %v3655, %v3648
    %v4041 = vpack.c.b16 %v3656, %v3649
    %v4042 = vpack.c.b16 %v3657, %v3650
    %v4043 = vpack.c.b16 %v3665, %v3658
    %v4044 = vpack.c.b16 %v3666, %v3659
    %v4045 = vpack.c.b16 %v3667, %v3660
    %v4046 = vpack.c.b16 %v3668, %v3661
    %v4047 = vpack.c.b16 %v3669, %v3662
    %v4048 = vpack.c.b16 %v3670, %v3663
    %v4049 = vpack.c.b16 %v3671, %v3664
    %v4050 = vpack.c.b16 %v3679, %v3672
    %v4051 = vpack.c.b16 %v3680, %v3673
    %v4052 = vpack.c.b16 %v3681, %v3674
    %v4053 = vpack.c.b16 %v3682, %v3675
    %v4054 = vpack.c.b16 %v3683, %v3676
    %v4055 = vpack.c.b16 %v3684, %v3677
    %v4056 = vpack.c.b16 %v3685, %v3678
    %v4057 = vpack.c.b16 %v3693, %v3686
    %v4058 = vpack.c.b16 %v3694, %v3687
    %v4059 = vpack.c.b16 %v3695, %v3688
    %v4060 = vpack.c.b16 %v3696, %v3689
    %v4061 = vpack.c.b16 %v3697, %v3690
    %v4062 = vpack.c.b16 %v3698, %v3691
    %v4063 = vpack.c.b16 %v3699, %v3692
    %v4064 = vpack.c.b16 %v3707, %v3700
    %v4065 = vpack.c.b16 %v3708, %v3701
    %v4066 = vpack.c.b16 %v3709, %v3702
    %v4067 = vpack.c.b16 %v3710, %v3703
    %v4068 = vpack.c.b16 %v3711, %v3704
    %v4069 = vpack.c.b16 %v3712, %v3705
    %v4070 = vpack.c.b16 %v3713, %v3706
    %v4071 = vpack.c.b16 %v3721, %v3714
    %v4072 = vpack.c.b16 %v3722, %v3715
    %v4073 = vpack.c.b16 %v3723, %v3716
    %v4074 = vpack.c.b16 %v3724, %v3717
    %v4075 = vpack.c.b16 %v3725, %v3718
    %v4076 = vpack.c.b16 %v3726, %v3719
    %v4077 = vpack.c.b16 %v3727, %v3720
    %v4078 = vpack.c.b16 %v3735, %v3728
    %v4079 = vpack.c.b16 %v3736, %v3729
    %v4080 = vpack.c.b16 %v3737, %v3730
    %v4081 = vpack.c.b16 %v3738, %v3731
    %v4082 = vpack.c.b16 %v3739, %v3732
    %v4083 = vpack.c.b16 %v3740, %v3733
    %v4084 = vpack.c.b16 %v3741, %v3734
    %v4085 = vpack.c.b16 %v3749, %v3742
    %v4086 = vpack.c.b16 %v3750, %v3743
    %v4087 = vpack.c.b16 %v3751, %v3744
    %v4088 = vpack.c.b16 %v3752, %v3745
    %v4089 = vpack.c.b16 %v3753, %v3746
    %v4090 = vpack.c.b16 %v3754, %v3747
    %v4091 = vpack.c.b16 %v3755, %v3748
    %v4092 = vpack.c.b16 %v3763, %v3756
    %v4093 = vpack.c.b16 %v3764, %v3757
    %v4094 = vpack.c.b16 %v3765, %v3758
    %v4095 = vpack.c.b16 %v3766, %v3759
    %v4096 = vpack.c.b16 %v3767, %v3760
    %v4097 = vpack.c.b16 %v3768, %v3761
    %v4098 = vpack.c.b16 %v3769, %v3762
    %v4099 = vpack.c.b16 %v3777, %v3770
    %v4100 = vpack.c.b16 %v3778, %v3771
    %v4101 = vpack.c.b16 %v3779, %v3772
    %v4102 = vpack.c.b16 %v3780, %v3773
    %v4103 = vpack.c.b16 %v3781, %v3774
    %v4104 = vpack.c.b16 %v3782, %v3775
    %v4105 = vpack.c.b16 %v3783, %v3776
    %v4106 = vpack.c.b16 %v3791, %v3784
    %v4107 = vpack.c.b16 %v3792, %v3785
    %v4108 = vpack.c.b16 %v3793, %v3786
    %v4109 = vpack.c.b16 %v3794, %v3787
    %v4110 = vpack.c.b16 %v3795, %v3788
    %v4111 = vpack.c.b16 %v3796, %v3789
    %v4112 = vpack.c.b16 %v3797, %v3790
    %v4113 = vpack.c.b16 %v3805, %v3798
    %v4114 = vpack.c.b16 %v3806, %v3799
    %v4115 = vpack.c.b16 %v3807, %v3800
    %v4116 = vpack.c.b16 %v3808, %v3801
    %v4117 = vpack.c.b16 %v3809, %v3802
    %v4118 = vpack.c.b16 %v3810, %v3803
    %v4119 = vpack.c.b16 %v3811, %v3804
    %v4120 = vpack.c.b16 %v3819, %v3812
    %v4121 = vpack.c.b16 %v3820, %v3813
    %v4122 = vpack.c.b16 %v3821, %v3814
    %v4123 = vpack.c.b16 %v3822, %v3815
    %v4124 = vpack.c.b16 %v3823, %v3816
    %v4125 = vpack.c.b16 %v3824, %v3817
    %v4126 = vpack.c.b16 %v3825, %v3818
    %v4127 = vpack.c.b16 %v3833, %v3826
    %v4128 = vpack.c.b16 %v3834, %v3827
    %v4129 = vpack.c.b16 %v3835, %v3828
    %v4130 = vpack.c.b16 %v3836, %v3829
    %v4131 = vpack.c.b16 %v3837, %v3830
    %v4132 = vpack.c.b16 %v3838, %v3831
    %v4133 = vpack.c.b16 %v3839, %v3832
    %v4134 = vpack.c.b16 %v3847, %v3840
    %v4135 = vpack.c.b16 %v3848, %v3841
    %v4136 = vpack.c.b16 %v3849, %v3842
    %v4137 = vpack.c.b16 %v3850, %v3843
    %v4138 = vpack.c.b16 %v3851, %v3844
    %v4139 = vpack.c.b16 %v3852, %v3845
    %v4140 = vpack.c.b16 %v3853, %v3846
    %v4141 = vpack.c.b16 %v3861, %v3854
    %v4142 = vpack.c.b16 %v3862, %v3855
    %v4143 = vpack.c.b16 %v3863, %v3856
    %v4144 = vpack.c.b16 %v3864, %v3857
    %v4145 = vpack.c.b16 %v3865, %v3858
    %v4146 = vpack.c.b16 %v3866, %v3859
    %v4147 = vpack.c.b16 %v3867, %v3860
    %v4148 = vpack.c.b16 %v3875, %v3868
    %v4149 = vpack.c.b16 %v3876, %v3869
    %v4150 = vpack.c.b16 %v3877, %v3870
    %v4151 = vpack.c.b16 %v3878, %v3871
    %v4152 = vpack.c.b16 %v3879, %v3872
    %v4153 = vpack.c.b16 %v3880, %v3873
    %v4154 = vpack.c.b16 %v3881, %v3874
    %v4155 = vpack.c.b16 %v3889, %v3882
    %v4156 = vpack.c.b16 %v3890, %v3883
    %v4157 = vpack.c.b16 %v3891, %v3884
    %v4158 = vpack.c.b16 %v3892, %v3885
    %v4159 = vpack.c.b16 %v3893, %v3886
    %v4160 = vpack.c.b16 %v3894, %v3887
    %v4161 = vpack.c.b16 %v3895, %v3888
    %v4162 = vpack.c.b16 %v3903, %v3896
    %v4163 = vpack.c.b16 %v3904, %v3897
    %v4164 = vpack.c.b16 %v3905, %v3898
    %v4165 = vpack.c.b16 %v3906, %v3899
    %v4166 = vpack.c.b16 %v3907, %v3900
    %v4167 = vpack.c.b16 %v3908, %v3901
    %v4168 = vpack.c.b16 %v3909, %v3902
    %v4169 = vpack.c.b16 %v3917, %v3910
    %v4170 = vpack.c.b16 %v3918, %v3911
    %v4171 = vpack.c.b16 %v3919, %v3912
    %v4172 = vpack.c.b16 %v3920, %v3913
    %v4173 = vpack.c.b16 %v3921, %v3914
    %v4174 = vpack.c.b16 %v3922, %v3915
    %v4175 = vpack.c.b16 %v3923, %v3916
    %v4176 = vpack.c.b16 %v3931, %v3924
    %v4177 = vpack.c.b16 %v3932, %v3925
    %v4178 = vpack.c.b16 %v3933, %v3926
    %v4179 = vpack.c.b16 %v3934, %v3927
    %v4180 = vpack.c.b16 %v3935, %v3928
    %v4181 = vpack.c.b16 %v3936, %v3929
    %v4182 = vpack.c.b16 %v3937, %v3930
    %v4183 = vpack.c.b16 %v3945, %v3938
    %v4184 = vpack.c.b16 %v3946, %v3939
    %v4185 = vpack.c.b16 %v3947, %v3940
    %v4186 = vpack.c.b16 %v3948, %v3941
    %v4187 = vpack.c.b16 %v3949, %v3942
    %v4188 = vpack.c.b16 %v3950, %v3943
    %v4189 = vpack.c.b16 %v3951, %v3944
    %v4190 = vpack.c.b16 %v3959, %v3952
    %v4191 = vpack.c.b16 %v3960, %v3953
    %v4192 = vpack.c.b16 %v3961, %v3954
    %v4193 = vpack.c.b16 %v3962, %v3955
    %v4194 = vpack.c.b16 %v3963, %v3956
    %v4195 = vpack.c.b16 %v3964, %v3957
    %v4196 = vpack.c.b16 %v3965, %v3958
    %v4197 = vpack.c.b16 %v3973, %v3966
    %v4198 = vpack.c.b16 %v3974, %v3967
    %v4199 = vpack.c.b16 %v3975, %v3968
    %v4200 = vpack.c.b16 %v3976, %v3969
    %v4201 = vpack.c.b16 %v3977, %v3970
    %v4202 = vpack.c.b16 %v3978, %v3971
    %v4203 = vpack.c.b16 %v3979, %v3972
    %4428 = vmatpush.bf16.msra.mxu0 %v4029
    %4429 = vmatpush.bf16.msra.mxu0 %v4022
    %4430 = vmatpush.bf16.msra.mxu0 %v4015
    %4431 = vmatpush.bf16.msra.mxu0 %v4008
    %4432 = vmatpush.bf16.msra.mxu0 %v4001
    %4433 = vmatpush.bf16.msra.mxu0 %v3994
    %4434 = vmatpush.bf16.msra.mxu0 %v3987
    %4435 = vmatpush.bf16.msra.mxu0 %v3980
    %4436 = vmatmul.bf16.gmra.mxu0 %v3000
    %v4437 = vpop.f32.mrf.mxu0
    %v4438 = vadd.f32 %v3262, %v4437
    %v4439 = vpop.f32.mrf.mxu0
    %v4440 = vadd.f32 %v3262, %v4439
    %4441 = vdwg.mxu0
    %4442 = vmatpush.bf16.msra.mxu0 %v4085
    %4443 = vmatpush.bf16.msra.mxu0 %v4078
    %4444 = vmatpush.bf16.msra.mxu0 %v4071
    %4445 = vmatpush.bf16.msra.mxu0 %v4064
    %4446 = vmatpush.bf16.msra.mxu0 %v4057
    %4447 = vmatpush.bf16.msra.mxu0 %v4050
    %4448 = vmatpush.bf16.msra.mxu0 %v4043
    %4449 = vmatpush.bf16.msra.mxu0 %v4036
    %4450 = vmatmul.bf16.gmra.mxu0 %v3001
    %v4451 = vpop.f32.mrf.mxu0
    %v4452 = vadd.f32 %v4438, %v4451
    %v4453 = vpop.f32.mrf.mxu0
    %v4454 = vadd.f32 %v4440, %v4453
    %4455 = vdwg.mxu0
    %4456 = vmatpush.bf16.msra.mxu0 %v4141
    %4457 = vmatpush.bf16.msra.mxu0 %v4134
    %4458 = vmatpush.bf16.msra.mxu0 %v4127
    %4459 = vmatpush.bf16.msra.mxu0 %v4120
    %4460 = vmatpush.bf16.msra.mxu0 %v4113
    %4461 = vmatpush.bf16.msra.mxu0 %v4106
    %4462 = vmatpush.bf16.msra.mxu0 %v4099
    %4463 = vmatpush.bf16.msra.mxu0 %v4092
    %4464 = vmatmul.bf16.gmra.mxu0 %v3002
    %v4465 = vpop.f32.mrf.mxu0
    %v4466 = vadd.f32 %v4452, %v4465
    %v4467 = vpop.f32.mrf.mxu0
    %v4468 = vadd.f32 %v4454, %v4467
    %4469 = vdwg.mxu0
    %4470 = vmatpush.bf16.msra.mxu0 %v4197
    %4471 = vmatpush.bf16.msra.mxu0 %v4190
    %4472 = vmatpush.bf16.msra.mxu0 %v4183
    %4473 = vmatpush.bf16.msra.mxu0 %v4176
    %4474 = vmatpush.bf16.msra.mxu0 %v4169
    %4475 = vmatpush.bf16.msra.mxu0 %v4162
    %4476 = vmatpush.bf16.msra.mxu0 %v4155
    %4477 = vmatpush.bf16.msra.mxu0 %v4148
    %4478 = vmatmul.bf16.gmra.mxu0 %v3003
    %v4479 = vpop.f32.mrf.mxu0
    %v4480 = vadd.f32 %v4466, %v4479
    %v4481 = vpop.f32.mrf.mxu0
    %v4482 = vadd.f32 %v4468, %v4481
    %4483 = vdwg.mxu0
    %4484 = vmatpush.bf16.msra.mxu0 %v4030
    %4485 = vmatpush.bf16.msra.mxu0 %v4023
    %4486 = vmatpush.bf16.msra.mxu0 %v4016
    %4487 = vmatpush.bf16.msra.mxu0 %v4009
    %4488 = vmatpush.bf16.msra.mxu0 %v4002
    %4489 = vmatpush.bf16.msra.mxu0 %v3995
    %4490 = vmatpush.bf16.msra.mxu0 %v3988
    %4491 = vmatpush.bf16.msra.mxu0 %v3981
    %4492 = vmatmul.bf16.gmra.mxu0 %v3000
    %v4493 = vpop.f32.mrf.mxu0
    %v4494 = vadd.f32 %v3263, %v4493
    %v4495 = vpop.f32.mrf.mxu0
    %v4496 = vadd.f32 %v3263, %v4495
    %4497 = vdwg.mxu0
    %4498 = vmatpush.bf16.msra.mxu0 %v4086
    %4499 = vmatpush.bf16.msra.mxu0 %v4079
    %4500 = vmatpush.bf16.msra.mxu0 %v4072
    %4501 = vmatpush.bf16.msra.mxu0 %v4065
    %4502 = vmatpush.bf16.msra.mxu0 %v4058
    %4503 = vmatpush.bf16.msra.mxu0 %v4051
    %4504 = vmatpush.bf16.msra.mxu0 %v4044
    %4505 = vmatpush.bf16.msra.mxu0 %v4037
    %4506 = vmatmul.bf16.gmra.mxu0 %v3001
    %v4507 = vpop.f32.mrf.mxu0
    %v4508 = vadd.f32 %v4494, %v4507
    %v4509 = vpop.f32.mrf.mxu0
    %v4510 = vadd.f32 %v4496, %v4509
    %4511 = vdwg.mxu0
    %4512 = vmatpush.bf16.msra.mxu0 %v4142
    %4513 = vmatpush.bf16.msra.mxu0 %v4135
    %4514 = vmatpush.bf16.msra.mxu0 %v4128
    %4515 = vmatpush.bf16.msra.mxu0 %v4121
    %4516 = vmatpush.bf16.msra.mxu0 %v4114
    %4517 = vmatpush.bf16.msra.mxu0 %v4107
    %4518 = vmatpush.bf16.msra.mxu0 %v4100
    %4519 = vmatpush.bf16.msra.mxu0 %v4093
    %4520 = vmatmul.bf16.gmra.mxu0 %v3002
    %v4521 = vpop.f32.mrf.mxu0
    %v4522 = vadd.f32 %v4508, %v4521
    %v4523 = vpop.f32.mrf.mxu0
    %v4524 = vadd.f32 %v4510, %v4523
    %4525 = vdwg.mxu0
    %4526 = vmatpush.bf16.msra.mxu0 %v4198
    %4527 = vmatpush.bf16.msra.mxu0 %v4191
    %4528 = vmatpush.bf16.msra.mxu0 %v4184
    %4529 = vmatpush.bf16.msra.mxu0 %v4177
    %4530 = vmatpush.bf16.msra.mxu0 %v4170
    %4531 = vmatpush.bf16.msra.mxu0 %v4163
    %4532 = vmatpush.bf16.msra.mxu0 %v4156
    %4533 = vmatpush.bf16.msra.mxu0 %v4149
    %4534 = vmatmul.bf16.gmra.mxu0 %v3003
    %v4535 = vpop.f32.mrf.mxu0
    %v4536 = vadd.f32 %v4522, %v4535
    %v4537 = vpop.f32.mrf.mxu0
    %v4538 = vadd.f32 %v4524, %v4537
    %4539 = vdwg.mxu0
    %4540 = vmatpush.bf16.msra.mxu0 %v4031
    %4541 = vmatpush.bf16.msra.mxu0 %v4024
    %4542 = vmatpush.bf16.msra.mxu0 %v4017
    %4543 = vmatpush.bf16.msra.mxu0 %v4010
    %4544 = vmatpush.bf16.msra.mxu0 %v4003
    %4545 = vmatpush.bf16.msra.mxu0 %v3996
    %4546 = vmatpush.bf16.msra.mxu0 %v3989
    %4547 = vmatpush.bf16.msra.mxu0 %v3982
    %4548 = vmatmul.bf16.gmra.mxu0 %v3000
    %v4549 = vpop.f32.mrf.mxu0
    %v4550 = vadd.f32 %v3264, %v4549
    %v4551 = vpop.f32.mrf.mxu0
    %v4552 = vadd.f32 %v3264, %v4551
    %4553 = vdwg.mxu0
    %4554 = vmatpush.bf16.msra.mxu0 %v4087
    %4555 = vmatpush.bf16.msra.mxu0 %v4080
    %4556 = vmatpush.bf16.msra.mxu0 %v4073
    %4557 = vmatpush.bf16.msra.mxu0 %v4066
    %4558 = vmatpush.bf16.msra.mxu0 %v4059
    %4559 = vmatpush.bf16.msra.mxu0 %v4052
    %4560 = vmatpush.bf16.msra.mxu0 %v4045
    %4561 = vmatpush.bf16.msra.mxu0 %v4038
    %4562 = vmatmul.bf16.gmra.mxu0 %v3001
    %v4563 = vpop.f32.mrf.mxu0
    %v4564 = vadd.f32 %v4550, %v4563
    %v4565 = vpop.f32.mrf.mxu0
    %v4566 = vadd.f32 %v4552, %v4565
    %4567 = vdwg.mxu0
    %4568 = vmatpush.bf16.msra.mxu0 %v4143
    %4569 = vmatpush.bf16.msra.mxu0 %v4136
    %4570 = vmatpush.bf16.msra.mxu0 %v4129
    %4571 = vmatpush.bf16.msra.mxu0 %v4122
    %4572 = vmatpush.bf16.msra.mxu0 %v4115
    %4573 = vmatpush.bf16.msra.mxu0 %v4108
    %4574 = vmatpush.bf16.msra.mxu0 %v4101
    %4575 = vmatpush.bf16.msra.mxu0 %v4094
    %4576 = vmatmul.bf16.gmra.mxu0 %v3002
    %v4577 = vpop.f32.mrf.mxu0
    %v4578 = vadd.f32 %v4564, %v4577
    %v4579 = vpop.f32.mrf.mxu0
    %v4580 = vadd.f32 %v4566, %v4579
    %4581 = vdwg.mxu0
    %4582 = vmatpush.bf16.msra.mxu0 %v4199
    %4583 = vmatpush.bf16.msra.mxu0 %v4192
    %4584 = vmatpush.bf16.msra.mxu0 %v4185
    %4585 = vmatpush.bf16.msra.mxu0 %v4178
    %4586 = vmatpush.bf16.msra.mxu0 %v4171
    %4587 = vmatpush.bf16.msra.mxu0 %v4164
    %4588 = vmatpush.bf16.msra.mxu0 %v4157
    %4589 = vmatpush.bf16.msra.mxu0 %v4150
    %4590 = vmatmul.bf16.gmra.mxu0 %v3003
    %v4591 = vpop.f32.mrf.mxu0
    %v4592 = vadd.f32 %v4578, %v4591
    %v4593 = vpop.f32.mrf.mxu0
    %v4594 = vadd.f32 %v4580, %v4593
    %4595 = vdwg.mxu0
    %4596 = vmatpush.bf16.msra.mxu0 %v4032
    %4597 = vmatpush.bf16.msra.mxu0 %v4025
    %4598 = vmatpush.bf16.msra.mxu0 %v4018
    %4599 = vmatpush.bf16.msra.mxu0 %v4011
    %4600 = vmatpush.bf16.msra.mxu0 %v4004
    %4601 = vmatpush.bf16.msra.mxu0 %v3997
    %4602 = vmatpush.bf16.msra.mxu0 %v3990
    %4603 = vmatpush.bf16.msra.mxu0 %v3983
    %4604 = vmatmul.bf16.gmra.mxu0 %v3000
    %v4605 = vpop.f32.mrf.mxu0
    %v4606 = vadd.f32 %v3265, %v4605
    %v4607 = vpop.f32.mrf.mxu0
    %v4608 = vadd.f32 %v3265, %v4607
    %4609 = vdwg.mxu0
    %4610 = vmatpush.bf16.msra.mxu0 %v4088
    %4611 = vmatpush.bf16.msra.mxu0 %v4081
    %4612 = vmatpush.bf16.msra.mxu0 %v4074
    %4613 = vmatpush.bf16.msra.mxu0 %v4067
    %4614 = vmatpush.bf16.msra.mxu0 %v4060
    %4615 = vmatpush.bf16.msra.mxu0 %v4053
    %4616 = vmatpush.bf16.msra.mxu0 %v4046
    %4617 = vmatpush.bf16.msra.mxu0 %v4039
    %4618 = vmatmul.bf16.gmra.mxu0 %v3001
    %v4619 = vpop.f32.mrf.mxu0
    %v4620 = vadd.f32 %v4606, %v4619
    %v4621 = vpop.f32.mrf.mxu0
    %v4622 = vadd.f32 %v4608, %v4621
    %4623 = vdwg.mxu0
    %4624 = vmatpush.bf16.msra.mxu0 %v4144
    %4625 = vmatpush.bf16.msra.mxu0 %v4137
    %4626 = vmatpush.bf16.msra.mxu0 %v4130
    %4627 = vmatpush.bf16.msra.mxu0 %v4123
    %4628 = vmatpush.bf16.msra.mxu0 %v4116
    %4629 = vmatpush.bf16.msra.mxu0 %v4109
    %4630 = vmatpush.bf16.msra.mxu0 %v4102
    %4631 = vmatpush.bf16.msra.mxu0 %v4095
    %4632 = vmatmul.bf16.gmra.mxu0 %v3002
    %v4633 = vpop.f32.mrf.mxu0
    %v4634 = vadd.f32 %v4620, %v4633
    %v4635 = vpop.f32.mrf.mxu0
    %v4636 = vadd.f32 %v4622, %v4635
    %4637 = vdwg.mxu0
    %4638 = vmatpush.bf16.msra.mxu0 %v4200
    %4639 = vmatpush.bf16.msra.mxu0 %v4193
    %4640 = vmatpush.bf16.msra.mxu0 %v4186
    %4641 = vmatpush.bf16.msra.mxu0 %v4179
    %4642 = vmatpush.bf16.msra.mxu0 %v4172
    %4643 = vmatpush.bf16.msra.mxu0 %v4165
    %4644 = vmatpush.bf16.msra.mxu0 %v4158
    %4645 = vmatpush.bf16.msra.mxu0 %v4151
    %4646 = vmatmul.bf16.gmra.mxu0 %v3003
    %v4647 = vpop.f32.mrf.mxu0
    %v4648 = vadd.f32 %v4634, %v4647
    %v4649 = vpop.f32.mrf.mxu0
    %v4650 = vadd.f32 %v4636, %v4649
    %4651 = vdwg.mxu0
    %4652 = vmatpush.bf16.msra.mxu0 %v4033
    %4653 = vmatpush.bf16.msra.mxu0 %v4026
    %4654 = vmatpush.bf16.msra.mxu0 %v4019
    %4655 = vmatpush.bf16.msra.mxu0 %v4012
    %4656 = vmatpush.bf16.msra.mxu0 %v4005
    %4657 = vmatpush.bf16.msra.mxu0 %v3998
    %4658 = vmatpush.bf16.msra.mxu0 %v3991
    %4659 = vmatpush.bf16.msra.mxu0 %v3984
    %4660 = vmatmul.bf16.gmra.mxu0 %v3000
    %v4661 = vpop.f32.mrf.mxu0
    %v4662 = vadd.f32 %v3266, %v4661
    %v4663 = vpop.f32.mrf.mxu0
    %v4664 = vadd.f32 %v3266, %v4663
    %4665 = vdwg.mxu0
    %4666 = vmatpush.bf16.msra.mxu0 %v4089
    %4667 = vmatpush.bf16.msra.mxu0 %v4082
    %4668 = vmatpush.bf16.msra.mxu0 %v4075
    %4669 = vmatpush.bf16.msra.mxu0 %v4068
    %4670 = vmatpush.bf16.msra.mxu0 %v4061
    %4671 = vmatpush.bf16.msra.mxu0 %v4054
    %4672 = vmatpush.bf16.msra.mxu0 %v4047
    %4673 = vmatpush.bf16.msra.mxu0 %v4040
    %4674 = vmatmul.bf16.gmra.mxu0 %v3001
    %v4675 = vpop.f32.mrf.mxu0
    %v4676 = vadd.f32 %v4662, %v4675
    %v4677 = vpop.f32.mrf.mxu0
    %v4678 = vadd.f32 %v4664, %v4677
    %4679 = vdwg.mxu0
    %4680 = vmatpush.bf16.msra.mxu0 %v4145
    %4681 = vmatpush.bf16.msra.mxu0 %v4138
    %4682 = vmatpush.bf16.msra.mxu0 %v4131
    %4683 = vmatpush.bf16.msra.mxu0 %v4124
    %4684 = vmatpush.bf16.msra.mxu0 %v4117
    %4685 = vmatpush.bf16.msra.mxu0 %v4110
    %4686 = vmatpush.bf16.msra.mxu0 %v4103
    %4687 = vmatpush.bf16.msra.mxu0 %v4096
    %4688 = vmatmul.bf16.gmra.mxu0 %v3002
    %v4689 = vpop.f32.mrf.mxu0
    %v4690 = vadd.f32 %v4676, %v4689
    %v4691 = vpop.f32.mrf.mxu0
    %v4692 = vadd.f32 %v4678, %v4691
    %4693 = vdwg.mxu0
    %4694 = vmatpush.bf16.msra.mxu0 %v4201
    %4695 = vmatpush.bf16.msra.mxu0 %v4194
    %4696 = vmatpush.bf16.msra.mxu0 %v4187
    %4697 = vmatpush.bf16.msra.mxu0 %v4180
    %4698 = vmatpush.bf16.msra.mxu0 %v4173
    %4699 = vmatpush.bf16.msra.mxu0 %v4166
    %4700 = vmatpush.bf16.msra.mxu0 %v4159
    %4701 = vmatpush.bf16.msra.mxu0 %v4152
    %4702 = vmatmul.bf16.gmra.mxu0 %v3003
    %v4703 = vpop.f32.mrf.mxu0
    %v4704 = vadd.f32 %v4690, %v4703
    %v4705 = vpop.f32.mrf.mxu0
    %v4706 = vadd.f32 %v4692, %v4705
    %4707 = vdwg.mxu0
    %4708 = vmatpush.bf16.msra.mxu0 %v4034
    %4709 = vmatpush.bf16.msra.mxu0 %v4027
    %4710 = vmatpush.bf16.msra.mxu0 %v4020
    %4711 = vmatpush.bf16.msra.mxu0 %v4013
    %4712 = vmatpush.bf16.msra.mxu0 %v4006
    %4713 = vmatpush.bf16.msra.mxu0 %v3999
    %4714 = vmatpush.bf16.msra.mxu0 %v3992
    %4715 = vmatpush.bf16.msra.mxu0 %v3985
    %4716 = vmatmul.bf16.gmra.mxu0 %v3000
    %v4717 = vpop.f32.mrf.mxu0
    %v4718 = vadd.f32 %v3267, %v4717
    %v4719 = vpop.f32.mrf.mxu0
    %v4720 = vadd.f32 %v3267, %v4719
    %4721 = vdwg.mxu0
    %4722 = vmatpush.bf16.msra.mxu0 %v4090
    %4723 = vmatpush.bf16.msra.mxu0 %v4083
    %4724 = vmatpush.bf16.msra.mxu0 %v4076
    %4725 = vmatpush.bf16.msra.mxu0 %v4069
    %4726 = vmatpush.bf16.msra.mxu0 %v4062
    %4727 = vmatpush.bf16.msra.mxu0 %v4055
    %4728 = vmatpush.bf16.msra.mxu0 %v4048
    %4729 = vmatpush.bf16.msra.mxu0 %v4041
    %4730 = vmatmul.bf16.gmra.mxu0 %v3001
    %v4731 = vpop.f32.mrf.mxu0
    %v4732 = vadd.f32 %v4718, %v4731
    %v4733 = vpop.f32.mrf.mxu0
    %v4734 = vadd.f32 %v4720, %v4733
    %4735 = vdwg.mxu0
    %4736 = vmatpush.bf16.msra.mxu0 %v4146
    %4737 = vmatpush.bf16.msra.mxu0 %v4139
    %4738 = vmatpush.bf16.msra.mxu0 %v4132
    %4739 = vmatpush.bf16.msra.mxu0 %v4125
    %4740 = vmatpush.bf16.msra.mxu0 %v4118
    %4741 = vmatpush.bf16.msra.mxu0 %v4111
    %4742 = vmatpush.bf16.msra.mxu0 %v4104
    %4743 = vmatpush.bf16.msra.mxu0 %v4097
    %4744 = vmatmul.bf16.gmra.mxu0 %v3002
    %v4745 = vpop.f32.mrf.mxu0
    %v4746 = vadd.f32 %v4732, %v4745
    %v4747 = vpop.f32.mrf.mxu0
    %v4748 = vadd.f32 %v4734, %v4747
    %4749 = vdwg.mxu0
    %4750 = vmatpush.bf16.msra.mxu0 %v4202
    %4751 = vmatpush.bf16.msra.mxu0 %v4195
    %4752 = vmatpush.bf16.msra.mxu0 %v4188
    %4753 = vmatpush.bf16.msra.mxu0 %v4181
    %4754 = vmatpush.bf16.msra.mxu0 %v4174
    %4755 = vmatpush.bf16.msra.mxu0 %v4167
    %4756 = vmatpush.bf16.msra.mxu0 %v4160
    %4757 = vmatpush.bf16.msra.mxu0 %v4153
    %4758 = vmatmul.bf16.gmra.mxu0 %v3003
    %v4759 = vpop.f32.mrf.mxu0
    %v4760 = vadd.f32 %v4746, %v4759
    %v4761 = vpop.f32.mrf.mxu0
    %v4762 = vadd.f32 %v4748, %v4761
    %4763 = vdwg.mxu0
    %4764 = vmatpush.bf16.msra.mxu0 %v4035
    %4765 = vmatpush.bf16.msra.mxu0 %v4028
    %4766 = vmatpush.bf16.msra.mxu0 %v4021
    %4767 = vmatpush.bf16.msra.mxu0 %v4014
    %4768 = vmatpush.bf16.msra.mxu0 %v4007
    %4769 = vmatpush.bf16.msra.mxu0 %v4000
    %4770 = vmatpush.bf16.msra.mxu0 %v3993
    %4771 = vmatpush.bf16.msra.mxu0 %v3986
    %4772 = vmatmul.bf16.gmra.mxu0 %v3000
    %v4773 = vpop.f32.mrf.mxu0
    %v4774 = vadd.f32 %v3268, %v4773
    %v4775 = vpop.f32.mrf.mxu0
    %v4776 = vadd.f32 %v3268, %v4775
    %4777 = vdwg.mxu0
    %4778 = vmatpush.bf16.msra.mxu0 %v4091
    %4779 = vmatpush.bf16.msra.mxu0 %v4084
    %4780 = vmatpush.bf16.msra.mxu0 %v4077
    %4781 = vmatpush.bf16.msra.mxu0 %v4070
    %4782 = vmatpush.bf16.msra.mxu0 %v4063
    %4783 = vmatpush.bf16.msra.mxu0 %v4056
    %4784 = vmatpush.bf16.msra.mxu0 %v4049
    %4785 = vmatpush.bf16.msra.mxu0 %v4042
    %4786 = vmatmul.bf16.gmra.mxu0 %v3001
    %v4787 = vpop.f32.mrf.mxu0
    %v4788 = vadd.f32 %v4774, %v4787
    %v4789 = vpop.f32.mrf.mxu0
    %v4790 = vadd.f32 %v4776, %v4789
    %4791 = vdwg.mxu0
    %4792 = vmatpush.bf16.msra.mxu0 %v4147
    %4793 = vmatpush.bf16.msra.mxu0 %v4140
    %4794 = vmatpush.bf16.msra.mxu0 %v4133
    %4795 = vmatpush.bf16.msra.mxu0 %v4126
    %4796 = vmatpush.bf16.msra.mxu0 %v4119
    %4797 = vmatpush.bf16.msra.mxu0 %v4112
    %4798 = vmatpush.bf16.msra.mxu0 %v4105
    %4799 = vmatpush.bf16.msra.mxu0 %v4098
    %4800 = vmatmul.bf16.gmra.mxu0 %v3002
    %v4801 = vpop.f32.mrf.mxu0
    %v4802 = vadd.f32 %v4788, %v4801
    %v4803 = vpop.f32.mrf.mxu0
    %v4804 = vadd.f32 %v4790, %v4803
    %4805 = vdwg.mxu0
    %4806 = vmatpush.bf16.msra.mxu0 %v4203
    %4807 = vmatpush.bf16.msra.mxu0 %v4196
    %4808 = vmatpush.bf16.msra.mxu0 %v4189
    %4809 = vmatpush.bf16.msra.mxu0 %v4182
    %4810 = vmatpush.bf16.msra.mxu0 %v4175
    %4811 = vmatpush.bf16.msra.mxu0 %v4168
    %4812 = vmatpush.bf16.msra.mxu0 %v4161
    %4813 = vmatpush.bf16.msra.mxu0 %v4154
    %4814 = vmatmul.bf16.gmra.mxu0 %v3003
    %v4815 = vpop.f32.mrf.mxu0
    %v4816 = vadd.f32 %v4802, %v4815
    %v4817 = vpop.f32.mrf.mxu0
    %v4818 = vadd.f32 %v4804, %v4817
    %4819 = vdwg.mxu0
    %v4820 = vmul.f32 %v4480, 0.5
    %v4821 = vmul.f32 %v4536, 0.5
    %v4822 = vmul.f32 %v4592, 0.5
    %v4823 = vmul.f32 %v4648, 0.5
    %v4824 = vmul.f32 %v4704, 0.5
    %v4825 = vmul.f32 %v4760, 0.5
    %v4826 = vmul.f32 %v4816, 0.5
    %v4827 = vmul.f32 %v4482, 0.5
    %v4828 = vmul.f32 %v4538, 0.5
    %v4829 = vmul.f32 %v4594, 0.5
    %v4830 = vmul.f32 %v4650, 0.5
    %v4831 = vmul.f32 %v4706, 0.5
    %v4832 = vmul.f32 %v4762, 0.5
    %v4833 = vmul.f32 %v4818, 0.5
    %v4834 = vtanh.pop %v4820
    %v4835 = vtanh.pop %v4821
    %v4836 = vtanh.pop %v4822
    %v4837 = vtanh.pop %v4823
    %v4838 = vtanh.pop %v4824
    %v4839 = vtanh.pop %v4825
    %v4840 = vtanh.pop %v4826
    %v4841 = vtanh.pop %v4827
    %v4842 = vtanh.pop %v4828
    %v4843 = vtanh.pop %v4829
    %v4844 = vtanh.pop %v4830
    %v4845 = vtanh.pop %v4831
    %v4846 = vtanh.pop %v4832
    %v4847 = vtanh.pop %v4833
    %v4848 = vadd.f32 %v4834, 1.0
    %v4849 = vadd.f32 %v4835, 1.0
    %v4850 = vadd.f32 %v4836, 1.0
    %v4851 = vadd.f32 %v4837, 1.0
    %v4852 = vadd.f32 %v4838, 1.0
    %v4853 = vadd.f32 %v4839, 1.0
    %v4854 = vadd.f32 %v4840, 1.0
    %v4855 = vadd.f32 %v4841, 1.0
    %v4856 = vadd.f32 %v4842, 1.0
    %v4857 = vadd.f32 %v4843, 1.0
    %v4858 = vadd.f32 %v4844, 1.0
    %v4859 = vadd.f32 %v4845, 1.0
    %v4860 = vadd.f32 %v4846, 1.0
    %v4861 = vadd.f32 %v4847, 1.0
    %v4862 = vmul.f32 %v4848, 0.5
    %v4863 = vmul.f32 %v4849, 0.5
    %v4864 = vmul.f32 %v4850, 0.5
    %v4865 = vmul.f32 %v4851, 0.5
    %v4866 = vmul.f32 %v4852, 0.5
    %v4867 = vmul.f32 %v4853, 0.5
    %v4868 = vmul.f32 %v4854, 0.5
    %v4869 = vmul.f32 %v4855, 0.5
    %v4870 = vmul.f32 %v4856, 0.5
    %v4871 = vmul.f32 %v4857, 0.5
    %v4872 = vmul.f32 %v4858, 0.5
    %v4873 = vmul.f32 %v4859, 0.5
    %v4874 = vmul.f32 %v4860, 0.5
    %v4875 = vmul.f32 %v4861, 0.5
    %v4876 = vpack.c.bf16 %v4863, %v4862
    %v4877 = vpack.c.bf16 %v4865, %v4864
    %v4878 = vpack.c.bf16 %v4867, %v4866
    %v4879 = vpack.c.bf16 %v4868, %v4868
    %v4880 = vpack.c.bf16 %v4870, %v4869
    %v4881 = vpack.c.bf16 %v4872, %v4871
    %v4882 = vpack.c.bf16 %v4874, %v4873
    %v4883 = vpack.c.bf16 %v4875, %v4875
    %v4892 = vrot.slane %v4876, 3
    %v4893 = vrot.slane %v4877, 6
    %v4894 = vrot.slane %v4877, 1
    %v4895 = vrot.slane %v4878, 4
    %v4896 = vrot.slane %v4878, 7
    %v4897 = vrot.slane %v4879, 2
    %v4898 = vrot.slane %v4879, 5
    %v4899 = vrot.slane %v4880, 3
    %v4900 = vrot.slane %v4881, 6
    %v4901 = vrot.slane %v4881, 1
    %v4902 = vrot.slane %v4882, 4
    %v4903 = vrot.slane %v4882, 7
    %v4904 = vrot.slane %v4883, 2
    %v4905 = vrot.slane %v4883, 5
    %vm4906 = vcmask 1040384
    %v4909 = vsel %vm4906, %v4876, %v4892
    %vm4910 = vcmask 1042434
    %v4913 = vsel %vm4910, %v4893, %v4894
    %vm4914 = vcmask 1041408
    %v4915 = vsel %vm4914, %v4909, %v4913
    %vm4916 = vcmask 1044484
    %v4919 = vsel %vm4916, %v4895, %v4896
    %vm4920 = vcmask 1046534
    %v4923 = vsel %vm4920, %v4897, %v4898
    %vm4924 = vcmask 1045508
    %v4925 = vsel %vm4924, %v4919, %v4923
    %vm4926 = vcmask 1043456
    %v4927 = vsel %vm4926, %v4915, %v4925
    %vm4928 = vcmask 1041409
    %v4929 = vsel %vm4928, %v4876, %v4892
    %vm4930 = vcmask 1043459
    %v4931 = vsel %vm4930, %v4893, %v4894
    %vm4932 = vcmask 1042433
    %v4933 = vsel %vm4932, %v4929, %v4931
    %vm4934 = vcmask 1045509
    %v4935 = vsel %vm4934, %v4895, %v4896
    %vm4936 = vcmask 1046528
    %v4937 = vsel %vm4936, %v4898, %v4897
    %vm4938 = vcmask 1046533
    %v4939 = vsel %vm4938, %v4935, %v4937
    %vm4940 = vcmask 1044481
    %v4941 = vsel %vm4940, %v4933, %v4939
    %v4943 = vrot.slane %v4941, 1
    %v4944 = vsel %vm4910, %v4876, %v4892
    %v4945 = vsel %vm4916, %v4893, %v4894
    %vm4946 = vcmask 1043458
    %v4947 = vsel %vm4946, %v4944, %v4945
    %v4948 = vsel %vm4920, %v4895, %v4896
    %v4949 = vsel %vm4906, %v4897, %v4898
    %vm4950 = vcmask 1045504
    %v4951 = vsel %vm4950, %v4949, %v4948
    %vm4952 = vcmask 1045506
    %v4953 = vsel %vm4952, %v4947, %v4951
    %v4955 = vrot.slane %v4953, 2
    %v4956 = vsel %vm4930, %v4876, %v4892
    %v4957 = vsel %vm4934, %v4893, %v4894
    %vm4958 = vcmask 1044483
    %v4959 = vsel %vm4958, %v4956, %v4957
    %v4960 = vsel %vm4936, %v4896, %v4895
    %v4961 = vsel %vm4928, %v4897, %v4898
    %vm4962 = vcmask 1046529
    %v4963 = vsel %vm4962, %v4961, %v4960
    %vm4964 = vcmask 1046531
    %v4965 = vsel %vm4964, %v4959, %v4963
    %v4967 = vrot.slane %v4965, 3
    %v4970 = vsel %vm4906, %v4880, %v4899
    %v4973 = vsel %vm4910, %v4900, %v4901
    %v4974 = vsel %vm4914, %v4970, %v4973
    %v4977 = vsel %vm4916, %v4902, %v4903
    %v4980 = vsel %vm4920, %v4904, %v4905
    %v4981 = vsel %vm4924, %v4977, %v4980
    %v4982 = vsel %vm4926, %v4974, %v4981
    %v4983 = vsel %vm4928, %v4880, %v4899
    %v4984 = vsel %vm4930, %v4900, %v4901
    %v4985 = vsel %vm4932, %v4983, %v4984
    %v4986 = vsel %vm4934, %v4902, %v4903
    %v4987 = vsel %vm4936, %v4905, %v4904
    %v4988 = vsel %vm4938, %v4986, %v4987
    %v4989 = vsel %vm4940, %v4985, %v4988
    %v4991 = vrot.slane %v4989, 1
    %v4992 = vsel %vm4910, %v4880, %v4899
    %v4993 = vsel %vm4916, %v4900, %v4901
    %v4994 = vsel %vm4946, %v4992, %v4993
    %v4995 = vsel %vm4920, %v4902, %v4903
    %v4996 = vsel %vm4906, %v4904, %v4905
    %v4997 = vsel %vm4950, %v4996, %v4995
    %v4998 = vsel %vm4952, %v4994, %v4997
    %v5000 = vrot.slane %v4998, 2
    %v5001 = vsel %vm4930, %v4880, %v4899
    %v5002 = vsel %vm4934, %v4900, %v4901
    %v5003 = vsel %vm4958, %v5001, %v5002
    %v5004 = vsel %vm4936, %v4903, %v4902
    %v5005 = vsel %vm4928, %v4904, %v4905
    %v5006 = vsel %vm4962, %v5005, %v5004
    %v5007 = vsel %vm4964, %v5003, %v5006
    %v5009 = vrot.slane %v5007, 3
    %vm5018 = vmor %vm4928, %vm4906
    %vm5019 = vmor %vm4910, %vm5018
    %vm5020 = vmor %vm4930, %vm5019
    %vm5021 = vmor %vm4916, %vm5020
    %vm5022 = vmor %vm4934, %vm5021
    %vm5023 = vcmask 129030
    %vm5024 = vmor %vm5023, %vm5022
    %5025 = vst.msk [vmem:[#allocation2] sm:$0x7f] %vm5024, %v4927
    %5026 = vst.msk [vmem:[#allocation2 + $0x7] sm:$0x7f] %vm5024, %v4943
    %5027 = vst.msk [vmem:[#allocation2 + $0xe] sm:$0x7f] %vm5024, %v4955
    %5028 = vst.msk [vmem:[#allocation2 + $0x15] sm:$0x7f] %vm5024, %v4967
    %5029 = vst.msk [vmem:[#allocation2 + $0x1c] sm:$0x7f] %vm5024, %v4982
    %5030 = vst.msk [vmem:[#allocation2 + $0x23] sm:$0x7f] %vm5024, %v4991
    %5031 = vst.msk [vmem:[#allocation2 + $0x2a] sm:$0x7f] %vm5024, %v5000
    %5032 = vst.msk [vmem:[#allocation2 + $0x31] sm:$0x7f] %vm5024, %v5009
    %vm5033 = vcmask 162816
    %5034 = vst.msk [vmem:[#allocation4] sm:$0xff] %vm5033, %v2400
    %5035 = vst.msk [vmem:[#allocation4 + $0x8] sm:$0xff] %vm5033, %v2402
    // Predicated region
    $region58: #{tpu_custom_call.1} parent=1 // pred_check
      _
    $region59: #{tpu_custom_call.1} parent=1 // pred_check_branch
      %5037 = sbr.rel (0) target = $region61
    $region60: #{tpu_custom_call.1} parent=1 // pred_region
      %5039 = vsyncadd [#allocation3], 784
      %s5040 = sshll.u32 [#allocation2], 4
      %s5041 = int_to_ptr.vmem [resolvable:$true] %s5040
      %s5042 = sshll.u32 %s14, 4
      %s5043 = int_to_ptr.hbm [resolvable:$true] %s5042
      %5048 = dma.vmem_to_hbm [thread:$0]  %s5041, 112, %s5043, [#allocation3], 112, 112, 7
    $region61: #{tpu_custom_call.1} parent=1 // pred_fallthru
      _
    // Predicated region
    $region62: #{tpu_custom_call.1} parent=1 // pred_check
      _
    $region63: #{tpu_custom_call.1} parent=1 // pred_check_branch
      %5050 = sbr.rel (0) target = $region65
    $region64: #{tpu_custom_call.1} parent=1 // pred_region
      %5052 = vsyncadd [#allocation5], 224
      %s5053 = sshll.u32 [#allocation4], 4
      %s5054 = int_to_ptr.vmem [resolvable:$true] %s5053
      %s5055 = sshll.u32 %s15, 4
      %s5056 = int_to_ptr.hbm [resolvable:$true] %s5055
      %5061 = dma.vmem_to_hbm [thread:$0]  %s5054, 32, %s5056, [#allocation5], 32, 32, 2
    $region65: #{tpu_custom_call.1} parent=1 // pred_fallthru
      _
    // Predicated region
    $region66: #{tpu_custom_call.1} parent=1 // pred_check
      _
    $region67: #{tpu_custom_call.1} parent=1 // pred_check_branch
      %5063 = sbr.rel (0) target = $region69
    $region68: #{tpu_custom_call.1} parent=1 // pred_region
      %5065 = dma.done [#allocation3], 896
    $region69: #{tpu_custom_call.1} parent=1 // pred_fallthru
      _
    // Predicated region
    $region70: #{tpu_custom_call.1} parent=1 // pred_check
      _
    $region71: #{tpu_custom_call.1} parent=1 // pred_check_branch
      %5067 = sbr.rel (0) target = $region73
    $region72: #{tpu_custom_call.1} parent=1 // pred_region
      %5069 = dma.done [#allocation5], 256
    $region73: #{tpu_custom_call.1} parent=1 // pred_fallthru
      _
    %5070 = vsyncpa [#allocation3], 1
    %5071 = vsyncpa [#allocation5], 1

</llo_original>
